<compile_context>
chip_gen: v7x
topology: tpu7x:2x2x1
jax: 0.10.0
libtpu: 0.0.40
codegen_flags: <defaults>
</compile_context>

<pallas_src>
import functools

import jax
import jax.numpy as jnp
import numpy as np
from jax.experimental import pallas as pl
from jax.experimental.pallas import tpu as pltpu

# ----------------------------- configuration -------------------------------
B = 2               # batch
ENC_H = 4           # config.enc_hidden_size  -> pixel_size = ENC_H * ENC_H
P = ENC_H * ENC_H   # 16 "pixels" after adaptive pooling
DEC_H = 32          # config.dec_hidden_size
L = 2               # config.dec_num_layers
C = 2048            # resnet101 channel dim (hard-coded in the PyTorch module)
FH = FW = 8         # spatial size of the backbone feature map fed to the pooling
S = FH * FW         # flattened spatial size


# ------------------------- adaptive-pool matrix -----------------------------
def _adaptive_avg_pool_matrix(in_size, out_size):
    """(out_size, in_size) averaging matrix reproducing PyTorch adaptive-pool bins."""
    m = np.zeros((out_size, in_size), np.float32)
    for i in range(out_size):
        lo = (i * in_size) // out_size
        hi = -((-(i + 1) * in_size) // out_size)   # ceil((i+1)*in/out)
        m[i, lo:hi] = 1.0 / (hi - lo)
    return m


def make_pool_matrix(fh, fw, oh, ow):
    # AdaptiveAvgPool2d((oh, ow)) on the flattened (fh*fw) spatial axis == kron of 1-D bins.
    m = np.kron(_adaptive_avg_pool_matrix(fh, oh), _adaptive_avg_pool_matrix(fw, ow))
    return jnp.asarray(m.T)                        # (S, P): pooled = feat_flat @ pool_t


# ------------------------------ fused kernel --------------------------------
def _encoder_kernel(feat_ref, pool_ref, hdc_w_ref, hdc_b_ref, w_hc_ref, b_hc_ref,
                    x_ref, hc_ref, *, apply_relu):
    bsz, ch, s = feat_ref.shape

    # Loop-invariant loads, hoisted (single vld each).
    pool_t = pool_ref[...]                                    # (S, P)
    hdc_w = hdc_w_ref[...]                                    # (P, L)
    hdc_b = hdc_b_ref[...]                                    # (1, L)
    w_hc = w_hc_ref[...]                                      # (C, 2*DEC_H)  [h_w | c_w]
    b_hc = b_hc_ref[...]                                      # (1, 2*DEC_H)  [h_b | c_b]

    # Fold the batch into the sublane axis (ch % 8 == 0 -> layout-free reshape).
    feat = feat_ref[...].reshape(bsz * ch, s)                 # (B*C, S)

    # AdaptiveAvgPool2d as a single MXU matmul over the spatial axis.
    pooled = jnp.dot(feat, pool_t,
                     preferred_element_type=jnp.float32)      # (B*C, P)
    x_ref[...] = pooled.reshape(bsz, ch, pool_t.shape[1])     # encoder output x (pre-ReLU)

    # hidden_dim_changer: ReLU -> Linear(P, L) -> ReLU   (or mean when L == 1,
    # encoded host-side as hdc_w = 1/P, hdc_b = 0, apply_relu=False).
    t = jnp.maximum(pooled, 0.0) if apply_relu else pooled
    tmp = jnp.dot(t, hdc_w,
                  preferred_element_type=jnp.float32) + hdc_b  # (B*C, L)
    if apply_relu:
        tmp = jnp.maximum(tmp, 0.0)

    # Heads: hc[b, l, :] = sum_c tmp[b, c, l] * [h_w | c_w][c, :] + [h_b | c_b]
    # Transposed-LHS MXU feed contracting the channel axis -> the (B, C, L) -> (L, B, C)
    # permute never materializes. One dot per batch (static unroll, B == 2).
    dims = (((0,), (0,)), ((), ()))
    for b in range(bsz):
        tmp_b = tmp[b * ch:(b + 1) * ch]                      # (C, L), static aligned slice
        head = jax.lax.dot_general(tmp_b, w_hc, dims,
                                   preferred_element_type=jnp.float32)   # (L, 2*DEC_H)
        hc_ref[b] = head + b_hc


def encoder_forward(params, feat):
    bsz, ch, fh, fw = feat.shape
    feat_flat = feat.reshape(bsz, ch, fh * fw)               # contiguous, free reshape

    full = lambda a: pl.BlockSpec(a.shape, lambda i, _nd=a.ndim: (0,) * _nd)
    kernel = functools.partial(_encoder_kernel, apply_relu=(L != 1))

    x, hc = pl.pallas_call(
        kernel,
        grid=(1,),                                           # single step: whole problem in VMEM
        in_specs=[
            pl.BlockSpec((bsz, ch, fh * fw), lambda i: (0, 0, 0)),    # full feature map
            full(params["pool_t"]),
            full(params["hdc_w"]), full(params["hdc_b"]),
            full(params["w_hc"]), full(params["b_hc"]),
        ],
        out_specs=[
            pl.BlockSpec((bsz, ch, P), lambda i: (0, 0, 0)),          # x
            pl.BlockSpec((bsz, L, 2 * DEC_H), lambda i: (0, 0, 0)),   # [h0 | c0], batch-major
        ],
        out_shape=[
            jax.ShapeDtypeStruct((bsz, ch, P), jnp.float32),
            jax.ShapeDtypeStruct((bsz, L, 2 * DEC_H), jnp.float32),
        ],
        compiler_params=pltpu.CompilerParams(dimension_semantics=("arbitrary",)),
    )(feat_flat, params["pool_t"], params["hdc_w"], params["hdc_b"],
      params["w_hc"], params["b_hc"])

    # Tiny (512 B) split + transpose to the module's (L, B, DEC_H) layout.
    h0 = jnp.transpose(hc[:, :, :DEC_H], (1, 0, 2))
    c0 = jnp.transpose(hc[:, :, DEC_H:], (1, 0, 2))
    return x, (h0, c0)


# ------------------------------ parameters ----------------------------------
def init_params(key):
    ks = iter(jax.random.split(key, 8))
    u = lambda shape, s=0.1: jax.random.uniform(next(ks), shape, jnp.float32, -s, s)
    p = {"pool_t": make_pool_matrix(FH, FW, ENC_H, ENC_H)}           # (S, P), fixed
    if L != 1:
        p["hdc_w"], p["hdc_b"] = u((P, L)), u((1, L))                # hidden_dim_changer
    else:
        p["hdc_w"] = jnp.full((P, 1), 1.0 / P, jnp.float32)          # mean(x, dim=2)
        p["hdc_b"] = jnp.zeros((1, 1), jnp.float32)
    p["h_w"], p["h_b"] = u((C, DEC_H)), u((1, 1, DEC_H))             # h_mlp (in, out)
    p["c_w"], p["c_b"] = u((C, DEC_H)), u((1, 1, DEC_H))             # c_mlp (in, out)
    # Pre-concatenated head weights/biases (built once, outside the jitted forward).
    p["w_hc"] = jnp.concatenate([p["h_w"], p["c_w"]], axis=1)        # (C, 2*DEC_H)
    p["b_hc"] = jnp.concatenate([p["h_b"].reshape(1, DEC_H),
                                 p["c_b"].reshape(1, DEC_H)], axis=1)  # (1, 2*DEC_H)
    return p


# ------------------------------ pure-JAX reference ---------------------------
def reference_forward(params, feat):
    hp = jax.lax.Precision.HIGHEST
    bsz, ch, fh, fw = feat.shape
    x = jnp.einsum("bcs,sp->bcp", feat.reshape(bsz, ch, fh * fw), params["pool_t"],
                   precision=hp)
    if L != 1:
        t = jnp.maximum(x, 0.0)
        tmp = jnp.maximum(
            jnp.einsum("bcp,pl->bcl", t, params["hdc_w"], precision=hp) + params["hdc_b"],
            0.0)
    else:
        tmp = jnp.mean(x, axis=2, keepdims=True)
    tmp = jnp.transpose(tmp, (2, 0, 1))                               # (L, B, C)
    h0 = jnp.einsum("lbc,ch->lbh", tmp, params["h_w"], precision=hp) + params["h_b"]
    c0 = jnp.einsum("lbc,ch->lbh", tmp, params["c_w"], precision=hp) + params["c_b"]
    return x, (h0, c0)


# ------------------------------ main -----------------------------------------
if __name__ == "__main__":
    key = jax.random.PRNGKey(0)
    kp, kf = jax.random.split(key)
    params = init_params(kp)
    feat = jax.random.normal(kf, (B, C, FH, FW), jnp.float32)  # resnet101 feature map

    fwd = jax.jit(encoder_forward)
    x, (h0, c0) = jax.block_until_ready(fwd(params, feat))

    rx, (rh, rc) = reference_forward(params, feat)
    np.testing.assert_allclose(np.asarray(x), np.asarray(rx), rtol=1e-2, atol=1e-2)
    np.testing.assert_allclose(np.asarray(h0), np.asarray(rh), rtol=1e-2, atol=1e-2)
    np.testing.assert_allclose(np.asarray(c0), np.asarray(rc), rtol=1e-2, atol=1e-2)

    assert x.shape == (B, C, P)
    assert h0.shape == (L, B, DEC_H) and c0.shape == (L, B, DEC_H)
    print("KERNEL_OK")
</pallas_src>

<mosaic_0001>
module attributes {stable_mosaic.version = 11 : i64} {
  func.func @_encoder_kernel(%arg0: i32, %arg1: memref<2x2048x64xf32, #tpu.memory_space<vmem>>, %arg2: memref<64x16xf32, #tpu.memory_space<vmem>>, %arg3: memref<16x2xf32, #tpu.memory_space<vmem>>, %arg4: memref<1x2xf32, #tpu.memory_space<vmem>>, %arg5: memref<2048x64xf32, #tpu.memory_space<vmem>>, %arg6: memref<1x64xf32, #tpu.memory_space<vmem>>, %arg7: memref<2x2048x16xf32, #tpu.memory_space<vmem>>, %arg8: memref<2x2x64xf32, #tpu.memory_space<vmem>>) attributes {dimension_semantics = [#tpu.dimension_semantics<arbitrary>], iteration_bounds = array<i64: 1>, scalar_prefetch = 0 : i64, scratch_operands = 0 : i64, tpu.core_type = #tpu.core_type<tc>, window_params = [{pipeline_mode = #tpu.pipeline_mode<synchronous>, transform_indices = @transform_0, window_bounds = array<i64: 2, 2048, 64>}, {pipeline_mode = #tpu.pipeline_mode<synchronous>, transform_indices = @transform_1, window_bounds = array<i64: 64, 16>}, {pipeline_mode = #tpu.pipeline_mode<synchronous>, transform_indices = @transform_2, window_bounds = array<i64: 16, 2>}, {pipeline_mode = #tpu.pipeline_mode<synchronous>, transform_indices = @transform_3, window_bounds = array<i64: 1, 2>}, {pipeline_mode = #tpu.pipeline_mode<synchronous>, transform_indices = @transform_4, window_bounds = array<i64: 2048, 64>}, {pipeline_mode = #tpu.pipeline_mode<synchronous>, transform_indices = @transform_5, window_bounds = array<i64: 1, 64>}, {pipeline_mode = #tpu.pipeline_mode<synchronous>, transform_indices = @transform_6, window_bounds = array<i64: 2, 2048, 16>}, {pipeline_mode = #tpu.pipeline_mode<synchronous>, transform_indices = @transform_7, window_bounds = array<i64: 2, 2, 64>}]} {
    %c0 = arith.constant 0 : index
    %c0_0 = arith.constant 0 : index
    %0 = vector.load %arg2[%c0, %c0_0] : memref<64x16xf32, #tpu.memory_space<vmem>>, vector<64x16xf32>
    %c0_1 = arith.constant 0 : index
    %c0_2 = arith.constant 0 : index
    %1 = vector.load %arg3[%c0_1, %c0_2] : memref<16x2xf32, #tpu.memory_space<vmem>>, vector<16x2xf32>
    %c0_3 = arith.constant 0 : index
    %c0_4 = arith.constant 0 : index
    %2 = vector.load %arg4[%c0_3, %c0_4] : memref<1x2xf32, #tpu.memory_space<vmem>>, vector<1x2xf32>
    %c0_5 = arith.constant 0 : index
    %c0_6 = arith.constant 0 : index
    %3 = vector.load %arg5[%c0_5, %c0_6] : memref<2048x64xf32, #tpu.memory_space<vmem>>, vector<2048x64xf32>
    %c0_7 = arith.constant 0 : index
    %c0_8 = arith.constant 0 : index
    %4 = vector.load %arg6[%c0_7, %c0_8] : memref<1x64xf32, #tpu.memory_space<vmem>>, vector<1x64xf32>
    %c0_9 = arith.constant 0 : index
    %c0_10 = arith.constant 0 : index
    %c0_11 = arith.constant 0 : index
    %5 = vector.load %arg1[%c0_9, %c0_10, %c0_11] : memref<2x2048x64xf32, #tpu.memory_space<vmem>>, vector<2x2048x64xf32>
    %6 = vector.shape_cast %5 : vector<2x2048x64xf32> to vector<4096x64xf32>
    %cst = arith.constant dense<0.000000e+00> : vector<4096x16xf32>
    %7 = tpu.matmul %6, %0, %cst {dimension_numbers = #tpu.dot_dimension_numbers<[1], [0], [0], [1], [0, 0, 1, 1], [], []>} : vector<4096x64xf32>, vector<64x16xf32>, vector<4096x16xf32> -> vector<4096x16xf32>
    %8 = vector.shape_cast %7 : vector<4096x16xf32> to vector<2x2048x16xf32>
    %c0_12 = arith.constant 0 : index
    %c0_13 = arith.constant 0 : index
    %c0_14 = arith.constant 0 : index
    %9 = vector.load %arg7[%c0_12, %c0_13, %c0_14] : memref<2x2048x16xf32, #tpu.memory_space<vmem>>, vector<2x2048x16xf32>
    tpu.vector_store %arg7[%c0_12, %c0_13, %c0_14], %8 {strides = array<i32>} : memref<2x2048x16xf32, #tpu.memory_space<vmem>>, vector<2x2048x16xf32>,
    %cst_15 = arith.constant 0.000000e+00 : f32
    %10 = vector.broadcast %cst_15 : f32 to vector<4096x16xf32>
    %11 = arith.maximumf %7, %10 : vector<4096x16xf32>
    %cst_16 = arith.constant dense<0.000000e+00> : vector<4096x2xf32>
    %12 = tpu.matmul %11, %1, %cst_16 {dimension_numbers = #tpu.dot_dimension_numbers<[1], [0], [0], [1], [0, 0, 1, 1], [], []>} : vector<4096x16xf32>, vector<16x2xf32>, vector<4096x2xf32> -> vector<4096x2xf32>
    %13 = vector.broadcast %2 : vector<1x2xf32> to vector<4096x2xf32>
    %14 = arith.addf %12, %13 : vector<4096x2xf32>
    %cst_17 = arith.constant 0.000000e+00 : f32
    %15 = vector.broadcast %cst_17 : f32 to vector<4096x2xf32>
    %16 = arith.maximumf %14, %15 : vector<4096x2xf32>
    %17 = vector.extract_strided_slice %16 {offsets = [0, 0], sizes = [2048, 2], strides = [1, 1]} : vector<4096x2xf32> to vector<2048x2xf32>
    %cst_18 = arith.constant dense<0.000000e+00> : vector<2x64xf32>
    %18 = tpu.matmul %17, %3, %cst_18 {dimension_numbers = #tpu.dot_dimension_numbers<[0], [0], [1], [1], [0, 1, 1, 1], [], []>} : vector<2048x2xf32>, vector<2048x64xf32>, vector<2x64xf32> -> vector<2x64xf32>
    %19 = vector.broadcast %4 : vector<1x64xf32> to vector<2x64xf32>
    %20 = arith.addf %18, %19 : vector<2x64xf32>
    %c0_19 = arith.constant 0 : index
    %c0_20 = arith.constant 0 : index
    %c0_21 = arith.constant 0 : index
    %21 = vector.load %arg8[%c0_19, %c0_20, %c0_21] : memref<2x2x64xf32, #tpu.memory_space<vmem>>, vector<1x2x64xf32>
    %22 = vector.shape_cast %21 : vector<1x2x64xf32> to vector<2x64xf32>
    %23 = vector.shape_cast %20 : vector<2x64xf32> to vector<1x2x64xf32>
    tpu.vector_store %arg8[%c0_19, %c0_20, %c0_21], %23 {strides = array<i32>} : memref<2x2x64xf32, #tpu.memory_space<vmem>>, vector<1x2x64xf32>,
    %24 = vector.extract_strided_slice %16 {offsets = [2048, 0], sizes = [2048, 2], strides = [1, 1]} : vector<4096x2xf32> to vector<2048x2xf32>
    %cst_22 = arith.constant dense<0.000000e+00> : vector<2x64xf32>
    %25 = tpu.matmul %24, %3, %cst_22 {dimension_numbers = #tpu.dot_dimension_numbers<[0], [0], [1], [1], [0, 1, 1, 1], [], []>} : vector<2048x2xf32>, vector<2048x64xf32>, vector<2x64xf32> -> vector<2x64xf32>
    %26 = vector.broadcast %4 : vector<1x64xf32> to vector<2x64xf32>
    %27 = arith.addf %25, %26 : vector<2x64xf32>
    %c1 = arith.constant 1 : index
    %c0_23 = arith.constant 0 : index
    %c0_24 = arith.constant 0 : index
    %28 = vector.load %arg8[%c1, %c0_23, %c0_24] : memref<2x2x64xf32, #tpu.memory_space<vmem>>, vector<1x2x64xf32>
    %29 = vector.shape_cast %28 : vector<1x2x64xf32> to vector<2x64xf32>
    %30 = vector.shape_cast %27 : vector<2x64xf32> to vector<1x2x64xf32>
    tpu.vector_store %arg8[%c1, %c0_23, %c0_24], %30 {strides = array<i32>} : memref<2x2x64xf32, #tpu.memory_space<vmem>>, vector<1x2x64xf32>,
    return
  }
  func.func @transform_0(%arg0: i32) -> (i32, i32, i32) {
    %c0_i32 = arith.constant 0 : i32
    %c0_i32_0 = arith.constant 0 : i32
    %c0_i32_1 = arith.constant 0 : i32
    %c0_i32_2 = arith.constant 0 : i32
    return %c0_i32, %c0_i32_0, %c0_i32_1 : i32, i32, i32
  }
  func.func @transform_1(%arg0: i32) -> (i32, i32) {
    %c0_i32 = arith.constant 0 : i32
    %c0_i32_0 = arith.constant 0 : i32
    %c0_i32_1 = arith.constant 0 : i32
    return %c0_i32, %c0_i32_0 : i32, i32
  }
  func.func @transform_2(%arg0: i32) -> (i32, i32) {
    %c0_i32 = arith.constant 0 : i32
    %c0_i32_0 = arith.constant 0 : i32
    %c0_i32_1 = arith.constant 0 : i32
    return %c0_i32, %c0_i32_0 : i32, i32
  }
  func.func @transform_3(%arg0: i32) -> (i32, i32) {
    %c0_i32 = arith.constant 0 : i32
    %c0_i32_0 = arith.constant 0 : i32
    %c0_i32_1 = arith.constant 0 : i32
    return %c0_i32, %c0_i32_0 : i32, i32
  }
  func.func @transform_4(%arg0: i32) -> (i32, i32) {
    %c0_i32 = arith.constant 0 : i32
    %c0_i32_0 = arith.constant 0 : i32
    %c0_i32_1 = arith.constant 0 : i32
    return %c0_i32, %c0_i32_0 : i32, i32
  }
  func.func @transform_5(%arg0: i32) -> (i32, i32) {
    %c0_i32 = arith.constant 0 : i32
    %c0_i32_0 = arith.constant 0 : i32
    %c0_i32_1 = arith.constant 0 : i32
    return %c0_i32, %c0_i32_0 : i32, i32
  }
  func.func @transform_6(%arg0: i32) -> (i32, i32, i32) {
    %c0_i32 = arith.constant 0 : i32
    %c0_i32_0 = arith.constant 0 : i32
    %c0_i32_1 = arith.constant 0 : i32
    %c0_i32_2 = arith.constant 0 : i32
    return %c0_i32, %c0_i32_0, %c0_i32_1 : i32, i32, i32
  }
  func.func @transform_7(%arg0: i32) -> (i32, i32, i32) {
    %c0_i32 = arith.constant 0 : i32
    %c0_i32_0 = arith.constant 0 : i32
    %c0_i32_1 = arith.constant 0 : i32
    %c0_i32_2 = arith.constant 0 : i32
    return %c0_i32, %c0_i32_0, %c0_i32_1 : i32, i32, i32
  }
}

</mosaic_0001>

<llo_original>
// kernel: encoder_forward.1
$region0: #{encoder_forward.1}
  #allocation0 [shape = 'u32[]', space=smem, size = 0x4, offset = 0x4, fixed_abs, tag = 'smem constant byte address 0x4 - core index']
  #allocation1 [shape = 'u32[144,128]{1,0:T(1,128)}', space=vmem, size = 0x12000, scoped, tag = 'internal scratch']
  %s0 = inlined_call_operand.vmem [shape: f32[2,2048,64], index: 0, kind: input, shape index: {}]
  %s1 = inlined_call_operand.vmem [shape: f32[64,16], index: 1, kind: input, shape index: {}]
  %s2 = inlined_call_operand.vmem [shape: f32[16,2], index: 2, kind: input, shape index: {}]
  %s3 = inlined_call_operand.vmem [shape: f32[1,2], index: 3, kind: input, shape index: {}]
  %s4 = inlined_call_operand.vmem [shape: f32[2048,64], index: 4, kind: input, shape index: {}]
  %s5 = inlined_call_operand.vmem [shape: f32[1,64], index: 5, kind: input, shape index: {}]
  %s6 = inlined_call_operand.vmem [shape: f32[2,2048,16], index: 6, kind: output, shape index: {0}]
  %s7 = inlined_call_operand.vmem [shape: f32[2,2,64], index: 7, kind: output, shape index: {1}]
  %8 = xla_tuple %s6, %s7
  %s9 = sld [smem:[#allocation0]]
  $region42: #{encoder_forward.1} parent=0
    _
  %s11 = ssub.s32 1, %s9
  %s12 = scalar_select 0, %s11, %s9
  // Predicated region
  $region2: #{encoder_forward.1} parent=0 // pred_check
    _
  $region3: #{encoder_forward.1} parent=0 // pred_check_branch
    %14 = sbr.rel (0) target = $region5
  $region4: #{encoder_forward.1} parent=0 // pred_region
    _
  $region5: #{encoder_forward.1} parent=0 // pred_fallthru
    _
  // Predicated region
  $region6: #{encoder_forward.1} parent=0 // pred_check
    _
  $region7: #{encoder_forward.1} parent=0 // pred_check_branch
    %16 = sbr.rel (0) target = $region9
  $region8: #{encoder_forward.1} parent=0 // pred_region
    _
  $region9: #{encoder_forward.1} parent=0 // pred_fallthru
    _
  // Predicated region
  $region10: #{encoder_forward.1} parent=0 // pred_check
    _
  $region11: #{encoder_forward.1} parent=0 // pred_check_branch
    %18 = sbr.rel (0) target = $region13
  $region12: #{encoder_forward.1} parent=0 // pred_region
    _
  $region13: #{encoder_forward.1} parent=0 // pred_fallthru
    _
  // Predicated region
  $region14: #{encoder_forward.1} parent=0 // pred_check
    _
  $region15: #{encoder_forward.1} parent=0 // pred_check_branch
    %20 = sbr.rel (0) target = $region17
  $region16: #{encoder_forward.1} parent=0 // pred_region
    _
  $region17: #{encoder_forward.1} parent=0 // pred_fallthru
    _
  // Predicated region
  $region18: #{encoder_forward.1} parent=0 // pred_check
    _
  $region19: #{encoder_forward.1} parent=0 // pred_check_branch
    %22 = sbr.rel (0) target = $region21
  $region20: #{encoder_forward.1} parent=0 // pred_region
    _
  $region21: #{encoder_forward.1} parent=0 // pred_fallthru
    _
  // Predicated region
  $region22: #{encoder_forward.1} parent=0 // pred_check
    _
  $region23: #{encoder_forward.1} parent=0 // pred_check_branch
    %24 = sbr.rel (0) target = $region25
  $region24: #{encoder_forward.1} parent=0 // pred_region
    _
  $region25: #{encoder_forward.1} parent=0 // pred_fallthru
    _
  %v25 = vld [vmem:[%s1] sm:$0xff]
  %v26 = vld [vmem:[%s1 + $0x8] sm:$0xff]
  %v27 = vld [vmem:[%s1 + $0x10] sm:$0xff]
  %v28 = vld [vmem:[%s1 + $0x18] sm:$0xff]
  %v29 = vld [vmem:[%s1 + $0x20] sm:$0xff]
  %v30 = vld [vmem:[%s1 + $0x28] sm:$0xff]
  %v31 = vld [vmem:[%s1 + $0x30] sm:$0xff]
  %v32 = vld [vmem:[%s1 + $0x38] sm:$0xff]
  %v33 = vld [vmem:[%s2] sm:$0xff]
  %v34 = vld [vmem:[%s2 + $0x8] sm:$0xff]
  %v35 = vld [vmem:[%s3] sm:$0x1]
  %v36 = vld [vmem:[%s4] sm:$0xff]
  %v37 = vld [vmem:[%s4 + $0x8] sm:$0xff]
  %v38 = vld [vmem:[%s4 + $0x10] sm:$0xff]
  %v39 = vld [vmem:[%s4 + $0x18] sm:$0xff]
  %v40 = vld [vmem:[%s4 + $0x20] sm:$0xff]
  %v41 = vld [vmem:[%s4 + $0x28] sm:$0xff]
  %v42 = vld [vmem:[%s4 + $0x30] sm:$0xff]
  %v43 = vld [vmem:[%s4 + $0x38] sm:$0xff]
  %v44 = vld [vmem:[%s4 + $0x40] sm:$0xff]
  %v45 = vld [vmem:[%s4 + $0x48] sm:$0xff]
  %v46 = vld [vmem:[%s4 + $0x50] sm:$0xff]
  %v47 = vld [vmem:[%s4 + $0x58] sm:$0xff]
  %v48 = vld [vmem:[%s4 + $0x60] sm:$0xff]
  %v49 = vld [vmem:[%s4 + $0x68] sm:$0xff]
  %v50 = vld [vmem:[%s4 + $0x70] sm:$0xff]
  %v51 = vld [vmem:[%s4 + $0x78] sm:$0xff]
  %v52 = vld [vmem:[%s4 + $0x80] sm:$0xff]
  %v53 = vld [vmem:[%s4 + $0x88] sm:$0xff]
  %v54 = vld [vmem:[%s4 + $0x90] sm:$0xff]
  %v55 = vld [vmem:[%s4 + $0x98] sm:$0xff]
  %v56 = vld [vmem:[%s4 + $0xa0] sm:$0xff]
  %v57 = vld [vmem:[%s4 + $0xa8] sm:$0xff]
  %v58 = vld [vmem:[%s4 + $0xb0] sm:$0xff]
  %v59 = vld [vmem:[%s4 + $0xb8] sm:$0xff]
  %v60 = vld [vmem:[%s4 + $0xc0] sm:$0xff]
  %v61 = vld [vmem:[%s4 + $0xc8] sm:$0xff]
  %v62 = vld [vmem:[%s4 + $0xd0] sm:$0xff]
  %v63 = vld [vmem:[%s4 + $0xd8] sm:$0xff]
  %v64 = vld [vmem:[%s4 + $0xe0] sm:$0xff]
  %v65 = vld [vmem:[%s4 + $0xe8] sm:$0xff]
  %v66 = vld [vmem:[%s4 + $0xf0] sm:$0xff]
  %v67 = vld [vmem:[%s4 + $0xf8] sm:$0xff]
  %v68 = vld [vmem:[%s4 + $0x100] sm:$0xff]
  %v69 = vld [vmem:[%s4 + $0x108] sm:$0xff]
  %v70 = vld [vmem:[%s4 + $0x110] sm:$0xff]
  %v71 = vld [vmem:[%s4 + $0x118] sm:$0xff]
  %v72 = vld [vmem:[%s4 + $0x120] sm:$0xff]
  %v73 = vld [vmem:[%s4 + $0x128] sm:$0xff]
  %v74 = vld [vmem:[%s4 + $0x130] sm:$0xff]
  %v75 = vld [vmem:[%s4 + $0x138] sm:$0xff]
  %v76 = vld [vmem:[%s4 + $0x140] sm:$0xff]
  %v77 = vld [vmem:[%s4 + $0x148] sm:$0xff]
  %v78 = vld [vmem:[%s4 + $0x150] sm:$0xff]
  %v79 = vld [vmem:[%s4 + $0x158] sm:$0xff]
  %v80 = vld [vmem:[%s4 + $0x160] sm:$0xff]
  %v81 = vld [vmem:[%s4 + $0x168] sm:$0xff]
  %v82 = vld [vmem:[%s4 + $0x170] sm:$0xff]
  %v83 = vld [vmem:[%s4 + $0x178] sm:$0xff]
  %v84 = vld [vmem:[%s4 + $0x180] sm:$0xff]
  %v85 = vld [vmem:[%s4 + $0x188] sm:$0xff]
  %v86 = vld [vmem:[%s4 + $0x190] sm:$0xff]
  %v87 = vld [vmem:[%s4 + $0x198] sm:$0xff]
  %v88 = vld [vmem:[%s4 + $0x1a0] sm:$0xff]
  %v89 = vld [vmem:[%s4 + $0x1a8] sm:$0xff]
  %v90 = vld [vmem:[%s4 + $0x1b0] sm:$0xff]
  %v91 = vld [vmem:[%s4 + $0x1b8] sm:$0xff]
  %v92 = vld [vmem:[%s4 + $0x1c0] sm:$0xff]
  %v93 = vld [vmem:[%s4 + $0x1c8] sm:$0xff]
  %v94 = vld [vmem:[%s4 + $0x1d0] sm:$0xff]
  %v95 = vld [vmem:[%s4 + $0x1d8] sm:$0xff]
  %v96 = vld [vmem:[%s4 + $0x1e0] sm:$0xff]
  %v97 = vld [vmem:[%s4 + $0x1e8] sm:$0xff]
  %v98 = vld [vmem:[%s4 + $0x1f0] sm:$0xff]
  %v99 = vld [vmem:[%s4 + $0x1f8] sm:$0xff]
  %v100 = vld [vmem:[%s4 + $0x200] sm:$0xff]
  %v101 = vld [vmem:[%s4 + $0x208] sm:$0xff]
  %v102 = vld [vmem:[%s4 + $0x210] sm:$0xff]
  %v103 = vld [vmem:[%s4 + $0x218] sm:$0xff]
  %v104 = vld [vmem:[%s4 + $0x220] sm:$0xff]
  %v105 = vld [vmem:[%s4 + $0x228] sm:$0xff]
  %v106 = vld [vmem:[%s4 + $0x230] sm:$0xff]
  %v107 = vld [vmem:[%s4 + $0x238] sm:$0xff]
  %v108 = vld [vmem:[%s4 + $0x240] sm:$0xff]
  %v109 = vld [vmem:[%s4 + $0x248] sm:$0xff]
  %v110 = vld [vmem:[%s4 + $0x250] sm:$0xff]
  %v111 = vld [vmem:[%s4 + $0x258] sm:$0xff]
  %v112 = vld [vmem:[%s4 + $0x260] sm:$0xff]
  %v113 = vld [vmem:[%s4 + $0x268] sm:$0xff]
  %v114 = vld [vmem:[%s4 + $0x270] sm:$0xff]
  %v115 = vld [vmem:[%s4 + $0x278] sm:$0xff]
  %v116 = vld [vmem:[%s4 + $0x280] sm:$0xff]
  %v117 = vld [vmem:[%s4 + $0x288] sm:$0xff]
  %v118 = vld [vmem:[%s4 + $0x290] sm:$0xff]
  %v119 = vld [vmem:[%s4 + $0x298] sm:$0xff]
  %v120 = vld [vmem:[%s4 + $0x2a0] sm:$0xff]
  %v121 = vld [vmem:[%s4 + $0x2a8] sm:$0xff]
  %v122 = vld [vmem:[%s4 + $0x2b0] sm:$0xff]
  %v123 = vld [vmem:[%s4 + $0x2b8] sm:$0xff]
  %v124 = vld [vmem:[%s4 + $0x2c0] sm:$0xff]
  %v125 = vld [vmem:[%s4 + $0x2c8] sm:$0xff]
  %v126 = vld [vmem:[%s4 + $0x2d0] sm:$0xff]
  %v127 = vld [vmem:[%s4 + $0x2d8] sm:$0xff]
  %v128 = vld [vmem:[%s4 + $0x2e0] sm:$0xff]
  %v129 = vld [vmem:[%s4 + $0x2e8] sm:$0xff]
  %v130 = vld [vmem:[%s4 + $0x2f0] sm:$0xff]
  %v131 = vld [vmem:[%s4 + $0x2f8] sm:$0xff]
  %v132 = vld [vmem:[%s4 + $0x300] sm:$0xff]
  %v133 = vld [vmem:[%s4 + $0x308] sm:$0xff]
  %v134 = vld [vmem:[%s4 + $0x310] sm:$0xff]
  %v135 = vld [vmem:[%s4 + $0x318] sm:$0xff]
  %v136 = vld [vmem:[%s4 + $0x320] sm:$0xff]
  %v137 = vld [vmem:[%s4 + $0x328] sm:$0xff]
  %v138 = vld [vmem:[%s4 + $0x330] sm:$0xff]
  %v139 = vld [vmem:[%s4 + $0x338] sm:$0xff]
  %v140 = vld [vmem:[%s4 + $0x340] sm:$0xff]
  %v141 = vld [vmem:[%s4 + $0x348] sm:$0xff]
  %v142 = vld [vmem:[%s4 + $0x350] sm:$0xff]
  %v143 = vld [vmem:[%s4 + $0x358] sm:$0xff]
  %v144 = vld [vmem:[%s4 + $0x360] sm:$0xff]
  %v145 = vld [vmem:[%s4 + $0x368] sm:$0xff]
  %v146 = vld [vmem:[%s4 + $0x370] sm:$0xff]
  %v147 = vld [vmem:[%s4 + $0x378] sm:$0xff]
  %v148 = vld [vmem:[%s4 + $0x380] sm:$0xff]
  %v149 = vld [vmem:[%s4 + $0x388] sm:$0xff]
  %v150 = vld [vmem:[%s4 + $0x390] sm:$0xff]
  %v151 = vld [vmem:[%s4 + $0x398] sm:$0xff]
  %v152 = vld [vmem:[%s4 + $0x3a0] sm:$0xff]
  %v153 = vld [vmem:[%s4 + $0x3a8] sm:$0xff]
  %v154 = vld [vmem:[%s4 + $0x3b0] sm:$0xff]
  %v155 = vld [vmem:[%s4 + $0x3b8] sm:$0xff]
  %v156 = vld [vmem:[%s4 + $0x3c0] sm:$0xff]
  %v157 = vld [vmem:[%s4 + $0x3c8] sm:$0xff]
  %v158 = vld [vmem:[%s4 + $0x3d0] sm:$0xff]
  %v159 = vld [vmem:[%s4 + $0x3d8] sm:$0xff]
  %v160 = vld [vmem:[%s4 + $0x3e0] sm:$0xff]
  %v161 = vld [vmem:[%s4 + $0x3e8] sm:$0xff]
  %v162 = vld [vmem:[%s4 + $0x3f0] sm:$0xff]
  %v163 = vld [vmem:[%s4 + $0x3f8] sm:$0xff]
  %v164 = vld [vmem:[%s4 + $0x400] sm:$0xff]
  %v165 = vld [vmem:[%s4 + $0x408] sm:$0xff]
  %v166 = vld [vmem:[%s4 + $0x410] sm:$0xff]
  %v167 = vld [vmem:[%s4 + $0x418] sm:$0xff]
  %v168 = vld [vmem:[%s4 + $0x420] sm:$0xff]
  %v169 = vld [vmem:[%s4 + $0x428] sm:$0xff]
  %v170 = vld [vmem:[%s4 + $0x430] sm:$0xff]
  %v171 = vld [vmem:[%s4 + $0x438] sm:$0xff]
  %v172 = vld [vmem:[%s4 + $0x440] sm:$0xff]
  %v173 = vld [vmem:[%s4 + $0x448] sm:$0xff]
  %v174 = vld [vmem:[%s4 + $0x450] sm:$0xff]
  %v175 = vld [vmem:[%s4 + $0x458] sm:$0xff]
  %v176 = vld [vmem:[%s4 + $0x460] sm:$0xff]
  %v177 = vld [vmem:[%s4 + $0x468] sm:$0xff]
  %v178 = vld [vmem:[%s4 + $0x470] sm:$0xff]
  %v179 = vld [vmem:[%s4 + $0x478] sm:$0xff]
  %v180 = vld [vmem:[%s4 + $0x480] sm:$0xff]
  %v181 = vld [vmem:[%s4 + $0x488] sm:$0xff]
  %v182 = vld [vmem:[%s4 + $0x490] sm:$0xff]
  %v183 = vld [vmem:[%s4 + $0x498] sm:$0xff]
  %v184 = vld [vmem:[%s4 + $0x4a0] sm:$0xff]
  %v185 = vld [vmem:[%s4 + $0x4a8] sm:$0xff]
  %v186 = vld [vmem:[%s4 + $0x4b0] sm:$0xff]
  %v187 = vld [vmem:[%s4 + $0x4b8] sm:$0xff]
  %v188 = vld [vmem:[%s4 + $0x4c0] sm:$0xff]
  %v189 = vld [vmem:[%s4 + $0x4c8] sm:$0xff]
  %v190 = vld [vmem:[%s4 + $0x4d0] sm:$0xff]
  %v191 = vld [vmem:[%s4 + $0x4d8] sm:$0xff]
  %v192 = vld [vmem:[%s4 + $0x4e0] sm:$0xff]
  %v193 = vld [vmem:[%s4 + $0x4e8] sm:$0xff]
  %v194 = vld [vmem:[%s4 + $0x4f0] sm:$0xff]
  %v195 = vld [vmem:[%s4 + $0x4f8] sm:$0xff]
  %v196 = vld [vmem:[%s4 + $0x500] sm:$0xff]
  %v197 = vld [vmem:[%s4 + $0x508] sm:$0xff]
  %v198 = vld [vmem:[%s4 + $0x510] sm:$0xff]
  %v199 = vld [vmem:[%s4 + $0x518] sm:$0xff]
  %v200 = vld [vmem:[%s4 + $0x520] sm:$0xff]
  %v201 = vld [vmem:[%s4 + $0x528] sm:$0xff]
  %v202 = vld [vmem:[%s4 + $0x530] sm:$0xff]
  %v203 = vld [vmem:[%s4 + $0x538] sm:$0xff]
  %v204 = vld [vmem:[%s4 + $0x540] sm:$0xff]
  %v205 = vld [vmem:[%s4 + $0x548] sm:$0xff]
  %v206 = vld [vmem:[%s4 + $0x550] sm:$0xff]
  %v207 = vld [vmem:[%s4 + $0x558] sm:$0xff]
  %v208 = vld [vmem:[%s4 + $0x560] sm:$0xff]
  %v209 = vld [vmem:[%s4 + $0x568] sm:$0xff]
  %v210 = vld [vmem:[%s4 + $0x570] sm:$0xff]
  %v211 = vld [vmem:[%s4 + $0x578] sm:$0xff]
  %v212 = vld [vmem:[%s4 + $0x580] sm:$0xff]
  %v213 = vld [vmem:[%s4 + $0x588] sm:$0xff]
  %v214 = vld [vmem:[%s4 + $0x590] sm:$0xff]
  %v215 = vld [vmem:[%s4 + $0x598] sm:$0xff]
  %v216 = vld [vmem:[%s4 + $0x5a0] sm:$0xff]
  %v217 = vld [vmem:[%s4 + $0x5a8] sm:$0xff]
  %v218 = vld [vmem:[%s4 + $0x5b0] sm:$0xff]
  %v219 = vld [vmem:[%s4 + $0x5b8] sm:$0xff]
  %v220 = vld [vmem:[%s4 + $0x5c0] sm:$0xff]
  %v221 = vld [vmem:[%s4 + $0x5c8] sm:$0xff]
  %v222 = vld [vmem:[%s4 + $0x5d0] sm:$0xff]
  %v223 = vld [vmem:[%s4 + $0x5d8] sm:$0xff]
  %v224 = vld [vmem:[%s4 + $0x5e0] sm:$0xff]
  %v225 = vld [vmem:[%s4 + $0x5e8] sm:$0xff]
  %v226 = vld [vmem:[%s4 + $0x5f0] sm:$0xff]
  %v227 = vld [vmem:[%s4 + $0x5f8] sm:$0xff]
  %v228 = vld [vmem:[%s4 + $0x600] sm:$0xff]
  %v229 = vld [vmem:[%s4 + $0x608] sm:$0xff]
  %v230 = vld [vmem:[%s4 + $0x610] sm:$0xff]
  %v231 = vld [vmem:[%s4 + $0x618] sm:$0xff]
  %v232 = vld [vmem:[%s4 + $0x620] sm:$0xff]
  %v233 = vld [vmem:[%s4 + $0x628] sm:$0xff]
  %v234 = vld [vmem:[%s4 + $0x630] sm:$0xff]
  %v235 = vld [vmem:[%s4 + $0x638] sm:$0xff]
  %v236 = vld [vmem:[%s4 + $0x640] sm:$0xff]
  %v237 = vld [vmem:[%s4 + $0x648] sm:$0xff]
  %v238 = vld [vmem:[%s4 + $0x650] sm:$0xff]
  %v239 = vld [vmem:[%s4 + $0x658] sm:$0xff]
  %v240 = vld [vmem:[%s4 + $0x660] sm:$0xff]
  %v241 = vld [vmem:[%s4 + $0x668] sm:$0xff]
  %v242 = vld [vmem:[%s4 + $0x670] sm:$0xff]
  %v243 = vld [vmem:[%s4 + $0x678] sm:$0xff]
  %v244 = vld [vmem:[%s4 + $0x680] sm:$0xff]
  %v245 = vld [vmem:[%s4 + $0x688] sm:$0xff]
  %v246 = vld [vmem:[%s4 + $0x690] sm:$0xff]
  %v247 = vld [vmem:[%s4 + $0x698] sm:$0xff]
  %v248 = vld [vmem:[%s4 + $0x6a0] sm:$0xff]
  %v249 = vld [vmem:[%s4 + $0x6a8] sm:$0xff]
  %v250 = vld [vmem:[%s4 + $0x6b0] sm:$0xff]
  %v251 = vld [vmem:[%s4 + $0x6b8] sm:$0xff]
  %v252 = vld [vmem:[%s4 + $0x6c0] sm:$0xff]
  %v253 = vld [vmem:[%s4 + $0x6c8] sm:$0xff]
  %v254 = vld [vmem:[%s4 + $0x6d0] sm:$0xff]
  %v255 = vld [vmem:[%s4 + $0x6d8] sm:$0xff]
  %v256 = vld [vmem:[%s4 + $0x6e0] sm:$0xff]
  %v257 = vld [vmem:[%s4 + $0x6e8] sm:$0xff]
  %v258 = vld [vmem:[%s4 + $0x6f0] sm:$0xff]
  %v259 = vld [vmem:[%s4 + $0x6f8] sm:$0xff]
  %v260 = vld [vmem:[%s4 + $0x700] sm:$0xff]
  %v261 = vld [vmem:[%s4 + $0x708] sm:$0xff]
  %v262 = vld [vmem:[%s4 + $0x710] sm:$0xff]
  %v263 = vld [vmem:[%s4 + $0x718] sm:$0xff]
  %v264 = vld [vmem:[%s4 + $0x720] sm:$0xff]
  %v265 = vld [vmem:[%s4 + $0x728] sm:$0xff]
  %v266 = vld [vmem:[%s4 + $0x730] sm:$0xff]
  %v267 = vld [vmem:[%s4 + $0x738] sm:$0xff]
  %v268 = vld [vmem:[%s4 + $0x740] sm:$0xff]
  %v269 = vld [vmem:[%s4 + $0x748] sm:$0xff]
  %v270 = vld [vmem:[%s4 + $0x750] sm:$0xff]
  %v271 = vld [vmem:[%s4 + $0x758] sm:$0xff]
  %v272 = vld [vmem:[%s4 + $0x760] sm:$0xff]
  %v273 = vld [vmem:[%s4 + $0x768] sm:$0xff]
  %v274 = vld [vmem:[%s4 + $0x770] sm:$0xff]
  %v275 = vld [vmem:[%s4 + $0x778] sm:$0xff]
  %v276 = vld [vmem:[%s4 + $0x780] sm:$0xff]
  %v277 = vld [vmem:[%s4 + $0x788] sm:$0xff]
  %v278 = vld [vmem:[%s4 + $0x790] sm:$0xff]
  %v279 = vld [vmem:[%s4 + $0x798] sm:$0xff]
  %v280 = vld [vmem:[%s4 + $0x7a0] sm:$0xff]
  %v281 = vld [vmem:[%s4 + $0x7a8] sm:$0xff]
  %v282 = vld [vmem:[%s4 + $0x7b0] sm:$0xff]
  %v283 = vld [vmem:[%s4 + $0x7b8] sm:$0xff]
  %v284 = vld [vmem:[%s4 + $0x7c0] sm:$0xff]
  %v285 = vld [vmem:[%s4 + $0x7c8] sm:$0xff]
  %v286 = vld [vmem:[%s4 + $0x7d0] sm:$0xff]
  %v287 = vld [vmem:[%s4 + $0x7d8] sm:$0xff]
  %v288 = vld [vmem:[%s4 + $0x7e0] sm:$0xff]
  %v289 = vld [vmem:[%s4 + $0x7e8] sm:$0xff]
  %v290 = vld [vmem:[%s4 + $0x7f0] sm:$0xff]
  %v291 = vld [vmem:[%s4 + $0x7f8] sm:$0xff]
  %v292 = vld [vmem:[%s5] sm:$0x1]
  %v293 = vld [vmem:[%s0] sm:$0xff]
  %v294 = vld [vmem:[%s0 + $0x8] sm:$0xff]
  %v295 = vld [vmem:[%s0 + $0x10] sm:$0xff]
  %v296 = vld [vmem:[%s0 + $0x18] sm:$0xff]
  %v297 = vld [vmem:[%s0 + $0x20] sm:$0xff]
  %v298 = vld [vmem:[%s0 + $0x28] sm:$0xff]
  %v299 = vld [vmem:[%s0 + $0x30] sm:$0xff]
  %v300 = vld [vmem:[%s0 + $0x38] sm:$0xff]
  %v301 = vld [vmem:[%s0 + $0x40] sm:$0xff]
  %v302 = vld [vmem:[%s0 + $0x48] sm:$0xff]
  %v303 = vld [vmem:[%s0 + $0x50] sm:$0xff]
  %v304 = vld [vmem:[%s0 + $0x58] sm:$0xff]
  %v305 = vld [vmem:[%s0 + $0x60] sm:$0xff]
  %v306 = vld [vmem:[%s0 + $0x68] sm:$0xff]
  %v307 = vld [vmem:[%s0 + $0x70] sm:$0xff]
  %v308 = vld [vmem:[%s0 + $0x78] sm:$0xff]
  %v309 = vld [vmem:[%s0 + $0x80] sm:$0xff]
  %v310 = vld [vmem:[%s0 + $0x88] sm:$0xff]
  %v311 = vld [vmem:[%s0 + $0x90] sm:$0xff]
  %v312 = vld [vmem:[%s0 + $0x98] sm:$0xff]
  %v313 = vld [vmem:[%s0 + $0xa0] sm:$0xff]
  %v314 = vld [vmem:[%s0 + $0xa8] sm:$0xff]
  %v315 = vld [vmem:[%s0 + $0xb0] sm:$0xff]
  %v316 = vld [vmem:[%s0 + $0xb8] sm:$0xff]
  %v317 = vld [vmem:[%s0 + $0xc0] sm:$0xff]
  %v318 = vld [vmem:[%s0 + $0xc8] sm:$0xff]
  %v319 = vld [vmem:[%s0 + $0xd0] sm:$0xff]
  %v320 = vld [vmem:[%s0 + $0xd8] sm:$0xff]
  %v321 = vld [vmem:[%s0 + $0xe0] sm:$0xff]
  %v322 = vld [vmem:[%s0 + $0xe8] sm:$0xff]
  %v323 = vld [vmem:[%s0 + $0xf0] sm:$0xff]
  %v324 = vld [vmem:[%s0 + $0xf8] sm:$0xff]
  %v325 = vld [vmem:[%s0 + $0x100] sm:$0xff]
  %v326 = vld [vmem:[%s0 + $0x108] sm:$0xff]
  %v327 = vld [vmem:[%s0 + $0x110] sm:$0xff]
  %v328 = vld [vmem:[%s0 + $0x118] sm:$0xff]
  %v329 = vld [vmem:[%s0 + $0x120] sm:$0xff]
  %v330 = vld [vmem:[%s0 + $0x128] sm:$0xff]
  %v331 = vld [vmem:[%s0 + $0x130] sm:$0xff]
  %v332 = vld [vmem:[%s0 + $0x138] sm:$0xff]
  %v333 = vld [vmem:[%s0 + $0x140] sm:$0xff]
  %v334 = vld [vmem:[%s0 + $0x148] sm:$0xff]
  %v335 = vld [vmem:[%s0 + $0x150] sm:$0xff]
  %v336 = vld [vmem:[%s0 + $0x158] sm:$0xff]
  %v337 = vld [vmem:[%s0 + $0x160] sm:$0xff]
  %v338 = vld [vmem:[%s0 + $0x168] sm:$0xff]
  %v339 = vld [vmem:[%s0 + $0x170] sm:$0xff]
  %v340 = vld [vmem:[%s0 + $0x178] sm:$0xff]
  %v341 = vld [vmem:[%s0 + $0x180] sm:$0xff]
  %v342 = vld [vmem:[%s0 + $0x188] sm:$0xff]
  %v343 = vld [vmem:[%s0 + $0x190] sm:$0xff]
  %v344 = vld [vmem:[%s0 + $0x198] sm:$0xff]
  %v345 = vld [vmem:[%s0 + $0x1a0] sm:$0xff]
  %v346 = vld [vmem:[%s0 + $0x1a8] sm:$0xff]
  %v347 = vld [vmem:[%s0 + $0x1b0] sm:$0xff]
  %v348 = vld [vmem:[%s0 + $0x1b8] sm:$0xff]
  %v349 = vld [vmem:[%s0 + $0x1c0] sm:$0xff]
  %v350 = vld [vmem:[%s0 + $0x1c8] sm:$0xff]
  %v351 = vld [vmem:[%s0 + $0x1d0] sm:$0xff]
  %v352 = vld [vmem:[%s0 + $0x1d8] sm:$0xff]
  %v353 = vld [vmem:[%s0 + $0x1e0] sm:$0xff]
  %v354 = vld [vmem:[%s0 + $0x1e8] sm:$0xff]
  %v355 = vld [vmem:[%s0 + $0x1f0] sm:$0xff]
  %v356 = vld [vmem:[%s0 + $0x1f8] sm:$0xff]
  %v357 = vld [vmem:[%s0 + $0x200] sm:$0xff]
  %v358 = vld [vmem:[%s0 + $0x208] sm:$0xff]
  %v359 = vld [vmem:[%s0 + $0x210] sm:$0xff]
  %v360 = vld [vmem:[%s0 + $0x218] sm:$0xff]
  %v361 = vld [vmem:[%s0 + $0x220] sm:$0xff]
  %v362 = vld [vmem:[%s0 + $0x228] sm:$0xff]
  %v363 = vld [vmem:[%s0 + $0x230] sm:$0xff]
  %v364 = vld [vmem:[%s0 + $0x238] sm:$0xff]
  %v365 = vld [vmem:[%s0 + $0x240] sm:$0xff]
  %v366 = vld [vmem:[%s0 + $0x248] sm:$0xff]
  %v367 = vld [vmem:[%s0 + $0x250] sm:$0xff]
  %v368 = vld [vmem:[%s0 + $0x258] sm:$0xff]
  %v369 = vld [vmem:[%s0 + $0x260] sm:$0xff]
  %v370 = vld [vmem:[%s0 + $0x268] sm:$0xff]
  %v371 = vld [vmem:[%s0 + $0x270] sm:$0xff]
  %v372 = vld [vmem:[%s0 + $0x278] sm:$0xff]
  %v373 = vld [vmem:[%s0 + $0x280] sm:$0xff]
  %v374 = vld [vmem:[%s0 + $0x288] sm:$0xff]
  %v375 = vld [vmem:[%s0 + $0x290] sm:$0xff]
  %v376 = vld [vmem:[%s0 + $0x298] sm:$0xff]
  %v377 = vld [vmem:[%s0 + $0x2a0] sm:$0xff]
  %v378 = vld [vmem:[%s0 + $0x2a8] sm:$0xff]
  %v379 = vld [vmem:[%s0 + $0x2b0] sm:$0xff]
  %v380 = vld [vmem:[%s0 + $0x2b8] sm:$0xff]
  %v381 = vld [vmem:[%s0 + $0x2c0] sm:$0xff]
  %v382 = vld [vmem:[%s0 + $0x2c8] sm:$0xff]
  %v383 = vld [vmem:[%s0 + $0x2d0] sm:$0xff]
  %v384 = vld [vmem:[%s0 + $0x2d8] sm:$0xff]
  %v385 = vld [vmem:[%s0 + $0x2e0] sm:$0xff]
  %v386 = vld [vmem:[%s0 + $0x2e8] sm:$0xff]
  %v387 = vld [vmem:[%s0 + $0x2f0] sm:$0xff]
  %v388 = vld [vmem:[%s0 + $0x2f8] sm:$0xff]
  %v389 = vld [vmem:[%s0 + $0x300] sm:$0xff]
  %v390 = vld [vmem:[%s0 + $0x308] sm:$0xff]
  %v391 = vld [vmem:[%s0 + $0x310] sm:$0xff]
  %v392 = vld [vmem:[%s0 + $0x318] sm:$0xff]
  %v393 = vld [vmem:[%s0 + $0x320] sm:$0xff]
  %v394 = vld [vmem:[%s0 + $0x328] sm:$0xff]
  %v395 = vld [vmem:[%s0 + $0x330] sm:$0xff]
  %v396 = vld [vmem:[%s0 + $0x338] sm:$0xff]
  %v397 = vld [vmem:[%s0 + $0x340] sm:$0xff]
  %v398 = vld [vmem:[%s0 + $0x348] sm:$0xff]
  %v399 = vld [vmem:[%s0 + $0x350] sm:$0xff]
  %v400 = vld [vmem:[%s0 + $0x358] sm:$0xff]
  %v401 = vld [vmem:[%s0 + $0x360] sm:$0xff]
  %v402 = vld [vmem:[%s0 + $0x368] sm:$0xff]
  %v403 = vld [vmem:[%s0 + $0x370] sm:$0xff]
  %v404 = vld [vmem:[%s0 + $0x378] sm:$0xff]
  %v405 = vld [vmem:[%s0 + $0x380] sm:$0xff]
  %v406 = vld [vmem:[%s0 + $0x388] sm:$0xff]
  %v407 = vld [vmem:[%s0 + $0x390] sm:$0xff]
  %v408 = vld [vmem:[%s0 + $0x398] sm:$0xff]
  %v409 = vld [vmem:[%s0 + $0x3a0] sm:$0xff]
  %v410 = vld [vmem:[%s0 + $0x3a8] sm:$0xff]
  %v411 = vld [vmem:[%s0 + $0x3b0] sm:$0xff]
  %v412 = vld [vmem:[%s0 + $0x3b8] sm:$0xff]
  %v413 = vld [vmem:[%s0 + $0x3c0] sm:$0xff]
  %v414 = vld [vmem:[%s0 + $0x3c8] sm:$0xff]
  %v415 = vld [vmem:[%s0 + $0x3d0] sm:$0xff]
  %v416 = vld [vmem:[%s0 + $0x3d8] sm:$0xff]
  %v417 = vld [vmem:[%s0 + $0x3e0] sm:$0xff]
  %v418 = vld [vmem:[%s0 + $0x3e8] sm:$0xff]
  %v419 = vld [vmem:[%s0 + $0x3f0] sm:$0xff]
  %v420 = vld [vmem:[%s0 + $0x3f8] sm:$0xff]
  %v421 = vld [vmem:[%s0 + $0x400] sm:$0xff]
  %v422 = vld [vmem:[%s0 + $0x408] sm:$0xff]
  %v423 = vld [vmem:[%s0 + $0x410] sm:$0xff]
  %v424 = vld [vmem:[%s0 + $0x418] sm:$0xff]
  %v425 = vld [vmem:[%s0 + $0x420] sm:$0xff]
  %v426 = vld [vmem:[%s0 + $0x428] sm:$0xff]
  %v427 = vld [vmem:[%s0 + $0x430] sm:$0xff]
  %v428 = vld [vmem:[%s0 + $0x438] sm:$0xff]
  %v429 = vld [vmem:[%s0 + $0x440] sm:$0xff]
  %v430 = vld [vmem:[%s0 + $0x448] sm:$0xff]
  %v431 = vld [vmem:[%s0 + $0x450] sm:$0xff]
  %v432 = vld [vmem:[%s0 + $0x458] sm:$0xff]
  %v433 = vld [vmem:[%s0 + $0x460] sm:$0xff]
  %v434 = vld [vmem:[%s0 + $0x468] sm:$0xff]
  %v435 = vld [vmem:[%s0 + $0x470] sm:$0xff]
  %v436 = vld [vmem:[%s0 + $0x478] sm:$0xff]
  %v437 = vld [vmem:[%s0 + $0x480] sm:$0xff]
  %v438 = vld [vmem:[%s0 + $0x488] sm:$0xff]
  %v439 = vld [vmem:[%s0 + $0x490] sm:$0xff]
  %v440 = vld [vmem:[%s0 + $0x498] sm:$0xff]
  %v441 = vld [vmem:[%s0 + $0x4a0] sm:$0xff]
  %v442 = vld [vmem:[%s0 + $0x4a8] sm:$0xff]
  %v443 = vld [vmem:[%s0 + $0x4b0] sm:$0xff]
  %v444 = vld [vmem:[%s0 + $0x4b8] sm:$0xff]
  %v445 = vld [vmem:[%s0 + $0x4c0] sm:$0xff]
  %v446 = vld [vmem:[%s0 + $0x4c8] sm:$0xff]
  %v447 = vld [vmem:[%s0 + $0x4d0] sm:$0xff]
  %v448 = vld [vmem:[%s0 + $0x4d8] sm:$0xff]
  %v449 = vld [vmem:[%s0 + $0x4e0] sm:$0xff]
  %v450 = vld [vmem:[%s0 + $0x4e8] sm:$0xff]
  %v451 = vld [vmem:[%s0 + $0x4f0] sm:$0xff]
  %v452 = vld [vmem:[%s0 + $0x4f8] sm:$0xff]
  %v453 = vld [vmem:[%s0 + $0x500] sm:$0xff]
  %v454 = vld [vmem:[%s0 + $0x508] sm:$0xff]
  %v455 = vld [vmem:[%s0 + $0x510] sm:$0xff]
  %v456 = vld [vmem:[%s0 + $0x518] sm:$0xff]
  %v457 = vld [vmem:[%s0 + $0x520] sm:$0xff]
  %v458 = vld [vmem:[%s0 + $0x528] sm:$0xff]
  %v459 = vld [vmem:[%s0 + $0x530] sm:$0xff]
  %v460 = vld [vmem:[%s0 + $0x538] sm:$0xff]
  %v461 = vld [vmem:[%s0 + $0x540] sm:$0xff]
  %v462 = vld [vmem:[%s0 + $0x548] sm:$0xff]
  %v463 = vld [vmem:[%s0 + $0x550] sm:$0xff]
  %v464 = vld [vmem:[%s0 + $0x558] sm:$0xff]
  %v465 = vld [vmem:[%s0 + $0x560] sm:$0xff]
  %v466 = vld [vmem:[%s0 + $0x568] sm:$0xff]
  %v467 = vld [vmem:[%s0 + $0x570] sm:$0xff]
  %v468 = vld [vmem:[%s0 + $0x578] sm:$0xff]
  %v469 = vld [vmem:[%s0 + $0x580] sm:$0xff]
  %v470 = vld [vmem:[%s0 + $0x588] sm:$0xff]
  %v471 = vld [vmem:[%s0 + $0x590] sm:$0xff]
  %v472 = vld [vmem:[%s0 + $0x598] sm:$0xff]
  %v473 = vld [vmem:[%s0 + $0x5a0] sm:$0xff]
  %v474 = vld [vmem:[%s0 + $0x5a8] sm:$0xff]
  %v475 = vld [vmem:[%s0 + $0x5b0] sm:$0xff]
  %v476 = vld [vmem:[%s0 + $0x5b8] sm:$0xff]
  %v477 = vld [vmem:[%s0 + $0x5c0] sm:$0xff]
  %v478 = vld [vmem:[%s0 + $0x5c8] sm:$0xff]
  %v479 = vld [vmem:[%s0 + $0x5d0] sm:$0xff]
  %v480 = vld [vmem:[%s0 + $0x5d8] sm:$0xff]
  %v481 = vld [vmem:[%s0 + $0x5e0] sm:$0xff]
  %v482 = vld [vmem:[%s0 + $0x5e8] sm:$0xff]
  %v483 = vld [vmem:[%s0 + $0x5f0] sm:$0xff]
  %v484 = vld [vmem:[%s0 + $0x5f8] sm:$0xff]
  %v485 = vld [vmem:[%s0 + $0x600] sm:$0xff]
  %v486 = vld [vmem:[%s0 + $0x608] sm:$0xff]
  %v487 = vld [vmem:[%s0 + $0x610] sm:$0xff]
  %v488 = vld [vmem:[%s0 + $0x618] sm:$0xff]
  %v489 = vld [vmem:[%s0 + $0x620] sm:$0xff]
  %v490 = vld [vmem:[%s0 + $0x628] sm:$0xff]
  %v491 = vld [vmem:[%s0 + $0x630] sm:$0xff]
  %v492 = vld [vmem:[%s0 + $0x638] sm:$0xff]
  %v493 = vld [vmem:[%s0 + $0x640] sm:$0xff]
  %v494 = vld [vmem:[%s0 + $0x648] sm:$0xff]
  %v495 = vld [vmem:[%s0 + $0x650] sm:$0xff]
  %v496 = vld [vmem:[%s0 + $0x658] sm:$0xff]
  %v497 = vld [vmem:[%s0 + $0x660] sm:$0xff]
  %v498 = vld [vmem:[%s0 + $0x668] sm:$0xff]
  %v499 = vld [vmem:[%s0 + $0x670] sm:$0xff]
  %v500 = vld [vmem:[%s0 + $0x678] sm:$0xff]
  %v501 = vld [vmem:[%s0 + $0x680] sm:$0xff]
  %v502 = vld [vmem:[%s0 + $0x688] sm:$0xff]
  %v503 = vld [vmem:[%s0 + $0x690] sm:$0xff]
  %v504 = vld [vmem:[%s0 + $0x698] sm:$0xff]
  %v505 = vld [vmem:[%s0 + $0x6a0] sm:$0xff]
  %v506 = vld [vmem:[%s0 + $0x6a8] sm:$0xff]
  %v507 = vld [vmem:[%s0 + $0x6b0] sm:$0xff]
  %v508 = vld [vmem:[%s0 + $0x6b8] sm:$0xff]
  %v509 = vld [vmem:[%s0 + $0x6c0] sm:$0xff]
  %v510 = vld [vmem:[%s0 + $0x6c8] sm:$0xff]
  %v511 = vld [vmem:[%s0 + $0x6d0] sm:$0xff]
  %v512 = vld [vmem:[%s0 + $0x6d8] sm:$0xff]
  %v513 = vld [vmem:[%s0 + $0x6e0] sm:$0xff]
  %v514 = vld [vmem:[%s0 + $0x6e8] sm:$0xff]
  %v515 = vld [vmem:[%s0 + $0x6f0] sm:$0xff]
  %v516 = vld [vmem:[%s0 + $0x6f8] sm:$0xff]
  %v517 = vld [vmem:[%s0 + $0x700] sm:$0xff]
  %v518 = vld [vmem:[%s0 + $0x708] sm:$0xff]
  %v519 = vld [vmem:[%s0 + $0x710] sm:$0xff]
  %v520 = vld [vmem:[%s0 + $0x718] sm:$0xff]
  %v521 = vld [vmem:[%s0 + $0x720] sm:$0xff]
  %v522 = vld [vmem:[%s0 + $0x728] sm:$0xff]
  %v523 = vld [vmem:[%s0 + $0x730] sm:$0xff]
  %v524 = vld [vmem:[%s0 + $0x738] sm:$0xff]
  %v525 = vld [vmem:[%s0 + $0x740] sm:$0xff]
  %v526 = vld [vmem:[%s0 + $0x748] sm:$0xff]
  %v527 = vld [vmem:[%s0 + $0x750] sm:$0xff]
  %v528 = vld [vmem:[%s0 + $0x758] sm:$0xff]
  %v529 = vld [vmem:[%s0 + $0x760] sm:$0xff]
  %v530 = vld [vmem:[%s0 + $0x768] sm:$0xff]
  %v531 = vld [vmem:[%s0 + $0x770] sm:$0xff]
  %v532 = vld [vmem:[%s0 + $0x778] sm:$0xff]
  %v533 = vld [vmem:[%s0 + $0x780] sm:$0xff]
  %v534 = vld [vmem:[%s0 + $0x788] sm:$0xff]
  %v535 = vld [vmem:[%s0 + $0x790] sm:$0xff]
  %v536 = vld [vmem:[%s0 + $0x798] sm:$0xff]
  %v537 = vld [vmem:[%s0 + $0x7a0] sm:$0xff]
  %v538 = vld [vmem:[%s0 + $0x7a8] sm:$0xff]
  %v539 = vld [vmem:[%s0 + $0x7b0] sm:$0xff]
  %v540 = vld [vmem:[%s0 + $0x7b8] sm:$0xff]
  %v541 = vld [vmem:[%s0 + $0x7c0] sm:$0xff]
  %v542 = vld [vmem:[%s0 + $0x7c8] sm:$0xff]
  %v543 = vld [vmem:[%s0 + $0x7d0] sm:$0xff]
  %v544 = vld [vmem:[%s0 + $0x7d8] sm:$0xff]
  %v545 = vld [vmem:[%s0 + $0x7e0] sm:$0xff]
  %v546 = vld [vmem:[%s0 + $0x7e8] sm:$0xff]
  %v547 = vld [vmem:[%s0 + $0x7f0] sm:$0xff]
  %v548 = vld [vmem:[%s0 + $0x7f8] sm:$0xff]
  %v549 = vld [vmem:[%s0 + $0x800] sm:$0xff]
  %v550 = vld [vmem:[%s0 + $0x808] sm:$0xff]
  %v551 = vld [vmem:[%s0 + $0x810] sm:$0xff]
  %v552 = vld [vmem:[%s0 + $0x818] sm:$0xff]
  %v553 = vld [vmem:[%s0 + $0x820] sm:$0xff]
  %v554 = vld [vmem:[%s0 + $0x828] sm:$0xff]
  %v555 = vld [vmem:[%s0 + $0x830] sm:$0xff]
  %v556 = vld [vmem:[%s0 + $0x838] sm:$0xff]
  %v557 = vld [vmem:[%s0 + $0x840] sm:$0xff]
  %v558 = vld [vmem:[%s0 + $0x848] sm:$0xff]
  %v559 = vld [vmem:[%s0 + $0x850] sm:$0xff]
  %v560 = vld [vmem:[%s0 + $0x858] sm:$0xff]
  %v561 = vld [vmem:[%s0 + $0x860] sm:$0xff]
  %v562 = vld [vmem:[%s0 + $0x868] sm:$0xff]
  %v563 = vld [vmem:[%s0 + $0x870] sm:$0xff]
  %v564 = vld [vmem:[%s0 + $0x878] sm:$0xff]
  %v565 = vld [vmem:[%s0 + $0x880] sm:$0xff]
  %v566 = vld [vmem:[%s0 + $0x888] sm:$0xff]
  %v567 = vld [vmem:[%s0 + $0x890] sm:$0xff]
  %v568 = vld [vmem:[%s0 + $0x898] sm:$0xff]
  %v569 = vld [vmem:[%s0 + $0x8a0] sm:$0xff]
  %v570 = vld [vmem:[%s0 + $0x8a8] sm:$0xff]
  %v571 = vld [vmem:[%s0 + $0x8b0] sm:$0xff]
  %v572 = vld [vmem:[%s0 + $0x8b8] sm:$0xff]
  %v573 = vld [vmem:[%s0 + $0x8c0] sm:$0xff]
  %v574 = vld [vmem:[%s0 + $0x8c8] sm:$0xff]
  %v575 = vld [vmem:[%s0 + $0x8d0] sm:$0xff]
  %v576 = vld [vmem:[%s0 + $0x8d8] sm:$0xff]
  %v577 = vld [vmem:[%s0 + $0x8e0] sm:$0xff]
  %v578 = vld [vmem:[%s0 + $0x8e8] sm:$0xff]
  %v579 = vld [vmem:[%s0 + $0x8f0] sm:$0xff]
  %v580 = vld [vmem:[%s0 + $0x8f8] sm:$0xff]
  %v581 = vld [vmem:[%s0 + $0x900] sm:$0xff]
  %v582 = vld [vmem:[%s0 + $0x908] sm:$0xff]
  %v583 = vld [vmem:[%s0 + $0x910] sm:$0xff]
  %v584 = vld [vmem:[%s0 + $0x918] sm:$0xff]
  %v585 = vld [vmem:[%s0 + $0x920] sm:$0xff]
  %v586 = vld [vmem:[%s0 + $0x928] sm:$0xff]
  %v587 = vld [vmem:[%s0 + $0x930] sm:$0xff]
  %v588 = vld [vmem:[%s0 + $0x938] sm:$0xff]
  %v589 = vld [vmem:[%s0 + $0x940] sm:$0xff]
  %v590 = vld [vmem:[%s0 + $0x948] sm:$0xff]
  %v591 = vld [vmem:[%s0 + $0x950] sm:$0xff]
  %v592 = vld [vmem:[%s0 + $0x958] sm:$0xff]
  %v593 = vld [vmem:[%s0 + $0x960] sm:$0xff]
  %v594 = vld [vmem:[%s0 + $0x968] sm:$0xff]
  %v595 = vld [vmem:[%s0 + $0x970] sm:$0xff]
  %v596 = vld [vmem:[%s0 + $0x978] sm:$0xff]
  %v597 = vld [vmem:[%s0 + $0x980] sm:$0xff]
  %v598 = vld [vmem:[%s0 + $0x988] sm:$0xff]
  %v599 = vld [vmem:[%s0 + $0x990] sm:$0xff]
  %v600 = vld [vmem:[%s0 + $0x998] sm:$0xff]
  %v601 = vld [vmem:[%s0 + $0x9a0] sm:$0xff]
  %v602 = vld [vmem:[%s0 + $0x9a8] sm:$0xff]
  %v603 = vld [vmem:[%s0 + $0x9b0] sm:$0xff]
  %v604 = vld [vmem:[%s0 + $0x9b8] sm:$0xff]
  %v605 = vld [vmem:[%s0 + $0x9c0] sm:$0xff]
  %v606 = vld [vmem:[%s0 + $0x9c8] sm:$0xff]
  %v607 = vld [vmem:[%s0 + $0x9d0] sm:$0xff]
  %v608 = vld [vmem:[%s0 + $0x9d8] sm:$0xff]
  %v609 = vld [vmem:[%s0 + $0x9e0] sm:$0xff]
  %v610 = vld [vmem:[%s0 + $0x9e8] sm:$0xff]
  %v611 = vld [vmem:[%s0 + $0x9f0] sm:$0xff]
  %v612 = vld [vmem:[%s0 + $0x9f8] sm:$0xff]
  %v613 = vld [vmem:[%s0 + $0xa00] sm:$0xff]
  %v614 = vld [vmem:[%s0 + $0xa08] sm:$0xff]
  %v615 = vld [vmem:[%s0 + $0xa10] sm:$0xff]
  %v616 = vld [vmem:[%s0 + $0xa18] sm:$0xff]
  %v617 = vld [vmem:[%s0 + $0xa20] sm:$0xff]
  %v618 = vld [vmem:[%s0 + $0xa28] sm:$0xff]
  %v619 = vld [vmem:[%s0 + $0xa30] sm:$0xff]
  %v620 = vld [vmem:[%s0 + $0xa38] sm:$0xff]
  %v621 = vld [vmem:[%s0 + $0xa40] sm:$0xff]
  %v622 = vld [vmem:[%s0 + $0xa48] sm:$0xff]
  %v623 = vld [vmem:[%s0 + $0xa50] sm:$0xff]
  %v624 = vld [vmem:[%s0 + $0xa58] sm:$0xff]
  %v625 = vld [vmem:[%s0 + $0xa60] sm:$0xff]
  %v626 = vld [vmem:[%s0 + $0xa68] sm:$0xff]
  %v627 = vld [vmem:[%s0 + $0xa70] sm:$0xff]
  %v628 = vld [vmem:[%s0 + $0xa78] sm:$0xff]
  %v629 = vld [vmem:[%s0 + $0xa80] sm:$0xff]
  %v630 = vld [vmem:[%s0 + $0xa88] sm:$0xff]
  %v631 = vld [vmem:[%s0 + $0xa90] sm:$0xff]
  %v632 = vld [vmem:[%s0 + $0xa98] sm:$0xff]
  %v633 = vld [vmem:[%s0 + $0xaa0] sm:$0xff]
  %v634 = vld [vmem:[%s0 + $0xaa8] sm:$0xff]
  %v635 = vld [vmem:[%s0 + $0xab0] sm:$0xff]
  %v636 = vld [vmem:[%s0 + $0xab8] sm:$0xff]
  %v637 = vld [vmem:[%s0 + $0xac0] sm:$0xff]
  %v638 = vld [vmem:[%s0 + $0xac8] sm:$0xff]
  %v639 = vld [vmem:[%s0 + $0xad0] sm:$0xff]
  %v640 = vld [vmem:[%s0 + $0xad8] sm:$0xff]
  %v641 = vld [vmem:[%s0 + $0xae0] sm:$0xff]
  %v642 = vld [vmem:[%s0 + $0xae8] sm:$0xff]
  %v643 = vld [vmem:[%s0 + $0xaf0] sm:$0xff]
  %v644 = vld [vmem:[%s0 + $0xaf8] sm:$0xff]
  %v645 = vld [vmem:[%s0 + $0xb00] sm:$0xff]
  %v646 = vld [vmem:[%s0 + $0xb08] sm:$0xff]
  %v647 = vld [vmem:[%s0 + $0xb10] sm:$0xff]
  %v648 = vld [vmem:[%s0 + $0xb18] sm:$0xff]
  %v649 = vld [vmem:[%s0 + $0xb20] sm:$0xff]
  %v650 = vld [vmem:[%s0 + $0xb28] sm:$0xff]
  %v651 = vld [vmem:[%s0 + $0xb30] sm:$0xff]
  %v652 = vld [vmem:[%s0 + $0xb38] sm:$0xff]
  %v653 = vld [vmem:[%s0 + $0xb40] sm:$0xff]
  %v654 = vld [vmem:[%s0 + $0xb48] sm:$0xff]
  %v655 = vld [vmem:[%s0 + $0xb50] sm:$0xff]
  %v656 = vld [vmem:[%s0 + $0xb58] sm:$0xff]
  %v657 = vld [vmem:[%s0 + $0xb60] sm:$0xff]
  %v658 = vld [vmem:[%s0 + $0xb68] sm:$0xff]
  %v659 = vld [vmem:[%s0 + $0xb70] sm:$0xff]
  %v660 = vld [vmem:[%s0 + $0xb78] sm:$0xff]
  %v661 = vld [vmem:[%s0 + $0xb80] sm:$0xff]
  %v662 = vld [vmem:[%s0 + $0xb88] sm:$0xff]
  %v663 = vld [vmem:[%s0 + $0xb90] sm:$0xff]
  %v664 = vld [vmem:[%s0 + $0xb98] sm:$0xff]
  %v665 = vld [vmem:[%s0 + $0xba0] sm:$0xff]
  %v666 = vld [vmem:[%s0 + $0xba8] sm:$0xff]
  %v667 = vld [vmem:[%s0 + $0xbb0] sm:$0xff]
  %v668 = vld [vmem:[%s0 + $0xbb8] sm:$0xff]
  %v669 = vld [vmem:[%s0 + $0xbc0] sm:$0xff]
  %v670 = vld [vmem:[%s0 + $0xbc8] sm:$0xff]
  %v671 = vld [vmem:[%s0 + $0xbd0] sm:$0xff]
  %v672 = vld [vmem:[%s0 + $0xbd8] sm:$0xff]
  %v673 = vld [vmem:[%s0 + $0xbe0] sm:$0xff]
  %v674 = vld [vmem:[%s0 + $0xbe8] sm:$0xff]
  %v675 = vld [vmem:[%s0 + $0xbf0] sm:$0xff]
  %v676 = vld [vmem:[%s0 + $0xbf8] sm:$0xff]
  %v677 = vld [vmem:[%s0 + $0xc00] sm:$0xff]
  %v678 = vld [vmem:[%s0 + $0xc08] sm:$0xff]
  %v679 = vld [vmem:[%s0 + $0xc10] sm:$0xff]
  %v680 = vld [vmem:[%s0 + $0xc18] sm:$0xff]
  %v681 = vld [vmem:[%s0 + $0xc20] sm:$0xff]
  %v682 = vld [vmem:[%s0 + $0xc28] sm:$0xff]
  %v683 = vld [vmem:[%s0 + $0xc30] sm:$0xff]
  %v684 = vld [vmem:[%s0 + $0xc38] sm:$0xff]
  %v685 = vld [vmem:[%s0 + $0xc40] sm:$0xff]
  %v686 = vld [vmem:[%s0 + $0xc48] sm:$0xff]
  %v687 = vld [vmem:[%s0 + $0xc50] sm:$0xff]
  %v688 = vld [vmem:[%s0 + $0xc58] sm:$0xff]
  %v689 = vld [vmem:[%s0 + $0xc60] sm:$0xff]
  %v690 = vld [vmem:[%s0 + $0xc68] sm:$0xff]
  %v691 = vld [vmem:[%s0 + $0xc70] sm:$0xff]
  %v692 = vld [vmem:[%s0 + $0xc78] sm:$0xff]
  %v693 = vld [vmem:[%s0 + $0xc80] sm:$0xff]
  %v694 = vld [vmem:[%s0 + $0xc88] sm:$0xff]
  %v695 = vld [vmem:[%s0 + $0xc90] sm:$0xff]
  %v696 = vld [vmem:[%s0 + $0xc98] sm:$0xff]
  %v697 = vld [vmem:[%s0 + $0xca0] sm:$0xff]
  %v698 = vld [vmem:[%s0 + $0xca8] sm:$0xff]
  %v699 = vld [vmem:[%s0 + $0xcb0] sm:$0xff]
  %v700 = vld [vmem:[%s0 + $0xcb8] sm:$0xff]
  %v701 = vld [vmem:[%s0 + $0xcc0] sm:$0xff]
  %v702 = vld [vmem:[%s0 + $0xcc8] sm:$0xff]
  %v703 = vld [vmem:[%s0 + $0xcd0] sm:$0xff]
  %v704 = vld [vmem:[%s0 + $0xcd8] sm:$0xff]
  %v705 = vld [vmem:[%s0 + $0xce0] sm:$0xff]
  %v706 = vld [vmem:[%s0 + $0xce8] sm:$0xff]
  %v707 = vld [vmem:[%s0 + $0xcf0] sm:$0xff]
  %v708 = vld [vmem:[%s0 + $0xcf8] sm:$0xff]
  %v709 = vld [vmem:[%s0 + $0xd00] sm:$0xff]
  %v710 = vld [vmem:[%s0 + $0xd08] sm:$0xff]
  %v711 = vld [vmem:[%s0 + $0xd10] sm:$0xff]
  %v712 = vld [vmem:[%s0 + $0xd18] sm:$0xff]
  %v713 = vld [vmem:[%s0 + $0xd20] sm:$0xff]
  %v714 = vld [vmem:[%s0 + $0xd28] sm:$0xff]
  %v715 = vld [vmem:[%s0 + $0xd30] sm:$0xff]
  %v716 = vld [vmem:[%s0 + $0xd38] sm:$0xff]
  %v717 = vld [vmem:[%s0 + $0xd40] sm:$0xff]
  %v718 = vld [vmem:[%s0 + $0xd48] sm:$0xff]
  %v719 = vld [vmem:[%s0 + $0xd50] sm:$0xff]
  %v720 = vld [vmem:[%s0 + $0xd58] sm:$0xff]
  %v721 = vld [vmem:[%s0 + $0xd60] sm:$0xff]
  %v722 = vld [vmem:[%s0 + $0xd68] sm:$0xff]
  %v723 = vld [vmem:[%s0 + $0xd70] sm:$0xff]
  %v724 = vld [vmem:[%s0 + $0xd78] sm:$0xff]
  %v725 = vld [vmem:[%s0 + $0xd80] sm:$0xff]
  %v726 = vld [vmem:[%s0 + $0xd88] sm:$0xff]
  %v727 = vld [vmem:[%s0 + $0xd90] sm:$0xff]
  %v728 = vld [vmem:[%s0 + $0xd98] sm:$0xff]
  %v729 = vld [vmem:[%s0 + $0xda0] sm:$0xff]
  %v730 = vld [vmem:[%s0 + $0xda8] sm:$0xff]
  %v731 = vld [vmem:[%s0 + $0xdb0] sm:$0xff]
  %v732 = vld [vmem:[%s0 + $0xdb8] sm:$0xff]
  %v733 = vld [vmem:[%s0 + $0xdc0] sm:$0xff]
  %v734 = vld [vmem:[%s0 + $0xdc8] sm:$0xff]
  %v735 = vld [vmem:[%s0 + $0xdd0] sm:$0xff]
  %v736 = vld [vmem:[%s0 + $0xdd8] sm:$0xff]
  %v737 = vld [vmem:[%s0 + $0xde0] sm:$0xff]
  %v738 = vld [vmem:[%s0 + $0xde8] sm:$0xff]
  %v739 = vld [vmem:[%s0 + $0xdf0] sm:$0xff]
  %v740 = vld [vmem:[%s0 + $0xdf8] sm:$0xff]
  %v741 = vld [vmem:[%s0 + $0xe00] sm:$0xff]
  %v742 = vld [vmem:[%s0 + $0xe08] sm:$0xff]
  %v743 = vld [vmem:[%s0 + $0xe10] sm:$0xff]
  %v744 = vld [vmem:[%s0 + $0xe18] sm:$0xff]
  %v745 = vld [vmem:[%s0 + $0xe20] sm:$0xff]
  %v746 = vld [vmem:[%s0 + $0xe28] sm:$0xff]
  %v747 = vld [vmem:[%s0 + $0xe30] sm:$0xff]
  %v748 = vld [vmem:[%s0 + $0xe38] sm:$0xff]
  %v749 = vld [vmem:[%s0 + $0xe40] sm:$0xff]
  %v750 = vld [vmem:[%s0 + $0xe48] sm:$0xff]
  %v751 = vld [vmem:[%s0 + $0xe50] sm:$0xff]
  %v752 = vld [vmem:[%s0 + $0xe58] sm:$0xff]
  %v753 = vld [vmem:[%s0 + $0xe60] sm:$0xff]
  %v754 = vld [vmem:[%s0 + $0xe68] sm:$0xff]
  %v755 = vld [vmem:[%s0 + $0xe70] sm:$0xff]
  %v756 = vld [vmem:[%s0 + $0xe78] sm:$0xff]
  %v757 = vld [vmem:[%s0 + $0xe80] sm:$0xff]
  %v758 = vld [vmem:[%s0 + $0xe88] sm:$0xff]
  %v759 = vld [vmem:[%s0 + $0xe90] sm:$0xff]
  %v760 = vld [vmem:[%s0 + $0xe98] sm:$0xff]
  %v761 = vld [vmem:[%s0 + $0xea0] sm:$0xff]
  %v762 = vld [vmem:[%s0 + $0xea8] sm:$0xff]
  %v763 = vld [vmem:[%s0 + $0xeb0] sm:$0xff]
  %v764 = vld [vmem:[%s0 + $0xeb8] sm:$0xff]
  %v765 = vld [vmem:[%s0 + $0xec0] sm:$0xff]
  %v766 = vld [vmem:[%s0 + $0xec8] sm:$0xff]
  %v767 = vld [vmem:[%s0 + $0xed0] sm:$0xff]
  %v768 = vld [vmem:[%s0 + $0xed8] sm:$0xff]
  %v769 = vld [vmem:[%s0 + $0xee0] sm:$0xff]
  %v770 = vld [vmem:[%s0 + $0xee8] sm:$0xff]
  %v771 = vld [vmem:[%s0 + $0xef0] sm:$0xff]
  %v772 = vld [vmem:[%s0 + $0xef8] sm:$0xff]
  %v773 = vld [vmem:[%s0 + $0xf00] sm:$0xff]
  %v774 = vld [vmem:[%s0 + $0xf08] sm:$0xff]
  %v775 = vld [vmem:[%s0 + $0xf10] sm:$0xff]
  %v776 = vld [vmem:[%s0 + $0xf18] sm:$0xff]
  %v777 = vld [vmem:[%s0 + $0xf20] sm:$0xff]
  %v778 = vld [vmem:[%s0 + $0xf28] sm:$0xff]
  %v779 = vld [vmem:[%s0 + $0xf30] sm:$0xff]
  %v780 = vld [vmem:[%s0 + $0xf38] sm:$0xff]
  %v781 = vld [vmem:[%s0 + $0xf40] sm:$0xff]
  %v782 = vld [vmem:[%s0 + $0xf48] sm:$0xff]
  %v783 = vld [vmem:[%s0 + $0xf50] sm:$0xff]
  %v784 = vld [vmem:[%s0 + $0xf58] sm:$0xff]
  %v785 = vld [vmem:[%s0 + $0xf60] sm:$0xff]
  %v786 = vld [vmem:[%s0 + $0xf68] sm:$0xff]
  %v787 = vld [vmem:[%s0 + $0xf70] sm:$0xff]
  %v788 = vld [vmem:[%s0 + $0xf78] sm:$0xff]
  %v789 = vld [vmem:[%s0 + $0xf80] sm:$0xff]
  %v790 = vld [vmem:[%s0 + $0xf88] sm:$0xff]
  %v791 = vld [vmem:[%s0 + $0xf90] sm:$0xff]
  %v792 = vld [vmem:[%s0 + $0xf98] sm:$0xff]
  %v793 = vld [vmem:[%s0 + $0xfa0] sm:$0xff]
  %v794 = vld [vmem:[%s0 + $0xfa8] sm:$0xff]
  %v795 = vld [vmem:[%s0 + $0xfb0] sm:$0xff]
  %v796 = vld [vmem:[%s0 + $0xfb8] sm:$0xff]
  %v797 = vld [vmem:[%s0 + $0xfc0] sm:$0xff]
  %v798 = vld [vmem:[%s0 + $0xfc8] sm:$0xff]
  %v799 = vld [vmem:[%s0 + $0xfd0] sm:$0xff]
  %v800 = vld [vmem:[%s0 + $0xfd8] sm:$0xff]
  %v801 = vld [vmem:[%s0 + $0xfe0] sm:$0xff]
  %v802 = vld [vmem:[%s0 + $0xfe8] sm:$0xff]
  %v803 = vld [vmem:[%s0 + $0xff0] sm:$0xff]
  %v804 = vld [vmem:[%s0 + $0xff8] sm:$0xff]
  %vm805 = vcmask 523264
  %v807 = vsel %vm805, %v293, 0
  %v810 = vsel %vm805, %v294, 0
  %v813 = vsel %vm805, %v295, 0
  %v816 = vsel %vm805, %v296, 0
  %v819 = vsel %vm805, %v297, 0
  %v822 = vsel %vm805, %v298, 0
  %v825 = vsel %vm805, %v299, 0
  %v828 = vsel %vm805, %v300, 0
  %v831 = vsel %vm805, %v301, 0
  %v834 = vsel %vm805, %v302, 0
  %v837 = vsel %vm805, %v303, 0
  %v840 = vsel %vm805, %v304, 0
  %v843 = vsel %vm805, %v305, 0
  %v846 = vsel %vm805, %v306, 0
  %v849 = vsel %vm805, %v307, 0
  %v852 = vsel %vm805, %v308, 0
  %v855 = vsel %vm805, %v309, 0
  %v858 = vsel %vm805, %v310, 0
  %v861 = vsel %vm805, %v311, 0
  %v864 = vsel %vm805, %v312, 0
  %v867 = vsel %vm805, %v313, 0
  %v870 = vsel %vm805, %v314, 0
  %v873 = vsel %vm805, %v315, 0
  %v876 = vsel %vm805, %v316, 0
  %v879 = vsel %vm805, %v317, 0
  %v882 = vsel %vm805, %v318, 0
  %v885 = vsel %vm805, %v319, 0
  %v888 = vsel %vm805, %v320, 0
  %v891 = vsel %vm805, %v321, 0
  %v894 = vsel %vm805, %v322, 0
  %v897 = vsel %vm805, %v323, 0
  %v900 = vsel %vm805, %v324, 0
  %v903 = vsel %vm805, %v325, 0
  %v906 = vsel %vm805, %v326, 0
  %v909 = vsel %vm805, %v327, 0
  %v912 = vsel %vm805, %v328, 0
  %v915 = vsel %vm805, %v329, 0
  %v918 = vsel %vm805, %v330, 0
  %v921 = vsel %vm805, %v331, 0
  %v924 = vsel %vm805, %v332, 0
  %v927 = vsel %vm805, %v333, 0
  %v930 = vsel %vm805, %v334, 0
  %v933 = vsel %vm805, %v335, 0
  %v936 = vsel %vm805, %v336, 0
  %v939 = vsel %vm805, %v337, 0
  %v942 = vsel %vm805, %v338, 0
  %v945 = vsel %vm805, %v339, 0
  %v948 = vsel %vm805, %v340, 0
  %v951 = vsel %vm805, %v341, 0
  %v954 = vsel %vm805, %v342, 0
  %v957 = vsel %vm805, %v343, 0
  %v960 = vsel %vm805, %v344, 0
  %v963 = vsel %vm805, %v345, 0
  %v966 = vsel %vm805, %v346, 0
  %v969 = vsel %vm805, %v347, 0
  %v972 = vsel %vm805, %v348, 0
  %v975 = vsel %vm805, %v349, 0
  %v978 = vsel %vm805, %v350, 0
  %v981 = vsel %vm805, %v351, 0
  %v984 = vsel %vm805, %v352, 0
  %v987 = vsel %vm805, %v353, 0
  %v990 = vsel %vm805, %v354, 0
  %v993 = vsel %vm805, %v355, 0
  %v996 = vsel %vm805, %v356, 0
  %v999 = vsel %vm805, %v357, 0
  %v1002 = vsel %vm805, %v358, 0
  %v1005 = vsel %vm805, %v359, 0
  %v1008 = vsel %vm805, %v360, 0
  %v1011 = vsel %vm805, %v361, 0
  %v1014 = vsel %vm805, %v362, 0
  %v1017 = vsel %vm805, %v363, 0
  %v1020 = vsel %vm805, %v364, 0
  %v1023 = vsel %vm805, %v365, 0
  %v1026 = vsel %vm805, %v366, 0
  %v1029 = vsel %vm805, %v367, 0
  %v1032 = vsel %vm805, %v368, 0
  %v1035 = vsel %vm805, %v369, 0
  %v1038 = vsel %vm805, %v370, 0
  %v1041 = vsel %vm805, %v371, 0
  %v1044 = vsel %vm805, %v372, 0
  %v1047 = vsel %vm805, %v373, 0
  %v1050 = vsel %vm805, %v374, 0
  %v1053 = vsel %vm805, %v375, 0
  %v1056 = vsel %vm805, %v376, 0
  %v1059 = vsel %vm805, %v377, 0
  %v1062 = vsel %vm805, %v378, 0
  %v1065 = vsel %vm805, %v379, 0
  %v1068 = vsel %vm805, %v380, 0
  %v1071 = vsel %vm805, %v381, 0
  %v1074 = vsel %vm805, %v382, 0
  %v1077 = vsel %vm805, %v383, 0
  %v1080 = vsel %vm805, %v384, 0
  %v1083 = vsel %vm805, %v385, 0
  %v1086 = vsel %vm805, %v386, 0
  %v1089 = vsel %vm805, %v387, 0
  %v1092 = vsel %vm805, %v388, 0
  %v1095 = vsel %vm805, %v389, 0
  %v1098 = vsel %vm805, %v390, 0
  %v1101 = vsel %vm805, %v391, 0
  %v1104 = vsel %vm805, %v392, 0
  %v1107 = vsel %vm805, %v393, 0
  %v1110 = vsel %vm805, %v394, 0
  %v1113 = vsel %vm805, %v395, 0
  %v1116 = vsel %vm805, %v396, 0
  %v1119 = vsel %vm805, %v397, 0
  %v1122 = vsel %vm805, %v398, 0
  %v1125 = vsel %vm805, %v399, 0
  %v1128 = vsel %vm805, %v400, 0
  %v1131 = vsel %vm805, %v401, 0
  %v1134 = vsel %vm805, %v402, 0
  %v1137 = vsel %vm805, %v403, 0
  %v1140 = vsel %vm805, %v404, 0
  %v1143 = vsel %vm805, %v405, 0
  %v1146 = vsel %vm805, %v406, 0
  %v1149 = vsel %vm805, %v407, 0
  %v1152 = vsel %vm805, %v408, 0
  %v1155 = vsel %vm805, %v409, 0
  %v1158 = vsel %vm805, %v410, 0
  %v1161 = vsel %vm805, %v411, 0
  %v1164 = vsel %vm805, %v412, 0
  %v1167 = vsel %vm805, %v413, 0
  %v1170 = vsel %vm805, %v414, 0
  %v1173 = vsel %vm805, %v415, 0
  %v1176 = vsel %vm805, %v416, 0
  %v1179 = vsel %vm805, %v417, 0
  %v1182 = vsel %vm805, %v418, 0
  %v1185 = vsel %vm805, %v419, 0
  %v1188 = vsel %vm805, %v420, 0
  %v1191 = vsel %vm805, %v421, 0
  %v1194 = vsel %vm805, %v422, 0
  %v1197 = vsel %vm805, %v423, 0
  %v1200 = vsel %vm805, %v424, 0
  %v1203 = vsel %vm805, %v425, 0
  %v1206 = vsel %vm805, %v426, 0
  %v1209 = vsel %vm805, %v427, 0
  %v1212 = vsel %vm805, %v428, 0
  %v1215 = vsel %vm805, %v429, 0
  %v1218 = vsel %vm805, %v430, 0
  %v1221 = vsel %vm805, %v431, 0
  %v1224 = vsel %vm805, %v432, 0
  %v1227 = vsel %vm805, %v433, 0
  %v1230 = vsel %vm805, %v434, 0
  %v1233 = vsel %vm805, %v435, 0
  %v1236 = vsel %vm805, %v436, 0
  %v1239 = vsel %vm805, %v437, 0
  %v1242 = vsel %vm805, %v438, 0
  %v1245 = vsel %vm805, %v439, 0
  %v1248 = vsel %vm805, %v440, 0
  %v1251 = vsel %vm805, %v441, 0
  %v1254 = vsel %vm805, %v442, 0
  %v1257 = vsel %vm805, %v443, 0
  %v1260 = vsel %vm805, %v444, 0
  %v1263 = vsel %vm805, %v445, 0
  %v1266 = vsel %vm805, %v446, 0
  %v1269 = vsel %vm805, %v447, 0
  %v1272 = vsel %vm805, %v448, 0
  %v1275 = vsel %vm805, %v449, 0
  %v1278 = vsel %vm805, %v450, 0
  %v1281 = vsel %vm805, %v451, 0
  %v1284 = vsel %vm805, %v452, 0
  %v1287 = vsel %vm805, %v453, 0
  %v1290 = vsel %vm805, %v454, 0
  %v1293 = vsel %vm805, %v455, 0
  %v1296 = vsel %vm805, %v456, 0
  %v1299 = vsel %vm805, %v457, 0
  %v1302 = vsel %vm805, %v458, 0
  %v1305 = vsel %vm805, %v459, 0
  %v1308 = vsel %vm805, %v460, 0
  %v1311 = vsel %vm805, %v461, 0
  %v1314 = vsel %vm805, %v462, 0
  %v1317 = vsel %vm805, %v463, 0
  %v1320 = vsel %vm805, %v464, 0
  %v1323 = vsel %vm805, %v465, 0
  %v1326 = vsel %vm805, %v466, 0
  %v1329 = vsel %vm805, %v467, 0
  %v1332 = vsel %vm805, %v468, 0
  %v1335 = vsel %vm805, %v469, 0
  %v1338 = vsel %vm805, %v470, 0
  %v1341 = vsel %vm805, %v471, 0
  %v1344 = vsel %vm805, %v472, 0
  %v1347 = vsel %vm805, %v473, 0
  %v1350 = vsel %vm805, %v474, 0
  %v1353 = vsel %vm805, %v475, 0
  %v1356 = vsel %vm805, %v476, 0
  %v1359 = vsel %vm805, %v477, 0
  %v1362 = vsel %vm805, %v478, 0
  %v1365 = vsel %vm805, %v479, 0
  %v1368 = vsel %vm805, %v480, 0
  %v1371 = vsel %vm805, %v481, 0
  %v1374 = vsel %vm805, %v482, 0
  %v1377 = vsel %vm805, %v483, 0
  %v1380 = vsel %vm805, %v484, 0
  %v1383 = vsel %vm805, %v485, 0
  %v1386 = vsel %vm805, %v486, 0
  %v1389 = vsel %vm805, %v487, 0
  %v1392 = vsel %vm805, %v488, 0
  %v1395 = vsel %vm805, %v489, 0
  %v1398 = vsel %vm805, %v490, 0
  %v1401 = vsel %vm805, %v491, 0
  %v1404 = vsel %vm805, %v492, 0
  %v1407 = vsel %vm805, %v493, 0
  %v1410 = vsel %vm805, %v494, 0
  %v1413 = vsel %vm805, %v495, 0
  %v1416 = vsel %vm805, %v496, 0
  %v1419 = vsel %vm805, %v497, 0
  %v1422 = vsel %vm805, %v498, 0
  %v1425 = vsel %vm805, %v499, 0
  %v1428 = vsel %vm805, %v500, 0
  %v1431 = vsel %vm805, %v501, 0
  %v1434 = vsel %vm805, %v502, 0
  %v1437 = vsel %vm805, %v503, 0
  %v1440 = vsel %vm805, %v504, 0
  %v1443 = vsel %vm805, %v505, 0
  %v1446 = vsel %vm805, %v506, 0
  %v1449 = vsel %vm805, %v507, 0
  %v1452 = vsel %vm805, %v508, 0
  %v1455 = vsel %vm805, %v509, 0
  %v1458 = vsel %vm805, %v510, 0
  %v1461 = vsel %vm805, %v511, 0
  %v1464 = vsel %vm805, %v512, 0
  %v1467 = vsel %vm805, %v513, 0
  %v1470 = vsel %vm805, %v514, 0
  %v1473 = vsel %vm805, %v515, 0
  %v1476 = vsel %vm805, %v516, 0
  %v1479 = vsel %vm805, %v517, 0
  %v1482 = vsel %vm805, %v518, 0
  %v1485 = vsel %vm805, %v519, 0
  %v1488 = vsel %vm805, %v520, 0
  %v1491 = vsel %vm805, %v521, 0
  %v1494 = vsel %vm805, %v522, 0
  %v1497 = vsel %vm805, %v523, 0
  %v1500 = vsel %vm805, %v524, 0
  %v1503 = vsel %vm805, %v525, 0
  %v1506 = vsel %vm805, %v526, 0
  %v1509 = vsel %vm805, %v527, 0
  %v1512 = vsel %vm805, %v528, 0
  %v1515 = vsel %vm805, %v529, 0
  %v1518 = vsel %vm805, %v530, 0
  %v1521 = vsel %vm805, %v531, 0
  %v1524 = vsel %vm805, %v532, 0
  %v1527 = vsel %vm805, %v533, 0
  %v1530 = vsel %vm805, %v534, 0
  %v1533 = vsel %vm805, %v535, 0
  %v1536 = vsel %vm805, %v536, 0
  %v1539 = vsel %vm805, %v537, 0
  %v1542 = vsel %vm805, %v538, 0
  %v1545 = vsel %vm805, %v539, 0
  %v1548 = vsel %vm805, %v540, 0
  %v1551 = vsel %vm805, %v541, 0
  %v1554 = vsel %vm805, %v542, 0
  %v1557 = vsel %vm805, %v543, 0
  %v1560 = vsel %vm805, %v544, 0
  %v1563 = vsel %vm805, %v545, 0
  %v1566 = vsel %vm805, %v546, 0
  %v1569 = vsel %vm805, %v547, 0
  %v1572 = vsel %vm805, %v548, 0
  %v1575 = vsel %vm805, %v549, 0
  %v1578 = vsel %vm805, %v550, 0
  %v1581 = vsel %vm805, %v551, 0
  %v1584 = vsel %vm805, %v552, 0
  %v1587 = vsel %vm805, %v553, 0
  %v1590 = vsel %vm805, %v554, 0
  %v1593 = vsel %vm805, %v555, 0
  %v1596 = vsel %vm805, %v556, 0
  %v1599 = vsel %vm805, %v557, 0
  %v1602 = vsel %vm805, %v558, 0
  %v1605 = vsel %vm805, %v559, 0
  %v1608 = vsel %vm805, %v560, 0
  %v1611 = vsel %vm805, %v561, 0
  %v1614 = vsel %vm805, %v562, 0
  %v1617 = vsel %vm805, %v563, 0
  %v1620 = vsel %vm805, %v564, 0
  %v1623 = vsel %vm805, %v565, 0
  %v1626 = vsel %vm805, %v566, 0
  %v1629 = vsel %vm805, %v567, 0
  %v1632 = vsel %vm805, %v568, 0
  %v1635 = vsel %vm805, %v569, 0
  %v1638 = vsel %vm805, %v570, 0
  %v1641 = vsel %vm805, %v571, 0
  %v1644 = vsel %vm805, %v572, 0
  %v1647 = vsel %vm805, %v573, 0
  %v1650 = vsel %vm805, %v574, 0
  %v1653 = vsel %vm805, %v575, 0
  %v1656 = vsel %vm805, %v576, 0
  %v1659 = vsel %vm805, %v577, 0
  %v1662 = vsel %vm805, %v578, 0
  %v1665 = vsel %vm805, %v579, 0
  %v1668 = vsel %vm805, %v580, 0
  %v1671 = vsel %vm805, %v581, 0
  %v1674 = vsel %vm805, %v582, 0
  %v1677 = vsel %vm805, %v583, 0
  %v1680 = vsel %vm805, %v584, 0
  %v1683 = vsel %vm805, %v585, 0
  %v1686 = vsel %vm805, %v586, 0
  %v1689 = vsel %vm805, %v587, 0
  %v1692 = vsel %vm805, %v588, 0
  %v1695 = vsel %vm805, %v589, 0
  %v1698 = vsel %vm805, %v590, 0
  %v1701 = vsel %vm805, %v591, 0
  %v1704 = vsel %vm805, %v592, 0
  %v1707 = vsel %vm805, %v593, 0
  %v1710 = vsel %vm805, %v594, 0
  %v1713 = vsel %vm805, %v595, 0
  %v1716 = vsel %vm805, %v596, 0
  %v1719 = vsel %vm805, %v597, 0
  %v1722 = vsel %vm805, %v598, 0
  %v1725 = vsel %vm805, %v599, 0
  %v1728 = vsel %vm805, %v600, 0
  %v1731 = vsel %vm805, %v601, 0
  %v1734 = vsel %vm805, %v602, 0
  %v1737 = vsel %vm805, %v603, 0
  %v1740 = vsel %vm805, %v604, 0
  %v1743 = vsel %vm805, %v605, 0
  %v1746 = vsel %vm805, %v606, 0
  %v1749 = vsel %vm805, %v607, 0
  %v1752 = vsel %vm805, %v608, 0
  %v1755 = vsel %vm805, %v609, 0
  %v1758 = vsel %vm805, %v610, 0
  %v1761 = vsel %vm805, %v611, 0
  %v1764 = vsel %vm805, %v612, 0
  %v1767 = vsel %vm805, %v613, 0
  %v1770 = vsel %vm805, %v614, 0
  %v1773 = vsel %vm805, %v615, 0
  %v1776 = vsel %vm805, %v616, 0
  %v1779 = vsel %vm805, %v617, 0
  %v1782 = vsel %vm805, %v618, 0
  %v1785 = vsel %vm805, %v619, 0
  %v1788 = vsel %vm805, %v620, 0
  %v1791 = vsel %vm805, %v621, 0
  %v1794 = vsel %vm805, %v622, 0
  %v1797 = vsel %vm805, %v623, 0
  %v1800 = vsel %vm805, %v624, 0
  %v1803 = vsel %vm805, %v625, 0
  %v1806 = vsel %vm805, %v626, 0
  %v1809 = vsel %vm805, %v627, 0
  %v1812 = vsel %vm805, %v628, 0
  %v1815 = vsel %vm805, %v629, 0
  %v1818 = vsel %vm805, %v630, 0
  %v1821 = vsel %vm805, %v631, 0
  %v1824 = vsel %vm805, %v632, 0
  %v1827 = vsel %vm805, %v633, 0
  %v1830 = vsel %vm805, %v634, 0
  %v1833 = vsel %vm805, %v635, 0
  %v1836 = vsel %vm805, %v636, 0
  %v1839 = vsel %vm805, %v637, 0
  %v1842 = vsel %vm805, %v638, 0
  %v1845 = vsel %vm805, %v639, 0
  %v1848 = vsel %vm805, %v640, 0
  %v1851 = vsel %vm805, %v641, 0
  %v1854 = vsel %vm805, %v642, 0
  %v1857 = vsel %vm805, %v643, 0
  %v1860 = vsel %vm805, %v644, 0
  %v1863 = vsel %vm805, %v645, 0
  %v1866 = vsel %vm805, %v646, 0
  %v1869 = vsel %vm805, %v647, 0
  %v1872 = vsel %vm805, %v648, 0
  %v1875 = vsel %vm805, %v649, 0
  %v1878 = vsel %vm805, %v650, 0
  %v1881 = vsel %vm805, %v651, 0
  %v1884 = vsel %vm805, %v652, 0
  %v1887 = vsel %vm805, %v653, 0
  %v1890 = vsel %vm805, %v654, 0
  %v1893 = vsel %vm805, %v655, 0
  %v1896 = vsel %vm805, %v656, 0
  %v1899 = vsel %vm805, %v657, 0
  %v1902 = vsel %vm805, %v658, 0
  %v1905 = vsel %vm805, %v659, 0
  %v1908 = vsel %vm805, %v660, 0
  %v1911 = vsel %vm805, %v661, 0
  %v1914 = vsel %vm805, %v662, 0
  %v1917 = vsel %vm805, %v663, 0
  %v1920 = vsel %vm805, %v664, 0
  %v1923 = vsel %vm805, %v665, 0
  %v1926 = vsel %vm805, %v666, 0
  %v1929 = vsel %vm805, %v667, 0
  %v1932 = vsel %vm805, %v668, 0
  %v1935 = vsel %vm805, %v669, 0
  %v1938 = vsel %vm805, %v670, 0
  %v1941 = vsel %vm805, %v671, 0
  %v1944 = vsel %vm805, %v672, 0
  %v1947 = vsel %vm805, %v673, 0
  %v1950 = vsel %vm805, %v674, 0
  %v1953 = vsel %vm805, %v675, 0
  %v1956 = vsel %vm805, %v676, 0
  %v1959 = vsel %vm805, %v677, 0
  %v1962 = vsel %vm805, %v678, 0
  %v1965 = vsel %vm805, %v679, 0
  %v1968 = vsel %vm805, %v680, 0
  %v1971 = vsel %vm805, %v681, 0
  %v1974 = vsel %vm805, %v682, 0
  %v1977 = vsel %vm805, %v683, 0
  %v1980 = vsel %vm805, %v684, 0
  %v1983 = vsel %vm805, %v685, 0
  %v1986 = vsel %vm805, %v686, 0
  %v1989 = vsel %vm805, %v687, 0
  %v1992 = vsel %vm805, %v688, 0
  %v1995 = vsel %vm805, %v689, 0
  %v1998 = vsel %vm805, %v690, 0
  %v2001 = vsel %vm805, %v691, 0
  %v2004 = vsel %vm805, %v692, 0
  %v2007 = vsel %vm805, %v693, 0
  %v2010 = vsel %vm805, %v694, 0
  %v2013 = vsel %vm805, %v695, 0
  %v2016 = vsel %vm805, %v696, 0
  %v2019 = vsel %vm805, %v697, 0
  %v2022 = vsel %vm805, %v698, 0
  %v2025 = vsel %vm805, %v699, 0
  %v2028 = vsel %vm805, %v700, 0
  %v2031 = vsel %vm805, %v701, 0
  %v2034 = vsel %vm805, %v702, 0
  %v2037 = vsel %vm805, %v703, 0
  %v2040 = vsel %vm805, %v704, 0
  %v2043 = vsel %vm805, %v705, 0
  %v2046 = vsel %vm805, %v706, 0
  %v2049 = vsel %vm805, %v707, 0
  %v2052 = vsel %vm805, %v708, 0
  %v2055 = vsel %vm805, %v709, 0
  %v2058 = vsel %vm805, %v710, 0
  %v2061 = vsel %vm805, %v711, 0
  %v2064 = vsel %vm805, %v712, 0
  %v2067 = vsel %vm805, %v713, 0
  %v2070 = vsel %vm805, %v714, 0
  %v2073 = vsel %vm805, %v715, 0
  %v2076 = vsel %vm805, %v716, 0
  %v2079 = vsel %vm805, %v717, 0
  %v2082 = vsel %vm805, %v718, 0
  %v2085 = vsel %vm805, %v719, 0
  %v2088 = vsel %vm805, %v720, 0
  %v2091 = vsel %vm805, %v721, 0
  %v2094 = vsel %vm805, %v722, 0
  %v2097 = vsel %vm805, %v723, 0
  %v2100 = vsel %vm805, %v724, 0
  %v2103 = vsel %vm805, %v725, 0
  %v2106 = vsel %vm805, %v726, 0
  %v2109 = vsel %vm805, %v727, 0
  %v2112 = vsel %vm805, %v728, 0
  %v2115 = vsel %vm805, %v729, 0
  %v2118 = vsel %vm805, %v730, 0
  %v2121 = vsel %vm805, %v731, 0
  %v2124 = vsel %vm805, %v732, 0
  %v2127 = vsel %vm805, %v733, 0
  %v2130 = vsel %vm805, %v734, 0
  %v2133 = vsel %vm805, %v735, 0
  %v2136 = vsel %vm805, %v736, 0
  %v2139 = vsel %vm805, %v737, 0
  %v2142 = vsel %vm805, %v738, 0
  %v2145 = vsel %vm805, %v739, 0
  %v2148 = vsel %vm805, %v740, 0
  %v2151 = vsel %vm805, %v741, 0
  %v2154 = vsel %vm805, %v742, 0
  %v2157 = vsel %vm805, %v743, 0
  %v2160 = vsel %vm805, %v744, 0
  %v2163 = vsel %vm805, %v745, 0
  %v2166 = vsel %vm805, %v746, 0
  %v2169 = vsel %vm805, %v747, 0
  %v2172 = vsel %vm805, %v748, 0
  %v2175 = vsel %vm805, %v749, 0
  %v2178 = vsel %vm805, %v750, 0
  %v2181 = vsel %vm805, %v751, 0
  %v2184 = vsel %vm805, %v752, 0
  %v2187 = vsel %vm805, %v753, 0
  %v2190 = vsel %vm805, %v754, 0
  %v2193 = vsel %vm805, %v755, 0
  %v2196 = vsel %vm805, %v756, 0
  %v2199 = vsel %vm805, %v757, 0
  %v2202 = vsel %vm805, %v758, 0
  %v2205 = vsel %vm805, %v759, 0
  %v2208 = vsel %vm805, %v760, 0
  %v2211 = vsel %vm805, %v761, 0
  %v2214 = vsel %vm805, %v762, 0
  %v2217 = vsel %vm805, %v763, 0
  %v2220 = vsel %vm805, %v764, 0
  %v2223 = vsel %vm805, %v765, 0
  %v2226 = vsel %vm805, %v766, 0
  %v2229 = vsel %vm805, %v767, 0
  %v2232 = vsel %vm805, %v768, 0
  %v2235 = vsel %vm805, %v769, 0
  %v2238 = vsel %vm805, %v770, 0
  %v2241 = vsel %vm805, %v771, 0
  %v2244 = vsel %vm805, %v772, 0
  %v2247 = vsel %vm805, %v773, 0
  %v2250 = vsel %vm805, %v774, 0
  %v2253 = vsel %vm805, %v775, 0
  %v2256 = vsel %vm805, %v776, 0
  %v2259 = vsel %vm805, %v777, 0
  %v2262 = vsel %vm805, %v778, 0
  %v2265 = vsel %vm805, %v779, 0
  %v2268 = vsel %vm805, %v780, 0
  %v2271 = vsel %vm805, %v781, 0
  %v2274 = vsel %vm805, %v782, 0
  %v2277 = vsel %vm805, %v783, 0
  %v2280 = vsel %vm805, %v784, 0
  %v2283 = vsel %vm805, %v785, 0
  %v2286 = vsel %vm805, %v786, 0
  %v2289 = vsel %vm805, %v787, 0
  %v2292 = vsel %vm805, %v788, 0
  %v2295 = vsel %vm805, %v789, 0
  %v2298 = vsel %vm805, %v790, 0
  %v2301 = vsel %vm805, %v791, 0
  %v2304 = vsel %vm805, %v792, 0
  %v2307 = vsel %vm805, %v793, 0
  %v2310 = vsel %vm805, %v794, 0
  %v2313 = vsel %vm805, %v795, 0
  %v2316 = vsel %vm805, %v796, 0
  %v2319 = vsel %vm805, %v797, 0
  %v2322 = vsel %vm805, %v798, 0
  %v2325 = vsel %vm805, %v799, 0
  %v2328 = vsel %vm805, %v800, 0
  %v2331 = vsel %vm805, %v801, 0
  %v2334 = vsel %vm805, %v802, 0
  %v2337 = vsel %vm805, %v803, 0
  %v2340 = vsel %vm805, %v804, 0
  %2342 = vmatprep.subr.mxu0 0.0
  %2343 = vmatpush1.msra.mxu0 %v25
  %2344 = vmatprep.subr.mxu0 0.0
  %2345 = vmatpush1.msra.mxu0 %v26
  %2346 = vmatprep.subr.mxu0 0.0
  %2347 = vmatpush1.msra.mxu0 %v27
  %2348 = vmatprep.subr.mxu0 0.0
  %2349 = vmatpush1.msra.mxu0 %v28
  %2350 = vmatprep.subr.mxu0 0.0
  %2351 = vmatpush1.msra.mxu0 %v29
  %2352 = vmatprep.subr.mxu0 0.0
  %2353 = vmatpush1.msra.mxu0 %v30
  %2354 = vmatprep.subr.mxu0 0.0
  %2355 = vmatpush1.msra.mxu0 %v31
  %2356 = vmatprep.subr.mxu0 0.0
  %2357 = vmatpush1.msra.mxu0 %v32
  %2358 = vmatprep.subr.mxu0 0.0
  %2359 = vmatpush1.msra.mxu0 0.0
  %2360 = vmatprep.subr.mxu0 0.0
  %2361 = vmatpush1.msra.mxu0 0.0
  %2362 = vmatprep.subr.mxu0 0.0
  %2363 = vmatpush1.msra.mxu0 0.0
  %2364 = vmatprep.subr.mxu0 0.0
  %2365 = vmatpush1.msra.mxu0 0.0
  %2366 = vmatprep.subr.mxu0 0.0
  %2367 = vmatpush1.msra.mxu0 0.0
  %2368 = vmatprep.subr.mxu0 0.0
  %2369 = vmatpush1.msra.mxu0 0.0
  %2370 = vmatprep.subr.mxu0 0.0
  %2371 = vmatpush1.msra.mxu0 0.0
  %2372 = vmatprep.subr.mxu0 0.0
  %2373 = vmatpush1.msra.mxu0 0.0
  %2374 = vmatprep.subr.mxu0 0.0
  %2375 = vmatpush1.msra.mxu0 0.0
  %2376 = vmatprep.subr.mxu0 0.0
  %2377 = vmatpush1.msra.mxu0 0.0
  %2378 = vmatprep.subr.mxu0 0.0
  %2379 = vmatpush1.msra.mxu0 0.0
  %2380 = vmatprep.subr.mxu0 0.0
  %2381 = vmatpush1.msra.mxu0 0.0
  %2382 = vmatprep.subr.mxu0 0.0
  %2383 = vmatpush1.msra.mxu0 0.0
  %2384 = vmatprep.subr.mxu0 0.0
  %2385 = vmatpush1.msra.mxu0 0.0
  %2386 = vmatprep.subr.mxu0 0.0
  %2387 = vmatpush1.msra.mxu0 0.0
  %2388 = vmatprep.subr.mxu0 0.0
  %2389 = vmatpush1.msra.mxu0 0.0
  %2390 = vmatprep.subr.mxu0 0.0
  %2391 = vmatpush1.msra.mxu0 0.0
  %2392 = vmatprep.subr.mxu0 0.0
  %2393 = vmatpush1.msra.mxu0 0.0
  %2394 = vmatprep.subr.mxu0 0.0
  %2395 = vmatpush1.msra.mxu0 0.0
  %2396 = vmatprep.subr.mxu0 0.0
  %2397 = vmatpush1.msra.mxu0 0.0
  %2398 = vmatprep.subr.mxu0 0.0
  %2399 = vmatpush1.msra.mxu0 0.0
  %2400 = vmatprep.subr.mxu0 0.0
  %2401 = vmatpush1.msra.mxu0 0.0
  %2402 = vmatprep.subr.mxu0 0.0
  %2403 = vmatpush1.msra.mxu0 0.0
  %2404 = vmatprep.subr.mxu0 0.0
  %2405 = vmatpush1.msra.mxu0 0.0
  %2406 = vmatprep.mubr.f32.mxu0 0.0
  %2407 = vmatmul.mubr.f32.gmra.mrb[0].mxu0 %v807
  %v2408 = vpop.f32.mrb[0].mxu0
  %v2409 = vadd.f32 0.0, %v2408
  %v2410 = vpop.f32.mrb[0].mxu0
  %2411 = vmatprep.mubr.f32.mxu0 0.0
  %2412 = vmatmul.mubr.f32.gmra.mrb[0].mxu0 %v810
  %v2413 = vpop.f32.mrb[0].mxu0
  %v2414 = vadd.f32 0.0, %v2413
  %v2415 = vpop.f32.mrb[0].mxu0
  %2416 = vmatprep.mubr.f32.mxu0 0.0
  %2417 = vmatmul.mubr.f32.gmra.mrb[0].mxu0 %v813
  %v2418 = vpop.f32.mrb[0].mxu0
  %v2419 = vadd.f32 0.0, %v2418
  %v2420 = vpop.f32.mrb[0].mxu0
  %2421 = vmatprep.mubr.f32.mxu0 0.0
  %2422 = vmatmul.mubr.f32.gmra.mrb[0].mxu0 %v816
  %v2423 = vpop.f32.mrb[0].mxu0
  %v2424 = vadd.f32 0.0, %v2423
  %v2425 = vpop.f32.mrb[0].mxu0
  %2426 = vmatprep.mubr.f32.mxu0 0.0
  %2427 = vmatmul.mubr.f32.gmra.mrb[0].mxu0 %v819
  %v2428 = vpop.f32.mrb[0].mxu0
  %v2429 = vadd.f32 0.0, %v2428
  %v2430 = vpop.f32.mrb[0].mxu0
  %2431 = vmatprep.mubr.f32.mxu0 0.0
  %2432 = vmatmul.mubr.f32.gmra.mrb[0].mxu0 %v822
  %v2433 = vpop.f32.mrb[0].mxu0
  %v2434 = vadd.f32 0.0, %v2433
  %v2435 = vpop.f32.mrb[0].mxu0
  %2436 = vmatprep.mubr.f32.mxu0 0.0
  %2437 = vmatmul.mubr.f32.gmra.mrb[0].mxu0 %v825
  %v2438 = vpop.f32.mrb[0].mxu0
  %v2439 = vadd.f32 0.0, %v2438
  %v2440 = vpop.f32.mrb[0].mxu0
  %2441 = vmatprep.mubr.f32.mxu0 0.0
  %2442 = vmatmul.mubr.f32.gmra.mrb[0].mxu0 %v828
  %v2443 = vpop.f32.mrb[0].mxu0
  %v2444 = vadd.f32 0.0, %v2443
  %v2445 = vpop.f32.mrb[0].mxu0
  %2446 = vmatprep.mubr.f32.mxu0 0.0
  %2447 = vmatmul.mubr.f32.gmra.mrb[0].mxu0 %v831
  %v2448 = vpop.f32.mrb[0].mxu0
  %v2449 = vadd.f32 0.0, %v2448
  %v2450 = vpop.f32.mrb[0].mxu0
  %2451 = vmatprep.mubr.f32.mxu0 0.0
  %2452 = vmatmul.mubr.f32.gmra.mrb[0].mxu0 %v834
  %v2453 = vpop.f32.mrb[0].mxu0
  %v2454 = vadd.f32 0.0, %v2453
  %v2455 = vpop.f32.mrb[0].mxu0
  %2456 = vmatprep.mubr.f32.mxu0 0.0
  %2457 = vmatmul.mubr.f32.gmra.mrb[0].mxu0 %v837
  %v2458 = vpop.f32.mrb[0].mxu0
  %v2459 = vadd.f32 0.0, %v2458
  %v2460 = vpop.f32.mrb[0].mxu0
  %2461 = vmatprep.mubr.f32.mxu0 0.0
  %2462 = vmatmul.mubr.f32.gmra.mrb[0].mxu0 %v840
  %v2463 = vpop.f32.mrb[0].mxu0
  %v2464 = vadd.f32 0.0, %v2463
  %v2465 = vpop.f32.mrb[0].mxu0
  %2466 = vmatprep.mubr.f32.mxu0 0.0
  %2467 = vmatmul.mubr.f32.gmra.mrb[0].mxu0 %v843
  %v2468 = vpop.f32.mrb[0].mxu0
  %v2469 = vadd.f32 0.0, %v2468
  %v2470 = vpop.f32.mrb[0].mxu0
  %2471 = vmatprep.mubr.f32.mxu0 0.0
  %2472 = vmatmul.mubr.f32.gmra.mrb[0].mxu0 %v846
  %v2473 = vpop.f32.mrb[0].mxu0
  %v2474 = vadd.f32 0.0, %v2473
  %v2475 = vpop.f32.mrb[0].mxu0
  %2476 = vmatprep.mubr.f32.mxu0 0.0
  %2477 = vmatmul.mubr.f32.gmra.mrb[0].mxu0 %v849
  %v2478 = vpop.f32.mrb[0].mxu0
  %v2479 = vadd.f32 0.0, %v2478
  %v2480 = vpop.f32.mrb[0].mxu0
  %2481 = vmatprep.mubr.f32.mxu0 0.0
  %2482 = vmatmul.mubr.f32.gmra.mrb[0].mxu0 %v852
  %v2483 = vpop.f32.mrb[0].mxu0
  %v2484 = vadd.f32 0.0, %v2483
  %v2485 = vpop.f32.mrb[0].mxu0
  %2486 = vmatprep.mubr.f32.mxu0 0.0
  %2487 = vmatmul.mubr.f32.gmra.mrb[0].mxu0 %v855
  %v2488 = vpop.f32.mrb[0].mxu0
  %v2489 = vadd.f32 0.0, %v2488
  %v2490 = vpop.f32.mrb[0].mxu0
  %2491 = vmatprep.mubr.f32.mxu0 0.0
  %2492 = vmatmul.mubr.f32.gmra.mrb[0].mxu0 %v858
  %v2493 = vpop.f32.mrb[0].mxu0
  %v2494 = vadd.f32 0.0, %v2493
  %v2495 = vpop.f32.mrb[0].mxu0
  %2496 = vmatprep.mubr.f32.mxu0 0.0
  %2497 = vmatmul.mubr.f32.gmra.mrb[0].mxu0 %v861
  %v2498 = vpop.f32.mrb[0].mxu0
  %v2499 = vadd.f32 0.0, %v2498
  %v2500 = vpop.f32.mrb[0].mxu0
  %2501 = vmatprep.mubr.f32.mxu0 0.0
  %2502 = vmatmul.mubr.f32.gmra.mrb[0].mxu0 %v864
  %v2503 = vpop.f32.mrb[0].mxu0
  %v2504 = vadd.f32 0.0, %v2503
  %v2505 = vpop.f32.mrb[0].mxu0
  %2506 = vmatprep.mubr.f32.mxu0 0.0
  %2507 = vmatmul.mubr.f32.gmra.mrb[0].mxu0 %v867
  %v2508 = vpop.f32.mrb[0].mxu0
  %v2509 = vadd.f32 0.0, %v2508
  %v2510 = vpop.f32.mrb[0].mxu0
  %2511 = vmatprep.mubr.f32.mxu0 0.0
  %2512 = vmatmul.mubr.f32.gmra.mrb[0].mxu0 %v870
  %v2513 = vpop.f32.mrb[0].mxu0
  %v2514 = vadd.f32 0.0, %v2513
  %v2515 = vpop.f32.mrb[0].mxu0
  %2516 = vmatprep.mubr.f32.mxu0 0.0
  %2517 = vmatmul.mubr.f32.gmra.mrb[0].mxu0 %v873
  %v2518 = vpop.f32.mrb[0].mxu0
  %v2519 = vadd.f32 0.0, %v2518
  %v2520 = vpop.f32.mrb[0].mxu0
  %2521 = vmatprep.mubr.f32.mxu0 0.0
  %2522 = vmatmul.mubr.f32.gmra.mrb[0].mxu0 %v876
  %v2523 = vpop.f32.mrb[0].mxu0
  %v2524 = vadd.f32 0.0, %v2523
  %v2525 = vpop.f32.mrb[0].mxu0
  %2526 = vmatprep.mubr.f32.mxu0 0.0
  %2527 = vmatmul.mubr.f32.gmra.mrb[0].mxu0 %v879
  %v2528 = vpop.f32.mrb[0].mxu0
  %v2529 = vadd.f32 0.0, %v2528
  %v2530 = vpop.f32.mrb[0].mxu0
  %2531 = vmatprep.mubr.f32.mxu0 0.0
  %2532 = vmatmul.mubr.f32.gmra.mrb[0].mxu0 %v882
  %v2533 = vpop.f32.mrb[0].mxu0
  %v2534 = vadd.f32 0.0, %v2533
  %v2535 = vpop.f32.mrb[0].mxu0
  %2536 = vmatprep.mubr.f32.mxu0 0.0
  %2537 = vmatmul.mubr.f32.gmra.mrb[0].mxu0 %v885
  %v2538 = vpop.f32.mrb[0].mxu0
  %v2539 = vadd.f32 0.0, %v2538
  %v2540 = vpop.f32.mrb[0].mxu0
  %2541 = vmatprep.mubr.f32.mxu0 0.0
  %2542 = vmatmul.mubr.f32.gmra.mrb[0].mxu0 %v888
  %v2543 = vpop.f32.mrb[0].mxu0
  %v2544 = vadd.f32 0.0, %v2543
  %v2545 = vpop.f32.mrb[0].mxu0
  %2546 = vmatprep.mubr.f32.mxu0 0.0
  %2547 = vmatmul.mubr.f32.gmra.mrb[0].mxu0 %v891
  %v2548 = vpop.f32.mrb[0].mxu0
  %v2549 = vadd.f32 0.0, %v2548
  %v2550 = vpop.f32.mrb[0].mxu0
  %2551 = vmatprep.mubr.f32.mxu0 0.0
  %2552 = vmatmul.mubr.f32.gmra.mrb[0].mxu0 %v894
  %v2553 = vpop.f32.mrb[0].mxu0
  %v2554 = vadd.f32 0.0, %v2553
  %v2555 = vpop.f32.mrb[0].mxu0
  %2556 = vmatprep.mubr.f32.mxu0 0.0
  %2557 = vmatmul.mubr.f32.gmra.mrb[0].mxu0 %v897
  %v2558 = vpop.f32.mrb[0].mxu0
  %v2559 = vadd.f32 0.0, %v2558
  %v2560 = vpop.f32.mrb[0].mxu0
  %2561 = vmatprep.mubr.f32.mxu0 0.0
  %2562 = vmatmul.mubr.f32.gmra.mrb[0].mxu0 %v900
  %v2563 = vpop.f32.mrb[0].mxu0
  %v2564 = vadd.f32 0.0, %v2563
  %v2565 = vpop.f32.mrb[0].mxu0
  %2566 = vmatprep.mubr.f32.mxu0 0.0
  %2567 = vmatmul.mubr.f32.gmra.mrb[0].mxu0 %v903
  %v2568 = vpop.f32.mrb[0].mxu0
  %v2569 = vadd.f32 0.0, %v2568
  %v2570 = vpop.f32.mrb[0].mxu0
  %2571 = vmatprep.mubr.f32.mxu0 0.0
  %2572 = vmatmul.mubr.f32.gmra.mrb[0].mxu0 %v906
  %v2573 = vpop.f32.mrb[0].mxu0
  %v2574 = vadd.f32 0.0, %v2573
  %v2575 = vpop.f32.mrb[0].mxu0
  %2576 = vmatprep.mubr.f32.mxu0 0.0
  %2577 = vmatmul.mubr.f32.gmra.mrb[0].mxu0 %v909
  %v2578 = vpop.f32.mrb[0].mxu0
  %v2579 = vadd.f32 0.0, %v2578
  %v2580 = vpop.f32.mrb[0].mxu0
  %2581 = vmatprep.mubr.f32.mxu0 0.0
  %2582 = vmatmul.mubr.f32.gmra.mrb[0].mxu0 %v912
  %v2583 = vpop.f32.mrb[0].mxu0
  %v2584 = vadd.f32 0.0, %v2583
  %v2585 = vpop.f32.mrb[0].mxu0
  %2586 = vmatprep.mubr.f32.mxu0 0.0
  %2587 = vmatmul.mubr.f32.gmra.mrb[0].mxu0 %v915
  %v2588 = vpop.f32.mrb[0].mxu0
  %v2589 = vadd.f32 0.0, %v2588
  %v2590 = vpop.f32.mrb[0].mxu0
  %2591 = vmatprep.mubr.f32.mxu0 0.0
  %2592 = vmatmul.mubr.f32.gmra.mrb[0].mxu0 %v918
  %v2593 = vpop.f32.mrb[0].mxu0
  %v2594 = vadd.f32 0.0, %v2593
  %v2595 = vpop.f32.mrb[0].mxu0
  %2596 = vmatprep.mubr.f32.mxu0 0.0
  %2597 = vmatmul.mubr.f32.gmra.mrb[0].mxu0 %v921
  %v2598 = vpop.f32.mrb[0].mxu0
  %v2599 = vadd.f32 0.0, %v2598
  %v2600 = vpop.f32.mrb[0].mxu0
  %2601 = vmatprep.mubr.f32.mxu0 0.0
  %2602 = vmatmul.mubr.f32.gmra.mrb[0].mxu0 %v924
  %v2603 = vpop.f32.mrb[0].mxu0
  %v2604 = vadd.f32 0.0, %v2603
  %v2605 = vpop.f32.mrb[0].mxu0
  %2606 = vmatprep.mubr.f32.mxu0 0.0
  %2607 = vmatmul.mubr.f32.gmra.mrb[0].mxu0 %v927
  %v2608 = vpop.f32.mrb[0].mxu0
  %v2609 = vadd.f32 0.0, %v2608
  %v2610 = vpop.f32.mrb[0].mxu0
  %2611 = vmatprep.mubr.f32.mxu0 0.0
  %2612 = vmatmul.mubr.f32.gmra.mrb[0].mxu0 %v930
  %v2613 = vpop.f32.mrb[0].mxu0
  %v2614 = vadd.f32 0.0, %v2613
  %v2615 = vpop.f32.mrb[0].mxu0
  %2616 = vmatprep.mubr.f32.mxu0 0.0
  %2617 = vmatmul.mubr.f32.gmra.mrb[0].mxu0 %v933
  %v2618 = vpop.f32.mrb[0].mxu0
  %v2619 = vadd.f32 0.0, %v2618
  %v2620 = vpop.f32.mrb[0].mxu0
  %2621 = vmatprep.mubr.f32.mxu0 0.0
  %2622 = vmatmul.mubr.f32.gmra.mrb[0].mxu0 %v936
  %v2623 = vpop.f32.mrb[0].mxu0
  %v2624 = vadd.f32 0.0, %v2623
  %v2625 = vpop.f32.mrb[0].mxu0
  %2626 = vmatprep.mubr.f32.mxu0 0.0
  %2627 = vmatmul.mubr.f32.gmra.mrb[0].mxu0 %v939
  %v2628 = vpop.f32.mrb[0].mxu0
  %v2629 = vadd.f32 0.0, %v2628
  %v2630 = vpop.f32.mrb[0].mxu0
  %2631 = vmatprep.mubr.f32.mxu0 0.0
  %2632 = vmatmul.mubr.f32.gmra.mrb[0].mxu0 %v942
  %v2633 = vpop.f32.mrb[0].mxu0
  %v2634 = vadd.f32 0.0, %v2633
  %v2635 = vpop.f32.mrb[0].mxu0
  %2636 = vmatprep.mubr.f32.mxu0 0.0
  %2637 = vmatmul.mubr.f32.gmra.mrb[0].mxu0 %v945
  %v2638 = vpop.f32.mrb[0].mxu0
  %v2639 = vadd.f32 0.0, %v2638
  %v2640 = vpop.f32.mrb[0].mxu0
  %2641 = vmatprep.mubr.f32.mxu0 0.0
  %2642 = vmatmul.mubr.f32.gmra.mrb[0].mxu0 %v948
  %v2643 = vpop.f32.mrb[0].mxu0
  %v2644 = vadd.f32 0.0, %v2643
  %v2645 = vpop.f32.mrb[0].mxu0
  %2646 = vmatprep.mubr.f32.mxu0 0.0
  %2647 = vmatmul.mubr.f32.gmra.mrb[0].mxu0 %v951
  %v2648 = vpop.f32.mrb[0].mxu0
  %v2649 = vadd.f32 0.0, %v2648
  %v2650 = vpop.f32.mrb[0].mxu0
  %2651 = vmatprep.mubr.f32.mxu0 0.0
  %2652 = vmatmul.mubr.f32.gmra.mrb[0].mxu0 %v954
  %v2653 = vpop.f32.mrb[0].mxu0
  %v2654 = vadd.f32 0.0, %v2653
  %v2655 = vpop.f32.mrb[0].mxu0
  %2656 = vmatprep.mubr.f32.mxu0 0.0
  %2657 = vmatmul.mubr.f32.gmra.mrb[0].mxu0 %v957
  %v2658 = vpop.f32.mrb[0].mxu0
  %v2659 = vadd.f32 0.0, %v2658
  %v2660 = vpop.f32.mrb[0].mxu0
  %2661 = vmatprep.mubr.f32.mxu0 0.0
  %2662 = vmatmul.mubr.f32.gmra.mrb[0].mxu0 %v960
  %v2663 = vpop.f32.mrb[0].mxu0
  %v2664 = vadd.f32 0.0, %v2663
  %v2665 = vpop.f32.mrb[0].mxu0
  %2666 = vmatprep.mubr.f32.mxu0 0.0
  %2667 = vmatmul.mubr.f32.gmra.mrb[0].mxu0 %v963
  %v2668 = vpop.f32.mrb[0].mxu0
  %v2669 = vadd.f32 0.0, %v2668
  %v2670 = vpop.f32.mrb[0].mxu0
  %2671 = vmatprep.mubr.f32.mxu0 0.0
  %2672 = vmatmul.mubr.f32.gmra.mrb[0].mxu0 %v966
  %v2673 = vpop.f32.mrb[0].mxu0
  %v2674 = vadd.f32 0.0, %v2673
  %v2675 = vpop.f32.mrb[0].mxu0
  %2676 = vmatprep.mubr.f32.mxu0 0.0
  %2677 = vmatmul.mubr.f32.gmra.mrb[0].mxu0 %v969
  %v2678 = vpop.f32.mrb[0].mxu0
  %v2679 = vadd.f32 0.0, %v2678
  %v2680 = vpop.f32.mrb[0].mxu0
  %2681 = vmatprep.mubr.f32.mxu0 0.0
  %2682 = vmatmul.mubr.f32.gmra.mrb[0].mxu0 %v972
  %v2683 = vpop.f32.mrb[0].mxu0
  %v2684 = vadd.f32 0.0, %v2683
  %v2685 = vpop.f32.mrb[0].mxu0
  %2686 = vmatprep.mubr.f32.mxu0 0.0
  %2687 = vmatmul.mubr.f32.gmra.mrb[0].mxu0 %v975
  %v2688 = vpop.f32.mrb[0].mxu0
  %v2689 = vadd.f32 0.0, %v2688
  %v2690 = vpop.f32.mrb[0].mxu0
  %2691 = vmatprep.mubr.f32.mxu0 0.0
  %2692 = vmatmul.mubr.f32.gmra.mrb[0].mxu0 %v978
  %v2693 = vpop.f32.mrb[0].mxu0
  %v2694 = vadd.f32 0.0, %v2693
  %v2695 = vpop.f32.mrb[0].mxu0
  %2696 = vmatprep.mubr.f32.mxu0 0.0
  %2697 = vmatmul.mubr.f32.gmra.mrb[0].mxu0 %v981
  %v2698 = vpop.f32.mrb[0].mxu0
  %v2699 = vadd.f32 0.0, %v2698
  %v2700 = vpop.f32.mrb[0].mxu0
  %2701 = vmatprep.mubr.f32.mxu0 0.0
  %2702 = vmatmul.mubr.f32.gmra.mrb[0].mxu0 %v984
  %v2703 = vpop.f32.mrb[0].mxu0
  %v2704 = vadd.f32 0.0, %v2703
  %v2705 = vpop.f32.mrb[0].mxu0
  %2706 = vmatprep.mubr.f32.mxu0 0.0
  %2707 = vmatmul.mubr.f32.gmra.mrb[0].mxu0 %v987
  %v2708 = vpop.f32.mrb[0].mxu0
  %v2709 = vadd.f32 0.0, %v2708
  %v2710 = vpop.f32.mrb[0].mxu0
  %2711 = vmatprep.mubr.f32.mxu0 0.0
  %2712 = vmatmul.mubr.f32.gmra.mrb[0].mxu0 %v990
  %v2713 = vpop.f32.mrb[0].mxu0
  %v2714 = vadd.f32 0.0, %v2713
  %v2715 = vpop.f32.mrb[0].mxu0
  %2716 = vmatprep.mubr.f32.mxu0 0.0
  %2717 = vmatmul.mubr.f32.gmra.mrb[0].mxu0 %v993
  %v2718 = vpop.f32.mrb[0].mxu0
  %v2719 = vadd.f32 0.0, %v2718
  %v2720 = vpop.f32.mrb[0].mxu0
  %2721 = vmatprep.mubr.f32.mxu0 0.0
  %2722 = vmatmul.mubr.f32.gmra.mrb[0].mxu0 %v996
  %v2723 = vpop.f32.mrb[0].mxu0
  %v2724 = vadd.f32 0.0, %v2723
  %v2725 = vpop.f32.mrb[0].mxu0
  %2726 = vmatprep.mubr.f32.mxu0 0.0
  %2727 = vmatmul.mubr.f32.gmra.mrb[0].mxu0 %v999
  %v2728 = vpop.f32.mrb[0].mxu0
  %v2729 = vadd.f32 0.0, %v2728
  %v2730 = vpop.f32.mrb[0].mxu0
  %2731 = vmatprep.mubr.f32.mxu0 0.0
  %2732 = vmatmul.mubr.f32.gmra.mrb[0].mxu0 %v1002
  %v2733 = vpop.f32.mrb[0].mxu0
  %v2734 = vadd.f32 0.0, %v2733
  %v2735 = vpop.f32.mrb[0].mxu0
  %2736 = vmatprep.mubr.f32.mxu0 0.0
  %2737 = vmatmul.mubr.f32.gmra.mrb[0].mxu0 %v1005
  %v2738 = vpop.f32.mrb[0].mxu0
  %v2739 = vadd.f32 0.0, %v2738
  %v2740 = vpop.f32.mrb[0].mxu0
  %2741 = vmatprep.mubr.f32.mxu0 0.0
  %2742 = vmatmul.mubr.f32.gmra.mrb[0].mxu0 %v1008
  %v2743 = vpop.f32.mrb[0].mxu0
  %v2744 = vadd.f32 0.0, %v2743
  %v2745 = vpop.f32.mrb[0].mxu0
  %2746 = vmatprep.mubr.f32.mxu0 0.0
  %2747 = vmatmul.mubr.f32.gmra.mrb[0].mxu0 %v1011
  %v2748 = vpop.f32.mrb[0].mxu0
  %v2749 = vadd.f32 0.0, %v2748
  %v2750 = vpop.f32.mrb[0].mxu0
  %2751 = vmatprep.mubr.f32.mxu0 0.0
  %2752 = vmatmul.mubr.f32.gmra.mrb[0].mxu0 %v1014
  %v2753 = vpop.f32.mrb[0].mxu0
  %v2754 = vadd.f32 0.0, %v2753
  %v2755 = vpop.f32.mrb[0].mxu0
  %2756 = vmatprep.mubr.f32.mxu0 0.0
  %2757 = vmatmul.mubr.f32.gmra.mrb[0].mxu0 %v1017
  %v2758 = vpop.f32.mrb[0].mxu0
  %v2759 = vadd.f32 0.0, %v2758
  %v2760 = vpop.f32.mrb[0].mxu0
  %2761 = vmatprep.mubr.f32.mxu0 0.0
  %2762 = vmatmul.mubr.f32.gmra.mrb[0].mxu0 %v1020
  %v2763 = vpop.f32.mrb[0].mxu0
  %v2764 = vadd.f32 0.0, %v2763
  %v2765 = vpop.f32.mrb[0].mxu0
  %2766 = vmatprep.mubr.f32.mxu0 0.0
  %2767 = vmatmul.mubr.f32.gmra.mrb[0].mxu0 %v1023
  %v2768 = vpop.f32.mrb[0].mxu0
  %v2769 = vadd.f32 0.0, %v2768
  %v2770 = vpop.f32.mrb[0].mxu0
  %2771 = vmatprep.mubr.f32.mxu0 0.0
  %2772 = vmatmul.mubr.f32.gmra.mrb[0].mxu0 %v1026
  %v2773 = vpop.f32.mrb[0].mxu0
  %v2774 = vadd.f32 0.0, %v2773
  %v2775 = vpop.f32.mrb[0].mxu0
  %2776 = vmatprep.mubr.f32.mxu0 0.0
  %2777 = vmatmul.mubr.f32.gmra.mrb[0].mxu0 %v1029
  %v2778 = vpop.f32.mrb[0].mxu0
  %v2779 = vadd.f32 0.0, %v2778
  %v2780 = vpop.f32.mrb[0].mxu0
  %2781 = vmatprep.mubr.f32.mxu0 0.0
  %2782 = vmatmul.mubr.f32.gmra.mrb[0].mxu0 %v1032
  %v2783 = vpop.f32.mrb[0].mxu0
  %v2784 = vadd.f32 0.0, %v2783
  %v2785 = vpop.f32.mrb[0].mxu0
  %2786 = vmatprep.mubr.f32.mxu0 0.0
  %2787 = vmatmul.mubr.f32.gmra.mrb[0].mxu0 %v1035
  %v2788 = vpop.f32.mrb[0].mxu0
  %v2789 = vadd.f32 0.0, %v2788
  %v2790 = vpop.f32.mrb[0].mxu0
  %2791 = vmatprep.mubr.f32.mxu0 0.0
  %2792 = vmatmul.mubr.f32.gmra.mrb[0].mxu0 %v1038
  %v2793 = vpop.f32.mrb[0].mxu0
  %v2794 = vadd.f32 0.0, %v2793
  %v2795 = vpop.f32.mrb[0].mxu0
  %2796 = vmatprep.mubr.f32.mxu0 0.0
  %2797 = vmatmul.mubr.f32.gmra.mrb[0].mxu0 %v1041
  %v2798 = vpop.f32.mrb[0].mxu0
  %v2799 = vadd.f32 0.0, %v2798
  %v2800 = vpop.f32.mrb[0].mxu0
  %2801 = vmatprep.mubr.f32.mxu0 0.0
  %2802 = vmatmul.mubr.f32.gmra.mrb[0].mxu0 %v1044
  %v2803 = vpop.f32.mrb[0].mxu0
  %v2804 = vadd.f32 0.0, %v2803
  %v2805 = vpop.f32.mrb[0].mxu0
  %2806 = vmatprep.mubr.f32.mxu0 0.0
  %2807 = vmatmul.mubr.f32.gmra.mrb[0].mxu0 %v1047
  %v2808 = vpop.f32.mrb[0].mxu0
  %v2809 = vadd.f32 0.0, %v2808
  %v2810 = vpop.f32.mrb[0].mxu0
  %2811 = vmatprep.mubr.f32.mxu0 0.0
  %2812 = vmatmul.mubr.f32.gmra.mrb[0].mxu0 %v1050
  %v2813 = vpop.f32.mrb[0].mxu0
  %v2814 = vadd.f32 0.0, %v2813
  %v2815 = vpop.f32.mrb[0].mxu0
  %2816 = vmatprep.mubr.f32.mxu0 0.0
  %2817 = vmatmul.mubr.f32.gmra.mrb[0].mxu0 %v1053
  %v2818 = vpop.f32.mrb[0].mxu0
  %v2819 = vadd.f32 0.0, %v2818
  %v2820 = vpop.f32.mrb[0].mxu0
  %2821 = vmatprep.mubr.f32.mxu0 0.0
  %2822 = vmatmul.mubr.f32.gmra.mrb[0].mxu0 %v1056
  %v2823 = vpop.f32.mrb[0].mxu0
  %v2824 = vadd.f32 0.0, %v2823
  %v2825 = vpop.f32.mrb[0].mxu0
  %2826 = vmatprep.mubr.f32.mxu0 0.0
  %2827 = vmatmul.mubr.f32.gmra.mrb[0].mxu0 %v1059
  %v2828 = vpop.f32.mrb[0].mxu0
  %v2829 = vadd.f32 0.0, %v2828
  %v2830 = vpop.f32.mrb[0].mxu0
  %2831 = vmatprep.mubr.f32.mxu0 0.0
  %2832 = vmatmul.mubr.f32.gmra.mrb[0].mxu0 %v1062
  %v2833 = vpop.f32.mrb[0].mxu0
  %v2834 = vadd.f32 0.0, %v2833
  %v2835 = vpop.f32.mrb[0].mxu0
  %2836 = vmatprep.mubr.f32.mxu0 0.0
  %2837 = vmatmul.mubr.f32.gmra.mrb[0].mxu0 %v1065
  %v2838 = vpop.f32.mrb[0].mxu0
  %v2839 = vadd.f32 0.0, %v2838
  %v2840 = vpop.f32.mrb[0].mxu0
  %2841 = vmatprep.mubr.f32.mxu0 0.0
  %2842 = vmatmul.mubr.f32.gmra.mrb[0].mxu0 %v1068
  %v2843 = vpop.f32.mrb[0].mxu0
  %v2844 = vadd.f32 0.0, %v2843
  %v2845 = vpop.f32.mrb[0].mxu0
  %2846 = vmatprep.mubr.f32.mxu0 0.0
  %2847 = vmatmul.mubr.f32.gmra.mrb[0].mxu0 %v1071
  %v2848 = vpop.f32.mrb[0].mxu0
  %v2849 = vadd.f32 0.0, %v2848
  %v2850 = vpop.f32.mrb[0].mxu0
  %2851 = vmatprep.mubr.f32.mxu0 0.0
  %2852 = vmatmul.mubr.f32.gmra.mrb[0].mxu0 %v1074
  %v2853 = vpop.f32.mrb[0].mxu0
  %v2854 = vadd.f32 0.0, %v2853
  %v2855 = vpop.f32.mrb[0].mxu0
  %2856 = vmatprep.mubr.f32.mxu0 0.0
  %2857 = vmatmul.mubr.f32.gmra.mrb[0].mxu0 %v1077
  %v2858 = vpop.f32.mrb[0].mxu0
  %v2859 = vadd.f32 0.0, %v2858
  %v2860 = vpop.f32.mrb[0].mxu0
  %2861 = vmatprep.mubr.f32.mxu0 0.0
  %2862 = vmatmul.mubr.f32.gmra.mrb[0].mxu0 %v1080
  %v2863 = vpop.f32.mrb[0].mxu0
  %v2864 = vadd.f32 0.0, %v2863
  %v2865 = vpop.f32.mrb[0].mxu0
  %2866 = vmatprep.mubr.f32.mxu0 0.0
  %2867 = vmatmul.mubr.f32.gmra.mrb[0].mxu0 %v1083
  %v2868 = vpop.f32.mrb[0].mxu0
  %v2869 = vadd.f32 0.0, %v2868
  %v2870 = vpop.f32.mrb[0].mxu0
  %2871 = vmatprep.mubr.f32.mxu0 0.0
  %2872 = vmatmul.mubr.f32.gmra.mrb[0].mxu0 %v1086
  %v2873 = vpop.f32.mrb[0].mxu0
  %v2874 = vadd.f32 0.0, %v2873
  %v2875 = vpop.f32.mrb[0].mxu0
  %2876 = vmatprep.mubr.f32.mxu0 0.0
  %2877 = vmatmul.mubr.f32.gmra.mrb[0].mxu0 %v1089
  %v2878 = vpop.f32.mrb[0].mxu0
  %v2879 = vadd.f32 0.0, %v2878
  %v2880 = vpop.f32.mrb[0].mxu0
  %2881 = vmatprep.mubr.f32.mxu0 0.0
  %2882 = vmatmul.mubr.f32.gmra.mrb[0].mxu0 %v1092
  %v2883 = vpop.f32.mrb[0].mxu0
  %v2884 = vadd.f32 0.0, %v2883
  %v2885 = vpop.f32.mrb[0].mxu0
  %2886 = vmatprep.mubr.f32.mxu0 0.0
  %2887 = vmatmul.mubr.f32.gmra.mrb[0].mxu0 %v1095
  %v2888 = vpop.f32.mrb[0].mxu0
  %v2889 = vadd.f32 0.0, %v2888
  %v2890 = vpop.f32.mrb[0].mxu0
  %2891 = vmatprep.mubr.f32.mxu0 0.0
  %2892 = vmatmul.mubr.f32.gmra.mrb[0].mxu0 %v1098
  %v2893 = vpop.f32.mrb[0].mxu0
  %v2894 = vadd.f32 0.0, %v2893
  %v2895 = vpop.f32.mrb[0].mxu0
  %2896 = vmatprep.mubr.f32.mxu0 0.0
  %2897 = vmatmul.mubr.f32.gmra.mrb[0].mxu0 %v1101
  %v2898 = vpop.f32.mrb[0].mxu0
  %v2899 = vadd.f32 0.0, %v2898
  %v2900 = vpop.f32.mrb[0].mxu0
  %2901 = vmatprep.mubr.f32.mxu0 0.0
  %2902 = vmatmul.mubr.f32.gmra.mrb[0].mxu0 %v1104
  %v2903 = vpop.f32.mrb[0].mxu0
  %v2904 = vadd.f32 0.0, %v2903
  %v2905 = vpop.f32.mrb[0].mxu0
  %2906 = vmatprep.mubr.f32.mxu0 0.0
  %2907 = vmatmul.mubr.f32.gmra.mrb[0].mxu0 %v1107
  %v2908 = vpop.f32.mrb[0].mxu0
  %v2909 = vadd.f32 0.0, %v2908
  %v2910 = vpop.f32.mrb[0].mxu0
  %2911 = vmatprep.mubr.f32.mxu0 0.0
  %2912 = vmatmul.mubr.f32.gmra.mrb[0].mxu0 %v1110
  %v2913 = vpop.f32.mrb[0].mxu0
  %v2914 = vadd.f32 0.0, %v2913
  %v2915 = vpop.f32.mrb[0].mxu0
  %2916 = vmatprep.mubr.f32.mxu0 0.0
  %2917 = vmatmul.mubr.f32.gmra.mrb[0].mxu0 %v1113
  %v2918 = vpop.f32.mrb[0].mxu0
  %v2919 = vadd.f32 0.0, %v2918
  %v2920 = vpop.f32.mrb[0].mxu0
  %2921 = vmatprep.mubr.f32.mxu0 0.0
  %2922 = vmatmul.mubr.f32.gmra.mrb[0].mxu0 %v1116
  %v2923 = vpop.f32.mrb[0].mxu0
  %v2924 = vadd.f32 0.0, %v2923
  %v2925 = vpop.f32.mrb[0].mxu0
  %2926 = vmatprep.mubr.f32.mxu0 0.0
  %2927 = vmatmul.mubr.f32.gmra.mrb[0].mxu0 %v1119
  %v2928 = vpop.f32.mrb[0].mxu0
  %v2929 = vadd.f32 0.0, %v2928
  %v2930 = vpop.f32.mrb[0].mxu0
  %2931 = vmatprep.mubr.f32.mxu0 0.0
  %2932 = vmatmul.mubr.f32.gmra.mrb[0].mxu0 %v1122
  %v2933 = vpop.f32.mrb[0].mxu0
  %v2934 = vadd.f32 0.0, %v2933
  %v2935 = vpop.f32.mrb[0].mxu0
  %2936 = vmatprep.mubr.f32.mxu0 0.0
  %2937 = vmatmul.mubr.f32.gmra.mrb[0].mxu0 %v1125
  %v2938 = vpop.f32.mrb[0].mxu0
  %v2939 = vadd.f32 0.0, %v2938
  %v2940 = vpop.f32.mrb[0].mxu0
  %2941 = vmatprep.mubr.f32.mxu0 0.0
  %2942 = vmatmul.mubr.f32.gmra.mrb[0].mxu0 %v1128
  %v2943 = vpop.f32.mrb[0].mxu0
  %v2944 = vadd.f32 0.0, %v2943
  %v2945 = vpop.f32.mrb[0].mxu0
  %2946 = vmatprep.mubr.f32.mxu0 0.0
  %2947 = vmatmul.mubr.f32.gmra.mrb[0].mxu0 %v1131
  %v2948 = vpop.f32.mrb[0].mxu0
  %v2949 = vadd.f32 0.0, %v2948
  %v2950 = vpop.f32.mrb[0].mxu0
  %2951 = vmatprep.mubr.f32.mxu0 0.0
  %2952 = vmatmul.mubr.f32.gmra.mrb[0].mxu0 %v1134
  %v2953 = vpop.f32.mrb[0].mxu0
  %v2954 = vadd.f32 0.0, %v2953
  %v2955 = vpop.f32.mrb[0].mxu0
  %2956 = vmatprep.mubr.f32.mxu0 0.0
  %2957 = vmatmul.mubr.f32.gmra.mrb[0].mxu0 %v1137
  %v2958 = vpop.f32.mrb[0].mxu0
  %v2959 = vadd.f32 0.0, %v2958
  %v2960 = vpop.f32.mrb[0].mxu0
  %2961 = vmatprep.mubr.f32.mxu0 0.0
  %2962 = vmatmul.mubr.f32.gmra.mrb[0].mxu0 %v1140
  %v2963 = vpop.f32.mrb[0].mxu0
  %v2964 = vadd.f32 0.0, %v2963
  %v2965 = vpop.f32.mrb[0].mxu0
  %2966 = vmatprep.mubr.f32.mxu0 0.0
  %2967 = vmatmul.mubr.f32.gmra.mrb[0].mxu0 %v1143
  %v2968 = vpop.f32.mrb[0].mxu0
  %v2969 = vadd.f32 0.0, %v2968
  %v2970 = vpop.f32.mrb[0].mxu0
  %2971 = vmatprep.mubr.f32.mxu0 0.0
  %2972 = vmatmul.mubr.f32.gmra.mrb[0].mxu0 %v1146
  %v2973 = vpop.f32.mrb[0].mxu0
  %v2974 = vadd.f32 0.0, %v2973
  %v2975 = vpop.f32.mrb[0].mxu0
  %2976 = vmatprep.mubr.f32.mxu0 0.0
  %2977 = vmatmul.mubr.f32.gmra.mrb[0].mxu0 %v1149
  %v2978 = vpop.f32.mrb[0].mxu0
  %v2979 = vadd.f32 0.0, %v2978
  %v2980 = vpop.f32.mrb[0].mxu0
  %2981 = vmatprep.mubr.f32.mxu0 0.0
  %2982 = vmatmul.mubr.f32.gmra.mrb[0].mxu0 %v1152
  %v2983 = vpop.f32.mrb[0].mxu0
  %v2984 = vadd.f32 0.0, %v2983
  %v2985 = vpop.f32.mrb[0].mxu0
  %2986 = vmatprep.mubr.f32.mxu0 0.0
  %2987 = vmatmul.mubr.f32.gmra.mrb[0].mxu0 %v1155
  %v2988 = vpop.f32.mrb[0].mxu0
  %v2989 = vadd.f32 0.0, %v2988
  %v2990 = vpop.f32.mrb[0].mxu0
  %2991 = vmatprep.mubr.f32.mxu0 0.0
  %2992 = vmatmul.mubr.f32.gmra.mrb[0].mxu0 %v1158
  %v2993 = vpop.f32.mrb[0].mxu0
  %v2994 = vadd.f32 0.0, %v2993
  %v2995 = vpop.f32.mrb[0].mxu0
  %2996 = vmatprep.mubr.f32.mxu0 0.0
  %2997 = vmatmul.mubr.f32.gmra.mrb[0].mxu0 %v1161
  %v2998 = vpop.f32.mrb[0].mxu0
  %v2999 = vadd.f32 0.0, %v2998
  %v3000 = vpop.f32.mrb[0].mxu0
  %3001 = vmatprep.mubr.f32.mxu0 0.0
  %3002 = vmatmul.mubr.f32.gmra.mrb[0].mxu0 %v1164
  %v3003 = vpop.f32.mrb[0].mxu0
  %v3004 = vadd.f32 0.0, %v3003
  %v3005 = vpop.f32.mrb[0].mxu0
  %3006 = vmatprep.mubr.f32.mxu0 0.0
  %3007 = vmatmul.mubr.f32.gmra.mrb[0].mxu0 %v1167
  %v3008 = vpop.f32.mrb[0].mxu0
  %v3009 = vadd.f32 0.0, %v3008
  %v3010 = vpop.f32.mrb[0].mxu0
  %3011 = vmatprep.mubr.f32.mxu0 0.0
  %3012 = vmatmul.mubr.f32.gmra.mrb[0].mxu0 %v1170
  %v3013 = vpop.f32.mrb[0].mxu0
  %v3014 = vadd.f32 0.0, %v3013
  %v3015 = vpop.f32.mrb[0].mxu0
  %3016 = vmatprep.mubr.f32.mxu0 0.0
  %3017 = vmatmul.mubr.f32.gmra.mrb[0].mxu0 %v1173
  %v3018 = vpop.f32.mrb[0].mxu0
  %v3019 = vadd.f32 0.0, %v3018
  %v3020 = vpop.f32.mrb[0].mxu0
  %3021 = vmatprep.mubr.f32.mxu0 0.0
  %3022 = vmatmul.mubr.f32.gmra.mrb[0].mxu0 %v1176
  %v3023 = vpop.f32.mrb[0].mxu0
  %v3024 = vadd.f32 0.0, %v3023
  %v3025 = vpop.f32.mrb[0].mxu0
  %3026 = vmatprep.mubr.f32.mxu0 0.0
  %3027 = vmatmul.mubr.f32.gmra.mrb[0].mxu0 %v1179
  %v3028 = vpop.f32.mrb[0].mxu0
  %v3029 = vadd.f32 0.0, %v3028
  %v3030 = vpop.f32.mrb[0].mxu0
  %3031 = vmatprep.mubr.f32.mxu0 0.0
  %3032 = vmatmul.mubr.f32.gmra.mrb[0].mxu0 %v1182
  %v3033 = vpop.f32.mrb[0].mxu0
  %v3034 = vadd.f32 0.0, %v3033
  %v3035 = vpop.f32.mrb[0].mxu0
  %3036 = vmatprep.mubr.f32.mxu0 0.0
  %3037 = vmatmul.mubr.f32.gmra.mrb[0].mxu0 %v1185
  %v3038 = vpop.f32.mrb[0].mxu0
  %v3039 = vadd.f32 0.0, %v3038
  %v3040 = vpop.f32.mrb[0].mxu0
  %3041 = vmatprep.mubr.f32.mxu0 0.0
  %3042 = vmatmul.mubr.f32.gmra.mrb[0].mxu0 %v1188
  %v3043 = vpop.f32.mrb[0].mxu0
  %v3044 = vadd.f32 0.0, %v3043
  %v3045 = vpop.f32.mrb[0].mxu0
  %3046 = vmatprep.mubr.f32.mxu0 0.0
  %3047 = vmatmul.mubr.f32.gmra.mrb[0].mxu0 %v1191
  %v3048 = vpop.f32.mrb[0].mxu0
  %v3049 = vadd.f32 0.0, %v3048
  %v3050 = vpop.f32.mrb[0].mxu0
  %3051 = vmatprep.mubr.f32.mxu0 0.0
  %3052 = vmatmul.mubr.f32.gmra.mrb[0].mxu0 %v1194
  %v3053 = vpop.f32.mrb[0].mxu0
  %v3054 = vadd.f32 0.0, %v3053
  %v3055 = vpop.f32.mrb[0].mxu0
  %3056 = vmatprep.mubr.f32.mxu0 0.0
  %3057 = vmatmul.mubr.f32.gmra.mrb[0].mxu0 %v1197
  %v3058 = vpop.f32.mrb[0].mxu0
  %v3059 = vadd.f32 0.0, %v3058
  %v3060 = vpop.f32.mrb[0].mxu0
  %3061 = vmatprep.mubr.f32.mxu0 0.0
  %3062 = vmatmul.mubr.f32.gmra.mrb[0].mxu0 %v1200
  %v3063 = vpop.f32.mrb[0].mxu0
  %v3064 = vadd.f32 0.0, %v3063
  %v3065 = vpop.f32.mrb[0].mxu0
  %3066 = vmatprep.mubr.f32.mxu0 0.0
  %3067 = vmatmul.mubr.f32.gmra.mrb[0].mxu0 %v1203
  %v3068 = vpop.f32.mrb[0].mxu0
  %v3069 = vadd.f32 0.0, %v3068
  %v3070 = vpop.f32.mrb[0].mxu0
  %3071 = vmatprep.mubr.f32.mxu0 0.0
  %3072 = vmatmul.mubr.f32.gmra.mrb[0].mxu0 %v1206
  %v3073 = vpop.f32.mrb[0].mxu0
  %v3074 = vadd.f32 0.0, %v3073
  %v3075 = vpop.f32.mrb[0].mxu0
  %3076 = vmatprep.mubr.f32.mxu0 0.0
  %3077 = vmatmul.mubr.f32.gmra.mrb[0].mxu0 %v1209
  %v3078 = vpop.f32.mrb[0].mxu0
  %v3079 = vadd.f32 0.0, %v3078
  %v3080 = vpop.f32.mrb[0].mxu0
  %3081 = vmatprep.mubr.f32.mxu0 0.0
  %3082 = vmatmul.mubr.f32.gmra.mrb[0].mxu0 %v1212
  %v3083 = vpop.f32.mrb[0].mxu0
  %v3084 = vadd.f32 0.0, %v3083
  %v3085 = vpop.f32.mrb[0].mxu0
  %3086 = vmatprep.mubr.f32.mxu0 0.0
  %3087 = vmatmul.mubr.f32.gmra.mrb[0].mxu0 %v1215
  %v3088 = vpop.f32.mrb[0].mxu0
  %v3089 = vadd.f32 0.0, %v3088
  %v3090 = vpop.f32.mrb[0].mxu0
  %3091 = vmatprep.mubr.f32.mxu0 0.0
  %3092 = vmatmul.mubr.f32.gmra.mrb[0].mxu0 %v1218
  %v3093 = vpop.f32.mrb[0].mxu0
  %v3094 = vadd.f32 0.0, %v3093
  %v3095 = vpop.f32.mrb[0].mxu0
  %3096 = vmatprep.mubr.f32.mxu0 0.0
  %3097 = vmatmul.mubr.f32.gmra.mrb[0].mxu0 %v1221
  %v3098 = vpop.f32.mrb[0].mxu0
  %v3099 = vadd.f32 0.0, %v3098
  %v3100 = vpop.f32.mrb[0].mxu0
  %3101 = vmatprep.mubr.f32.mxu0 0.0
  %3102 = vmatmul.mubr.f32.gmra.mrb[0].mxu0 %v1224
  %v3103 = vpop.f32.mrb[0].mxu0
  %v3104 = vadd.f32 0.0, %v3103
  %v3105 = vpop.f32.mrb[0].mxu0
  %3106 = vmatprep.mubr.f32.mxu0 0.0
  %3107 = vmatmul.mubr.f32.gmra.mrb[0].mxu0 %v1227
  %v3108 = vpop.f32.mrb[0].mxu0
  %v3109 = vadd.f32 0.0, %v3108
  %v3110 = vpop.f32.mrb[0].mxu0
  %3111 = vmatprep.mubr.f32.mxu0 0.0
  %3112 = vmatmul.mubr.f32.gmra.mrb[0].mxu0 %v1230
  %v3113 = vpop.f32.mrb[0].mxu0
  %v3114 = vadd.f32 0.0, %v3113
  %v3115 = vpop.f32.mrb[0].mxu0
  %3116 = vmatprep.mubr.f32.mxu0 0.0
  %3117 = vmatmul.mubr.f32.gmra.mrb[0].mxu0 %v1233
  %v3118 = vpop.f32.mrb[0].mxu0
  %v3119 = vadd.f32 0.0, %v3118
  %v3120 = vpop.f32.mrb[0].mxu0
  %3121 = vmatprep.mubr.f32.mxu0 0.0
  %3122 = vmatmul.mubr.f32.gmra.mrb[0].mxu0 %v1236
  %v3123 = vpop.f32.mrb[0].mxu0
  %v3124 = vadd.f32 0.0, %v3123
  %v3125 = vpop.f32.mrb[0].mxu0
  %3126 = vmatprep.mubr.f32.mxu0 0.0
  %3127 = vmatmul.mubr.f32.gmra.mrb[0].mxu0 %v1239
  %v3128 = vpop.f32.mrb[0].mxu0
  %v3129 = vadd.f32 0.0, %v3128
  %v3130 = vpop.f32.mrb[0].mxu0
  %3131 = vmatprep.mubr.f32.mxu0 0.0
  %3132 = vmatmul.mubr.f32.gmra.mrb[0].mxu0 %v1242
  %v3133 = vpop.f32.mrb[0].mxu0
  %v3134 = vadd.f32 0.0, %v3133
  %v3135 = vpop.f32.mrb[0].mxu0
  %3136 = vmatprep.mubr.f32.mxu0 0.0
  %3137 = vmatmul.mubr.f32.gmra.mrb[0].mxu0 %v1245
  %v3138 = vpop.f32.mrb[0].mxu0
  %v3139 = vadd.f32 0.0, %v3138
  %v3140 = vpop.f32.mrb[0].mxu0
  %3141 = vmatprep.mubr.f32.mxu0 0.0
  %3142 = vmatmul.mubr.f32.gmra.mrb[0].mxu0 %v1248
  %v3143 = vpop.f32.mrb[0].mxu0
  %v3144 = vadd.f32 0.0, %v3143
  %v3145 = vpop.f32.mrb[0].mxu0
  %3146 = vmatprep.mubr.f32.mxu0 0.0
  %3147 = vmatmul.mubr.f32.gmra.mrb[0].mxu0 %v1251
  %v3148 = vpop.f32.mrb[0].mxu0
  %v3149 = vadd.f32 0.0, %v3148
  %v3150 = vpop.f32.mrb[0].mxu0
  %3151 = vmatprep.mubr.f32.mxu0 0.0
  %3152 = vmatmul.mubr.f32.gmra.mrb[0].mxu0 %v1254
  %v3153 = vpop.f32.mrb[0].mxu0
  %v3154 = vadd.f32 0.0, %v3153
  %v3155 = vpop.f32.mrb[0].mxu0
  %3156 = vmatprep.mubr.f32.mxu0 0.0
  %3157 = vmatmul.mubr.f32.gmra.mrb[0].mxu0 %v1257
  %v3158 = vpop.f32.mrb[0].mxu0
  %v3159 = vadd.f32 0.0, %v3158
  %v3160 = vpop.f32.mrb[0].mxu0
  %3161 = vmatprep.mubr.f32.mxu0 0.0
  %3162 = vmatmul.mubr.f32.gmra.mrb[0].mxu0 %v1260
  %v3163 = vpop.f32.mrb[0].mxu0
  %v3164 = vadd.f32 0.0, %v3163
  %v3165 = vpop.f32.mrb[0].mxu0
  %3166 = vmatprep.mubr.f32.mxu0 0.0
  %3167 = vmatmul.mubr.f32.gmra.mrb[0].mxu0 %v1263
  %v3168 = vpop.f32.mrb[0].mxu0
  %v3169 = vadd.f32 0.0, %v3168
  %v3170 = vpop.f32.mrb[0].mxu0
  %3171 = vmatprep.mubr.f32.mxu0 0.0
  %3172 = vmatmul.mubr.f32.gmra.mrb[0].mxu0 %v1266
  %v3173 = vpop.f32.mrb[0].mxu0
  %v3174 = vadd.f32 0.0, %v3173
  %v3175 = vpop.f32.mrb[0].mxu0
  %3176 = vmatprep.mubr.f32.mxu0 0.0
  %3177 = vmatmul.mubr.f32.gmra.mrb[0].mxu0 %v1269
  %v3178 = vpop.f32.mrb[0].mxu0
  %v3179 = vadd.f32 0.0, %v3178
  %v3180 = vpop.f32.mrb[0].mxu0
  %3181 = vmatprep.mubr.f32.mxu0 0.0
  %3182 = vmatmul.mubr.f32.gmra.mrb[0].mxu0 %v1272
  %v3183 = vpop.f32.mrb[0].mxu0
  %v3184 = vadd.f32 0.0, %v3183
  %v3185 = vpop.f32.mrb[0].mxu0
  %3186 = vmatprep.mubr.f32.mxu0 0.0
  %3187 = vmatmul.mubr.f32.gmra.mrb[0].mxu0 %v1275
  %v3188 = vpop.f32.mrb[0].mxu0
  %v3189 = vadd.f32 0.0, %v3188
  %v3190 = vpop.f32.mrb[0].mxu0
  %3191 = vmatprep.mubr.f32.mxu0 0.0
  %3192 = vmatmul.mubr.f32.gmra.mrb[0].mxu0 %v1278
  %v3193 = vpop.f32.mrb[0].mxu0
  %v3194 = vadd.f32 0.0, %v3193
  %v3195 = vpop.f32.mrb[0].mxu0
  %3196 = vmatprep.mubr.f32.mxu0 0.0
  %3197 = vmatmul.mubr.f32.gmra.mrb[0].mxu0 %v1281
  %v3198 = vpop.f32.mrb[0].mxu0
  %v3199 = vadd.f32 0.0, %v3198
  %v3200 = vpop.f32.mrb[0].mxu0
  %3201 = vmatprep.mubr.f32.mxu0 0.0
  %3202 = vmatmul.mubr.f32.gmra.mrb[0].mxu0 %v1284
  %v3203 = vpop.f32.mrb[0].mxu0
  %v3204 = vadd.f32 0.0, %v3203
  %v3205 = vpop.f32.mrb[0].mxu0
  %3206 = vmatprep.mubr.f32.mxu0 0.0
  %3207 = vmatmul.mubr.f32.gmra.mrb[0].mxu0 %v1287
  %v3208 = vpop.f32.mrb[0].mxu0
  %v3209 = vadd.f32 0.0, %v3208
  %v3210 = vpop.f32.mrb[0].mxu0
  %3211 = vmatprep.mubr.f32.mxu0 0.0
  %3212 = vmatmul.mubr.f32.gmra.mrb[0].mxu0 %v1290
  %v3213 = vpop.f32.mrb[0].mxu0
  %v3214 = vadd.f32 0.0, %v3213
  %v3215 = vpop.f32.mrb[0].mxu0
  %3216 = vmatprep.mubr.f32.mxu0 0.0
  %3217 = vmatmul.mubr.f32.gmra.mrb[0].mxu0 %v1293
  %v3218 = vpop.f32.mrb[0].mxu0
  %v3219 = vadd.f32 0.0, %v3218
  %v3220 = vpop.f32.mrb[0].mxu0
  %3221 = vmatprep.mubr.f32.mxu0 0.0
  %3222 = vmatmul.mubr.f32.gmra.mrb[0].mxu0 %v1296
  %v3223 = vpop.f32.mrb[0].mxu0
  %v3224 = vadd.f32 0.0, %v3223
  %v3225 = vpop.f32.mrb[0].mxu0
  %3226 = vmatprep.mubr.f32.mxu0 0.0
  %3227 = vmatmul.mubr.f32.gmra.mrb[0].mxu0 %v1299
  %v3228 = vpop.f32.mrb[0].mxu0
  %v3229 = vadd.f32 0.0, %v3228
  %v3230 = vpop.f32.mrb[0].mxu0
  %3231 = vmatprep.mubr.f32.mxu0 0.0
  %3232 = vmatmul.mubr.f32.gmra.mrb[0].mxu0 %v1302
  %v3233 = vpop.f32.mrb[0].mxu0
  %v3234 = vadd.f32 0.0, %v3233
  %v3235 = vpop.f32.mrb[0].mxu0
  %3236 = vmatprep.mubr.f32.mxu0 0.0
  %3237 = vmatmul.mubr.f32.gmra.mrb[0].mxu0 %v1305
  %v3238 = vpop.f32.mrb[0].mxu0
  %v3239 = vadd.f32 0.0, %v3238
  %v3240 = vpop.f32.mrb[0].mxu0
  %3241 = vmatprep.mubr.f32.mxu0 0.0
  %3242 = vmatmul.mubr.f32.gmra.mrb[0].mxu0 %v1308
  %v3243 = vpop.f32.mrb[0].mxu0
  %v3244 = vadd.f32 0.0, %v3243
  %v3245 = vpop.f32.mrb[0].mxu0
  %3246 = vmatprep.mubr.f32.mxu0 0.0
  %3247 = vmatmul.mubr.f32.gmra.mrb[0].mxu0 %v1311
  %v3248 = vpop.f32.mrb[0].mxu0
  %v3249 = vadd.f32 0.0, %v3248
  %v3250 = vpop.f32.mrb[0].mxu0
  %3251 = vmatprep.mubr.f32.mxu0 0.0
  %3252 = vmatmul.mubr.f32.gmra.mrb[0].mxu0 %v1314
  %v3253 = vpop.f32.mrb[0].mxu0
  %v3254 = vadd.f32 0.0, %v3253
  %v3255 = vpop.f32.mrb[0].mxu0
  %3256 = vmatprep.mubr.f32.mxu0 0.0
  %3257 = vmatmul.mubr.f32.gmra.mrb[0].mxu0 %v1317
  %v3258 = vpop.f32.mrb[0].mxu0
  %v3259 = vadd.f32 0.0, %v3258
  %v3260 = vpop.f32.mrb[0].mxu0
  %3261 = vmatprep.mubr.f32.mxu0 0.0
  %3262 = vmatmul.mubr.f32.gmra.mrb[0].mxu0 %v1320
  %v3263 = vpop.f32.mrb[0].mxu0
  %v3264 = vadd.f32 0.0, %v3263
  %v3265 = vpop.f32.mrb[0].mxu0
  %3266 = vmatprep.mubr.f32.mxu0 0.0
  %3267 = vmatmul.mubr.f32.gmra.mrb[0].mxu0 %v1323
  %v3268 = vpop.f32.mrb[0].mxu0
  %v3269 = vadd.f32 0.0, %v3268
  %v3270 = vpop.f32.mrb[0].mxu0
  %3271 = vmatprep.mubr.f32.mxu0 0.0
  %3272 = vmatmul.mubr.f32.gmra.mrb[0].mxu0 %v1326
  %v3273 = vpop.f32.mrb[0].mxu0
  %v3274 = vadd.f32 0.0, %v3273
  %v3275 = vpop.f32.mrb[0].mxu0
  %3276 = vmatprep.mubr.f32.mxu0 0.0
  %3277 = vmatmul.mubr.f32.gmra.mrb[0].mxu0 %v1329
  %v3278 = vpop.f32.mrb[0].mxu0
  %v3279 = vadd.f32 0.0, %v3278
  %v3280 = vpop.f32.mrb[0].mxu0
  %3281 = vmatprep.mubr.f32.mxu0 0.0
  %3282 = vmatmul.mubr.f32.gmra.mrb[0].mxu0 %v1332
  %v3283 = vpop.f32.mrb[0].mxu0
  %v3284 = vadd.f32 0.0, %v3283
  %v3285 = vpop.f32.mrb[0].mxu0
  %3286 = vmatprep.mubr.f32.mxu0 0.0
  %3287 = vmatmul.mubr.f32.gmra.mrb[0].mxu0 %v1335
  %v3288 = vpop.f32.mrb[0].mxu0
  %v3289 = vadd.f32 0.0, %v3288
  %v3290 = vpop.f32.mrb[0].mxu0
  %3291 = vmatprep.mubr.f32.mxu0 0.0
  %3292 = vmatmul.mubr.f32.gmra.mrb[0].mxu0 %v1338
  %v3293 = vpop.f32.mrb[0].mxu0
  %v3294 = vadd.f32 0.0, %v3293
  %v3295 = vpop.f32.mrb[0].mxu0
  %3296 = vmatprep.mubr.f32.mxu0 0.0
  %3297 = vmatmul.mubr.f32.gmra.mrb[0].mxu0 %v1341
  %v3298 = vpop.f32.mrb[0].mxu0
  %v3299 = vadd.f32 0.0, %v3298
  %v3300 = vpop.f32.mrb[0].mxu0
  %3301 = vmatprep.mubr.f32.mxu0 0.0
  %3302 = vmatmul.mubr.f32.gmra.mrb[0].mxu0 %v1344
  %v3303 = vpop.f32.mrb[0].mxu0
  %v3304 = vadd.f32 0.0, %v3303
  %v3305 = vpop.f32.mrb[0].mxu0
  %3306 = vmatprep.mubr.f32.mxu0 0.0
  %3307 = vmatmul.mubr.f32.gmra.mrb[0].mxu0 %v1347
  %v3308 = vpop.f32.mrb[0].mxu0
  %v3309 = vadd.f32 0.0, %v3308
  %v3310 = vpop.f32.mrb[0].mxu0
  %3311 = vmatprep.mubr.f32.mxu0 0.0
  %3312 = vmatmul.mubr.f32.gmra.mrb[0].mxu0 %v1350
  %v3313 = vpop.f32.mrb[0].mxu0
  %v3314 = vadd.f32 0.0, %v3313
  %v3315 = vpop.f32.mrb[0].mxu0
  %3316 = vmatprep.mubr.f32.mxu0 0.0
  %3317 = vmatmul.mubr.f32.gmra.mrb[0].mxu0 %v1353
  %v3318 = vpop.f32.mrb[0].mxu0
  %v3319 = vadd.f32 0.0, %v3318
  %v3320 = vpop.f32.mrb[0].mxu0
  %3321 = vmatprep.mubr.f32.mxu0 0.0
  %3322 = vmatmul.mubr.f32.gmra.mrb[0].mxu0 %v1356
  %v3323 = vpop.f32.mrb[0].mxu0
  %v3324 = vadd.f32 0.0, %v3323
  %v3325 = vpop.f32.mrb[0].mxu0
  %3326 = vmatprep.mubr.f32.mxu0 0.0
  %3327 = vmatmul.mubr.f32.gmra.mrb[0].mxu0 %v1359
  %v3328 = vpop.f32.mrb[0].mxu0
  %v3329 = vadd.f32 0.0, %v3328
  %v3330 = vpop.f32.mrb[0].mxu0
  %3331 = vmatprep.mubr.f32.mxu0 0.0
  %3332 = vmatmul.mubr.f32.gmra.mrb[0].mxu0 %v1362
  %v3333 = vpop.f32.mrb[0].mxu0
  %v3334 = vadd.f32 0.0, %v3333
  %v3335 = vpop.f32.mrb[0].mxu0
  %3336 = vmatprep.mubr.f32.mxu0 0.0
  %3337 = vmatmul.mubr.f32.gmra.mrb[0].mxu0 %v1365
  %v3338 = vpop.f32.mrb[0].mxu0
  %v3339 = vadd.f32 0.0, %v3338
  %v3340 = vpop.f32.mrb[0].mxu0
  %3341 = vmatprep.mubr.f32.mxu0 0.0
  %3342 = vmatmul.mubr.f32.gmra.mrb[0].mxu0 %v1368
  %v3343 = vpop.f32.mrb[0].mxu0
  %v3344 = vadd.f32 0.0, %v3343
  %v3345 = vpop.f32.mrb[0].mxu0
  %3346 = vmatprep.mubr.f32.mxu0 0.0
  %3347 = vmatmul.mubr.f32.gmra.mrb[0].mxu0 %v1371
  %v3348 = vpop.f32.mrb[0].mxu0
  %v3349 = vadd.f32 0.0, %v3348
  %v3350 = vpop.f32.mrb[0].mxu0
  %3351 = vmatprep.mubr.f32.mxu0 0.0
  %3352 = vmatmul.mubr.f32.gmra.mrb[0].mxu0 %v1374
  %v3353 = vpop.f32.mrb[0].mxu0
  %v3354 = vadd.f32 0.0, %v3353
  %v3355 = vpop.f32.mrb[0].mxu0
  %3356 = vmatprep.mubr.f32.mxu0 0.0
  %3357 = vmatmul.mubr.f32.gmra.mrb[0].mxu0 %v1377
  %v3358 = vpop.f32.mrb[0].mxu0
  %v3359 = vadd.f32 0.0, %v3358
  %v3360 = vpop.f32.mrb[0].mxu0
  %3361 = vmatprep.mubr.f32.mxu0 0.0
  %3362 = vmatmul.mubr.f32.gmra.mrb[0].mxu0 %v1380
  %v3363 = vpop.f32.mrb[0].mxu0
  %v3364 = vadd.f32 0.0, %v3363
  %v3365 = vpop.f32.mrb[0].mxu0
  %3366 = vmatprep.mubr.f32.mxu0 0.0
  %3367 = vmatmul.mubr.f32.gmra.mrb[0].mxu0 %v1383
  %v3368 = vpop.f32.mrb[0].mxu0
  %v3369 = vadd.f32 0.0, %v3368
  %v3370 = vpop.f32.mrb[0].mxu0
  %3371 = vmatprep.mubr.f32.mxu0 0.0
  %3372 = vmatmul.mubr.f32.gmra.mrb[0].mxu0 %v1386
  %v3373 = vpop.f32.mrb[0].mxu0
  %v3374 = vadd.f32 0.0, %v3373
  %v3375 = vpop.f32.mrb[0].mxu0
  %3376 = vmatprep.mubr.f32.mxu0 0.0
  %3377 = vmatmul.mubr.f32.gmra.mrb[0].mxu0 %v1389
  %v3378 = vpop.f32.mrb[0].mxu0
  %v3379 = vadd.f32 0.0, %v3378
  %v3380 = vpop.f32.mrb[0].mxu0
  %3381 = vmatprep.mubr.f32.mxu0 0.0
  %3382 = vmatmul.mubr.f32.gmra.mrb[0].mxu0 %v1392
  %v3383 = vpop.f32.mrb[0].mxu0
  %v3384 = vadd.f32 0.0, %v3383
  %v3385 = vpop.f32.mrb[0].mxu0
  %3386 = vmatprep.mubr.f32.mxu0 0.0
  %3387 = vmatmul.mubr.f32.gmra.mrb[0].mxu0 %v1395
  %v3388 = vpop.f32.mrb[0].mxu0
  %v3389 = vadd.f32 0.0, %v3388
  %v3390 = vpop.f32.mrb[0].mxu0
  %3391 = vmatprep.mubr.f32.mxu0 0.0
  %3392 = vmatmul.mubr.f32.gmra.mrb[0].mxu0 %v1398
  %v3393 = vpop.f32.mrb[0].mxu0
  %v3394 = vadd.f32 0.0, %v3393
  %v3395 = vpop.f32.mrb[0].mxu0
  %3396 = vmatprep.mubr.f32.mxu0 0.0
  %3397 = vmatmul.mubr.f32.gmra.mrb[0].mxu0 %v1401
  %v3398 = vpop.f32.mrb[0].mxu0
  %v3399 = vadd.f32 0.0, %v3398
  %v3400 = vpop.f32.mrb[0].mxu0
  %3401 = vmatprep.mubr.f32.mxu0 0.0
  %3402 = vmatmul.mubr.f32.gmra.mrb[0].mxu0 %v1404
  %v3403 = vpop.f32.mrb[0].mxu0
  %v3404 = vadd.f32 0.0, %v3403
  %v3405 = vpop.f32.mrb[0].mxu0
  %3406 = vmatprep.mubr.f32.mxu0 0.0
  %3407 = vmatmul.mubr.f32.gmra.mrb[0].mxu0 %v1407
  %v3408 = vpop.f32.mrb[0].mxu0
  %v3409 = vadd.f32 0.0, %v3408
  %v3410 = vpop.f32.mrb[0].mxu0
  %3411 = vmatprep.mubr.f32.mxu0 0.0
  %3412 = vmatmul.mubr.f32.gmra.mrb[0].mxu0 %v1410
  %v3413 = vpop.f32.mrb[0].mxu0
  %v3414 = vadd.f32 0.0, %v3413
  %v3415 = vpop.f32.mrb[0].mxu0
  %3416 = vmatprep.mubr.f32.mxu0 0.0
  %3417 = vmatmul.mubr.f32.gmra.mrb[0].mxu0 %v1413
  %v3418 = vpop.f32.mrb[0].mxu0
  %v3419 = vadd.f32 0.0, %v3418
  %v3420 = vpop.f32.mrb[0].mxu0
  %3421 = vmatprep.mubr.f32.mxu0 0.0
  %3422 = vmatmul.mubr.f32.gmra.mrb[0].mxu0 %v1416
  %v3423 = vpop.f32.mrb[0].mxu0
  %v3424 = vadd.f32 0.0, %v3423
  %v3425 = vpop.f32.mrb[0].mxu0
  %3426 = vmatprep.mubr.f32.mxu0 0.0
  %3427 = vmatmul.mubr.f32.gmra.mrb[0].mxu0 %v1419
  %v3428 = vpop.f32.mrb[0].mxu0
  %v3429 = vadd.f32 0.0, %v3428
  %v3430 = vpop.f32.mrb[0].mxu0
  %3431 = vmatprep.mubr.f32.mxu0 0.0
  %3432 = vmatmul.mubr.f32.gmra.mrb[0].mxu0 %v1422
  %v3433 = vpop.f32.mrb[0].mxu0
  %v3434 = vadd.f32 0.0, %v3433
  %v3435 = vpop.f32.mrb[0].mxu0
  %3436 = vmatprep.mubr.f32.mxu0 0.0
  %3437 = vmatmul.mubr.f32.gmra.mrb[0].mxu0 %v1425
  %v3438 = vpop.f32.mrb[0].mxu0
  %v3439 = vadd.f32 0.0, %v3438
  %v3440 = vpop.f32.mrb[0].mxu0
  %3441 = vmatprep.mubr.f32.mxu0 0.0
  %3442 = vmatmul.mubr.f32.gmra.mrb[0].mxu0 %v1428
  %v3443 = vpop.f32.mrb[0].mxu0
  %v3444 = vadd.f32 0.0, %v3443
  %v3445 = vpop.f32.mrb[0].mxu0
  %3446 = vmatprep.mubr.f32.mxu0 0.0
  %3447 = vmatmul.mubr.f32.gmra.mrb[0].mxu0 %v1431
  %v3448 = vpop.f32.mrb[0].mxu0
  %v3449 = vadd.f32 0.0, %v3448
  %v3450 = vpop.f32.mrb[0].mxu0
  %3451 = vmatprep.mubr.f32.mxu0 0.0
  %3452 = vmatmul.mubr.f32.gmra.mrb[0].mxu0 %v1434
  %v3453 = vpop.f32.mrb[0].mxu0
  %v3454 = vadd.f32 0.0, %v3453
  %v3455 = vpop.f32.mrb[0].mxu0
  %3456 = vmatprep.mubr.f32.mxu0 0.0
  %3457 = vmatmul.mubr.f32.gmra.mrb[0].mxu0 %v1437
  %v3458 = vpop.f32.mrb[0].mxu0
  %v3459 = vadd.f32 0.0, %v3458
  %v3460 = vpop.f32.mrb[0].mxu0
  %3461 = vmatprep.mubr.f32.mxu0 0.0
  %3462 = vmatmul.mubr.f32.gmra.mrb[0].mxu0 %v1440
  %v3463 = vpop.f32.mrb[0].mxu0
  %v3464 = vadd.f32 0.0, %v3463
  %v3465 = vpop.f32.mrb[0].mxu0
  %3466 = vmatprep.mubr.f32.mxu0 0.0
  %3467 = vmatmul.mubr.f32.gmra.mrb[0].mxu0 %v1443
  %v3468 = vpop.f32.mrb[0].mxu0
  %v3469 = vadd.f32 0.0, %v3468
  %v3470 = vpop.f32.mrb[0].mxu0
  %3471 = vmatprep.mubr.f32.mxu0 0.0
  %3472 = vmatmul.mubr.f32.gmra.mrb[0].mxu0 %v1446
  %v3473 = vpop.f32.mrb[0].mxu0
  %v3474 = vadd.f32 0.0, %v3473
  %v3475 = vpop.f32.mrb[0].mxu0
  %3476 = vmatprep.mubr.f32.mxu0 0.0
  %3477 = vmatmul.mubr.f32.gmra.mrb[0].mxu0 %v1449
  %v3478 = vpop.f32.mrb[0].mxu0
  %v3479 = vadd.f32 0.0, %v3478
  %v3480 = vpop.f32.mrb[0].mxu0
  %3481 = vmatprep.mubr.f32.mxu0 0.0
  %3482 = vmatmul.mubr.f32.gmra.mrb[0].mxu0 %v1452
  %v3483 = vpop.f32.mrb[0].mxu0
  %v3484 = vadd.f32 0.0, %v3483
  %v3485 = vpop.f32.mrb[0].mxu0
  %3486 = vmatprep.mubr.f32.mxu0 0.0
  %3487 = vmatmul.mubr.f32.gmra.mrb[0].mxu0 %v1455
  %v3488 = vpop.f32.mrb[0].mxu0
  %v3489 = vadd.f32 0.0, %v3488
  %v3490 = vpop.f32.mrb[0].mxu0
  %3491 = vmatprep.mubr.f32.mxu0 0.0
  %3492 = vmatmul.mubr.f32.gmra.mrb[0].mxu0 %v1458
  %v3493 = vpop.f32.mrb[0].mxu0
  %v3494 = vadd.f32 0.0, %v3493
  %v3495 = vpop.f32.mrb[0].mxu0
  %3496 = vmatprep.mubr.f32.mxu0 0.0
  %3497 = vmatmul.mubr.f32.gmra.mrb[0].mxu0 %v1461
  %v3498 = vpop.f32.mrb[0].mxu0
  %v3499 = vadd.f32 0.0, %v3498
  %v3500 = vpop.f32.mrb[0].mxu0
  %3501 = vmatprep.mubr.f32.mxu0 0.0
  %3502 = vmatmul.mubr.f32.gmra.mrb[0].mxu0 %v1464
  %v3503 = vpop.f32.mrb[0].mxu0
  %v3504 = vadd.f32 0.0, %v3503
  %v3505 = vpop.f32.mrb[0].mxu0
  %3506 = vmatprep.mubr.f32.mxu0 0.0
  %3507 = vmatmul.mubr.f32.gmra.mrb[0].mxu0 %v1467
  %v3508 = vpop.f32.mrb[0].mxu0
  %v3509 = vadd.f32 0.0, %v3508
  %v3510 = vpop.f32.mrb[0].mxu0
  %3511 = vmatprep.mubr.f32.mxu0 0.0
  %3512 = vmatmul.mubr.f32.gmra.mrb[0].mxu0 %v1470
  %v3513 = vpop.f32.mrb[0].mxu0
  %v3514 = vadd.f32 0.0, %v3513
  %v3515 = vpop.f32.mrb[0].mxu0
  %3516 = vmatprep.mubr.f32.mxu0 0.0
  %3517 = vmatmul.mubr.f32.gmra.mrb[0].mxu0 %v1473
  %v3518 = vpop.f32.mrb[0].mxu0
  %v3519 = vadd.f32 0.0, %v3518
  %v3520 = vpop.f32.mrb[0].mxu0
  %3521 = vmatprep.mubr.f32.mxu0 0.0
  %3522 = vmatmul.mubr.f32.gmra.mrb[0].mxu0 %v1476
  %v3523 = vpop.f32.mrb[0].mxu0
  %v3524 = vadd.f32 0.0, %v3523
  %v3525 = vpop.f32.mrb[0].mxu0
  %3526 = vmatprep.mubr.f32.mxu0 0.0
  %3527 = vmatmul.mubr.f32.gmra.mrb[0].mxu0 %v1479
  %v3528 = vpop.f32.mrb[0].mxu0
  %v3529 = vadd.f32 0.0, %v3528
  %v3530 = vpop.f32.mrb[0].mxu0
  %3531 = vmatprep.mubr.f32.mxu0 0.0
  %3532 = vmatmul.mubr.f32.gmra.mrb[0].mxu0 %v1482
  %v3533 = vpop.f32.mrb[0].mxu0
  %v3534 = vadd.f32 0.0, %v3533
  %v3535 = vpop.f32.mrb[0].mxu0
  %3536 = vmatprep.mubr.f32.mxu0 0.0
  %3537 = vmatmul.mubr.f32.gmra.mrb[0].mxu0 %v1485
  %v3538 = vpop.f32.mrb[0].mxu0
  %v3539 = vadd.f32 0.0, %v3538
  %v3540 = vpop.f32.mrb[0].mxu0
  %3541 = vmatprep.mubr.f32.mxu0 0.0
  %3542 = vmatmul.mubr.f32.gmra.mrb[0].mxu0 %v1488
  %v3543 = vpop.f32.mrb[0].mxu0
  %v3544 = vadd.f32 0.0, %v3543
  %v3545 = vpop.f32.mrb[0].mxu0
  %3546 = vmatprep.mubr.f32.mxu0 0.0
  %3547 = vmatmul.mubr.f32.gmra.mrb[0].mxu0 %v1491
  %v3548 = vpop.f32.mrb[0].mxu0
  %v3549 = vadd.f32 0.0, %v3548
  %v3550 = vpop.f32.mrb[0].mxu0
  %3551 = vmatprep.mubr.f32.mxu0 0.0
  %3552 = vmatmul.mubr.f32.gmra.mrb[0].mxu0 %v1494
  %v3553 = vpop.f32.mrb[0].mxu0
  %v3554 = vadd.f32 0.0, %v3553
  %v3555 = vpop.f32.mrb[0].mxu0
  %3556 = vmatprep.mubr.f32.mxu0 0.0
  %3557 = vmatmul.mubr.f32.gmra.mrb[0].mxu0 %v1497
  %v3558 = vpop.f32.mrb[0].mxu0
  %v3559 = vadd.f32 0.0, %v3558
  %v3560 = vpop.f32.mrb[0].mxu0
  %3561 = vmatprep.mubr.f32.mxu0 0.0
  %3562 = vmatmul.mubr.f32.gmra.mrb[0].mxu0 %v1500
  %v3563 = vpop.f32.mrb[0].mxu0
  %v3564 = vadd.f32 0.0, %v3563
  %v3565 = vpop.f32.mrb[0].mxu0
  %3566 = vmatprep.mubr.f32.mxu0 0.0
  %3567 = vmatmul.mubr.f32.gmra.mrb[0].mxu0 %v1503
  %v3568 = vpop.f32.mrb[0].mxu0
  %v3569 = vadd.f32 0.0, %v3568
  %v3570 = vpop.f32.mrb[0].mxu0
  %3571 = vmatprep.mubr.f32.mxu0 0.0
  %3572 = vmatmul.mubr.f32.gmra.mrb[0].mxu0 %v1506
  %v3573 = vpop.f32.mrb[0].mxu0
  %v3574 = vadd.f32 0.0, %v3573
  %v3575 = vpop.f32.mrb[0].mxu0
  %3576 = vmatprep.mubr.f32.mxu0 0.0
  %3577 = vmatmul.mubr.f32.gmra.mrb[0].mxu0 %v1509
  %v3578 = vpop.f32.mrb[0].mxu0
  %v3579 = vadd.f32 0.0, %v3578
  %v3580 = vpop.f32.mrb[0].mxu0
  %3581 = vmatprep.mubr.f32.mxu0 0.0
  %3582 = vmatmul.mubr.f32.gmra.mrb[0].mxu0 %v1512
  %v3583 = vpop.f32.mrb[0].mxu0
  %v3584 = vadd.f32 0.0, %v3583
  %v3585 = vpop.f32.mrb[0].mxu0
  %3586 = vmatprep.mubr.f32.mxu0 0.0
  %3587 = vmatmul.mubr.f32.gmra.mrb[0].mxu0 %v1515
  %v3588 = vpop.f32.mrb[0].mxu0
  %v3589 = vadd.f32 0.0, %v3588
  %v3590 = vpop.f32.mrb[0].mxu0
  %3591 = vmatprep.mubr.f32.mxu0 0.0
  %3592 = vmatmul.mubr.f32.gmra.mrb[0].mxu0 %v1518
  %v3593 = vpop.f32.mrb[0].mxu0
  %v3594 = vadd.f32 0.0, %v3593
  %v3595 = vpop.f32.mrb[0].mxu0
  %3596 = vmatprep.mubr.f32.mxu0 0.0
  %3597 = vmatmul.mubr.f32.gmra.mrb[0].mxu0 %v1521
  %v3598 = vpop.f32.mrb[0].mxu0
  %v3599 = vadd.f32 0.0, %v3598
  %v3600 = vpop.f32.mrb[0].mxu0
  %3601 = vmatprep.mubr.f32.mxu0 0.0
  %3602 = vmatmul.mubr.f32.gmra.mrb[0].mxu0 %v1524
  %v3603 = vpop.f32.mrb[0].mxu0
  %v3604 = vadd.f32 0.0, %v3603
  %v3605 = vpop.f32.mrb[0].mxu0
  %3606 = vmatprep.mubr.f32.mxu0 0.0
  %3607 = vmatmul.mubr.f32.gmra.mrb[0].mxu0 %v1527
  %v3608 = vpop.f32.mrb[0].mxu0
  %v3609 = vadd.f32 0.0, %v3608
  %v3610 = vpop.f32.mrb[0].mxu0
  %3611 = vmatprep.mubr.f32.mxu0 0.0
  %3612 = vmatmul.mubr.f32.gmra.mrb[0].mxu0 %v1530
  %v3613 = vpop.f32.mrb[0].mxu0
  %v3614 = vadd.f32 0.0, %v3613
  %v3615 = vpop.f32.mrb[0].mxu0
  %3616 = vmatprep.mubr.f32.mxu0 0.0
  %3617 = vmatmul.mubr.f32.gmra.mrb[0].mxu0 %v1533
  %v3618 = vpop.f32.mrb[0].mxu0
  %v3619 = vadd.f32 0.0, %v3618
  %v3620 = vpop.f32.mrb[0].mxu0
  %3621 = vmatprep.mubr.f32.mxu0 0.0
  %3622 = vmatmul.mubr.f32.gmra.mrb[0].mxu0 %v1536
  %v3623 = vpop.f32.mrb[0].mxu0
  %v3624 = vadd.f32 0.0, %v3623
  %v3625 = vpop.f32.mrb[0].mxu0
  %3626 = vmatprep.mubr.f32.mxu0 0.0
  %3627 = vmatmul.mubr.f32.gmra.mrb[0].mxu0 %v1539
  %v3628 = vpop.f32.mrb[0].mxu0
  %v3629 = vadd.f32 0.0, %v3628
  %v3630 = vpop.f32.mrb[0].mxu0
  %3631 = vmatprep.mubr.f32.mxu0 0.0
  %3632 = vmatmul.mubr.f32.gmra.mrb[0].mxu0 %v1542
  %v3633 = vpop.f32.mrb[0].mxu0
  %v3634 = vadd.f32 0.0, %v3633
  %v3635 = vpop.f32.mrb[0].mxu0
  %3636 = vmatprep.mubr.f32.mxu0 0.0
  %3637 = vmatmul.mubr.f32.gmra.mrb[0].mxu0 %v1545
  %v3638 = vpop.f32.mrb[0].mxu0
  %v3639 = vadd.f32 0.0, %v3638
  %v3640 = vpop.f32.mrb[0].mxu0
  %3641 = vmatprep.mubr.f32.mxu0 0.0
  %3642 = vmatmul.mubr.f32.gmra.mrb[0].mxu0 %v1548
  %v3643 = vpop.f32.mrb[0].mxu0
  %v3644 = vadd.f32 0.0, %v3643
  %v3645 = vpop.f32.mrb[0].mxu0
  %3646 = vmatprep.mubr.f32.mxu0 0.0
  %3647 = vmatmul.mubr.f32.gmra.mrb[0].mxu0 %v1551
  %v3648 = vpop.f32.mrb[0].mxu0
  %v3649 = vadd.f32 0.0, %v3648
  %v3650 = vpop.f32.mrb[0].mxu0
  %3651 = vmatprep.mubr.f32.mxu0 0.0
  %3652 = vmatmul.mubr.f32.gmra.mrb[0].mxu0 %v1554
  %v3653 = vpop.f32.mrb[0].mxu0
  %v3654 = vadd.f32 0.0, %v3653
  %v3655 = vpop.f32.mrb[0].mxu0
  %3656 = vmatprep.mubr.f32.mxu0 0.0
  %3657 = vmatmul.mubr.f32.gmra.mrb[0].mxu0 %v1557
  %v3658 = vpop.f32.mrb[0].mxu0
  %v3659 = vadd.f32 0.0, %v3658
  %v3660 = vpop.f32.mrb[0].mxu0
  %3661 = vmatprep.mubr.f32.mxu0 0.0
  %3662 = vmatmul.mubr.f32.gmra.mrb[0].mxu0 %v1560
  %v3663 = vpop.f32.mrb[0].mxu0
  %v3664 = vadd.f32 0.0, %v3663
  %v3665 = vpop.f32.mrb[0].mxu0
  %3666 = vmatprep.mubr.f32.mxu0 0.0
  %3667 = vmatmul.mubr.f32.gmra.mrb[0].mxu0 %v1563
  %v3668 = vpop.f32.mrb[0].mxu0
  %v3669 = vadd.f32 0.0, %v3668
  %v3670 = vpop.f32.mrb[0].mxu0
  %3671 = vmatprep.mubr.f32.mxu0 0.0
  %3672 = vmatmul.mubr.f32.gmra.mrb[0].mxu0 %v1566
  %v3673 = vpop.f32.mrb[0].mxu0
  %v3674 = vadd.f32 0.0, %v3673
  %v3675 = vpop.f32.mrb[0].mxu0
  %3676 = vmatprep.mubr.f32.mxu0 0.0
  %3677 = vmatmul.mubr.f32.gmra.mrb[0].mxu0 %v1569
  %v3678 = vpop.f32.mrb[0].mxu0
  %v3679 = vadd.f32 0.0, %v3678
  %v3680 = vpop.f32.mrb[0].mxu0
  %3681 = vmatprep.mubr.f32.mxu0 0.0
  %3682 = vmatmul.mubr.f32.gmra.mrb[0].mxu0 %v1572
  %v3683 = vpop.f32.mrb[0].mxu0
  %v3684 = vadd.f32 0.0, %v3683
  %v3685 = vpop.f32.mrb[0].mxu0
  %3686 = vmatprep.mubr.f32.mxu0 0.0
  %3687 = vmatmul.mubr.f32.gmra.mrb[0].mxu0 %v1575
  %v3688 = vpop.f32.mrb[0].mxu0
  %v3689 = vadd.f32 0.0, %v3688
  %v3690 = vpop.f32.mrb[0].mxu0
  %3691 = vmatprep.mubr.f32.mxu0 0.0
  %3692 = vmatmul.mubr.f32.gmra.mrb[0].mxu0 %v1578
  %v3693 = vpop.f32.mrb[0].mxu0
  %v3694 = vadd.f32 0.0, %v3693
  %v3695 = vpop.f32.mrb[0].mxu0
  %3696 = vmatprep.mubr.f32.mxu0 0.0
  %3697 = vmatmul.mubr.f32.gmra.mrb[0].mxu0 %v1581
  %v3698 = vpop.f32.mrb[0].mxu0
  %v3699 = vadd.f32 0.0, %v3698
  %v3700 = vpop.f32.mrb[0].mxu0
  %3701 = vmatprep.mubr.f32.mxu0 0.0
  %3702 = vmatmul.mubr.f32.gmra.mrb[0].mxu0 %v1584
  %v3703 = vpop.f32.mrb[0].mxu0
  %v3704 = vadd.f32 0.0, %v3703
  %v3705 = vpop.f32.mrb[0].mxu0
  %3706 = vmatprep.mubr.f32.mxu0 0.0
  %3707 = vmatmul.mubr.f32.gmra.mrb[0].mxu0 %v1587
  %v3708 = vpop.f32.mrb[0].mxu0
  %v3709 = vadd.f32 0.0, %v3708
  %v3710 = vpop.f32.mrb[0].mxu0
  %3711 = vmatprep.mubr.f32.mxu0 0.0
  %3712 = vmatmul.mubr.f32.gmra.mrb[0].mxu0 %v1590
  %v3713 = vpop.f32.mrb[0].mxu0
  %v3714 = vadd.f32 0.0, %v3713
  %v3715 = vpop.f32.mrb[0].mxu0
  %3716 = vmatprep.mubr.f32.mxu0 0.0
  %3717 = vmatmul.mubr.f32.gmra.mrb[0].mxu0 %v1593
  %v3718 = vpop.f32.mrb[0].mxu0
  %v3719 = vadd.f32 0.0, %v3718
  %v3720 = vpop.f32.mrb[0].mxu0
  %3721 = vmatprep.mubr.f32.mxu0 0.0
  %3722 = vmatmul.mubr.f32.gmra.mrb[0].mxu0 %v1596
  %v3723 = vpop.f32.mrb[0].mxu0
  %v3724 = vadd.f32 0.0, %v3723
  %v3725 = vpop.f32.mrb[0].mxu0
  %3726 = vmatprep.mubr.f32.mxu0 0.0
  %3727 = vmatmul.mubr.f32.gmra.mrb[0].mxu0 %v1599
  %v3728 = vpop.f32.mrb[0].mxu0
  %v3729 = vadd.f32 0.0, %v3728
  %v3730 = vpop.f32.mrb[0].mxu0
  %3731 = vmatprep.mubr.f32.mxu0 0.0
  %3732 = vmatmul.mubr.f32.gmra.mrb[0].mxu0 %v1602
  %v3733 = vpop.f32.mrb[0].mxu0
  %v3734 = vadd.f32 0.0, %v3733
  %v3735 = vpop.f32.mrb[0].mxu0
  %3736 = vmatprep.mubr.f32.mxu0 0.0
  %3737 = vmatmul.mubr.f32.gmra.mrb[0].mxu0 %v1605
  %v3738 = vpop.f32.mrb[0].mxu0
  %v3739 = vadd.f32 0.0, %v3738
  %v3740 = vpop.f32.mrb[0].mxu0
  %3741 = vmatprep.mubr.f32.mxu0 0.0
  %3742 = vmatmul.mubr.f32.gmra.mrb[0].mxu0 %v1608
  %v3743 = vpop.f32.mrb[0].mxu0
  %v3744 = vadd.f32 0.0, %v3743
  %v3745 = vpop.f32.mrb[0].mxu0
  %3746 = vmatprep.mubr.f32.mxu0 0.0
  %3747 = vmatmul.mubr.f32.gmra.mrb[0].mxu0 %v1611
  %v3748 = vpop.f32.mrb[0].mxu0
  %v3749 = vadd.f32 0.0, %v3748
  %v3750 = vpop.f32.mrb[0].mxu0
  %3751 = vmatprep.mubr.f32.mxu0 0.0
  %3752 = vmatmul.mubr.f32.gmra.mrb[0].mxu0 %v1614
  %v3753 = vpop.f32.mrb[0].mxu0
  %v3754 = vadd.f32 0.0, %v3753
  %v3755 = vpop.f32.mrb[0].mxu0
  %3756 = vmatprep.mubr.f32.mxu0 0.0
  %3757 = vmatmul.mubr.f32.gmra.mrb[0].mxu0 %v1617
  %v3758 = vpop.f32.mrb[0].mxu0
  %v3759 = vadd.f32 0.0, %v3758
  %v3760 = vpop.f32.mrb[0].mxu0
  %3761 = vmatprep.mubr.f32.mxu0 0.0
  %3762 = vmatmul.mubr.f32.gmra.mrb[0].mxu0 %v1620
  %v3763 = vpop.f32.mrb[0].mxu0
  %v3764 = vadd.f32 0.0, %v3763
  %v3765 = vpop.f32.mrb[0].mxu0
  %3766 = vmatprep.mubr.f32.mxu0 0.0
  %3767 = vmatmul.mubr.f32.gmra.mrb[0].mxu0 %v1623
  %v3768 = vpop.f32.mrb[0].mxu0
  %v3769 = vadd.f32 0.0, %v3768
  %v3770 = vpop.f32.mrb[0].mxu0
  %3771 = vmatprep.mubr.f32.mxu0 0.0
  %3772 = vmatmul.mubr.f32.gmra.mrb[0].mxu0 %v1626
  %v3773 = vpop.f32.mrb[0].mxu0
  %v3774 = vadd.f32 0.0, %v3773
  %v3775 = vpop.f32.mrb[0].mxu0
  %3776 = vmatprep.mubr.f32.mxu0 0.0
  %3777 = vmatmul.mubr.f32.gmra.mrb[0].mxu0 %v1629
  %v3778 = vpop.f32.mrb[0].mxu0
  %v3779 = vadd.f32 0.0, %v3778
  %v3780 = vpop.f32.mrb[0].mxu0
  %3781 = vmatprep.mubr.f32.mxu0 0.0
  %3782 = vmatmul.mubr.f32.gmra.mrb[0].mxu0 %v1632
  %v3783 = vpop.f32.mrb[0].mxu0
  %v3784 = vadd.f32 0.0, %v3783
  %v3785 = vpop.f32.mrb[0].mxu0
  %3786 = vmatprep.mubr.f32.mxu0 0.0
  %3787 = vmatmul.mubr.f32.gmra.mrb[0].mxu0 %v1635
  %v3788 = vpop.f32.mrb[0].mxu0
  %v3789 = vadd.f32 0.0, %v3788
  %v3790 = vpop.f32.mrb[0].mxu0
  %3791 = vmatprep.mubr.f32.mxu0 0.0
  %3792 = vmatmul.mubr.f32.gmra.mrb[0].mxu0 %v1638
  %v3793 = vpop.f32.mrb[0].mxu0
  %v3794 = vadd.f32 0.0, %v3793
  %v3795 = vpop.f32.mrb[0].mxu0
  %3796 = vmatprep.mubr.f32.mxu0 0.0
  %3797 = vmatmul.mubr.f32.gmra.mrb[0].mxu0 %v1641
  %v3798 = vpop.f32.mrb[0].mxu0
  %v3799 = vadd.f32 0.0, %v3798
  %v3800 = vpop.f32.mrb[0].mxu0
  %3801 = vmatprep.mubr.f32.mxu0 0.0
  %3802 = vmatmul.mubr.f32.gmra.mrb[0].mxu0 %v1644
  %v3803 = vpop.f32.mrb[0].mxu0
  %v3804 = vadd.f32 0.0, %v3803
  %v3805 = vpop.f32.mrb[0].mxu0
  %3806 = vmatprep.mubr.f32.mxu0 0.0
  %3807 = vmatmul.mubr.f32.gmra.mrb[0].mxu0 %v1647
  %v3808 = vpop.f32.mrb[0].mxu0
  %v3809 = vadd.f32 0.0, %v3808
  %v3810 = vpop.f32.mrb[0].mxu0
  %3811 = vmatprep.mubr.f32.mxu0 0.0
  %3812 = vmatmul.mubr.f32.gmra.mrb[0].mxu0 %v1650
  %v3813 = vpop.f32.mrb[0].mxu0
  %v3814 = vadd.f32 0.0, %v3813
  %v3815 = vpop.f32.mrb[0].mxu0
  %3816 = vmatprep.mubr.f32.mxu0 0.0
  %3817 = vmatmul.mubr.f32.gmra.mrb[0].mxu0 %v1653
  %v3818 = vpop.f32.mrb[0].mxu0
  %v3819 = vadd.f32 0.0, %v3818
  %v3820 = vpop.f32.mrb[0].mxu0
  %3821 = vmatprep.mubr.f32.mxu0 0.0
  %3822 = vmatmul.mubr.f32.gmra.mrb[0].mxu0 %v1656
  %v3823 = vpop.f32.mrb[0].mxu0
  %v3824 = vadd.f32 0.0, %v3823
  %v3825 = vpop.f32.mrb[0].mxu0
  %3826 = vmatprep.mubr.f32.mxu0 0.0
  %3827 = vmatmul.mubr.f32.gmra.mrb[0].mxu0 %v1659
  %v3828 = vpop.f32.mrb[0].mxu0
  %v3829 = vadd.f32 0.0, %v3828
  %v3830 = vpop.f32.mrb[0].mxu0
  %3831 = vmatprep.mubr.f32.mxu0 0.0
  %3832 = vmatmul.mubr.f32.gmra.mrb[0].mxu0 %v1662
  %v3833 = vpop.f32.mrb[0].mxu0
  %v3834 = vadd.f32 0.0, %v3833
  %v3835 = vpop.f32.mrb[0].mxu0
  %3836 = vmatprep.mubr.f32.mxu0 0.0
  %3837 = vmatmul.mubr.f32.gmra.mrb[0].mxu0 %v1665
  %v3838 = vpop.f32.mrb[0].mxu0
  %v3839 = vadd.f32 0.0, %v3838
  %v3840 = vpop.f32.mrb[0].mxu0
  %3841 = vmatprep.mubr.f32.mxu0 0.0
  %3842 = vmatmul.mubr.f32.gmra.mrb[0].mxu0 %v1668
  %v3843 = vpop.f32.mrb[0].mxu0
  %v3844 = vadd.f32 0.0, %v3843
  %v3845 = vpop.f32.mrb[0].mxu0
  %3846 = vmatprep.mubr.f32.mxu0 0.0
  %3847 = vmatmul.mubr.f32.gmra.mrb[0].mxu0 %v1671
  %v3848 = vpop.f32.mrb[0].mxu0
  %v3849 = vadd.f32 0.0, %v3848
  %v3850 = vpop.f32.mrb[0].mxu0
  %3851 = vmatprep.mubr.f32.mxu0 0.0
  %3852 = vmatmul.mubr.f32.gmra.mrb[0].mxu0 %v1674
  %v3853 = vpop.f32.mrb[0].mxu0
  %v3854 = vadd.f32 0.0, %v3853
  %v3855 = vpop.f32.mrb[0].mxu0
  %3856 = vmatprep.mubr.f32.mxu0 0.0
  %3857 = vmatmul.mubr.f32.gmra.mrb[0].mxu0 %v1677
  %v3858 = vpop.f32.mrb[0].mxu0
  %v3859 = vadd.f32 0.0, %v3858
  %v3860 = vpop.f32.mrb[0].mxu0
  %3861 = vmatprep.mubr.f32.mxu0 0.0
  %3862 = vmatmul.mubr.f32.gmra.mrb[0].mxu0 %v1680
  %v3863 = vpop.f32.mrb[0].mxu0
  %v3864 = vadd.f32 0.0, %v3863
  %v3865 = vpop.f32.mrb[0].mxu0
  %3866 = vmatprep.mubr.f32.mxu0 0.0
  %3867 = vmatmul.mubr.f32.gmra.mrb[0].mxu0 %v1683
  %v3868 = vpop.f32.mrb[0].mxu0
  %v3869 = vadd.f32 0.0, %v3868
  %v3870 = vpop.f32.mrb[0].mxu0
  %3871 = vmatprep.mubr.f32.mxu0 0.0
  %3872 = vmatmul.mubr.f32.gmra.mrb[0].mxu0 %v1686
  %v3873 = vpop.f32.mrb[0].mxu0
  %v3874 = vadd.f32 0.0, %v3873
  %v3875 = vpop.f32.mrb[0].mxu0
  %3876 = vmatprep.mubr.f32.mxu0 0.0
  %3877 = vmatmul.mubr.f32.gmra.mrb[0].mxu0 %v1689
  %v3878 = vpop.f32.mrb[0].mxu0
  %v3879 = vadd.f32 0.0, %v3878
  %v3880 = vpop.f32.mrb[0].mxu0
  %3881 = vmatprep.mubr.f32.mxu0 0.0
  %3882 = vmatmul.mubr.f32.gmra.mrb[0].mxu0 %v1692
  %v3883 = vpop.f32.mrb[0].mxu0
  %v3884 = vadd.f32 0.0, %v3883
  %v3885 = vpop.f32.mrb[0].mxu0
  %3886 = vmatprep.mubr.f32.mxu0 0.0
  %3887 = vmatmul.mubr.f32.gmra.mrb[0].mxu0 %v1695
  %v3888 = vpop.f32.mrb[0].mxu0
  %v3889 = vadd.f32 0.0, %v3888
  %v3890 = vpop.f32.mrb[0].mxu0
  %3891 = vmatprep.mubr.f32.mxu0 0.0
  %3892 = vmatmul.mubr.f32.gmra.mrb[0].mxu0 %v1698
  %v3893 = vpop.f32.mrb[0].mxu0
  %v3894 = vadd.f32 0.0, %v3893
  %v3895 = vpop.f32.mrb[0].mxu0
  %3896 = vmatprep.mubr.f32.mxu0 0.0
  %3897 = vmatmul.mubr.f32.gmra.mrb[0].mxu0 %v1701
  %v3898 = vpop.f32.mrb[0].mxu0
  %v3899 = vadd.f32 0.0, %v3898
  %v3900 = vpop.f32.mrb[0].mxu0
  %3901 = vmatprep.mubr.f32.mxu0 0.0
  %3902 = vmatmul.mubr.f32.gmra.mrb[0].mxu0 %v1704
  %v3903 = vpop.f32.mrb[0].mxu0
  %v3904 = vadd.f32 0.0, %v3903
  %v3905 = vpop.f32.mrb[0].mxu0
  %3906 = vmatprep.mubr.f32.mxu0 0.0
  %3907 = vmatmul.mubr.f32.gmra.mrb[0].mxu0 %v1707
  %v3908 = vpop.f32.mrb[0].mxu0
  %v3909 = vadd.f32 0.0, %v3908
  %v3910 = vpop.f32.mrb[0].mxu0
  %3911 = vmatprep.mubr.f32.mxu0 0.0
  %3912 = vmatmul.mubr.f32.gmra.mrb[0].mxu0 %v1710
  %v3913 = vpop.f32.mrb[0].mxu0
  %v3914 = vadd.f32 0.0, %v3913
  %v3915 = vpop.f32.mrb[0].mxu0
  %3916 = vmatprep.mubr.f32.mxu0 0.0
  %3917 = vmatmul.mubr.f32.gmra.mrb[0].mxu0 %v1713
  %v3918 = vpop.f32.mrb[0].mxu0
  %v3919 = vadd.f32 0.0, %v3918
  %v3920 = vpop.f32.mrb[0].mxu0
  %3921 = vmatprep.mubr.f32.mxu0 0.0
  %3922 = vmatmul.mubr.f32.gmra.mrb[0].mxu0 %v1716
  %v3923 = vpop.f32.mrb[0].mxu0
  %v3924 = vadd.f32 0.0, %v3923
  %v3925 = vpop.f32.mrb[0].mxu0
  %3926 = vmatprep.mubr.f32.mxu0 0.0
  %3927 = vmatmul.mubr.f32.gmra.mrb[0].mxu0 %v1719
  %v3928 = vpop.f32.mrb[0].mxu0
  %v3929 = vadd.f32 0.0, %v3928
  %v3930 = vpop.f32.mrb[0].mxu0
  %3931 = vmatprep.mubr.f32.mxu0 0.0
  %3932 = vmatmul.mubr.f32.gmra.mrb[0].mxu0 %v1722
  %v3933 = vpop.f32.mrb[0].mxu0
  %v3934 = vadd.f32 0.0, %v3933
  %v3935 = vpop.f32.mrb[0].mxu0
  %3936 = vmatprep.mubr.f32.mxu0 0.0
  %3937 = vmatmul.mubr.f32.gmra.mrb[0].mxu0 %v1725
  %v3938 = vpop.f32.mrb[0].mxu0
  %v3939 = vadd.f32 0.0, %v3938
  %v3940 = vpop.f32.mrb[0].mxu0
  %3941 = vmatprep.mubr.f32.mxu0 0.0
  %3942 = vmatmul.mubr.f32.gmra.mrb[0].mxu0 %v1728
  %v3943 = vpop.f32.mrb[0].mxu0
  %v3944 = vadd.f32 0.0, %v3943
  %v3945 = vpop.f32.mrb[0].mxu0
  %3946 = vmatprep.mubr.f32.mxu0 0.0
  %3947 = vmatmul.mubr.f32.gmra.mrb[0].mxu0 %v1731
  %v3948 = vpop.f32.mrb[0].mxu0
  %v3949 = vadd.f32 0.0, %v3948
  %v3950 = vpop.f32.mrb[0].mxu0
  %3951 = vmatprep.mubr.f32.mxu0 0.0
  %3952 = vmatmul.mubr.f32.gmra.mrb[0].mxu0 %v1734
  %v3953 = vpop.f32.mrb[0].mxu0
  %v3954 = vadd.f32 0.0, %v3953
  %v3955 = vpop.f32.mrb[0].mxu0
  %3956 = vmatprep.mubr.f32.mxu0 0.0
  %3957 = vmatmul.mubr.f32.gmra.mrb[0].mxu0 %v1737
  %v3958 = vpop.f32.mrb[0].mxu0
  %v3959 = vadd.f32 0.0, %v3958
  %v3960 = vpop.f32.mrb[0].mxu0
  %3961 = vmatprep.mubr.f32.mxu0 0.0
  %3962 = vmatmul.mubr.f32.gmra.mrb[0].mxu0 %v1740
  %v3963 = vpop.f32.mrb[0].mxu0
  %v3964 = vadd.f32 0.0, %v3963
  %v3965 = vpop.f32.mrb[0].mxu0
  %3966 = vmatprep.mubr.f32.mxu0 0.0
  %3967 = vmatmul.mubr.f32.gmra.mrb[0].mxu0 %v1743
  %v3968 = vpop.f32.mrb[0].mxu0
  %v3969 = vadd.f32 0.0, %v3968
  %v3970 = vpop.f32.mrb[0].mxu0
  %3971 = vmatprep.mubr.f32.mxu0 0.0
  %3972 = vmatmul.mubr.f32.gmra.mrb[0].mxu0 %v1746
  %v3973 = vpop.f32.mrb[0].mxu0
  %v3974 = vadd.f32 0.0, %v3973
  %v3975 = vpop.f32.mrb[0].mxu0
  %3976 = vmatprep.mubr.f32.mxu0 0.0
  %3977 = vmatmul.mubr.f32.gmra.mrb[0].mxu0 %v1749
  %v3978 = vpop.f32.mrb[0].mxu0
  %v3979 = vadd.f32 0.0, %v3978
  %v3980 = vpop.f32.mrb[0].mxu0
  %3981 = vmatprep.mubr.f32.mxu0 0.0
  %3982 = vmatmul.mubr.f32.gmra.mrb[0].mxu0 %v1752
  %v3983 = vpop.f32.mrb[0].mxu0
  %v3984 = vadd.f32 0.0, %v3983
  %v3985 = vpop.f32.mrb[0].mxu0
  %3986 = vmatprep.mubr.f32.mxu0 0.0
  %3987 = vmatmul.mubr.f32.gmra.mrb[0].mxu0 %v1755
  %v3988 = vpop.f32.mrb[0].mxu0
  %v3989 = vadd.f32 0.0, %v3988
  %v3990 = vpop.f32.mrb[0].mxu0
  %3991 = vmatprep.mubr.f32.mxu0 0.0
  %3992 = vmatmul.mubr.f32.gmra.mrb[0].mxu0 %v1758
  %v3993 = vpop.f32.mrb[0].mxu0
  %v3994 = vadd.f32 0.0, %v3993
  %v3995 = vpop.f32.mrb[0].mxu0
  %3996 = vmatprep.mubr.f32.mxu0 0.0
  %3997 = vmatmul.mubr.f32.gmra.mrb[0].mxu0 %v1761
  %v3998 = vpop.f32.mrb[0].mxu0
  %v3999 = vadd.f32 0.0, %v3998
  %v4000 = vpop.f32.mrb[0].mxu0
  %4001 = vmatprep.mubr.f32.mxu0 0.0
  %4002 = vmatmul.mubr.f32.gmra.mrb[0].mxu0 %v1764
  %v4003 = vpop.f32.mrb[0].mxu0
  %v4004 = vadd.f32 0.0, %v4003
  %v4005 = vpop.f32.mrb[0].mxu0
  %4006 = vmatprep.mubr.f32.mxu0 0.0
  %4007 = vmatmul.mubr.f32.gmra.mrb[0].mxu0 %v1767
  %v4008 = vpop.f32.mrb[0].mxu0
  %v4009 = vadd.f32 0.0, %v4008
  %v4010 = vpop.f32.mrb[0].mxu0
  %4011 = vmatprep.mubr.f32.mxu0 0.0
  %4012 = vmatmul.mubr.f32.gmra.mrb[0].mxu0 %v1770
  %v4013 = vpop.f32.mrb[0].mxu0
  %v4014 = vadd.f32 0.0, %v4013
  %v4015 = vpop.f32.mrb[0].mxu0
  %4016 = vmatprep.mubr.f32.mxu0 0.0
  %4017 = vmatmul.mubr.f32.gmra.mrb[0].mxu0 %v1773
  %v4018 = vpop.f32.mrb[0].mxu0
  %v4019 = vadd.f32 0.0, %v4018
  %v4020 = vpop.f32.mrb[0].mxu0
  %4021 = vmatprep.mubr.f32.mxu0 0.0
  %4022 = vmatmul.mubr.f32.gmra.mrb[0].mxu0 %v1776
  %v4023 = vpop.f32.mrb[0].mxu0
  %v4024 = vadd.f32 0.0, %v4023
  %v4025 = vpop.f32.mrb[0].mxu0
  %4026 = vmatprep.mubr.f32.mxu0 0.0
  %4027 = vmatmul.mubr.f32.gmra.mrb[0].mxu0 %v1779
  %v4028 = vpop.f32.mrb[0].mxu0
  %v4029 = vadd.f32 0.0, %v4028
  %v4030 = vpop.f32.mrb[0].mxu0
  %4031 = vmatprep.mubr.f32.mxu0 0.0
  %4032 = vmatmul.mubr.f32.gmra.mrb[0].mxu0 %v1782
  %v4033 = vpop.f32.mrb[0].mxu0
  %v4034 = vadd.f32 0.0, %v4033
  %v4035 = vpop.f32.mrb[0].mxu0
  %4036 = vmatprep.mubr.f32.mxu0 0.0
  %4037 = vmatmul.mubr.f32.gmra.mrb[0].mxu0 %v1785
  %v4038 = vpop.f32.mrb[0].mxu0
  %v4039 = vadd.f32 0.0, %v4038
  %v4040 = vpop.f32.mrb[0].mxu0
  %4041 = vmatprep.mubr.f32.mxu0 0.0
  %4042 = vmatmul.mubr.f32.gmra.mrb[0].mxu0 %v1788
  %v4043 = vpop.f32.mrb[0].mxu0
  %v4044 = vadd.f32 0.0, %v4043
  %v4045 = vpop.f32.mrb[0].mxu0
  %4046 = vmatprep.mubr.f32.mxu0 0.0
  %4047 = vmatmul.mubr.f32.gmra.mrb[0].mxu0 %v1791
  %v4048 = vpop.f32.mrb[0].mxu0
  %v4049 = vadd.f32 0.0, %v4048
  %v4050 = vpop.f32.mrb[0].mxu0
  %4051 = vmatprep.mubr.f32.mxu0 0.0
  %4052 = vmatmul.mubr.f32.gmra.mrb[0].mxu0 %v1794
  %v4053 = vpop.f32.mrb[0].mxu0
  %v4054 = vadd.f32 0.0, %v4053
  %v4055 = vpop.f32.mrb[0].mxu0
  %4056 = vmatprep.mubr.f32.mxu0 0.0
  %4057 = vmatmul.mubr.f32.gmra.mrb[0].mxu0 %v1797
  %v4058 = vpop.f32.mrb[0].mxu0
  %v4059 = vadd.f32 0.0, %v4058
  %v4060 = vpop.f32.mrb[0].mxu0
  %4061 = vmatprep.mubr.f32.mxu0 0.0
  %4062 = vmatmul.mubr.f32.gmra.mrb[0].mxu0 %v1800
  %v4063 = vpop.f32.mrb[0].mxu0
  %v4064 = vadd.f32 0.0, %v4063
  %v4065 = vpop.f32.mrb[0].mxu0
  %4066 = vmatprep.mubr.f32.mxu0 0.0
  %4067 = vmatmul.mubr.f32.gmra.mrb[0].mxu0 %v1803
  %v4068 = vpop.f32.mrb[0].mxu0
  %v4069 = vadd.f32 0.0, %v4068
  %v4070 = vpop.f32.mrb[0].mxu0
  %4071 = vmatprep.mubr.f32.mxu0 0.0
  %4072 = vmatmul.mubr.f32.gmra.mrb[0].mxu0 %v1806
  %v4073 = vpop.f32.mrb[0].mxu0
  %v4074 = vadd.f32 0.0, %v4073
  %v4075 = vpop.f32.mrb[0].mxu0
  %4076 = vmatprep.mubr.f32.mxu0 0.0
  %4077 = vmatmul.mubr.f32.gmra.mrb[0].mxu0 %v1809
  %v4078 = vpop.f32.mrb[0].mxu0
  %v4079 = vadd.f32 0.0, %v4078
  %v4080 = vpop.f32.mrb[0].mxu0
  %4081 = vmatprep.mubr.f32.mxu0 0.0
  %4082 = vmatmul.mubr.f32.gmra.mrb[0].mxu0 %v1812
  %v4083 = vpop.f32.mrb[0].mxu0
  %v4084 = vadd.f32 0.0, %v4083
  %v4085 = vpop.f32.mrb[0].mxu0
  %4086 = vmatprep.mubr.f32.mxu0 0.0
  %4087 = vmatmul.mubr.f32.gmra.mrb[0].mxu0 %v1815
  %v4088 = vpop.f32.mrb[0].mxu0
  %v4089 = vadd.f32 0.0, %v4088
  %v4090 = vpop.f32.mrb[0].mxu0
  %4091 = vmatprep.mubr.f32.mxu0 0.0
  %4092 = vmatmul.mubr.f32.gmra.mrb[0].mxu0 %v1818
  %v4093 = vpop.f32.mrb[0].mxu0
  %v4094 = vadd.f32 0.0, %v4093
  %v4095 = vpop.f32.mrb[0].mxu0
  %4096 = vmatprep.mubr.f32.mxu0 0.0
  %4097 = vmatmul.mubr.f32.gmra.mrb[0].mxu0 %v1821
  %v4098 = vpop.f32.mrb[0].mxu0
  %v4099 = vadd.f32 0.0, %v4098
  %v4100 = vpop.f32.mrb[0].mxu0
  %4101 = vmatprep.mubr.f32.mxu0 0.0
  %4102 = vmatmul.mubr.f32.gmra.mrb[0].mxu0 %v1824
  %v4103 = vpop.f32.mrb[0].mxu0
  %v4104 = vadd.f32 0.0, %v4103
  %v4105 = vpop.f32.mrb[0].mxu0
  %4106 = vmatprep.mubr.f32.mxu0 0.0
  %4107 = vmatmul.mubr.f32.gmra.mrb[0].mxu0 %v1827
  %v4108 = vpop.f32.mrb[0].mxu0
  %v4109 = vadd.f32 0.0, %v4108
  %v4110 = vpop.f32.mrb[0].mxu0
  %4111 = vmatprep.mubr.f32.mxu0 0.0
  %4112 = vmatmul.mubr.f32.gmra.mrb[0].mxu0 %v1830
  %v4113 = vpop.f32.mrb[0].mxu0
  %v4114 = vadd.f32 0.0, %v4113
  %v4115 = vpop.f32.mrb[0].mxu0
  %4116 = vmatprep.mubr.f32.mxu0 0.0
  %4117 = vmatmul.mubr.f32.gmra.mrb[0].mxu0 %v1833
  %v4118 = vpop.f32.mrb[0].mxu0
  %v4119 = vadd.f32 0.0, %v4118
  %v4120 = vpop.f32.mrb[0].mxu0
  %4121 = vmatprep.mubr.f32.mxu0 0.0
  %4122 = vmatmul.mubr.f32.gmra.mrb[0].mxu0 %v1836
  %v4123 = vpop.f32.mrb[0].mxu0
  %v4124 = vadd.f32 0.0, %v4123
  %v4125 = vpop.f32.mrb[0].mxu0
  %4126 = vmatprep.mubr.f32.mxu0 0.0
  %4127 = vmatmul.mubr.f32.gmra.mrb[0].mxu0 %v1839
  %v4128 = vpop.f32.mrb[0].mxu0
  %v4129 = vadd.f32 0.0, %v4128
  %v4130 = vpop.f32.mrb[0].mxu0
  %4131 = vmatprep.mubr.f32.mxu0 0.0
  %4132 = vmatmul.mubr.f32.gmra.mrb[0].mxu0 %v1842
  %v4133 = vpop.f32.mrb[0].mxu0
  %v4134 = vadd.f32 0.0, %v4133
  %v4135 = vpop.f32.mrb[0].mxu0
  %4136 = vmatprep.mubr.f32.mxu0 0.0
  %4137 = vmatmul.mubr.f32.gmra.mrb[0].mxu0 %v1845
  %v4138 = vpop.f32.mrb[0].mxu0
  %v4139 = vadd.f32 0.0, %v4138
  %v4140 = vpop.f32.mrb[0].mxu0
  %4141 = vmatprep.mubr.f32.mxu0 0.0
  %4142 = vmatmul.mubr.f32.gmra.mrb[0].mxu0 %v1848
  %v4143 = vpop.f32.mrb[0].mxu0
  %v4144 = vadd.f32 0.0, %v4143
  %v4145 = vpop.f32.mrb[0].mxu0
  %4146 = vmatprep.mubr.f32.mxu0 0.0
  %4147 = vmatmul.mubr.f32.gmra.mrb[0].mxu0 %v1851
  %v4148 = vpop.f32.mrb[0].mxu0
  %v4149 = vadd.f32 0.0, %v4148
  %v4150 = vpop.f32.mrb[0].mxu0
  %4151 = vmatprep.mubr.f32.mxu0 0.0
  %4152 = vmatmul.mubr.f32.gmra.mrb[0].mxu0 %v1854
  %v4153 = vpop.f32.mrb[0].mxu0
  %v4154 = vadd.f32 0.0, %v4153
  %v4155 = vpop.f32.mrb[0].mxu0
  %4156 = vmatprep.mubr.f32.mxu0 0.0
  %4157 = vmatmul.mubr.f32.gmra.mrb[0].mxu0 %v1857
  %v4158 = vpop.f32.mrb[0].mxu0
  %v4159 = vadd.f32 0.0, %v4158
  %v4160 = vpop.f32.mrb[0].mxu0
  %4161 = vmatprep.mubr.f32.mxu0 0.0
  %4162 = vmatmul.mubr.f32.gmra.mrb[0].mxu0 %v1860
  %v4163 = vpop.f32.mrb[0].mxu0
  %v4164 = vadd.f32 0.0, %v4163
  %v4165 = vpop.f32.mrb[0].mxu0
  %4166 = vmatprep.mubr.f32.mxu0 0.0
  %4167 = vmatmul.mubr.f32.gmra.mrb[0].mxu0 %v1863
  %v4168 = vpop.f32.mrb[0].mxu0
  %v4169 = vadd.f32 0.0, %v4168
  %v4170 = vpop.f32.mrb[0].mxu0
  %4171 = vmatprep.mubr.f32.mxu0 0.0
  %4172 = vmatmul.mubr.f32.gmra.mrb[0].mxu0 %v1866
  %v4173 = vpop.f32.mrb[0].mxu0
  %v4174 = vadd.f32 0.0, %v4173
  %v4175 = vpop.f32.mrb[0].mxu0
  %4176 = vmatprep.mubr.f32.mxu0 0.0
  %4177 = vmatmul.mubr.f32.gmra.mrb[0].mxu0 %v1869
  %v4178 = vpop.f32.mrb[0].mxu0
  %v4179 = vadd.f32 0.0, %v4178
  %v4180 = vpop.f32.mrb[0].mxu0
  %4181 = vmatprep.mubr.f32.mxu0 0.0
  %4182 = vmatmul.mubr.f32.gmra.mrb[0].mxu0 %v1872
  %v4183 = vpop.f32.mrb[0].mxu0
  %v4184 = vadd.f32 0.0, %v4183
  %v4185 = vpop.f32.mrb[0].mxu0
  %4186 = vmatprep.mubr.f32.mxu0 0.0
  %4187 = vmatmul.mubr.f32.gmra.mrb[0].mxu0 %v1875
  %v4188 = vpop.f32.mrb[0].mxu0
  %v4189 = vadd.f32 0.0, %v4188
  %v4190 = vpop.f32.mrb[0].mxu0
  %4191 = vmatprep.mubr.f32.mxu0 0.0
  %4192 = vmatmul.mubr.f32.gmra.mrb[0].mxu0 %v1878
  %v4193 = vpop.f32.mrb[0].mxu0
  %v4194 = vadd.f32 0.0, %v4193
  %v4195 = vpop.f32.mrb[0].mxu0
  %4196 = vmatprep.mubr.f32.mxu0 0.0
  %4197 = vmatmul.mubr.f32.gmra.mrb[0].mxu0 %v1881
  %v4198 = vpop.f32.mrb[0].mxu0
  %v4199 = vadd.f32 0.0, %v4198
  %v4200 = vpop.f32.mrb[0].mxu0
  %4201 = vmatprep.mubr.f32.mxu0 0.0
  %4202 = vmatmul.mubr.f32.gmra.mrb[0].mxu0 %v1884
  %v4203 = vpop.f32.mrb[0].mxu0
  %v4204 = vadd.f32 0.0, %v4203
  %v4205 = vpop.f32.mrb[0].mxu0
  %4206 = vmatprep.mubr.f32.mxu0 0.0
  %4207 = vmatmul.mubr.f32.gmra.mrb[0].mxu0 %v1887
  %v4208 = vpop.f32.mrb[0].mxu0
  %v4209 = vadd.f32 0.0, %v4208
  %v4210 = vpop.f32.mrb[0].mxu0
  %4211 = vmatprep.mubr.f32.mxu0 0.0
  %4212 = vmatmul.mubr.f32.gmra.mrb[0].mxu0 %v1890
  %v4213 = vpop.f32.mrb[0].mxu0
  %v4214 = vadd.f32 0.0, %v4213
  %v4215 = vpop.f32.mrb[0].mxu0
  %4216 = vmatprep.mubr.f32.mxu0 0.0
  %4217 = vmatmul.mubr.f32.gmra.mrb[0].mxu0 %v1893
  %v4218 = vpop.f32.mrb[0].mxu0
  %v4219 = vadd.f32 0.0, %v4218
  %v4220 = vpop.f32.mrb[0].mxu0
  %4221 = vmatprep.mubr.f32.mxu0 0.0
  %4222 = vmatmul.mubr.f32.gmra.mrb[0].mxu0 %v1896
  %v4223 = vpop.f32.mrb[0].mxu0
  %v4224 = vadd.f32 0.0, %v4223
  %v4225 = vpop.f32.mrb[0].mxu0
  %4226 = vmatprep.mubr.f32.mxu0 0.0
  %4227 = vmatmul.mubr.f32.gmra.mrb[0].mxu0 %v1899
  %v4228 = vpop.f32.mrb[0].mxu0
  %v4229 = vadd.f32 0.0, %v4228
  %v4230 = vpop.f32.mrb[0].mxu0
  %4231 = vmatprep.mubr.f32.mxu0 0.0
  %4232 = vmatmul.mubr.f32.gmra.mrb[0].mxu0 %v1902
  %v4233 = vpop.f32.mrb[0].mxu0
  %v4234 = vadd.f32 0.0, %v4233
  %v4235 = vpop.f32.mrb[0].mxu0
  %4236 = vmatprep.mubr.f32.mxu0 0.0
  %4237 = vmatmul.mubr.f32.gmra.mrb[0].mxu0 %v1905
  %v4238 = vpop.f32.mrb[0].mxu0
  %v4239 = vadd.f32 0.0, %v4238
  %v4240 = vpop.f32.mrb[0].mxu0
  %4241 = vmatprep.mubr.f32.mxu0 0.0
  %4242 = vmatmul.mubr.f32.gmra.mrb[0].mxu0 %v1908
  %v4243 = vpop.f32.mrb[0].mxu0
  %v4244 = vadd.f32 0.0, %v4243
  %v4245 = vpop.f32.mrb[0].mxu0
  %4246 = vmatprep.mubr.f32.mxu0 0.0
  %4247 = vmatmul.mubr.f32.gmra.mrb[0].mxu0 %v1911
  %v4248 = vpop.f32.mrb[0].mxu0
  %v4249 = vadd.f32 0.0, %v4248
  %v4250 = vpop.f32.mrb[0].mxu0
  %4251 = vmatprep.mubr.f32.mxu0 0.0
  %4252 = vmatmul.mubr.f32.gmra.mrb[0].mxu0 %v1914
  %v4253 = vpop.f32.mrb[0].mxu0
  %v4254 = vadd.f32 0.0, %v4253
  %v4255 = vpop.f32.mrb[0].mxu0
  %4256 = vmatprep.mubr.f32.mxu0 0.0
  %4257 = vmatmul.mubr.f32.gmra.mrb[0].mxu0 %v1917
  %v4258 = vpop.f32.mrb[0].mxu0
  %v4259 = vadd.f32 0.0, %v4258
  %v4260 = vpop.f32.mrb[0].mxu0
  %4261 = vmatprep.mubr.f32.mxu0 0.0
  %4262 = vmatmul.mubr.f32.gmra.mrb[0].mxu0 %v1920
  %v4263 = vpop.f32.mrb[0].mxu0
  %v4264 = vadd.f32 0.0, %v4263
  %v4265 = vpop.f32.mrb[0].mxu0
  %4266 = vmatprep.mubr.f32.mxu0 0.0
  %4267 = vmatmul.mubr.f32.gmra.mrb[0].mxu0 %v1923
  %v4268 = vpop.f32.mrb[0].mxu0
  %v4269 = vadd.f32 0.0, %v4268
  %v4270 = vpop.f32.mrb[0].mxu0
  %4271 = vmatprep.mubr.f32.mxu0 0.0
  %4272 = vmatmul.mubr.f32.gmra.mrb[0].mxu0 %v1926
  %v4273 = vpop.f32.mrb[0].mxu0
  %v4274 = vadd.f32 0.0, %v4273
  %v4275 = vpop.f32.mrb[0].mxu0
  %4276 = vmatprep.mubr.f32.mxu0 0.0
  %4277 = vmatmul.mubr.f32.gmra.mrb[0].mxu0 %v1929
  %v4278 = vpop.f32.mrb[0].mxu0
  %v4279 = vadd.f32 0.0, %v4278
  %v4280 = vpop.f32.mrb[0].mxu0
  %4281 = vmatprep.mubr.f32.mxu0 0.0
  %4282 = vmatmul.mubr.f32.gmra.mrb[0].mxu0 %v1932
  %v4283 = vpop.f32.mrb[0].mxu0
  %v4284 = vadd.f32 0.0, %v4283
  %v4285 = vpop.f32.mrb[0].mxu0
  %4286 = vmatprep.mubr.f32.mxu0 0.0
  %4287 = vmatmul.mubr.f32.gmra.mrb[0].mxu0 %v1935
  %v4288 = vpop.f32.mrb[0].mxu0
  %v4289 = vadd.f32 0.0, %v4288
  %v4290 = vpop.f32.mrb[0].mxu0
  %4291 = vmatprep.mubr.f32.mxu0 0.0
  %4292 = vmatmul.mubr.f32.gmra.mrb[0].mxu0 %v1938
  %v4293 = vpop.f32.mrb[0].mxu0
  %v4294 = vadd.f32 0.0, %v4293
  %v4295 = vpop.f32.mrb[0].mxu0
  %4296 = vmatprep.mubr.f32.mxu0 0.0
  %4297 = vmatmul.mubr.f32.gmra.mrb[0].mxu0 %v1941
  %v4298 = vpop.f32.mrb[0].mxu0
  %v4299 = vadd.f32 0.0, %v4298
  %v4300 = vpop.f32.mrb[0].mxu0
  %4301 = vmatprep.mubr.f32.mxu0 0.0
  %4302 = vmatmul.mubr.f32.gmra.mrb[0].mxu0 %v1944
  %v4303 = vpop.f32.mrb[0].mxu0
  %v4304 = vadd.f32 0.0, %v4303
  %v4305 = vpop.f32.mrb[0].mxu0
  %4306 = vmatprep.mubr.f32.mxu0 0.0
  %4307 = vmatmul.mubr.f32.gmra.mrb[0].mxu0 %v1947
  %v4308 = vpop.f32.mrb[0].mxu0
  %v4309 = vadd.f32 0.0, %v4308
  %v4310 = vpop.f32.mrb[0].mxu0
  %4311 = vmatprep.mubr.f32.mxu0 0.0
  %4312 = vmatmul.mubr.f32.gmra.mrb[0].mxu0 %v1950
  %v4313 = vpop.f32.mrb[0].mxu0
  %v4314 = vadd.f32 0.0, %v4313
  %v4315 = vpop.f32.mrb[0].mxu0
  %4316 = vmatprep.mubr.f32.mxu0 0.0
  %4317 = vmatmul.mubr.f32.gmra.mrb[0].mxu0 %v1953
  %v4318 = vpop.f32.mrb[0].mxu0
  %v4319 = vadd.f32 0.0, %v4318
  %v4320 = vpop.f32.mrb[0].mxu0
  %4321 = vmatprep.mubr.f32.mxu0 0.0
  %4322 = vmatmul.mubr.f32.gmra.mrb[0].mxu0 %v1956
  %v4323 = vpop.f32.mrb[0].mxu0
  %v4324 = vadd.f32 0.0, %v4323
  %v4325 = vpop.f32.mrb[0].mxu0
  %4326 = vmatprep.mubr.f32.mxu0 0.0
  %4327 = vmatmul.mubr.f32.gmra.mrb[0].mxu0 %v1959
  %v4328 = vpop.f32.mrb[0].mxu0
  %v4329 = vadd.f32 0.0, %v4328
  %v4330 = vpop.f32.mrb[0].mxu0
  %4331 = vmatprep.mubr.f32.mxu0 0.0
  %4332 = vmatmul.mubr.f32.gmra.mrb[0].mxu0 %v1962
  %v4333 = vpop.f32.mrb[0].mxu0
  %v4334 = vadd.f32 0.0, %v4333
  %v4335 = vpop.f32.mrb[0].mxu0
  %4336 = vmatprep.mubr.f32.mxu0 0.0
  %4337 = vmatmul.mubr.f32.gmra.mrb[0].mxu0 %v1965
  %v4338 = vpop.f32.mrb[0].mxu0
  %v4339 = vadd.f32 0.0, %v4338
  %v4340 = vpop.f32.mrb[0].mxu0
  %4341 = vmatprep.mubr.f32.mxu0 0.0
  %4342 = vmatmul.mubr.f32.gmra.mrb[0].mxu0 %v1968
  %v4343 = vpop.f32.mrb[0].mxu0
  %v4344 = vadd.f32 0.0, %v4343
  %v4345 = vpop.f32.mrb[0].mxu0
  %4346 = vmatprep.mubr.f32.mxu0 0.0
  %4347 = vmatmul.mubr.f32.gmra.mrb[0].mxu0 %v1971
  %v4348 = vpop.f32.mrb[0].mxu0
  %v4349 = vadd.f32 0.0, %v4348
  %v4350 = vpop.f32.mrb[0].mxu0
  %4351 = vmatprep.mubr.f32.mxu0 0.0
  %4352 = vmatmul.mubr.f32.gmra.mrb[0].mxu0 %v1974
  %v4353 = vpop.f32.mrb[0].mxu0
  %v4354 = vadd.f32 0.0, %v4353
  %v4355 = vpop.f32.mrb[0].mxu0
  %4356 = vmatprep.mubr.f32.mxu0 0.0
  %4357 = vmatmul.mubr.f32.gmra.mrb[0].mxu0 %v1977
  %v4358 = vpop.f32.mrb[0].mxu0
  %v4359 = vadd.f32 0.0, %v4358
  %v4360 = vpop.f32.mrb[0].mxu0
  %4361 = vmatprep.mubr.f32.mxu0 0.0
  %4362 = vmatmul.mubr.f32.gmra.mrb[0].mxu0 %v1980
  %v4363 = vpop.f32.mrb[0].mxu0
  %v4364 = vadd.f32 0.0, %v4363
  %v4365 = vpop.f32.mrb[0].mxu0
  %4366 = vmatprep.mubr.f32.mxu0 0.0
  %4367 = vmatmul.mubr.f32.gmra.mrb[0].mxu0 %v1983
  %v4368 = vpop.f32.mrb[0].mxu0
  %v4369 = vadd.f32 0.0, %v4368
  %v4370 = vpop.f32.mrb[0].mxu0
  %4371 = vmatprep.mubr.f32.mxu0 0.0
  %4372 = vmatmul.mubr.f32.gmra.mrb[0].mxu0 %v1986
  %v4373 = vpop.f32.mrb[0].mxu0
  %v4374 = vadd.f32 0.0, %v4373
  %v4375 = vpop.f32.mrb[0].mxu0
  %4376 = vmatprep.mubr.f32.mxu0 0.0
  %4377 = vmatmul.mubr.f32.gmra.mrb[0].mxu0 %v1989
  %v4378 = vpop.f32.mrb[0].mxu0
  %v4379 = vadd.f32 0.0, %v4378
  %v4380 = vpop.f32.mrb[0].mxu0
  %4381 = vmatprep.mubr.f32.mxu0 0.0
  %4382 = vmatmul.mubr.f32.gmra.mrb[0].mxu0 %v1992
  %v4383 = vpop.f32.mrb[0].mxu0
  %v4384 = vadd.f32 0.0, %v4383
  %v4385 = vpop.f32.mrb[0].mxu0
  %4386 = vmatprep.mubr.f32.mxu0 0.0
  %4387 = vmatmul.mubr.f32.gmra.mrb[0].mxu0 %v1995
  %v4388 = vpop.f32.mrb[0].mxu0
  %v4389 = vadd.f32 0.0, %v4388
  %v4390 = vpop.f32.mrb[0].mxu0
  %4391 = vmatprep.mubr.f32.mxu0 0.0
  %4392 = vmatmul.mubr.f32.gmra.mrb[0].mxu0 %v1998
  %v4393 = vpop.f32.mrb[0].mxu0
  %v4394 = vadd.f32 0.0, %v4393
  %v4395 = vpop.f32.mrb[0].mxu0
  %4396 = vmatprep.mubr.f32.mxu0 0.0
  %4397 = vmatmul.mubr.f32.gmra.mrb[0].mxu0 %v2001
  %v4398 = vpop.f32.mrb[0].mxu0
  %v4399 = vadd.f32 0.0, %v4398
  %v4400 = vpop.f32.mrb[0].mxu0
  %4401 = vmatprep.mubr.f32.mxu0 0.0
  %4402 = vmatmul.mubr.f32.gmra.mrb[0].mxu0 %v2004
  %v4403 = vpop.f32.mrb[0].mxu0
  %v4404 = vadd.f32 0.0, %v4403
  %v4405 = vpop.f32.mrb[0].mxu0
  %4406 = vmatprep.mubr.f32.mxu0 0.0
  %4407 = vmatmul.mubr.f32.gmra.mrb[0].mxu0 %v2007
  %v4408 = vpop.f32.mrb[0].mxu0
  %v4409 = vadd.f32 0.0, %v4408
  %v4410 = vpop.f32.mrb[0].mxu0
  %4411 = vmatprep.mubr.f32.mxu0 0.0
  %4412 = vmatmul.mubr.f32.gmra.mrb[0].mxu0 %v2010
  %v4413 = vpop.f32.mrb[0].mxu0
  %v4414 = vadd.f32 0.0, %v4413
  %v4415 = vpop.f32.mrb[0].mxu0
  %4416 = vmatprep.mubr.f32.mxu0 0.0
  %4417 = vmatmul.mubr.f32.gmra.mrb[0].mxu0 %v2013
  %v4418 = vpop.f32.mrb[0].mxu0
  %v4419 = vadd.f32 0.0, %v4418
  %v4420 = vpop.f32.mrb[0].mxu0
  %4421 = vmatprep.mubr.f32.mxu0 0.0
  %4422 = vmatmul.mubr.f32.gmra.mrb[0].mxu0 %v2016
  %v4423 = vpop.f32.mrb[0].mxu0
  %v4424 = vadd.f32 0.0, %v4423
  %v4425 = vpop.f32.mrb[0].mxu0
  %4426 = vmatprep.mubr.f32.mxu0 0.0
  %4427 = vmatmul.mubr.f32.gmra.mrb[0].mxu0 %v2019
  %v4428 = vpop.f32.mrb[0].mxu0
  %v4429 = vadd.f32 0.0, %v4428
  %v4430 = vpop.f32.mrb[0].mxu0
  %4431 = vmatprep.mubr.f32.mxu0 0.0
  %4432 = vmatmul.mubr.f32.gmra.mrb[0].mxu0 %v2022
  %v4433 = vpop.f32.mrb[0].mxu0
  %v4434 = vadd.f32 0.0, %v4433
  %v4435 = vpop.f32.mrb[0].mxu0
  %4436 = vmatprep.mubr.f32.mxu0 0.0
  %4437 = vmatmul.mubr.f32.gmra.mrb[0].mxu0 %v2025
  %v4438 = vpop.f32.mrb[0].mxu0
  %v4439 = vadd.f32 0.0, %v4438
  %v4440 = vpop.f32.mrb[0].mxu0
  %4441 = vmatprep.mubr.f32.mxu0 0.0
  %4442 = vmatmul.mubr.f32.gmra.mrb[0].mxu0 %v2028
  %v4443 = vpop.f32.mrb[0].mxu0
  %v4444 = vadd.f32 0.0, %v4443
  %v4445 = vpop.f32.mrb[0].mxu0
  %4446 = vmatprep.mubr.f32.mxu0 0.0
  %4447 = vmatmul.mubr.f32.gmra.mrb[0].mxu0 %v2031
  %v4448 = vpop.f32.mrb[0].mxu0
  %v4449 = vadd.f32 0.0, %v4448
  %v4450 = vpop.f32.mrb[0].mxu0
  %4451 = vmatprep.mubr.f32.mxu0 0.0
  %4452 = vmatmul.mubr.f32.gmra.mrb[0].mxu0 %v2034
  %v4453 = vpop.f32.mrb[0].mxu0
  %v4454 = vadd.f32 0.0, %v4453
  %v4455 = vpop.f32.mrb[0].mxu0
  %4456 = vmatprep.mubr.f32.mxu0 0.0
  %4457 = vmatmul.mubr.f32.gmra.mrb[0].mxu0 %v2037
  %v4458 = vpop.f32.mrb[0].mxu0
  %v4459 = vadd.f32 0.0, %v4458
  %v4460 = vpop.f32.mrb[0].mxu0
  %4461 = vmatprep.mubr.f32.mxu0 0.0
  %4462 = vmatmul.mubr.f32.gmra.mrb[0].mxu0 %v2040
  %v4463 = vpop.f32.mrb[0].mxu0
  %v4464 = vadd.f32 0.0, %v4463
  %v4465 = vpop.f32.mrb[0].mxu0
  %4466 = vmatprep.mubr.f32.mxu0 0.0
  %4467 = vmatmul.mubr.f32.gmra.mrb[0].mxu0 %v2043
  %v4468 = vpop.f32.mrb[0].mxu0
  %v4469 = vadd.f32 0.0, %v4468
  %v4470 = vpop.f32.mrb[0].mxu0
  %4471 = vmatprep.mubr.f32.mxu0 0.0
  %4472 = vmatmul.mubr.f32.gmra.mrb[0].mxu0 %v2046
  %v4473 = vpop.f32.mrb[0].mxu0
  %v4474 = vadd.f32 0.0, %v4473
  %v4475 = vpop.f32.mrb[0].mxu0
  %4476 = vmatprep.mubr.f32.mxu0 0.0
  %4477 = vmatmul.mubr.f32.gmra.mrb[0].mxu0 %v2049
  %v4478 = vpop.f32.mrb[0].mxu0
  %v4479 = vadd.f32 0.0, %v4478
  %v4480 = vpop.f32.mrb[0].mxu0
  %4481 = vmatprep.mubr.f32.mxu0 0.0
  %4482 = vmatmul.mubr.f32.gmra.mrb[0].mxu0 %v2052
  %v4483 = vpop.f32.mrb[0].mxu0
  %v4484 = vadd.f32 0.0, %v4483
  %v4485 = vpop.f32.mrb[0].mxu0
  %4486 = vmatprep.mubr.f32.mxu0 0.0
  %4487 = vmatmul.mubr.f32.gmra.mrb[0].mxu0 %v2055
  %v4488 = vpop.f32.mrb[0].mxu0
  %v4489 = vadd.f32 0.0, %v4488
  %v4490 = vpop.f32.mrb[0].mxu0
  %4491 = vmatprep.mubr.f32.mxu0 0.0
  %4492 = vmatmul.mubr.f32.gmra.mrb[0].mxu0 %v2058
  %v4493 = vpop.f32.mrb[0].mxu0
  %v4494 = vadd.f32 0.0, %v4493
  %v4495 = vpop.f32.mrb[0].mxu0
  %4496 = vmatprep.mubr.f32.mxu0 0.0
  %4497 = vmatmul.mubr.f32.gmra.mrb[0].mxu0 %v2061
  %v4498 = vpop.f32.mrb[0].mxu0
  %v4499 = vadd.f32 0.0, %v4498
  %v4500 = vpop.f32.mrb[0].mxu0
  %4501 = vmatprep.mubr.f32.mxu0 0.0
  %4502 = vmatmul.mubr.f32.gmra.mrb[0].mxu0 %v2064
  %v4503 = vpop.f32.mrb[0].mxu0
  %v4504 = vadd.f32 0.0, %v4503
  %v4505 = vpop.f32.mrb[0].mxu0
  %4506 = vmatprep.mubr.f32.mxu0 0.0
  %4507 = vmatmul.mubr.f32.gmra.mrb[0].mxu0 %v2067
  %v4508 = vpop.f32.mrb[0].mxu0
  %v4509 = vadd.f32 0.0, %v4508
  %v4510 = vpop.f32.mrb[0].mxu0
  %4511 = vmatprep.mubr.f32.mxu0 0.0
  %4512 = vmatmul.mubr.f32.gmra.mrb[0].mxu0 %v2070
  %v4513 = vpop.f32.mrb[0].mxu0
  %v4514 = vadd.f32 0.0, %v4513
  %v4515 = vpop.f32.mrb[0].mxu0
  %4516 = vmatprep.mubr.f32.mxu0 0.0
  %4517 = vmatmul.mubr.f32.gmra.mrb[0].mxu0 %v2073
  %v4518 = vpop.f32.mrb[0].mxu0
  %v4519 = vadd.f32 0.0, %v4518
  %v4520 = vpop.f32.mrb[0].mxu0
  %4521 = vmatprep.mubr.f32.mxu0 0.0
  %4522 = vmatmul.mubr.f32.gmra.mrb[0].mxu0 %v2076
  %v4523 = vpop.f32.mrb[0].mxu0
  %v4524 = vadd.f32 0.0, %v4523
  %v4525 = vpop.f32.mrb[0].mxu0
  %4526 = vmatprep.mubr.f32.mxu0 0.0
  %4527 = vmatmul.mubr.f32.gmra.mrb[0].mxu0 %v2079
  %v4528 = vpop.f32.mrb[0].mxu0
  %v4529 = vadd.f32 0.0, %v4528
  %v4530 = vpop.f32.mrb[0].mxu0
  %4531 = vmatprep.mubr.f32.mxu0 0.0
  %4532 = vmatmul.mubr.f32.gmra.mrb[0].mxu0 %v2082
  %v4533 = vpop.f32.mrb[0].mxu0
  %v4534 = vadd.f32 0.0, %v4533
  %v4535 = vpop.f32.mrb[0].mxu0
  %4536 = vmatprep.mubr.f32.mxu0 0.0
  %4537 = vmatmul.mubr.f32.gmra.mrb[0].mxu0 %v2085
  %v4538 = vpop.f32.mrb[0].mxu0
  %v4539 = vadd.f32 0.0, %v4538
  %v4540 = vpop.f32.mrb[0].mxu0
  %4541 = vmatprep.mubr.f32.mxu0 0.0
  %4542 = vmatmul.mubr.f32.gmra.mrb[0].mxu0 %v2088
  %v4543 = vpop.f32.mrb[0].mxu0
  %v4544 = vadd.f32 0.0, %v4543
  %v4545 = vpop.f32.mrb[0].mxu0
  %4546 = vmatprep.mubr.f32.mxu0 0.0
  %4547 = vmatmul.mubr.f32.gmra.mrb[0].mxu0 %v2091
  %v4548 = vpop.f32.mrb[0].mxu0
  %v4549 = vadd.f32 0.0, %v4548
  %v4550 = vpop.f32.mrb[0].mxu0
  %4551 = vmatprep.mubr.f32.mxu0 0.0
  %4552 = vmatmul.mubr.f32.gmra.mrb[0].mxu0 %v2094
  %v4553 = vpop.f32.mrb[0].mxu0
  %v4554 = vadd.f32 0.0, %v4553
  %v4555 = vpop.f32.mrb[0].mxu0
  %4556 = vmatprep.mubr.f32.mxu0 0.0
  %4557 = vmatmul.mubr.f32.gmra.mrb[0].mxu0 %v2097
  %v4558 = vpop.f32.mrb[0].mxu0
  %v4559 = vadd.f32 0.0, %v4558
  %v4560 = vpop.f32.mrb[0].mxu0
  %4561 = vmatprep.mubr.f32.mxu0 0.0
  %4562 = vmatmul.mubr.f32.gmra.mrb[0].mxu0 %v2100
  %v4563 = vpop.f32.mrb[0].mxu0
  %v4564 = vadd.f32 0.0, %v4563
  %v4565 = vpop.f32.mrb[0].mxu0
  %4566 = vmatprep.mubr.f32.mxu0 0.0
  %4567 = vmatmul.mubr.f32.gmra.mrb[0].mxu0 %v2103
  %v4568 = vpop.f32.mrb[0].mxu0
  %v4569 = vadd.f32 0.0, %v4568
  %v4570 = vpop.f32.mrb[0].mxu0
  %4571 = vmatprep.mubr.f32.mxu0 0.0
  %4572 = vmatmul.mubr.f32.gmra.mrb[0].mxu0 %v2106
  %v4573 = vpop.f32.mrb[0].mxu0
  %v4574 = vadd.f32 0.0, %v4573
  %v4575 = vpop.f32.mrb[0].mxu0
  %4576 = vmatprep.mubr.f32.mxu0 0.0
  %4577 = vmatmul.mubr.f32.gmra.mrb[0].mxu0 %v2109
  %v4578 = vpop.f32.mrb[0].mxu0
  %v4579 = vadd.f32 0.0, %v4578
  %v4580 = vpop.f32.mrb[0].mxu0
  %4581 = vmatprep.mubr.f32.mxu0 0.0
  %4582 = vmatmul.mubr.f32.gmra.mrb[0].mxu0 %v2112
  %v4583 = vpop.f32.mrb[0].mxu0
  %v4584 = vadd.f32 0.0, %v4583
  %v4585 = vpop.f32.mrb[0].mxu0
  %4586 = vmatprep.mubr.f32.mxu0 0.0
  %4587 = vmatmul.mubr.f32.gmra.mrb[0].mxu0 %v2115
  %v4588 = vpop.f32.mrb[0].mxu0
  %v4589 = vadd.f32 0.0, %v4588
  %v4590 = vpop.f32.mrb[0].mxu0
  %4591 = vmatprep.mubr.f32.mxu0 0.0
  %4592 = vmatmul.mubr.f32.gmra.mrb[0].mxu0 %v2118
  %v4593 = vpop.f32.mrb[0].mxu0
  %v4594 = vadd.f32 0.0, %v4593
  %v4595 = vpop.f32.mrb[0].mxu0
  %4596 = vmatprep.mubr.f32.mxu0 0.0
  %4597 = vmatmul.mubr.f32.gmra.mrb[0].mxu0 %v2121
  %v4598 = vpop.f32.mrb[0].mxu0
  %v4599 = vadd.f32 0.0, %v4598
  %v4600 = vpop.f32.mrb[0].mxu0
  %4601 = vmatprep.mubr.f32.mxu0 0.0
  %4602 = vmatmul.mubr.f32.gmra.mrb[0].mxu0 %v2124
  %v4603 = vpop.f32.mrb[0].mxu0
  %v4604 = vadd.f32 0.0, %v4603
  %v4605 = vpop.f32.mrb[0].mxu0
  %4606 = vmatprep.mubr.f32.mxu0 0.0
  %4607 = vmatmul.mubr.f32.gmra.mrb[0].mxu0 %v2127
  %v4608 = vpop.f32.mrb[0].mxu0
  %v4609 = vadd.f32 0.0, %v4608
  %v4610 = vpop.f32.mrb[0].mxu0
  %4611 = vmatprep.mubr.f32.mxu0 0.0
  %4612 = vmatmul.mubr.f32.gmra.mrb[0].mxu0 %v2130
  %v4613 = vpop.f32.mrb[0].mxu0
  %v4614 = vadd.f32 0.0, %v4613
  %v4615 = vpop.f32.mrb[0].mxu0
  %4616 = vmatprep.mubr.f32.mxu0 0.0
  %4617 = vmatmul.mubr.f32.gmra.mrb[0].mxu0 %v2133
  %v4618 = vpop.f32.mrb[0].mxu0
  %v4619 = vadd.f32 0.0, %v4618
  %v4620 = vpop.f32.mrb[0].mxu0
  %4621 = vmatprep.mubr.f32.mxu0 0.0
  %4622 = vmatmul.mubr.f32.gmra.mrb[0].mxu0 %v2136
  %v4623 = vpop.f32.mrb[0].mxu0
  %v4624 = vadd.f32 0.0, %v4623
  %v4625 = vpop.f32.mrb[0].mxu0
  %4626 = vmatprep.mubr.f32.mxu0 0.0
  %4627 = vmatmul.mubr.f32.gmra.mrb[0].mxu0 %v2139
  %v4628 = vpop.f32.mrb[0].mxu0
  %v4629 = vadd.f32 0.0, %v4628
  %v4630 = vpop.f32.mrb[0].mxu0
  %4631 = vmatprep.mubr.f32.mxu0 0.0
  %4632 = vmatmul.mubr.f32.gmra.mrb[0].mxu0 %v2142
  %v4633 = vpop.f32.mrb[0].mxu0
  %v4634 = vadd.f32 0.0, %v4633
  %v4635 = vpop.f32.mrb[0].mxu0
  %4636 = vmatprep.mubr.f32.mxu0 0.0
  %4637 = vmatmul.mubr.f32.gmra.mrb[0].mxu0 %v2145
  %v4638 = vpop.f32.mrb[0].mxu0
  %v4639 = vadd.f32 0.0, %v4638
  %v4640 = vpop.f32.mrb[0].mxu0
  %4641 = vmatprep.mubr.f32.mxu0 0.0
  %4642 = vmatmul.mubr.f32.gmra.mrb[0].mxu0 %v2148
  %v4643 = vpop.f32.mrb[0].mxu0
  %v4644 = vadd.f32 0.0, %v4643
  %v4645 = vpop.f32.mrb[0].mxu0
  %4646 = vmatprep.mubr.f32.mxu0 0.0
  %4647 = vmatmul.mubr.f32.gmra.mrb[0].mxu0 %v2151
  %v4648 = vpop.f32.mrb[0].mxu0
  %v4649 = vadd.f32 0.0, %v4648
  %v4650 = vpop.f32.mrb[0].mxu0
  %4651 = vmatprep.mubr.f32.mxu0 0.0
  %4652 = vmatmul.mubr.f32.gmra.mrb[0].mxu0 %v2154
  %v4653 = vpop.f32.mrb[0].mxu0
  %v4654 = vadd.f32 0.0, %v4653
  %v4655 = vpop.f32.mrb[0].mxu0
  %4656 = vmatprep.mubr.f32.mxu0 0.0
  %4657 = vmatmul.mubr.f32.gmra.mrb[0].mxu0 %v2157
  %v4658 = vpop.f32.mrb[0].mxu0
  %v4659 = vadd.f32 0.0, %v4658
  %v4660 = vpop.f32.mrb[0].mxu0
  %4661 = vmatprep.mubr.f32.mxu0 0.0
  %4662 = vmatmul.mubr.f32.gmra.mrb[0].mxu0 %v2160
  %v4663 = vpop.f32.mrb[0].mxu0
  %v4664 = vadd.f32 0.0, %v4663
  %v4665 = vpop.f32.mrb[0].mxu0
  %4666 = vmatprep.mubr.f32.mxu0 0.0
  %4667 = vmatmul.mubr.f32.gmra.mrb[0].mxu0 %v2163
  %v4668 = vpop.f32.mrb[0].mxu0
  %v4669 = vadd.f32 0.0, %v4668
  %v4670 = vpop.f32.mrb[0].mxu0
  %4671 = vmatprep.mubr.f32.mxu0 0.0
  %4672 = vmatmul.mubr.f32.gmra.mrb[0].mxu0 %v2166
  %v4673 = vpop.f32.mrb[0].mxu0
  %v4674 = vadd.f32 0.0, %v4673
  %v4675 = vpop.f32.mrb[0].mxu0
  %4676 = vmatprep.mubr.f32.mxu0 0.0
  %4677 = vmatmul.mubr.f32.gmra.mrb[0].mxu0 %v2169
  %v4678 = vpop.f32.mrb[0].mxu0
  %v4679 = vadd.f32 0.0, %v4678
  %v4680 = vpop.f32.mrb[0].mxu0
  %4681 = vmatprep.mubr.f32.mxu0 0.0
  %4682 = vmatmul.mubr.f32.gmra.mrb[0].mxu0 %v2172
  %v4683 = vpop.f32.mrb[0].mxu0
  %v4684 = vadd.f32 0.0, %v4683
  %v4685 = vpop.f32.mrb[0].mxu0
  %4686 = vmatprep.mubr.f32.mxu0 0.0
  %4687 = vmatmul.mubr.f32.gmra.mrb[0].mxu0 %v2175
  %v4688 = vpop.f32.mrb[0].mxu0
  %v4689 = vadd.f32 0.0, %v4688
  %v4690 = vpop.f32.mrb[0].mxu0
  %4691 = vmatprep.mubr.f32.mxu0 0.0
  %4692 = vmatmul.mubr.f32.gmra.mrb[0].mxu0 %v2178
  %v4693 = vpop.f32.mrb[0].mxu0
  %v4694 = vadd.f32 0.0, %v4693
  %v4695 = vpop.f32.mrb[0].mxu0
  %4696 = vmatprep.mubr.f32.mxu0 0.0
  %4697 = vmatmul.mubr.f32.gmra.mrb[0].mxu0 %v2181
  %v4698 = vpop.f32.mrb[0].mxu0
  %v4699 = vadd.f32 0.0, %v4698
  %v4700 = vpop.f32.mrb[0].mxu0
  %4701 = vmatprep.mubr.f32.mxu0 0.0
  %4702 = vmatmul.mubr.f32.gmra.mrb[0].mxu0 %v2184
  %v4703 = vpop.f32.mrb[0].mxu0
  %v4704 = vadd.f32 0.0, %v4703
  %v4705 = vpop.f32.mrb[0].mxu0
  %4706 = vmatprep.mubr.f32.mxu0 0.0
  %4707 = vmatmul.mubr.f32.gmra.mrb[0].mxu0 %v2187
  %v4708 = vpop.f32.mrb[0].mxu0
  %v4709 = vadd.f32 0.0, %v4708
  %v4710 = vpop.f32.mrb[0].mxu0
  %4711 = vmatprep.mubr.f32.mxu0 0.0
  %4712 = vmatmul.mubr.f32.gmra.mrb[0].mxu0 %v2190
  %v4713 = vpop.f32.mrb[0].mxu0
  %v4714 = vadd.f32 0.0, %v4713
  %v4715 = vpop.f32.mrb[0].mxu0
  %4716 = vmatprep.mubr.f32.mxu0 0.0
  %4717 = vmatmul.mubr.f32.gmra.mrb[0].mxu0 %v2193
  %v4718 = vpop.f32.mrb[0].mxu0
  %v4719 = vadd.f32 0.0, %v4718
  %v4720 = vpop.f32.mrb[0].mxu0
  %4721 = vmatprep.mubr.f32.mxu0 0.0
  %4722 = vmatmul.mubr.f32.gmra.mrb[0].mxu0 %v2196
  %v4723 = vpop.f32.mrb[0].mxu0
  %v4724 = vadd.f32 0.0, %v4723
  %v4725 = vpop.f32.mrb[0].mxu0
  %4726 = vmatprep.mubr.f32.mxu0 0.0
  %4727 = vmatmul.mubr.f32.gmra.mrb[0].mxu0 %v2199
  %v4728 = vpop.f32.mrb[0].mxu0
  %v4729 = vadd.f32 0.0, %v4728
  %v4730 = vpop.f32.mrb[0].mxu0
  %4731 = vmatprep.mubr.f32.mxu0 0.0
  %4732 = vmatmul.mubr.f32.gmra.mrb[0].mxu0 %v2202
  %v4733 = vpop.f32.mrb[0].mxu0
  %v4734 = vadd.f32 0.0, %v4733
  %v4735 = vpop.f32.mrb[0].mxu0
  %4736 = vmatprep.mubr.f32.mxu0 0.0
  %4737 = vmatmul.mubr.f32.gmra.mrb[0].mxu0 %v2205
  %v4738 = vpop.f32.mrb[0].mxu0
  %v4739 = vadd.f32 0.0, %v4738
  %v4740 = vpop.f32.mrb[0].mxu0
  %4741 = vmatprep.mubr.f32.mxu0 0.0
  %4742 = vmatmul.mubr.f32.gmra.mrb[0].mxu0 %v2208
  %v4743 = vpop.f32.mrb[0].mxu0
  %v4744 = vadd.f32 0.0, %v4743
  %v4745 = vpop.f32.mrb[0].mxu0
  %4746 = vmatprep.mubr.f32.mxu0 0.0
  %4747 = vmatmul.mubr.f32.gmra.mrb[0].mxu0 %v2211
  %v4748 = vpop.f32.mrb[0].mxu0
  %v4749 = vadd.f32 0.0, %v4748
  %v4750 = vpop.f32.mrb[0].mxu0
  %4751 = vmatprep.mubr.f32.mxu0 0.0
  %4752 = vmatmul.mubr.f32.gmra.mrb[0].mxu0 %v2214
  %v4753 = vpop.f32.mrb[0].mxu0
  %v4754 = vadd.f32 0.0, %v4753
  %v4755 = vpop.f32.mrb[0].mxu0
  %4756 = vmatprep.mubr.f32.mxu0 0.0
  %4757 = vmatmul.mubr.f32.gmra.mrb[0].mxu0 %v2217
  %v4758 = vpop.f32.mrb[0].mxu0
  %v4759 = vadd.f32 0.0, %v4758
  %v4760 = vpop.f32.mrb[0].mxu0
  %4761 = vmatprep.mubr.f32.mxu0 0.0
  %4762 = vmatmul.mubr.f32.gmra.mrb[0].mxu0 %v2220
  %v4763 = vpop.f32.mrb[0].mxu0
  %v4764 = vadd.f32 0.0, %v4763
  %v4765 = vpop.f32.mrb[0].mxu0
  %4766 = vmatprep.mubr.f32.mxu0 0.0
  %4767 = vmatmul.mubr.f32.gmra.mrb[0].mxu0 %v2223
  %v4768 = vpop.f32.mrb[0].mxu0
  %v4769 = vadd.f32 0.0, %v4768
  %v4770 = vpop.f32.mrb[0].mxu0
  %4771 = vmatprep.mubr.f32.mxu0 0.0
  %4772 = vmatmul.mubr.f32.gmra.mrb[0].mxu0 %v2226
  %v4773 = vpop.f32.mrb[0].mxu0
  %v4774 = vadd.f32 0.0, %v4773
  %v4775 = vpop.f32.mrb[0].mxu0
  %4776 = vmatprep.mubr.f32.mxu0 0.0
  %4777 = vmatmul.mubr.f32.gmra.mrb[0].mxu0 %v2229
  %v4778 = vpop.f32.mrb[0].mxu0
  %v4779 = vadd.f32 0.0, %v4778
  %v4780 = vpop.f32.mrb[0].mxu0
  %4781 = vmatprep.mubr.f32.mxu0 0.0
  %4782 = vmatmul.mubr.f32.gmra.mrb[0].mxu0 %v2232
  %v4783 = vpop.f32.mrb[0].mxu0
  %v4784 = vadd.f32 0.0, %v4783
  %v4785 = vpop.f32.mrb[0].mxu0
  %4786 = vmatprep.mubr.f32.mxu0 0.0
  %4787 = vmatmul.mubr.f32.gmra.mrb[0].mxu0 %v2235
  %v4788 = vpop.f32.mrb[0].mxu0
  %v4789 = vadd.f32 0.0, %v4788
  %v4790 = vpop.f32.mrb[0].mxu0
  %4791 = vmatprep.mubr.f32.mxu0 0.0
  %4792 = vmatmul.mubr.f32.gmra.mrb[0].mxu0 %v2238
  %v4793 = vpop.f32.mrb[0].mxu0
  %v4794 = vadd.f32 0.0, %v4793
  %v4795 = vpop.f32.mrb[0].mxu0
  %4796 = vmatprep.mubr.f32.mxu0 0.0
  %4797 = vmatmul.mubr.f32.gmra.mrb[0].mxu0 %v2241
  %v4798 = vpop.f32.mrb[0].mxu0
  %v4799 = vadd.f32 0.0, %v4798
  %v4800 = vpop.f32.mrb[0].mxu0
  %4801 = vmatprep.mubr.f32.mxu0 0.0
  %4802 = vmatmul.mubr.f32.gmra.mrb[0].mxu0 %v2244
  %v4803 = vpop.f32.mrb[0].mxu0
  %v4804 = vadd.f32 0.0, %v4803
  %v4805 = vpop.f32.mrb[0].mxu0
  %4806 = vmatprep.mubr.f32.mxu0 0.0
  %4807 = vmatmul.mubr.f32.gmra.mrb[0].mxu0 %v2247
  %v4808 = vpop.f32.mrb[0].mxu0
  %v4809 = vadd.f32 0.0, %v4808
  %v4810 = vpop.f32.mrb[0].mxu0
  %4811 = vmatprep.mubr.f32.mxu0 0.0
  %4812 = vmatmul.mubr.f32.gmra.mrb[0].mxu0 %v2250
  %v4813 = vpop.f32.mrb[0].mxu0
  %v4814 = vadd.f32 0.0, %v4813
  %v4815 = vpop.f32.mrb[0].mxu0
  %4816 = vmatprep.mubr.f32.mxu0 0.0
  %4817 = vmatmul.mubr.f32.gmra.mrb[0].mxu0 %v2253
  %v4818 = vpop.f32.mrb[0].mxu0
  %v4819 = vadd.f32 0.0, %v4818
  %v4820 = vpop.f32.mrb[0].mxu0
  %4821 = vmatprep.mubr.f32.mxu0 0.0
  %4822 = vmatmul.mubr.f32.gmra.mrb[0].mxu0 %v2256
  %v4823 = vpop.f32.mrb[0].mxu0
  %v4824 = vadd.f32 0.0, %v4823
  %v4825 = vpop.f32.mrb[0].mxu0
  %4826 = vmatprep.mubr.f32.mxu0 0.0
  %4827 = vmatmul.mubr.f32.gmra.mrb[0].mxu0 %v2259
  %v4828 = vpop.f32.mrb[0].mxu0
  %v4829 = vadd.f32 0.0, %v4828
  %v4830 = vpop.f32.mrb[0].mxu0
  %4831 = vmatprep.mubr.f32.mxu0 0.0
  %4832 = vmatmul.mubr.f32.gmra.mrb[0].mxu0 %v2262
  %v4833 = vpop.f32.mrb[0].mxu0
  %v4834 = vadd.f32 0.0, %v4833
  %v4835 = vpop.f32.mrb[0].mxu0
  %4836 = vmatprep.mubr.f32.mxu0 0.0
  %4837 = vmatmul.mubr.f32.gmra.mrb[0].mxu0 %v2265
  %v4838 = vpop.f32.mrb[0].mxu0
  %v4839 = vadd.f32 0.0, %v4838
  %v4840 = vpop.f32.mrb[0].mxu0
  %4841 = vmatprep.mubr.f32.mxu0 0.0
  %4842 = vmatmul.mubr.f32.gmra.mrb[0].mxu0 %v2268
  %v4843 = vpop.f32.mrb[0].mxu0
  %v4844 = vadd.f32 0.0, %v4843
  %v4845 = vpop.f32.mrb[0].mxu0
  %4846 = vmatprep.mubr.f32.mxu0 0.0
  %4847 = vmatmul.mubr.f32.gmra.mrb[0].mxu0 %v2271
  %v4848 = vpop.f32.mrb[0].mxu0
  %v4849 = vadd.f32 0.0, %v4848
  %v4850 = vpop.f32.mrb[0].mxu0
  %4851 = vmatprep.mubr.f32.mxu0 0.0
  %4852 = vmatmul.mubr.f32.gmra.mrb[0].mxu0 %v2274
  %v4853 = vpop.f32.mrb[0].mxu0
  %v4854 = vadd.f32 0.0, %v4853
  %v4855 = vpop.f32.mrb[0].mxu0
  %4856 = vmatprep.mubr.f32.mxu0 0.0
  %4857 = vmatmul.mubr.f32.gmra.mrb[0].mxu0 %v2277
  %v4858 = vpop.f32.mrb[0].mxu0
  %v4859 = vadd.f32 0.0, %v4858
  %v4860 = vpop.f32.mrb[0].mxu0
  %4861 = vmatprep.mubr.f32.mxu0 0.0
  %4862 = vmatmul.mubr.f32.gmra.mrb[0].mxu0 %v2280
  %v4863 = vpop.f32.mrb[0].mxu0
  %v4864 = vadd.f32 0.0, %v4863
  %v4865 = vpop.f32.mrb[0].mxu0
  %4866 = vmatprep.mubr.f32.mxu0 0.0
  %4867 = vmatmul.mubr.f32.gmra.mrb[0].mxu0 %v2283
  %v4868 = vpop.f32.mrb[0].mxu0
  %v4869 = vadd.f32 0.0, %v4868
  %v4870 = vpop.f32.mrb[0].mxu0
  %4871 = vmatprep.mubr.f32.mxu0 0.0
  %4872 = vmatmul.mubr.f32.gmra.mrb[0].mxu0 %v2286
  %v4873 = vpop.f32.mrb[0].mxu0
  %v4874 = vadd.f32 0.0, %v4873
  %v4875 = vpop.f32.mrb[0].mxu0
  %4876 = vmatprep.mubr.f32.mxu0 0.0
  %4877 = vmatmul.mubr.f32.gmra.mrb[0].mxu0 %v2289
  %v4878 = vpop.f32.mrb[0].mxu0
  %v4879 = vadd.f32 0.0, %v4878
  %v4880 = vpop.f32.mrb[0].mxu0
  %4881 = vmatprep.mubr.f32.mxu0 0.0
  %4882 = vmatmul.mubr.f32.gmra.mrb[0].mxu0 %v2292
  %v4883 = vpop.f32.mrb[0].mxu0
  %v4884 = vadd.f32 0.0, %v4883
  %v4885 = vpop.f32.mrb[0].mxu0
  %4886 = vmatprep.mubr.f32.mxu0 0.0
  %4887 = vmatmul.mubr.f32.gmra.mrb[0].mxu0 %v2295
  %v4888 = vpop.f32.mrb[0].mxu0
  %v4889 = vadd.f32 0.0, %v4888
  %v4890 = vpop.f32.mrb[0].mxu0
  %4891 = vmatprep.mubr.f32.mxu0 0.0
  %4892 = vmatmul.mubr.f32.gmra.mrb[0].mxu0 %v2298
  %v4893 = vpop.f32.mrb[0].mxu0
  %v4894 = vadd.f32 0.0, %v4893
  %v4895 = vpop.f32.mrb[0].mxu0
  %4896 = vmatprep.mubr.f32.mxu0 0.0
  %4897 = vmatmul.mubr.f32.gmra.mrb[0].mxu0 %v2301
  %v4898 = vpop.f32.mrb[0].mxu0
  %v4899 = vadd.f32 0.0, %v4898
  %v4900 = vpop.f32.mrb[0].mxu0
  %4901 = vmatprep.mubr.f32.mxu0 0.0
  %4902 = vmatmul.mubr.f32.gmra.mrb[0].mxu0 %v2304
  %v4903 = vpop.f32.mrb[0].mxu0
  %v4904 = vadd.f32 0.0, %v4903
  %v4905 = vpop.f32.mrb[0].mxu0
  %4906 = vmatprep.mubr.f32.mxu0 0.0
  %4907 = vmatmul.mubr.f32.gmra.mrb[0].mxu0 %v2307
  %v4908 = vpop.f32.mrb[0].mxu0
  %v4909 = vadd.f32 0.0, %v4908
  %v4910 = vpop.f32.mrb[0].mxu0
  %4911 = vmatprep.mubr.f32.mxu0 0.0
  %4912 = vmatmul.mubr.f32.gmra.mrb[0].mxu0 %v2310
  %v4913 = vpop.f32.mrb[0].mxu0
  %v4914 = vadd.f32 0.0, %v4913
  %v4915 = vpop.f32.mrb[0].mxu0
  %4916 = vmatprep.mubr.f32.mxu0 0.0
  %4917 = vmatmul.mubr.f32.gmra.mrb[0].mxu0 %v2313
  %v4918 = vpop.f32.mrb[0].mxu0
  %v4919 = vadd.f32 0.0, %v4918
  %v4920 = vpop.f32.mrb[0].mxu0
  %4921 = vmatprep.mubr.f32.mxu0 0.0
  %4922 = vmatmul.mubr.f32.gmra.mrb[0].mxu0 %v2316
  %v4923 = vpop.f32.mrb[0].mxu0
  %v4924 = vadd.f32 0.0, %v4923
  %v4925 = vpop.f32.mrb[0].mxu0
  %4926 = vmatprep.mubr.f32.mxu0 0.0
  %4927 = vmatmul.mubr.f32.gmra.mrb[0].mxu0 %v2319
  %v4928 = vpop.f32.mrb[0].mxu0
  %v4929 = vadd.f32 0.0, %v4928
  %v4930 = vpop.f32.mrb[0].mxu0
  %4931 = vmatprep.mubr.f32.mxu0 0.0
  %4932 = vmatmul.mubr.f32.gmra.mrb[0].mxu0 %v2322
  %v4933 = vpop.f32.mrb[0].mxu0
  %v4934 = vadd.f32 0.0, %v4933
  %v4935 = vpop.f32.mrb[0].mxu0
  %4936 = vmatprep.mubr.f32.mxu0 0.0
  %4937 = vmatmul.mubr.f32.gmra.mrb[0].mxu0 %v2325
  %v4938 = vpop.f32.mrb[0].mxu0
  %v4939 = vadd.f32 0.0, %v4938
  %v4940 = vpop.f32.mrb[0].mxu0
  %4941 = vmatprep.mubr.f32.mxu0 0.0
  %4942 = vmatmul.mubr.f32.gmra.mrb[0].mxu0 %v2328
  %v4943 = vpop.f32.mrb[0].mxu0
  %v4944 = vadd.f32 0.0, %v4943
  %v4945 = vpop.f32.mrb[0].mxu0
  %4946 = vmatprep.mubr.f32.mxu0 0.0
  %4947 = vmatmul.mubr.f32.gmra.mrb[0].mxu0 %v2331
  %v4948 = vpop.f32.mrb[0].mxu0
  %v4949 = vadd.f32 0.0, %v4948
  %v4950 = vpop.f32.mrb[0].mxu0
  %4951 = vmatprep.mubr.f32.mxu0 0.0
  %4952 = vmatmul.mubr.f32.gmra.mrb[0].mxu0 %v2334
  %v4953 = vpop.f32.mrb[0].mxu0
  %v4954 = vadd.f32 0.0, %v4953
  %v4955 = vpop.f32.mrb[0].mxu0
  %4956 = vmatprep.mubr.f32.mxu0 0.0
  %4957 = vmatmul.mubr.f32.gmra.mrb[0].mxu0 %v2337
  %v4958 = vpop.f32.mrb[0].mxu0
  %v4959 = vadd.f32 0.0, %v4958
  %v4960 = vpop.f32.mrb[0].mxu0
  %4961 = vmatprep.mubr.f32.mxu0 0.0
  %4962 = vmatmul.mubr.f32.gmra.mrb[0].mxu0 %v2340
  %v4963 = vpop.f32.mrb[0].mxu0
  %v4964 = vadd.f32 0.0, %v4963
  %v4965 = vpop.f32.mrb[0].mxu0
  %4966 = vdwg.mxu0
  %vm4967 = vcmask 130048
  %4968 = vst.msk [vmem:[%s6] sm:$0xff] %vm4967, %v2409
  %4969 = vst.msk [vmem:[%s6 + $0x8] sm:$0xff] %vm4967, %v2414
  %4970 = vst.msk [vmem:[%s6 + $0x10] sm:$0xff] %vm4967, %v2419
  %4971 = vst.msk [vmem:[%s6 + $0x18] sm:$0xff] %vm4967, %v2424
  %4972 = vst.msk [vmem:[%s6 + $0x20] sm:$0xff] %vm4967, %v2429
  %4973 = vst.msk [vmem:[%s6 + $0x28] sm:$0xff] %vm4967, %v2434
  %4974 = vst.msk [vmem:[%s6 + $0x30] sm:$0xff] %vm4967, %v2439
  %4975 = vst.msk [vmem:[%s6 + $0x38] sm:$0xff] %vm4967, %v2444
  %4976 = vst.msk [vmem:[%s6 + $0x40] sm:$0xff] %vm4967, %v2449
  %4977 = vst.msk [vmem:[%s6 + $0x48] sm:$0xff] %vm4967, %v2454
  %4978 = vst.msk [vmem:[%s6 + $0x50] sm:$0xff] %vm4967, %v2459
  %4979 = vst.msk [vmem:[%s6 + $0x58] sm:$0xff] %vm4967, %v2464
  %4980 = vst.msk [vmem:[%s6 + $0x60] sm:$0xff] %vm4967, %v2469
  %4981 = vst.msk [vmem:[%s6 + $0x68] sm:$0xff] %vm4967, %v2474
  %4982 = vst.msk [vmem:[%s6 + $0x70] sm:$0xff] %vm4967, %v2479
  %4983 = vst.msk [vmem:[%s6 + $0x78] sm:$0xff] %vm4967, %v2484
  %4984 = vst.msk [vmem:[%s6 + $0x80] sm:$0xff] %vm4967, %v2489
  %4985 = vst.msk [vmem:[%s6 + $0x88] sm:$0xff] %vm4967, %v2494
  %4986 = vst.msk [vmem:[%s6 + $0x90] sm:$0xff] %vm4967, %v2499
  %4987 = vst.msk [vmem:[%s6 + $0x98] sm:$0xff] %vm4967, %v2504
  %4988 = vst.msk [vmem:[%s6 + $0xa0] sm:$0xff] %vm4967, %v2509
  %4989 = vst.msk [vmem:[%s6 + $0xa8] sm:$0xff] %vm4967, %v2514
  %4990 = vst.msk [vmem:[%s6 + $0xb0] sm:$0xff] %vm4967, %v2519
  %4991 = vst.msk [vmem:[%s6 + $0xb8] sm:$0xff] %vm4967, %v2524
  %4992 = vst.msk [vmem:[%s6 + $0xc0] sm:$0xff] %vm4967, %v2529
  %4993 = vst.msk [vmem:[%s6 + $0xc8] sm:$0xff] %vm4967, %v2534
  %4994 = vst.msk [vmem:[%s6 + $0xd0] sm:$0xff] %vm4967, %v2539
  %4995 = vst.msk [vmem:[%s6 + $0xd8] sm:$0xff] %vm4967, %v2544
  %4996 = vst.msk [vmem:[%s6 + $0xe0] sm:$0xff] %vm4967, %v2549
  %4997 = vst.msk [vmem:[%s6 + $0xe8] sm:$0xff] %vm4967, %v2554
  %4998 = vst.msk [vmem:[%s6 + $0xf0] sm:$0xff] %vm4967, %v2559
  %4999 = vst.msk [vmem:[%s6 + $0xf8] sm:$0xff] %vm4967, %v2564
  %5000 = vst.msk [vmem:[%s6 + $0x100] sm:$0xff] %vm4967, %v2569
  %5001 = vst.msk [vmem:[%s6 + $0x108] sm:$0xff] %vm4967, %v2574
  %5002 = vst.msk [vmem:[%s6 + $0x110] sm:$0xff] %vm4967, %v2579
  %5003 = vst.msk [vmem:[%s6 + $0x118] sm:$0xff] %vm4967, %v2584
  %5004 = vst.msk [vmem:[%s6 + $0x120] sm:$0xff] %vm4967, %v2589
  %5005 = vst.msk [vmem:[%s6 + $0x128] sm:$0xff] %vm4967, %v2594
  %5006 = vst.msk [vmem:[%s6 + $0x130] sm:$0xff] %vm4967, %v2599
  %5007 = vst.msk [vmem:[%s6 + $0x138] sm:$0xff] %vm4967, %v2604
  %5008 = vst.msk [vmem:[%s6 + $0x140] sm:$0xff] %vm4967, %v2609
  %5009 = vst.msk [vmem:[%s6 + $0x148] sm:$0xff] %vm4967, %v2614
  %5010 = vst.msk [vmem:[%s6 + $0x150] sm:$0xff] %vm4967, %v2619
  %5011 = vst.msk [vmem:[%s6 + $0x158] sm:$0xff] %vm4967, %v2624
  %5012 = vst.msk [vmem:[%s6 + $0x160] sm:$0xff] %vm4967, %v2629
  %5013 = vst.msk [vmem:[%s6 + $0x168] sm:$0xff] %vm4967, %v2634
  %5014 = vst.msk [vmem:[%s6 + $0x170] sm:$0xff] %vm4967, %v2639
  %5015 = vst.msk [vmem:[%s6 + $0x178] sm:$0xff] %vm4967, %v2644
  %5016 = vst.msk [vmem:[%s6 + $0x180] sm:$0xff] %vm4967, %v2649
  %5017 = vst.msk [vmem:[%s6 + $0x188] sm:$0xff] %vm4967, %v2654
  %5018 = vst.msk [vmem:[%s6 + $0x190] sm:$0xff] %vm4967, %v2659
  %5019 = vst.msk [vmem:[%s6 + $0x198] sm:$0xff] %vm4967, %v2664
  %5020 = vst.msk [vmem:[%s6 + $0x1a0] sm:$0xff] %vm4967, %v2669
  %5021 = vst.msk [vmem:[%s6 + $0x1a8] sm:$0xff] %vm4967, %v2674
  %5022 = vst.msk [vmem:[%s6 + $0x1b0] sm:$0xff] %vm4967, %v2679
  %5023 = vst.msk [vmem:[%s6 + $0x1b8] sm:$0xff] %vm4967, %v2684
  %5024 = vst.msk [vmem:[%s6 + $0x1c0] sm:$0xff] %vm4967, %v2689
  %5025 = vst.msk [vmem:[%s6 + $0x1c8] sm:$0xff] %vm4967, %v2694
  %5026 = vst.msk [vmem:[%s6 + $0x1d0] sm:$0xff] %vm4967, %v2699
  %5027 = vst.msk [vmem:[%s6 + $0x1d8] sm:$0xff] %vm4967, %v2704
  %5028 = vst.msk [vmem:[%s6 + $0x1e0] sm:$0xff] %vm4967, %v2709
  %5029 = vst.msk [vmem:[%s6 + $0x1e8] sm:$0xff] %vm4967, %v2714
  %5030 = vst.msk [vmem:[%s6 + $0x1f0] sm:$0xff] %vm4967, %v2719
  %5031 = vst.msk [vmem:[%s6 + $0x1f8] sm:$0xff] %vm4967, %v2724
  %5032 = vst.msk [vmem:[%s6 + $0x200] sm:$0xff] %vm4967, %v2729
  %5033 = vst.msk [vmem:[%s6 + $0x208] sm:$0xff] %vm4967, %v2734
  %5034 = vst.msk [vmem:[%s6 + $0x210] sm:$0xff] %vm4967, %v2739
  %5035 = vst.msk [vmem:[%s6 + $0x218] sm:$0xff] %vm4967, %v2744
  %5036 = vst.msk [vmem:[%s6 + $0x220] sm:$0xff] %vm4967, %v2749
  %5037 = vst.msk [vmem:[%s6 + $0x228] sm:$0xff] %vm4967, %v2754
  %5038 = vst.msk [vmem:[%s6 + $0x230] sm:$0xff] %vm4967, %v2759
  %5039 = vst.msk [vmem:[%s6 + $0x238] sm:$0xff] %vm4967, %v2764
  %5040 = vst.msk [vmem:[%s6 + $0x240] sm:$0xff] %vm4967, %v2769
  %5041 = vst.msk [vmem:[%s6 + $0x248] sm:$0xff] %vm4967, %v2774
  %5042 = vst.msk [vmem:[%s6 + $0x250] sm:$0xff] %vm4967, %v2779
  %5043 = vst.msk [vmem:[%s6 + $0x258] sm:$0xff] %vm4967, %v2784
  %5044 = vst.msk [vmem:[%s6 + $0x260] sm:$0xff] %vm4967, %v2789
  %5045 = vst.msk [vmem:[%s6 + $0x268] sm:$0xff] %vm4967, %v2794
  %5046 = vst.msk [vmem:[%s6 + $0x270] sm:$0xff] %vm4967, %v2799
  %5047 = vst.msk [vmem:[%s6 + $0x278] sm:$0xff] %vm4967, %v2804
  %5048 = vst.msk [vmem:[%s6 + $0x280] sm:$0xff] %vm4967, %v2809
  %5049 = vst.msk [vmem:[%s6 + $0x288] sm:$0xff] %vm4967, %v2814
  %5050 = vst.msk [vmem:[%s6 + $0x290] sm:$0xff] %vm4967, %v2819
  %5051 = vst.msk [vmem:[%s6 + $0x298] sm:$0xff] %vm4967, %v2824
  %5052 = vst.msk [vmem:[%s6 + $0x2a0] sm:$0xff] %vm4967, %v2829
  %5053 = vst.msk [vmem:[%s6 + $0x2a8] sm:$0xff] %vm4967, %v2834
  %5054 = vst.msk [vmem:[%s6 + $0x2b0] sm:$0xff] %vm4967, %v2839
  %5055 = vst.msk [vmem:[%s6 + $0x2b8] sm:$0xff] %vm4967, %v2844
  %5056 = vst.msk [vmem:[%s6 + $0x2c0] sm:$0xff] %vm4967, %v2849
  %5057 = vst.msk [vmem:[%s6 + $0x2c8] sm:$0xff] %vm4967, %v2854
  %5058 = vst.msk [vmem:[%s6 + $0x2d0] sm:$0xff] %vm4967, %v2859
  %5059 = vst.msk [vmem:[%s6 + $0x2d8] sm:$0xff] %vm4967, %v2864
  %5060 = vst.msk [vmem:[%s6 + $0x2e0] sm:$0xff] %vm4967, %v2869
  %5061 = vst.msk [vmem:[%s6 + $0x2e8] sm:$0xff] %vm4967, %v2874
  %5062 = vst.msk [vmem:[%s6 + $0x2f0] sm:$0xff] %vm4967, %v2879
  %5063 = vst.msk [vmem:[%s6 + $0x2f8] sm:$0xff] %vm4967, %v2884
  %5064 = vst.msk [vmem:[%s6 + $0x300] sm:$0xff] %vm4967, %v2889
  %5065 = vst.msk [vmem:[%s6 + $0x308] sm:$0xff] %vm4967, %v2894
  %5066 = vst.msk [vmem:[%s6 + $0x310] sm:$0xff] %vm4967, %v2899
  %5067 = vst.msk [vmem:[%s6 + $0x318] sm:$0xff] %vm4967, %v2904
  %5068 = vst.msk [vmem:[%s6 + $0x320] sm:$0xff] %vm4967, %v2909
  %5069 = vst.msk [vmem:[%s6 + $0x328] sm:$0xff] %vm4967, %v2914
  %5070 = vst.msk [vmem:[%s6 + $0x330] sm:$0xff] %vm4967, %v2919
  %5071 = vst.msk [vmem:[%s6 + $0x338] sm:$0xff] %vm4967, %v2924
  %5072 = vst.msk [vmem:[%s6 + $0x340] sm:$0xff] %vm4967, %v2929
  %5073 = vst.msk [vmem:[%s6 + $0x348] sm:$0xff] %vm4967, %v2934
  %5074 = vst.msk [vmem:[%s6 + $0x350] sm:$0xff] %vm4967, %v2939
  %5075 = vst.msk [vmem:[%s6 + $0x358] sm:$0xff] %vm4967, %v2944
  %5076 = vst.msk [vmem:[%s6 + $0x360] sm:$0xff] %vm4967, %v2949
  %5077 = vst.msk [vmem:[%s6 + $0x368] sm:$0xff] %vm4967, %v2954
  %5078 = vst.msk [vmem:[%s6 + $0x370] sm:$0xff] %vm4967, %v2959
  %5079 = vst.msk [vmem:[%s6 + $0x378] sm:$0xff] %vm4967, %v2964
  %5080 = vst.msk [vmem:[%s6 + $0x380] sm:$0xff] %vm4967, %v2969
  %5081 = vst.msk [vmem:[%s6 + $0x388] sm:$0xff] %vm4967, %v2974
  %5082 = vst.msk [vmem:[%s6 + $0x390] sm:$0xff] %vm4967, %v2979
  %5083 = vst.msk [vmem:[%s6 + $0x398] sm:$0xff] %vm4967, %v2984
  %5084 = vst.msk [vmem:[%s6 + $0x3a0] sm:$0xff] %vm4967, %v2989
  %5085 = vst.msk [vmem:[%s6 + $0x3a8] sm:$0xff] %vm4967, %v2994
  %5086 = vst.msk [vmem:[%s6 + $0x3b0] sm:$0xff] %vm4967, %v2999
  %5087 = vst.msk [vmem:[%s6 + $0x3b8] sm:$0xff] %vm4967, %v3004
  %5088 = vst.msk [vmem:[%s6 + $0x3c0] sm:$0xff] %vm4967, %v3009
  %5089 = vst.msk [vmem:[%s6 + $0x3c8] sm:$0xff] %vm4967, %v3014
  %5090 = vst.msk [vmem:[%s6 + $0x3d0] sm:$0xff] %vm4967, %v3019
  %5091 = vst.msk [vmem:[%s6 + $0x3d8] sm:$0xff] %vm4967, %v3024
  %5092 = vst.msk [vmem:[%s6 + $0x3e0] sm:$0xff] %vm4967, %v3029
  %5093 = vst.msk [vmem:[%s6 + $0x3e8] sm:$0xff] %vm4967, %v3034
  %5094 = vst.msk [vmem:[%s6 + $0x3f0] sm:$0xff] %vm4967, %v3039
  %5095 = vst.msk [vmem:[%s6 + $0x3f8] sm:$0xff] %vm4967, %v3044
  %5096 = vst.msk [vmem:[%s6 + $0x400] sm:$0xff] %vm4967, %v3049
  %5097 = vst.msk [vmem:[%s6 + $0x408] sm:$0xff] %vm4967, %v3054
  %5098 = vst.msk [vmem:[%s6 + $0x410] sm:$0xff] %vm4967, %v3059
  %5099 = vst.msk [vmem:[%s6 + $0x418] sm:$0xff] %vm4967, %v3064
  %5100 = vst.msk [vmem:[%s6 + $0x420] sm:$0xff] %vm4967, %v3069
  %5101 = vst.msk [vmem:[%s6 + $0x428] sm:$0xff] %vm4967, %v3074
  %5102 = vst.msk [vmem:[%s6 + $0x430] sm:$0xff] %vm4967, %v3079
  %5103 = vst.msk [vmem:[%s6 + $0x438] sm:$0xff] %vm4967, %v3084
  %5104 = vst.msk [vmem:[%s6 + $0x440] sm:$0xff] %vm4967, %v3089
  %5105 = vst.msk [vmem:[%s6 + $0x448] sm:$0xff] %vm4967, %v3094
  %5106 = vst.msk [vmem:[%s6 + $0x450] sm:$0xff] %vm4967, %v3099
  %5107 = vst.msk [vmem:[%s6 + $0x458] sm:$0xff] %vm4967, %v3104
  %5108 = vst.msk [vmem:[%s6 + $0x460] sm:$0xff] %vm4967, %v3109
  %5109 = vst.msk [vmem:[%s6 + $0x468] sm:$0xff] %vm4967, %v3114
  %5110 = vst.msk [vmem:[%s6 + $0x470] sm:$0xff] %vm4967, %v3119
  %5111 = vst.msk [vmem:[%s6 + $0x478] sm:$0xff] %vm4967, %v3124
  %5112 = vst.msk [vmem:[%s6 + $0x480] sm:$0xff] %vm4967, %v3129
  %5113 = vst.msk [vmem:[%s6 + $0x488] sm:$0xff] %vm4967, %v3134
  %5114 = vst.msk [vmem:[%s6 + $0x490] sm:$0xff] %vm4967, %v3139
  %5115 = vst.msk [vmem:[%s6 + $0x498] sm:$0xff] %vm4967, %v3144
  %5116 = vst.msk [vmem:[%s6 + $0x4a0] sm:$0xff] %vm4967, %v3149
  %5117 = vst.msk [vmem:[%s6 + $0x4a8] sm:$0xff] %vm4967, %v3154
  %5118 = vst.msk [vmem:[%s6 + $0x4b0] sm:$0xff] %vm4967, %v3159
  %5119 = vst.msk [vmem:[%s6 + $0x4b8] sm:$0xff] %vm4967, %v3164
  %5120 = vst.msk [vmem:[%s6 + $0x4c0] sm:$0xff] %vm4967, %v3169
  %5121 = vst.msk [vmem:[%s6 + $0x4c8] sm:$0xff] %vm4967, %v3174
  %5122 = vst.msk [vmem:[%s6 + $0x4d0] sm:$0xff] %vm4967, %v3179
  %5123 = vst.msk [vmem:[%s6 + $0x4d8] sm:$0xff] %vm4967, %v3184
  %5124 = vst.msk [vmem:[%s6 + $0x4e0] sm:$0xff] %vm4967, %v3189
  %5125 = vst.msk [vmem:[%s6 + $0x4e8] sm:$0xff] %vm4967, %v3194
  %5126 = vst.msk [vmem:[%s6 + $0x4f0] sm:$0xff] %vm4967, %v3199
  %5127 = vst.msk [vmem:[%s6 + $0x4f8] sm:$0xff] %vm4967, %v3204
  %5128 = vst.msk [vmem:[%s6 + $0x500] sm:$0xff] %vm4967, %v3209
  %5129 = vst.msk [vmem:[%s6 + $0x508] sm:$0xff] %vm4967, %v3214
  %5130 = vst.msk [vmem:[%s6 + $0x510] sm:$0xff] %vm4967, %v3219
  %5131 = vst.msk [vmem:[%s6 + $0x518] sm:$0xff] %vm4967, %v3224
  %5132 = vst.msk [vmem:[%s6 + $0x520] sm:$0xff] %vm4967, %v3229
  %5133 = vst.msk [vmem:[%s6 + $0x528] sm:$0xff] %vm4967, %v3234
  %5134 = vst.msk [vmem:[%s6 + $0x530] sm:$0xff] %vm4967, %v3239
  %5135 = vst.msk [vmem:[%s6 + $0x538] sm:$0xff] %vm4967, %v3244
  %5136 = vst.msk [vmem:[%s6 + $0x540] sm:$0xff] %vm4967, %v3249
  %5137 = vst.msk [vmem:[%s6 + $0x548] sm:$0xff] %vm4967, %v3254
  %5138 = vst.msk [vmem:[%s6 + $0x550] sm:$0xff] %vm4967, %v3259
  %5139 = vst.msk [vmem:[%s6 + $0x558] sm:$0xff] %vm4967, %v3264
  %5140 = vst.msk [vmem:[%s6 + $0x560] sm:$0xff] %vm4967, %v3269
  %5141 = vst.msk [vmem:[%s6 + $0x568] sm:$0xff] %vm4967, %v3274
  %5142 = vst.msk [vmem:[%s6 + $0x570] sm:$0xff] %vm4967, %v3279
  %5143 = vst.msk [vmem:[%s6 + $0x578] sm:$0xff] %vm4967, %v3284
  %5144 = vst.msk [vmem:[%s6 + $0x580] sm:$0xff] %vm4967, %v3289
  %5145 = vst.msk [vmem:[%s6 + $0x588] sm:$0xff] %vm4967, %v3294
  %5146 = vst.msk [vmem:[%s6 + $0x590] sm:$0xff] %vm4967, %v3299
  %5147 = vst.msk [vmem:[%s6 + $0x598] sm:$0xff] %vm4967, %v3304
  %5148 = vst.msk [vmem:[%s6 + $0x5a0] sm:$0xff] %vm4967, %v3309
  %5149 = vst.msk [vmem:[%s6 + $0x5a8] sm:$0xff] %vm4967, %v3314
  %5150 = vst.msk [vmem:[%s6 + $0x5b0] sm:$0xff] %vm4967, %v3319
  %5151 = vst.msk [vmem:[%s6 + $0x5b8] sm:$0xff] %vm4967, %v3324
  %5152 = vst.msk [vmem:[%s6 + $0x5c0] sm:$0xff] %vm4967, %v3329
  %5153 = vst.msk [vmem:[%s6 + $0x5c8] sm:$0xff] %vm4967, %v3334
  %5154 = vst.msk [vmem:[%s6 + $0x5d0] sm:$0xff] %vm4967, %v3339
  %5155 = vst.msk [vmem:[%s6 + $0x5d8] sm:$0xff] %vm4967, %v3344
  %5156 = vst.msk [vmem:[%s6 + $0x5e0] sm:$0xff] %vm4967, %v3349
  %5157 = vst.msk [vmem:[%s6 + $0x5e8] sm:$0xff] %vm4967, %v3354
  %5158 = vst.msk [vmem:[%s6 + $0x5f0] sm:$0xff] %vm4967, %v3359
  %5159 = vst.msk [vmem:[%s6 + $0x5f8] sm:$0xff] %vm4967, %v3364
  %5160 = vst.msk [vmem:[%s6 + $0x600] sm:$0xff] %vm4967, %v3369
  %5161 = vst.msk [vmem:[%s6 + $0x608] sm:$0xff] %vm4967, %v3374
  %5162 = vst.msk [vmem:[%s6 + $0x610] sm:$0xff] %vm4967, %v3379
  %5163 = vst.msk [vmem:[%s6 + $0x618] sm:$0xff] %vm4967, %v3384
  %5164 = vst.msk [vmem:[%s6 + $0x620] sm:$0xff] %vm4967, %v3389
  %5165 = vst.msk [vmem:[%s6 + $0x628] sm:$0xff] %vm4967, %v3394
  %5166 = vst.msk [vmem:[%s6 + $0x630] sm:$0xff] %vm4967, %v3399
  %5167 = vst.msk [vmem:[%s6 + $0x638] sm:$0xff] %vm4967, %v3404
  %5168 = vst.msk [vmem:[%s6 + $0x640] sm:$0xff] %vm4967, %v3409
  %5169 = vst.msk [vmem:[%s6 + $0x648] sm:$0xff] %vm4967, %v3414
  %5170 = vst.msk [vmem:[%s6 + $0x650] sm:$0xff] %vm4967, %v3419
  %5171 = vst.msk [vmem:[%s6 + $0x658] sm:$0xff] %vm4967, %v3424
  %5172 = vst.msk [vmem:[%s6 + $0x660] sm:$0xff] %vm4967, %v3429
  %5173 = vst.msk [vmem:[%s6 + $0x668] sm:$0xff] %vm4967, %v3434
  %5174 = vst.msk [vmem:[%s6 + $0x670] sm:$0xff] %vm4967, %v3439
  %5175 = vst.msk [vmem:[%s6 + $0x678] sm:$0xff] %vm4967, %v3444
  %5176 = vst.msk [vmem:[%s6 + $0x680] sm:$0xff] %vm4967, %v3449
  %5177 = vst.msk [vmem:[%s6 + $0x688] sm:$0xff] %vm4967, %v3454
  %5178 = vst.msk [vmem:[%s6 + $0x690] sm:$0xff] %vm4967, %v3459
  %5179 = vst.msk [vmem:[%s6 + $0x698] sm:$0xff] %vm4967, %v3464
  %5180 = vst.msk [vmem:[%s6 + $0x6a0] sm:$0xff] %vm4967, %v3469
  %5181 = vst.msk [vmem:[%s6 + $0x6a8] sm:$0xff] %vm4967, %v3474
  %5182 = vst.msk [vmem:[%s6 + $0x6b0] sm:$0xff] %vm4967, %v3479
  %5183 = vst.msk [vmem:[%s6 + $0x6b8] sm:$0xff] %vm4967, %v3484
  %5184 = vst.msk [vmem:[%s6 + $0x6c0] sm:$0xff] %vm4967, %v3489
  %5185 = vst.msk [vmem:[%s6 + $0x6c8] sm:$0xff] %vm4967, %v3494
  %5186 = vst.msk [vmem:[%s6 + $0x6d0] sm:$0xff] %vm4967, %v3499
  %5187 = vst.msk [vmem:[%s6 + $0x6d8] sm:$0xff] %vm4967, %v3504
  %5188 = vst.msk [vmem:[%s6 + $0x6e0] sm:$0xff] %vm4967, %v3509
  %5189 = vst.msk [vmem:[%s6 + $0x6e8] sm:$0xff] %vm4967, %v3514
  %5190 = vst.msk [vmem:[%s6 + $0x6f0] sm:$0xff] %vm4967, %v3519
  %5191 = vst.msk [vmem:[%s6 + $0x6f8] sm:$0xff] %vm4967, %v3524
  %5192 = vst.msk [vmem:[%s6 + $0x700] sm:$0xff] %vm4967, %v3529
  %5193 = vst.msk [vmem:[%s6 + $0x708] sm:$0xff] %vm4967, %v3534
  %5194 = vst.msk [vmem:[%s6 + $0x710] sm:$0xff] %vm4967, %v3539
  %5195 = vst.msk [vmem:[%s6 + $0x718] sm:$0xff] %vm4967, %v3544
  %5196 = vst.msk [vmem:[%s6 + $0x720] sm:$0xff] %vm4967, %v3549
  %5197 = vst.msk [vmem:[%s6 + $0x728] sm:$0xff] %vm4967, %v3554
  %5198 = vst.msk [vmem:[%s6 + $0x730] sm:$0xff] %vm4967, %v3559
  %5199 = vst.msk [vmem:[%s6 + $0x738] sm:$0xff] %vm4967, %v3564
  %5200 = vst.msk [vmem:[%s6 + $0x740] sm:$0xff] %vm4967, %v3569
  %5201 = vst.msk [vmem:[%s6 + $0x748] sm:$0xff] %vm4967, %v3574
  %5202 = vst.msk [vmem:[%s6 + $0x750] sm:$0xff] %vm4967, %v3579
  %5203 = vst.msk [vmem:[%s6 + $0x758] sm:$0xff] %vm4967, %v3584
  %5204 = vst.msk [vmem:[%s6 + $0x760] sm:$0xff] %vm4967, %v3589
  %5205 = vst.msk [vmem:[%s6 + $0x768] sm:$0xff] %vm4967, %v3594
  %5206 = vst.msk [vmem:[%s6 + $0x770] sm:$0xff] %vm4967, %v3599
  %5207 = vst.msk [vmem:[%s6 + $0x778] sm:$0xff] %vm4967, %v3604
  %5208 = vst.msk [vmem:[%s6 + $0x780] sm:$0xff] %vm4967, %v3609
  %5209 = vst.msk [vmem:[%s6 + $0x788] sm:$0xff] %vm4967, %v3614
  %5210 = vst.msk [vmem:[%s6 + $0x790] sm:$0xff] %vm4967, %v3619
  %5211 = vst.msk [vmem:[%s6 + $0x798] sm:$0xff] %vm4967, %v3624
  %5212 = vst.msk [vmem:[%s6 + $0x7a0] sm:$0xff] %vm4967, %v3629
  %5213 = vst.msk [vmem:[%s6 + $0x7a8] sm:$0xff] %vm4967, %v3634
  %5214 = vst.msk [vmem:[%s6 + $0x7b0] sm:$0xff] %vm4967, %v3639
  %5215 = vst.msk [vmem:[%s6 + $0x7b8] sm:$0xff] %vm4967, %v3644
  %5216 = vst.msk [vmem:[%s6 + $0x7c0] sm:$0xff] %vm4967, %v3649
  %5217 = vst.msk [vmem:[%s6 + $0x7c8] sm:$0xff] %vm4967, %v3654
  %5218 = vst.msk [vmem:[%s6 + $0x7d0] sm:$0xff] %vm4967, %v3659
  %5219 = vst.msk [vmem:[%s6 + $0x7d8] sm:$0xff] %vm4967, %v3664
  %5220 = vst.msk [vmem:[%s6 + $0x7e0] sm:$0xff] %vm4967, %v3669
  %5221 = vst.msk [vmem:[%s6 + $0x7e8] sm:$0xff] %vm4967, %v3674
  %5222 = vst.msk [vmem:[%s6 + $0x7f0] sm:$0xff] %vm4967, %v3679
  %5223 = vst.msk [vmem:[%s6 + $0x7f8] sm:$0xff] %vm4967, %v3684
  %5224 = vst.msk [vmem:[%s6 + $0x800] sm:$0xff] %vm4967, %v3689
  %5225 = vst.msk [vmem:[%s6 + $0x808] sm:$0xff] %vm4967, %v3694
  %5226 = vst.msk [vmem:[%s6 + $0x810] sm:$0xff] %vm4967, %v3699
  %5227 = vst.msk [vmem:[%s6 + $0x818] sm:$0xff] %vm4967, %v3704
  %5228 = vst.msk [vmem:[%s6 + $0x820] sm:$0xff] %vm4967, %v3709
  %5229 = vst.msk [vmem:[%s6 + $0x828] sm:$0xff] %vm4967, %v3714
  %5230 = vst.msk [vmem:[%s6 + $0x830] sm:$0xff] %vm4967, %v3719
  %5231 = vst.msk [vmem:[%s6 + $0x838] sm:$0xff] %vm4967, %v3724
  %5232 = vst.msk [vmem:[%s6 + $0x840] sm:$0xff] %vm4967, %v3729
  %5233 = vst.msk [vmem:[%s6 + $0x848] sm:$0xff] %vm4967, %v3734
  %5234 = vst.msk [vmem:[%s6 + $0x850] sm:$0xff] %vm4967, %v3739
  %5235 = vst.msk [vmem:[%s6 + $0x858] sm:$0xff] %vm4967, %v3744
  %5236 = vst.msk [vmem:[%s6 + $0x860] sm:$0xff] %vm4967, %v3749
  %5237 = vst.msk [vmem:[%s6 + $0x868] sm:$0xff] %vm4967, %v3754
  %5238 = vst.msk [vmem:[%s6 + $0x870] sm:$0xff] %vm4967, %v3759
  %5239 = vst.msk [vmem:[%s6 + $0x878] sm:$0xff] %vm4967, %v3764
  %5240 = vst.msk [vmem:[%s6 + $0x880] sm:$0xff] %vm4967, %v3769
  %5241 = vst.msk [vmem:[%s6 + $0x888] sm:$0xff] %vm4967, %v3774
  %5242 = vst.msk [vmem:[%s6 + $0x890] sm:$0xff] %vm4967, %v3779
  %5243 = vst.msk [vmem:[%s6 + $0x898] sm:$0xff] %vm4967, %v3784
  %5244 = vst.msk [vmem:[%s6 + $0x8a0] sm:$0xff] %vm4967, %v3789
  %5245 = vst.msk [vmem:[%s6 + $0x8a8] sm:$0xff] %vm4967, %v3794
  %5246 = vst.msk [vmem:[%s6 + $0x8b0] sm:$0xff] %vm4967, %v3799
  %5247 = vst.msk [vmem:[%s6 + $0x8b8] sm:$0xff] %vm4967, %v3804
  %5248 = vst.msk [vmem:[%s6 + $0x8c0] sm:$0xff] %vm4967, %v3809
  %5249 = vst.msk [vmem:[%s6 + $0x8c8] sm:$0xff] %vm4967, %v3814
  %5250 = vst.msk [vmem:[%s6 + $0x8d0] sm:$0xff] %vm4967, %v3819
  %5251 = vst.msk [vmem:[%s6 + $0x8d8] sm:$0xff] %vm4967, %v3824
  %5252 = vst.msk [vmem:[%s6 + $0x8e0] sm:$0xff] %vm4967, %v3829
  %5253 = vst.msk [vmem:[%s6 + $0x8e8] sm:$0xff] %vm4967, %v3834
  %5254 = vst.msk [vmem:[%s6 + $0x8f0] sm:$0xff] %vm4967, %v3839
  %5255 = vst.msk [vmem:[%s6 + $0x8f8] sm:$0xff] %vm4967, %v3844
  %5256 = vst.msk [vmem:[%s6 + $0x900] sm:$0xff] %vm4967, %v3849
  %5257 = vst.msk [vmem:[%s6 + $0x908] sm:$0xff] %vm4967, %v3854
  %5258 = vst.msk [vmem:[%s6 + $0x910] sm:$0xff] %vm4967, %v3859
  %5259 = vst.msk [vmem:[%s6 + $0x918] sm:$0xff] %vm4967, %v3864
  %5260 = vst.msk [vmem:[%s6 + $0x920] sm:$0xff] %vm4967, %v3869
  %5261 = vst.msk [vmem:[%s6 + $0x928] sm:$0xff] %vm4967, %v3874
  %5262 = vst.msk [vmem:[%s6 + $0x930] sm:$0xff] %vm4967, %v3879
  %5263 = vst.msk [vmem:[%s6 + $0x938] sm:$0xff] %vm4967, %v3884
  %5264 = vst.msk [vmem:[%s6 + $0x940] sm:$0xff] %vm4967, %v3889
  %5265 = vst.msk [vmem:[%s6 + $0x948] sm:$0xff] %vm4967, %v3894
  %5266 = vst.msk [vmem:[%s6 + $0x950] sm:$0xff] %vm4967, %v3899
  %5267 = vst.msk [vmem:[%s6 + $0x958] sm:$0xff] %vm4967, %v3904
  %5268 = vst.msk [vmem:[%s6 + $0x960] sm:$0xff] %vm4967, %v3909
  %5269 = vst.msk [vmem:[%s6 + $0x968] sm:$0xff] %vm4967, %v3914
  %5270 = vst.msk [vmem:[%s6 + $0x970] sm:$0xff] %vm4967, %v3919
  %5271 = vst.msk [vmem:[%s6 + $0x978] sm:$0xff] %vm4967, %v3924
  %5272 = vst.msk [vmem:[%s6 + $0x980] sm:$0xff] %vm4967, %v3929
  %5273 = vst.msk [vmem:[%s6 + $0x988] sm:$0xff] %vm4967, %v3934
  %5274 = vst.msk [vmem:[%s6 + $0x990] sm:$0xff] %vm4967, %v3939
  %5275 = vst.msk [vmem:[%s6 + $0x998] sm:$0xff] %vm4967, %v3944
  %5276 = vst.msk [vmem:[%s6 + $0x9a0] sm:$0xff] %vm4967, %v3949
  %5277 = vst.msk [vmem:[%s6 + $0x9a8] sm:$0xff] %vm4967, %v3954
  %5278 = vst.msk [vmem:[%s6 + $0x9b0] sm:$0xff] %vm4967, %v3959
  %5279 = vst.msk [vmem:[%s6 + $0x9b8] sm:$0xff] %vm4967, %v3964
  %5280 = vst.msk [vmem:[%s6 + $0x9c0] sm:$0xff] %vm4967, %v3969
  %5281 = vst.msk [vmem:[%s6 + $0x9c8] sm:$0xff] %vm4967, %v3974
  %5282 = vst.msk [vmem:[%s6 + $0x9d0] sm:$0xff] %vm4967, %v3979
  %5283 = vst.msk [vmem:[%s6 + $0x9d8] sm:$0xff] %vm4967, %v3984
  %5284 = vst.msk [vmem:[%s6 + $0x9e0] sm:$0xff] %vm4967, %v3989
  %5285 = vst.msk [vmem:[%s6 + $0x9e8] sm:$0xff] %vm4967, %v3994
  %5286 = vst.msk [vmem:[%s6 + $0x9f0] sm:$0xff] %vm4967, %v3999
  %5287 = vst.msk [vmem:[%s6 + $0x9f8] sm:$0xff] %vm4967, %v4004
  %5288 = vst.msk [vmem:[%s6 + $0xa00] sm:$0xff] %vm4967, %v4009
  %5289 = vst.msk [vmem:[%s6 + $0xa08] sm:$0xff] %vm4967, %v4014
  %5290 = vst.msk [vmem:[%s6 + $0xa10] sm:$0xff] %vm4967, %v4019
  %5291 = vst.msk [vmem:[%s6 + $0xa18] sm:$0xff] %vm4967, %v4024
  %5292 = vst.msk [vmem:[%s6 + $0xa20] sm:$0xff] %vm4967, %v4029
  %5293 = vst.msk [vmem:[%s6 + $0xa28] sm:$0xff] %vm4967, %v4034
  %5294 = vst.msk [vmem:[%s6 + $0xa30] sm:$0xff] %vm4967, %v4039
  %5295 = vst.msk [vmem:[%s6 + $0xa38] sm:$0xff] %vm4967, %v4044
  %5296 = vst.msk [vmem:[%s6 + $0xa40] sm:$0xff] %vm4967, %v4049
  %5297 = vst.msk [vmem:[%s6 + $0xa48] sm:$0xff] %vm4967, %v4054
  %5298 = vst.msk [vmem:[%s6 + $0xa50] sm:$0xff] %vm4967, %v4059
  %5299 = vst.msk [vmem:[%s6 + $0xa58] sm:$0xff] %vm4967, %v4064
  %5300 = vst.msk [vmem:[%s6 + $0xa60] sm:$0xff] %vm4967, %v4069
  %5301 = vst.msk [vmem:[%s6 + $0xa68] sm:$0xff] %vm4967, %v4074
  %5302 = vst.msk [vmem:[%s6 + $0xa70] sm:$0xff] %vm4967, %v4079
  %5303 = vst.msk [vmem:[%s6 + $0xa78] sm:$0xff] %vm4967, %v4084
  %5304 = vst.msk [vmem:[%s6 + $0xa80] sm:$0xff] %vm4967, %v4089
  %5305 = vst.msk [vmem:[%s6 + $0xa88] sm:$0xff] %vm4967, %v4094
  %5306 = vst.msk [vmem:[%s6 + $0xa90] sm:$0xff] %vm4967, %v4099
  %5307 = vst.msk [vmem:[%s6 + $0xa98] sm:$0xff] %vm4967, %v4104
  %5308 = vst.msk [vmem:[%s6 + $0xaa0] sm:$0xff] %vm4967, %v4109
  %5309 = vst.msk [vmem:[%s6 + $0xaa8] sm:$0xff] %vm4967, %v4114
  %5310 = vst.msk [vmem:[%s6 + $0xab0] sm:$0xff] %vm4967, %v4119
  %5311 = vst.msk [vmem:[%s6 + $0xab8] sm:$0xff] %vm4967, %v4124
  %5312 = vst.msk [vmem:[%s6 + $0xac0] sm:$0xff] %vm4967, %v4129
  %5313 = vst.msk [vmem:[%s6 + $0xac8] sm:$0xff] %vm4967, %v4134
  %5314 = vst.msk [vmem:[%s6 + $0xad0] sm:$0xff] %vm4967, %v4139
  %5315 = vst.msk [vmem:[%s6 + $0xad8] sm:$0xff] %vm4967, %v4144
  %5316 = vst.msk [vmem:[%s6 + $0xae0] sm:$0xff] %vm4967, %v4149
  %5317 = vst.msk [vmem:[%s6 + $0xae8] sm:$0xff] %vm4967, %v4154
  %5318 = vst.msk [vmem:[%s6 + $0xaf0] sm:$0xff] %vm4967, %v4159
  %5319 = vst.msk [vmem:[%s6 + $0xaf8] sm:$0xff] %vm4967, %v4164
  %5320 = vst.msk [vmem:[%s6 + $0xb00] sm:$0xff] %vm4967, %v4169
  %5321 = vst.msk [vmem:[%s6 + $0xb08] sm:$0xff] %vm4967, %v4174
  %5322 = vst.msk [vmem:[%s6 + $0xb10] sm:$0xff] %vm4967, %v4179
  %5323 = vst.msk [vmem:[%s6 + $0xb18] sm:$0xff] %vm4967, %v4184
  %5324 = vst.msk [vmem:[%s6 + $0xb20] sm:$0xff] %vm4967, %v4189
  %5325 = vst.msk [vmem:[%s6 + $0xb28] sm:$0xff] %vm4967, %v4194
  %5326 = vst.msk [vmem:[%s6 + $0xb30] sm:$0xff] %vm4967, %v4199
  %5327 = vst.msk [vmem:[%s6 + $0xb38] sm:$0xff] %vm4967, %v4204
  %5328 = vst.msk [vmem:[%s6 + $0xb40] sm:$0xff] %vm4967, %v4209
  %5329 = vst.msk [vmem:[%s6 + $0xb48] sm:$0xff] %vm4967, %v4214
  %5330 = vst.msk [vmem:[%s6 + $0xb50] sm:$0xff] %vm4967, %v4219
  %5331 = vst.msk [vmem:[%s6 + $0xb58] sm:$0xff] %vm4967, %v4224
  %5332 = vst.msk [vmem:[%s6 + $0xb60] sm:$0xff] %vm4967, %v4229
  %5333 = vst.msk [vmem:[%s6 + $0xb68] sm:$0xff] %vm4967, %v4234
  %5334 = vst.msk [vmem:[%s6 + $0xb70] sm:$0xff] %vm4967, %v4239
  %5335 = vst.msk [vmem:[%s6 + $0xb78] sm:$0xff] %vm4967, %v4244
  %5336 = vst.msk [vmem:[%s6 + $0xb80] sm:$0xff] %vm4967, %v4249
  %5337 = vst.msk [vmem:[%s6 + $0xb88] sm:$0xff] %vm4967, %v4254
  %5338 = vst.msk [vmem:[%s6 + $0xb90] sm:$0xff] %vm4967, %v4259
  %5339 = vst.msk [vmem:[%s6 + $0xb98] sm:$0xff] %vm4967, %v4264
  %5340 = vst.msk [vmem:[%s6 + $0xba0] sm:$0xff] %vm4967, %v4269
  %5341 = vst.msk [vmem:[%s6 + $0xba8] sm:$0xff] %vm4967, %v4274
  %5342 = vst.msk [vmem:[%s6 + $0xbb0] sm:$0xff] %vm4967, %v4279
  %5343 = vst.msk [vmem:[%s6 + $0xbb8] sm:$0xff] %vm4967, %v4284
  %5344 = vst.msk [vmem:[%s6 + $0xbc0] sm:$0xff] %vm4967, %v4289
  %5345 = vst.msk [vmem:[%s6 + $0xbc8] sm:$0xff] %vm4967, %v4294
  %5346 = vst.msk [vmem:[%s6 + $0xbd0] sm:$0xff] %vm4967, %v4299
  %5347 = vst.msk [vmem:[%s6 + $0xbd8] sm:$0xff] %vm4967, %v4304
  %5348 = vst.msk [vmem:[%s6 + $0xbe0] sm:$0xff] %vm4967, %v4309
  %5349 = vst.msk [vmem:[%s6 + $0xbe8] sm:$0xff] %vm4967, %v4314
  %5350 = vst.msk [vmem:[%s6 + $0xbf0] sm:$0xff] %vm4967, %v4319
  %5351 = vst.msk [vmem:[%s6 + $0xbf8] sm:$0xff] %vm4967, %v4324
  %5352 = vst.msk [vmem:[%s6 + $0xc00] sm:$0xff] %vm4967, %v4329
  %5353 = vst.msk [vmem:[%s6 + $0xc08] sm:$0xff] %vm4967, %v4334
  %5354 = vst.msk [vmem:[%s6 + $0xc10] sm:$0xff] %vm4967, %v4339
  %5355 = vst.msk [vmem:[%s6 + $0xc18] sm:$0xff] %vm4967, %v4344
  %5356 = vst.msk [vmem:[%s6 + $0xc20] sm:$0xff] %vm4967, %v4349
  %5357 = vst.msk [vmem:[%s6 + $0xc28] sm:$0xff] %vm4967, %v4354
  %5358 = vst.msk [vmem:[%s6 + $0xc30] sm:$0xff] %vm4967, %v4359
  %5359 = vst.msk [vmem:[%s6 + $0xc38] sm:$0xff] %vm4967, %v4364
  %5360 = vst.msk [vmem:[%s6 + $0xc40] sm:$0xff] %vm4967, %v4369
  %5361 = vst.msk [vmem:[%s6 + $0xc48] sm:$0xff] %vm4967, %v4374
  %5362 = vst.msk [vmem:[%s6 + $0xc50] sm:$0xff] %vm4967, %v4379
  %5363 = vst.msk [vmem:[%s6 + $0xc58] sm:$0xff] %vm4967, %v4384
  %5364 = vst.msk [vmem:[%s6 + $0xc60] sm:$0xff] %vm4967, %v4389
  %5365 = vst.msk [vmem:[%s6 + $0xc68] sm:$0xff] %vm4967, %v4394
  %5366 = vst.msk [vmem:[%s6 + $0xc70] sm:$0xff] %vm4967, %v4399
  %5367 = vst.msk [vmem:[%s6 + $0xc78] sm:$0xff] %vm4967, %v4404
  %5368 = vst.msk [vmem:[%s6 + $0xc80] sm:$0xff] %vm4967, %v4409
  %5369 = vst.msk [vmem:[%s6 + $0xc88] sm:$0xff] %vm4967, %v4414
  %5370 = vst.msk [vmem:[%s6 + $0xc90] sm:$0xff] %vm4967, %v4419
  %5371 = vst.msk [vmem:[%s6 + $0xc98] sm:$0xff] %vm4967, %v4424
  %5372 = vst.msk [vmem:[%s6 + $0xca0] sm:$0xff] %vm4967, %v4429
  %5373 = vst.msk [vmem:[%s6 + $0xca8] sm:$0xff] %vm4967, %v4434
  %5374 = vst.msk [vmem:[%s6 + $0xcb0] sm:$0xff] %vm4967, %v4439
  %5375 = vst.msk [vmem:[%s6 + $0xcb8] sm:$0xff] %vm4967, %v4444
  %5376 = vst.msk [vmem:[%s6 + $0xcc0] sm:$0xff] %vm4967, %v4449
  %5377 = vst.msk [vmem:[%s6 + $0xcc8] sm:$0xff] %vm4967, %v4454
  %5378 = vst.msk [vmem:[%s6 + $0xcd0] sm:$0xff] %vm4967, %v4459
  %5379 = vst.msk [vmem:[%s6 + $0xcd8] sm:$0xff] %vm4967, %v4464
  %5380 = vst.msk [vmem:[%s6 + $0xce0] sm:$0xff] %vm4967, %v4469
  %5381 = vst.msk [vmem:[%s6 + $0xce8] sm:$0xff] %vm4967, %v4474
  %5382 = vst.msk [vmem:[%s6 + $0xcf0] sm:$0xff] %vm4967, %v4479
  %5383 = vst.msk [vmem:[%s6 + $0xcf8] sm:$0xff] %vm4967, %v4484
  %5384 = vst.msk [vmem:[%s6 + $0xd00] sm:$0xff] %vm4967, %v4489
  %5385 = vst.msk [vmem:[%s6 + $0xd08] sm:$0xff] %vm4967, %v4494
  %5386 = vst.msk [vmem:[%s6 + $0xd10] sm:$0xff] %vm4967, %v4499
  %5387 = vst.msk [vmem:[%s6 + $0xd18] sm:$0xff] %vm4967, %v4504
  %5388 = vst.msk [vmem:[%s6 + $0xd20] sm:$0xff] %vm4967, %v4509
  %5389 = vst.msk [vmem:[%s6 + $0xd28] sm:$0xff] %vm4967, %v4514
  %5390 = vst.msk [vmem:[%s6 + $0xd30] sm:$0xff] %vm4967, %v4519
  %5391 = vst.msk [vmem:[%s6 + $0xd38] sm:$0xff] %vm4967, %v4524
  %5392 = vst.msk [vmem:[%s6 + $0xd40] sm:$0xff] %vm4967, %v4529
  %5393 = vst.msk [vmem:[%s6 + $0xd48] sm:$0xff] %vm4967, %v4534
  %5394 = vst.msk [vmem:[%s6 + $0xd50] sm:$0xff] %vm4967, %v4539
  %5395 = vst.msk [vmem:[%s6 + $0xd58] sm:$0xff] %vm4967, %v4544
  %5396 = vst.msk [vmem:[%s6 + $0xd60] sm:$0xff] %vm4967, %v4549
  %5397 = vst.msk [vmem:[%s6 + $0xd68] sm:$0xff] %vm4967, %v4554
  %5398 = vst.msk [vmem:[%s6 + $0xd70] sm:$0xff] %vm4967, %v4559
  %5399 = vst.msk [vmem:[%s6 + $0xd78] sm:$0xff] %vm4967, %v4564
  %5400 = vst.msk [vmem:[%s6 + $0xd80] sm:$0xff] %vm4967, %v4569
  %5401 = vst.msk [vmem:[%s6 + $0xd88] sm:$0xff] %vm4967, %v4574
  %5402 = vst.msk [vmem:[%s6 + $0xd90] sm:$0xff] %vm4967, %v4579
  %5403 = vst.msk [vmem:[%s6 + $0xd98] sm:$0xff] %vm4967, %v4584
  %5404 = vst.msk [vmem:[%s6 + $0xda0] sm:$0xff] %vm4967, %v4589
  %5405 = vst.msk [vmem:[%s6 + $0xda8] sm:$0xff] %vm4967, %v4594
  %5406 = vst.msk [vmem:[%s6 + $0xdb0] sm:$0xff] %vm4967, %v4599
  %5407 = vst.msk [vmem:[%s6 + $0xdb8] sm:$0xff] %vm4967, %v4604
  %5408 = vst.msk [vmem:[%s6 + $0xdc0] sm:$0xff] %vm4967, %v4609
  %5409 = vst.msk [vmem:[%s6 + $0xdc8] sm:$0xff] %vm4967, %v4614
  %5410 = vst.msk [vmem:[%s6 + $0xdd0] sm:$0xff] %vm4967, %v4619
  %5411 = vst.msk [vmem:[%s6 + $0xdd8] sm:$0xff] %vm4967, %v4624
  %5412 = vst.msk [vmem:[%s6 + $0xde0] sm:$0xff] %vm4967, %v4629
  %5413 = vst.msk [vmem:[%s6 + $0xde8] sm:$0xff] %vm4967, %v4634
  %5414 = vst.msk [vmem:[%s6 + $0xdf0] sm:$0xff] %vm4967, %v4639
  %5415 = vst.msk [vmem:[%s6 + $0xdf8] sm:$0xff] %vm4967, %v4644
  %5416 = vst.msk [vmem:[%s6 + $0xe00] sm:$0xff] %vm4967, %v4649
  %5417 = vst.msk [vmem:[%s6 + $0xe08] sm:$0xff] %vm4967, %v4654
  %5418 = vst.msk [vmem:[%s6 + $0xe10] sm:$0xff] %vm4967, %v4659
  %5419 = vst.msk [vmem:[%s6 + $0xe18] sm:$0xff] %vm4967, %v4664
  %5420 = vst.msk [vmem:[%s6 + $0xe20] sm:$0xff] %vm4967, %v4669
  %5421 = vst.msk [vmem:[%s6 + $0xe28] sm:$0xff] %vm4967, %v4674
  %5422 = vst.msk [vmem:[%s6 + $0xe30] sm:$0xff] %vm4967, %v4679
  %5423 = vst.msk [vmem:[%s6 + $0xe38] sm:$0xff] %vm4967, %v4684
  %5424 = vst.msk [vmem:[%s6 + $0xe40] sm:$0xff] %vm4967, %v4689
  %5425 = vst.msk [vmem:[%s6 + $0xe48] sm:$0xff] %vm4967, %v4694
  %5426 = vst.msk [vmem:[%s6 + $0xe50] sm:$0xff] %vm4967, %v4699
  %5427 = vst.msk [vmem:[%s6 + $0xe58] sm:$0xff] %vm4967, %v4704
  %5428 = vst.msk [vmem:[%s6 + $0xe60] sm:$0xff] %vm4967, %v4709
  %5429 = vst.msk [vmem:[%s6 + $0xe68] sm:$0xff] %vm4967, %v4714
  %5430 = vst.msk [vmem:[%s6 + $0xe70] sm:$0xff] %vm4967, %v4719
  %5431 = vst.msk [vmem:[%s6 + $0xe78] sm:$0xff] %vm4967, %v4724
  %5432 = vst.msk [vmem:[%s6 + $0xe80] sm:$0xff] %vm4967, %v4729
  %5433 = vst.msk [vmem:[%s6 + $0xe88] sm:$0xff] %vm4967, %v4734
  %5434 = vst.msk [vmem:[%s6 + $0xe90] sm:$0xff] %vm4967, %v4739
  %5435 = vst.msk [vmem:[%s6 + $0xe98] sm:$0xff] %vm4967, %v4744
  %5436 = vst.msk [vmem:[%s6 + $0xea0] sm:$0xff] %vm4967, %v4749
  %5437 = vst.msk [vmem:[%s6 + $0xea8] sm:$0xff] %vm4967, %v4754
  %5438 = vst.msk [vmem:[%s6 + $0xeb0] sm:$0xff] %vm4967, %v4759
  %5439 = vst.msk [vmem:[%s6 + $0xeb8] sm:$0xff] %vm4967, %v4764
  %5440 = vst.msk [vmem:[%s6 + $0xec0] sm:$0xff] %vm4967, %v4769
  %5441 = vst.msk [vmem:[%s6 + $0xec8] sm:$0xff] %vm4967, %v4774
  %5442 = vst.msk [vmem:[%s6 + $0xed0] sm:$0xff] %vm4967, %v4779
  %5443 = vst.msk [vmem:[%s6 + $0xed8] sm:$0xff] %vm4967, %v4784
  %5444 = vst.msk [vmem:[%s6 + $0xee0] sm:$0xff] %vm4967, %v4789
  %5445 = vst.msk [vmem:[%s6 + $0xee8] sm:$0xff] %vm4967, %v4794
  %5446 = vst.msk [vmem:[%s6 + $0xef0] sm:$0xff] %vm4967, %v4799
  %5447 = vst.msk [vmem:[%s6 + $0xef8] sm:$0xff] %vm4967, %v4804
  %5448 = vst.msk [vmem:[%s6 + $0xf00] sm:$0xff] %vm4967, %v4809
  %5449 = vst.msk [vmem:[%s6 + $0xf08] sm:$0xff] %vm4967, %v4814
  %5450 = vst.msk [vmem:[%s6 + $0xf10] sm:$0xff] %vm4967, %v4819
  %5451 = vst.msk [vmem:[%s6 + $0xf18] sm:$0xff] %vm4967, %v4824
  %5452 = vst.msk [vmem:[%s6 + $0xf20] sm:$0xff] %vm4967, %v4829
  %5453 = vst.msk [vmem:[%s6 + $0xf28] sm:$0xff] %vm4967, %v4834
  %5454 = vst.msk [vmem:[%s6 + $0xf30] sm:$0xff] %vm4967, %v4839
  %5455 = vst.msk [vmem:[%s6 + $0xf38] sm:$0xff] %vm4967, %v4844
  %5456 = vst.msk [vmem:[%s6 + $0xf40] sm:$0xff] %vm4967, %v4849
  %5457 = vst.msk [vmem:[%s6 + $0xf48] sm:$0xff] %vm4967, %v4854
  %5458 = vst.msk [vmem:[%s6 + $0xf50] sm:$0xff] %vm4967, %v4859
  %5459 = vst.msk [vmem:[%s6 + $0xf58] sm:$0xff] %vm4967, %v4864
  %5460 = vst.msk [vmem:[%s6 + $0xf60] sm:$0xff] %vm4967, %v4869
  %5461 = vst.msk [vmem:[%s6 + $0xf68] sm:$0xff] %vm4967, %v4874
  %5462 = vst.msk [vmem:[%s6 + $0xf70] sm:$0xff] %vm4967, %v4879
  %5463 = vst.msk [vmem:[%s6 + $0xf78] sm:$0xff] %vm4967, %v4884
  %5464 = vst.msk [vmem:[%s6 + $0xf80] sm:$0xff] %vm4967, %v4889
  %5465 = vst.msk [vmem:[%s6 + $0xf88] sm:$0xff] %vm4967, %v4894
  %5466 = vst.msk [vmem:[%s6 + $0xf90] sm:$0xff] %vm4967, %v4899
  %5467 = vst.msk [vmem:[%s6 + $0xf98] sm:$0xff] %vm4967, %v4904
  %5468 = vst.msk [vmem:[%s6 + $0xfa0] sm:$0xff] %vm4967, %v4909
  %5469 = vst.msk [vmem:[%s6 + $0xfa8] sm:$0xff] %vm4967, %v4914
  %5470 = vst.msk [vmem:[%s6 + $0xfb0] sm:$0xff] %vm4967, %v4919
  %5471 = vst.msk [vmem:[%s6 + $0xfb8] sm:$0xff] %vm4967, %v4924
  %5472 = vst.msk [vmem:[%s6 + $0xfc0] sm:$0xff] %vm4967, %v4929
  %5473 = vst.msk [vmem:[%s6 + $0xfc8] sm:$0xff] %vm4967, %v4934
  %5474 = vst.msk [vmem:[%s6 + $0xfd0] sm:$0xff] %vm4967, %v4939
  %5475 = vst.msk [vmem:[%s6 + $0xfd8] sm:$0xff] %vm4967, %v4944
  %5476 = vst.msk [vmem:[%s6 + $0xfe0] sm:$0xff] %vm4967, %v4949
  %5477 = vst.msk [vmem:[%s6 + $0xfe8] sm:$0xff] %vm4967, %v4954
  %5478 = vst.msk [vmem:[%s6 + $0xff0] sm:$0xff] %vm4967, %v4959
  %5479 = vst.msk [vmem:[%s6 + $0xff8] sm:$0xff] %vm4967, %v4964
  %v5480 = vmax.f32 %v2409, 0.0
  %v5481 = vmax.f32 %v2414, 0.0
  %v5482 = vmax.f32 %v2419, 0.0
  %v5483 = vmax.f32 %v2424, 0.0
  %v5484 = vmax.f32 %v2429, 0.0
  %v5485 = vmax.f32 %v2434, 0.0
  %v5486 = vmax.f32 %v2439, 0.0
  %v5487 = vmax.f32 %v2444, 0.0
  %v5488 = vmax.f32 %v2449, 0.0
  %v5489 = vmax.f32 %v2454, 0.0
  %v5490 = vmax.f32 %v2459, 0.0
  %v5491 = vmax.f32 %v2464, 0.0
  %v5492 = vmax.f32 %v2469, 0.0
  %v5493 = vmax.f32 %v2474, 0.0
  %v5494 = vmax.f32 %v2479, 0.0
  %v5495 = vmax.f32 %v2484, 0.0
  %v5496 = vmax.f32 %v2489, 0.0
  %v5497 = vmax.f32 %v2494, 0.0
  %v5498 = vmax.f32 %v2499, 0.0
  %v5499 = vmax.f32 %v2504, 0.0
  %v5500 = vmax.f32 %v2509, 0.0
  %v5501 = vmax.f32 %v2514, 0.0
  %v5502 = vmax.f32 %v2519, 0.0
  %v5503 = vmax.f32 %v2524, 0.0
  %v5504 = vmax.f32 %v2529, 0.0
  %v5505 = vmax.f32 %v2534, 0.0
  %v5506 = vmax.f32 %v2539, 0.0
  %v5507 = vmax.f32 %v2544, 0.0
  %v5508 = vmax.f32 %v2549, 0.0
  %v5509 = vmax.f32 %v2554, 0.0
  %v5510 = vmax.f32 %v2559, 0.0
  %v5511 = vmax.f32 %v2564, 0.0
  %v5512 = vmax.f32 %v2569, 0.0
  %v5513 = vmax.f32 %v2574, 0.0
  %v5514 = vmax.f32 %v2579, 0.0
  %v5515 = vmax.f32 %v2584, 0.0
  %v5516 = vmax.f32 %v2589, 0.0
  %v5517 = vmax.f32 %v2594, 0.0
  %v5518 = vmax.f32 %v2599, 0.0
  %v5519 = vmax.f32 %v2604, 0.0
  %v5520 = vmax.f32 %v2609, 0.0
  %v5521 = vmax.f32 %v2614, 0.0
  %v5522 = vmax.f32 %v2619, 0.0
  %v5523 = vmax.f32 %v2624, 0.0
  %v5524 = vmax.f32 %v2629, 0.0
  %v5525 = vmax.f32 %v2634, 0.0
  %v5526 = vmax.f32 %v2639, 0.0
  %v5527 = vmax.f32 %v2644, 0.0
  %v5528 = vmax.f32 %v2649, 0.0
  %v5529 = vmax.f32 %v2654, 0.0
  %v5530 = vmax.f32 %v2659, 0.0
  %v5531 = vmax.f32 %v2664, 0.0
  %v5532 = vmax.f32 %v2669, 0.0
  %v5533 = vmax.f32 %v2674, 0.0
  %v5534 = vmax.f32 %v2679, 0.0
  %v5535 = vmax.f32 %v2684, 0.0
  %v5536 = vmax.f32 %v2689, 0.0
  %v5537 = vmax.f32 %v2694, 0.0
  %v5538 = vmax.f32 %v2699, 0.0
  %v5539 = vmax.f32 %v2704, 0.0
  %v5540 = vmax.f32 %v2709, 0.0
  %v5541 = vmax.f32 %v2714, 0.0
  %v5542 = vmax.f32 %v2719, 0.0
  %v5543 = vmax.f32 %v2724, 0.0
  %v5544 = vmax.f32 %v2729, 0.0
  %v5545 = vmax.f32 %v2734, 0.0
  %v5546 = vmax.f32 %v2739, 0.0
  %v5547 = vmax.f32 %v2744, 0.0
  %v5548 = vmax.f32 %v2749, 0.0
  %v5549 = vmax.f32 %v2754, 0.0
  %v5550 = vmax.f32 %v2759, 0.0
  %v5551 = vmax.f32 %v2764, 0.0
  %v5552 = vmax.f32 %v2769, 0.0
  %v5553 = vmax.f32 %v2774, 0.0
  %v5554 = vmax.f32 %v2779, 0.0
  %v5555 = vmax.f32 %v2784, 0.0
  %v5556 = vmax.f32 %v2789, 0.0
  %v5557 = vmax.f32 %v2794, 0.0
  %v5558 = vmax.f32 %v2799, 0.0
  %v5559 = vmax.f32 %v2804, 0.0
  %v5560 = vmax.f32 %v2809, 0.0
  %v5561 = vmax.f32 %v2814, 0.0
  %v5562 = vmax.f32 %v2819, 0.0
  %v5563 = vmax.f32 %v2824, 0.0
  %v5564 = vmax.f32 %v2829, 0.0
  %v5565 = vmax.f32 %v2834, 0.0
  %v5566 = vmax.f32 %v2839, 0.0
  %v5567 = vmax.f32 %v2844, 0.0
  %v5568 = vmax.f32 %v2849, 0.0
  %v5569 = vmax.f32 %v2854, 0.0
  %v5570 = vmax.f32 %v2859, 0.0
  %v5571 = vmax.f32 %v2864, 0.0
  %v5572 = vmax.f32 %v2869, 0.0
  %v5573 = vmax.f32 %v2874, 0.0
  %v5574 = vmax.f32 %v2879, 0.0
  %v5575 = vmax.f32 %v2884, 0.0
  %v5576 = vmax.f32 %v2889, 0.0
  %v5577 = vmax.f32 %v2894, 0.0
  %v5578 = vmax.f32 %v2899, 0.0
  %v5579 = vmax.f32 %v2904, 0.0
  %v5580 = vmax.f32 %v2909, 0.0
  %v5581 = vmax.f32 %v2914, 0.0
  %v5582 = vmax.f32 %v2919, 0.0
  %v5583 = vmax.f32 %v2924, 0.0
  %v5584 = vmax.f32 %v2929, 0.0
  %v5585 = vmax.f32 %v2934, 0.0
  %v5586 = vmax.f32 %v2939, 0.0
  %v5587 = vmax.f32 %v2944, 0.0
  %v5588 = vmax.f32 %v2949, 0.0
  %v5589 = vmax.f32 %v2954, 0.0
  %v5590 = vmax.f32 %v2959, 0.0
  %v5591 = vmax.f32 %v2964, 0.0
  %v5592 = vmax.f32 %v2969, 0.0
  %v5593 = vmax.f32 %v2974, 0.0
  %v5594 = vmax.f32 %v2979, 0.0
  %v5595 = vmax.f32 %v2984, 0.0
  %v5596 = vmax.f32 %v2989, 0.0
  %v5597 = vmax.f32 %v2994, 0.0
  %v5598 = vmax.f32 %v2999, 0.0
  %v5599 = vmax.f32 %v3004, 0.0
  %v5600 = vmax.f32 %v3009, 0.0
  %v5601 = vmax.f32 %v3014, 0.0
  %v5602 = vmax.f32 %v3019, 0.0
  %v5603 = vmax.f32 %v3024, 0.0
  %v5604 = vmax.f32 %v3029, 0.0
  %v5605 = vmax.f32 %v3034, 0.0
  %v5606 = vmax.f32 %v3039, 0.0
  %v5607 = vmax.f32 %v3044, 0.0
  %v5608 = vmax.f32 %v3049, 0.0
  %v5609 = vmax.f32 %v3054, 0.0
  %v5610 = vmax.f32 %v3059, 0.0
  %v5611 = vmax.f32 %v3064, 0.0
  %v5612 = vmax.f32 %v3069, 0.0
  %v5613 = vmax.f32 %v3074, 0.0
  %v5614 = vmax.f32 %v3079, 0.0
  %v5615 = vmax.f32 %v3084, 0.0
  %v5616 = vmax.f32 %v3089, 0.0
  %v5617 = vmax.f32 %v3094, 0.0
  %v5618 = vmax.f32 %v3099, 0.0
  %v5619 = vmax.f32 %v3104, 0.0
  %v5620 = vmax.f32 %v3109, 0.0
  %v5621 = vmax.f32 %v3114, 0.0
  %v5622 = vmax.f32 %v3119, 0.0
  %v5623 = vmax.f32 %v3124, 0.0
  %v5624 = vmax.f32 %v3129, 0.0
  %v5625 = vmax.f32 %v3134, 0.0
  %v5626 = vmax.f32 %v3139, 0.0
  %v5627 = vmax.f32 %v3144, 0.0
  %v5628 = vmax.f32 %v3149, 0.0
  %v5629 = vmax.f32 %v3154, 0.0
  %v5630 = vmax.f32 %v3159, 0.0
  %v5631 = vmax.f32 %v3164, 0.0
  %v5632 = vmax.f32 %v3169, 0.0
  %v5633 = vmax.f32 %v3174, 0.0
  %v5634 = vmax.f32 %v3179, 0.0
  %v5635 = vmax.f32 %v3184, 0.0
  %v5636 = vmax.f32 %v3189, 0.0
  %v5637 = vmax.f32 %v3194, 0.0
  %v5638 = vmax.f32 %v3199, 0.0
  %v5639 = vmax.f32 %v3204, 0.0
  %v5640 = vmax.f32 %v3209, 0.0
  %v5641 = vmax.f32 %v3214, 0.0
  %v5642 = vmax.f32 %v3219, 0.0
  %v5643 = vmax.f32 %v3224, 0.0
  %v5644 = vmax.f32 %v3229, 0.0
  %v5645 = vmax.f32 %v3234, 0.0
  %v5646 = vmax.f32 %v3239, 0.0
  %v5647 = vmax.f32 %v3244, 0.0
  %v5648 = vmax.f32 %v3249, 0.0
  %v5649 = vmax.f32 %v3254, 0.0
  %v5650 = vmax.f32 %v3259, 0.0
  %v5651 = vmax.f32 %v3264, 0.0
  %v5652 = vmax.f32 %v3269, 0.0
  %v5653 = vmax.f32 %v3274, 0.0
  %v5654 = vmax.f32 %v3279, 0.0
  %v5655 = vmax.f32 %v3284, 0.0
  %v5656 = vmax.f32 %v3289, 0.0
  %v5657 = vmax.f32 %v3294, 0.0
  %v5658 = vmax.f32 %v3299, 0.0
  %v5659 = vmax.f32 %v3304, 0.0
  %v5660 = vmax.f32 %v3309, 0.0
  %v5661 = vmax.f32 %v3314, 0.0
  %v5662 = vmax.f32 %v3319, 0.0
  %v5663 = vmax.f32 %v3324, 0.0
  %v5664 = vmax.f32 %v3329, 0.0
  %v5665 = vmax.f32 %v3334, 0.0
  %v5666 = vmax.f32 %v3339, 0.0
  %v5667 = vmax.f32 %v3344, 0.0
  %v5668 = vmax.f32 %v3349, 0.0
  %v5669 = vmax.f32 %v3354, 0.0
  %v5670 = vmax.f32 %v3359, 0.0
  %v5671 = vmax.f32 %v3364, 0.0
  %v5672 = vmax.f32 %v3369, 0.0
  %v5673 = vmax.f32 %v3374, 0.0
  %v5674 = vmax.f32 %v3379, 0.0
  %v5675 = vmax.f32 %v3384, 0.0
  %v5676 = vmax.f32 %v3389, 0.0
  %v5677 = vmax.f32 %v3394, 0.0
  %v5678 = vmax.f32 %v3399, 0.0
  %v5679 = vmax.f32 %v3404, 0.0
  %v5680 = vmax.f32 %v3409, 0.0
  %v5681 = vmax.f32 %v3414, 0.0
  %v5682 = vmax.f32 %v3419, 0.0
  %v5683 = vmax.f32 %v3424, 0.0
  %v5684 = vmax.f32 %v3429, 0.0
  %v5685 = vmax.f32 %v3434, 0.0
  %v5686 = vmax.f32 %v3439, 0.0
  %v5687 = vmax.f32 %v3444, 0.0
  %v5688 = vmax.f32 %v3449, 0.0
  %v5689 = vmax.f32 %v3454, 0.0
  %v5690 = vmax.f32 %v3459, 0.0
  %v5691 = vmax.f32 %v3464, 0.0
  %v5692 = vmax.f32 %v3469, 0.0
  %v5693 = vmax.f32 %v3474, 0.0
  %v5694 = vmax.f32 %v3479, 0.0
  %v5695 = vmax.f32 %v3484, 0.0
  %v5696 = vmax.f32 %v3489, 0.0
  %v5697 = vmax.f32 %v3494, 0.0
  %v5698 = vmax.f32 %v3499, 0.0
  %v5699 = vmax.f32 %v3504, 0.0
  %v5700 = vmax.f32 %v3509, 0.0
  %v5701 = vmax.f32 %v3514, 0.0
  %v5702 = vmax.f32 %v3519, 0.0
  %v5703 = vmax.f32 %v3524, 0.0
  %v5704 = vmax.f32 %v3529, 0.0
  %v5705 = vmax.f32 %v3534, 0.0
  %v5706 = vmax.f32 %v3539, 0.0
  %v5707 = vmax.f32 %v3544, 0.0
  %v5708 = vmax.f32 %v3549, 0.0
  %v5709 = vmax.f32 %v3554, 0.0
  %v5710 = vmax.f32 %v3559, 0.0
  %v5711 = vmax.f32 %v3564, 0.0
  %v5712 = vmax.f32 %v3569, 0.0
  %v5713 = vmax.f32 %v3574, 0.0
  %v5714 = vmax.f32 %v3579, 0.0
  %v5715 = vmax.f32 %v3584, 0.0
  %v5716 = vmax.f32 %v3589, 0.0
  %v5717 = vmax.f32 %v3594, 0.0
  %v5718 = vmax.f32 %v3599, 0.0
  %v5719 = vmax.f32 %v3604, 0.0
  %v5720 = vmax.f32 %v3609, 0.0
  %v5721 = vmax.f32 %v3614, 0.0
  %v5722 = vmax.f32 %v3619, 0.0
  %v5723 = vmax.f32 %v3624, 0.0
  %v5724 = vmax.f32 %v3629, 0.0
  %v5725 = vmax.f32 %v3634, 0.0
  %v5726 = vmax.f32 %v3639, 0.0
  %v5727 = vmax.f32 %v3644, 0.0
  %v5728 = vmax.f32 %v3649, 0.0
  %v5729 = vmax.f32 %v3654, 0.0
  %v5730 = vmax.f32 %v3659, 0.0
  %v5731 = vmax.f32 %v3664, 0.0
  %v5732 = vmax.f32 %v3669, 0.0
  %v5733 = vmax.f32 %v3674, 0.0
  %v5734 = vmax.f32 %v3679, 0.0
  %v5735 = vmax.f32 %v3684, 0.0
  %v5736 = vmax.f32 %v3689, 0.0
  %v5737 = vmax.f32 %v3694, 0.0
  %v5738 = vmax.f32 %v3699, 0.0
  %v5739 = vmax.f32 %v3704, 0.0
  %v5740 = vmax.f32 %v3709, 0.0
  %v5741 = vmax.f32 %v3714, 0.0
  %v5742 = vmax.f32 %v3719, 0.0
  %v5743 = vmax.f32 %v3724, 0.0
  %v5744 = vmax.f32 %v3729, 0.0
  %v5745 = vmax.f32 %v3734, 0.0
  %v5746 = vmax.f32 %v3739, 0.0
  %v5747 = vmax.f32 %v3744, 0.0
  %v5748 = vmax.f32 %v3749, 0.0
  %v5749 = vmax.f32 %v3754, 0.0
  %v5750 = vmax.f32 %v3759, 0.0
  %v5751 = vmax.f32 %v3764, 0.0
  %v5752 = vmax.f32 %v3769, 0.0
  %v5753 = vmax.f32 %v3774, 0.0
  %v5754 = vmax.f32 %v3779, 0.0
  %v5755 = vmax.f32 %v3784, 0.0
  %v5756 = vmax.f32 %v3789, 0.0
  %v5757 = vmax.f32 %v3794, 0.0
  %v5758 = vmax.f32 %v3799, 0.0
  %v5759 = vmax.f32 %v3804, 0.0
  %v5760 = vmax.f32 %v3809, 0.0
  %v5761 = vmax.f32 %v3814, 0.0
  %v5762 = vmax.f32 %v3819, 0.0
  %v5763 = vmax.f32 %v3824, 0.0
  %v5764 = vmax.f32 %v3829, 0.0
  %v5765 = vmax.f32 %v3834, 0.0
  %v5766 = vmax.f32 %v3839, 0.0
  %v5767 = vmax.f32 %v3844, 0.0
  %v5768 = vmax.f32 %v3849, 0.0
  %v5769 = vmax.f32 %v3854, 0.0
  %v5770 = vmax.f32 %v3859, 0.0
  %v5771 = vmax.f32 %v3864, 0.0
  %v5772 = vmax.f32 %v3869, 0.0
  %v5773 = vmax.f32 %v3874, 0.0
  %v5774 = vmax.f32 %v3879, 0.0
  %v5775 = vmax.f32 %v3884, 0.0
  %v5776 = vmax.f32 %v3889, 0.0
  %v5777 = vmax.f32 %v3894, 0.0
  %v5778 = vmax.f32 %v3899, 0.0
  %v5779 = vmax.f32 %v3904, 0.0
  %v5780 = vmax.f32 %v3909, 0.0
  %v5781 = vmax.f32 %v3914, 0.0
  %v5782 = vmax.f32 %v3919, 0.0
  %v5783 = vmax.f32 %v3924, 0.0
  %v5784 = vmax.f32 %v3929, 0.0
  %v5785 = vmax.f32 %v3934, 0.0
  %v5786 = vmax.f32 %v3939, 0.0
  %v5787 = vmax.f32 %v3944, 0.0
  %v5788 = vmax.f32 %v3949, 0.0
  %v5789 = vmax.f32 %v3954, 0.0
  %v5790 = vmax.f32 %v3959, 0.0
  %v5791 = vmax.f32 %v3964, 0.0
  %v5792 = vmax.f32 %v3969, 0.0
  %v5793 = vmax.f32 %v3974, 0.0
  %v5794 = vmax.f32 %v3979, 0.0
  %v5795 = vmax.f32 %v3984, 0.0
  %v5796 = vmax.f32 %v3989, 0.0
  %v5797 = vmax.f32 %v3994, 0.0
  %v5798 = vmax.f32 %v3999, 0.0
  %v5799 = vmax.f32 %v4004, 0.0
  %v5800 = vmax.f32 %v4009, 0.0
  %v5801 = vmax.f32 %v4014, 0.0
  %v5802 = vmax.f32 %v4019, 0.0
  %v5803 = vmax.f32 %v4024, 0.0
  %v5804 = vmax.f32 %v4029, 0.0
  %v5805 = vmax.f32 %v4034, 0.0
  %v5806 = vmax.f32 %v4039, 0.0
  %v5807 = vmax.f32 %v4044, 0.0
  %v5808 = vmax.f32 %v4049, 0.0
  %v5809 = vmax.f32 %v4054, 0.0
  %v5810 = vmax.f32 %v4059, 0.0
  %v5811 = vmax.f32 %v4064, 0.0
  %v5812 = vmax.f32 %v4069, 0.0
  %v5813 = vmax.f32 %v4074, 0.0
  %v5814 = vmax.f32 %v4079, 0.0
  %v5815 = vmax.f32 %v4084, 0.0
  %v5816 = vmax.f32 %v4089, 0.0
  %v5817 = vmax.f32 %v4094, 0.0
  %v5818 = vmax.f32 %v4099, 0.0
  %v5819 = vmax.f32 %v4104, 0.0
  %v5820 = vmax.f32 %v4109, 0.0
  %v5821 = vmax.f32 %v4114, 0.0
  %v5822 = vmax.f32 %v4119, 0.0
  %v5823 = vmax.f32 %v4124, 0.0
  %v5824 = vmax.f32 %v4129, 0.0
  %v5825 = vmax.f32 %v4134, 0.0
  %v5826 = vmax.f32 %v4139, 0.0
  %v5827 = vmax.f32 %v4144, 0.0
  %v5828 = vmax.f32 %v4149, 0.0
  %v5829 = vmax.f32 %v4154, 0.0
  %v5830 = vmax.f32 %v4159, 0.0
  %v5831 = vmax.f32 %v4164, 0.0
  %v5832 = vmax.f32 %v4169, 0.0
  %v5833 = vmax.f32 %v4174, 0.0
  %v5834 = vmax.f32 %v4179, 0.0
  %v5835 = vmax.f32 %v4184, 0.0
  %v5836 = vmax.f32 %v4189, 0.0
  %v5837 = vmax.f32 %v4194, 0.0
  %v5838 = vmax.f32 %v4199, 0.0
  %v5839 = vmax.f32 %v4204, 0.0
  %v5840 = vmax.f32 %v4209, 0.0
  %v5841 = vmax.f32 %v4214, 0.0
  %v5842 = vmax.f32 %v4219, 0.0
  %v5843 = vmax.f32 %v4224, 0.0
  %v5844 = vmax.f32 %v4229, 0.0
  %v5845 = vmax.f32 %v4234, 0.0
  %v5846 = vmax.f32 %v4239, 0.0
  %v5847 = vmax.f32 %v4244, 0.0
  %v5848 = vmax.f32 %v4249, 0.0
  %v5849 = vmax.f32 %v4254, 0.0
  %v5850 = vmax.f32 %v4259, 0.0
  %v5851 = vmax.f32 %v4264, 0.0
  %v5852 = vmax.f32 %v4269, 0.0
  %v5853 = vmax.f32 %v4274, 0.0
  %v5854 = vmax.f32 %v4279, 0.0
  %v5855 = vmax.f32 %v4284, 0.0
  %v5856 = vmax.f32 %v4289, 0.0
  %v5857 = vmax.f32 %v4294, 0.0
  %v5858 = vmax.f32 %v4299, 0.0
  %v5859 = vmax.f32 %v4304, 0.0
  %v5860 = vmax.f32 %v4309, 0.0
  %v5861 = vmax.f32 %v4314, 0.0
  %v5862 = vmax.f32 %v4319, 0.0
  %v5863 = vmax.f32 %v4324, 0.0
  %v5864 = vmax.f32 %v4329, 0.0
  %v5865 = vmax.f32 %v4334, 0.0
  %v5866 = vmax.f32 %v4339, 0.0
  %v5867 = vmax.f32 %v4344, 0.0
  %v5868 = vmax.f32 %v4349, 0.0
  %v5869 = vmax.f32 %v4354, 0.0
  %v5870 = vmax.f32 %v4359, 0.0
  %v5871 = vmax.f32 %v4364, 0.0
  %v5872 = vmax.f32 %v4369, 0.0
  %v5873 = vmax.f32 %v4374, 0.0
  %v5874 = vmax.f32 %v4379, 0.0
  %v5875 = vmax.f32 %v4384, 0.0
  %v5876 = vmax.f32 %v4389, 0.0
  %v5877 = vmax.f32 %v4394, 0.0
  %v5878 = vmax.f32 %v4399, 0.0
  %v5879 = vmax.f32 %v4404, 0.0
  %v5880 = vmax.f32 %v4409, 0.0
  %v5881 = vmax.f32 %v4414, 0.0
  %v5882 = vmax.f32 %v4419, 0.0
  %v5883 = vmax.f32 %v4424, 0.0
  %v5884 = vmax.f32 %v4429, 0.0
  %v5885 = vmax.f32 %v4434, 0.0
  %v5886 = vmax.f32 %v4439, 0.0
  %v5887 = vmax.f32 %v4444, 0.0
  %v5888 = vmax.f32 %v4449, 0.0
  %v5889 = vmax.f32 %v4454, 0.0
  %v5890 = vmax.f32 %v4459, 0.0
  %v5891 = vmax.f32 %v4464, 0.0
  %v5892 = vmax.f32 %v4469, 0.0
  %v5893 = vmax.f32 %v4474, 0.0
  %v5894 = vmax.f32 %v4479, 0.0
  %v5895 = vmax.f32 %v4484, 0.0
  %v5896 = vmax.f32 %v4489, 0.0
  %v5897 = vmax.f32 %v4494, 0.0
  %v5898 = vmax.f32 %v4499, 0.0
  %v5899 = vmax.f32 %v4504, 0.0
  %v5900 = vmax.f32 %v4509, 0.0
  %v5901 = vmax.f32 %v4514, 0.0
  %v5902 = vmax.f32 %v4519, 0.0
  %v5903 = vmax.f32 %v4524, 0.0
  %v5904 = vmax.f32 %v4529, 0.0
  %v5905 = vmax.f32 %v4534, 0.0
  %v5906 = vmax.f32 %v4539, 0.0
  %v5907 = vmax.f32 %v4544, 0.0
  %v5908 = vmax.f32 %v4549, 0.0
  %v5909 = vmax.f32 %v4554, 0.0
  %v5910 = vmax.f32 %v4559, 0.0
  %v5911 = vmax.f32 %v4564, 0.0
  %v5912 = vmax.f32 %v4569, 0.0
  %v5913 = vmax.f32 %v4574, 0.0
  %v5914 = vmax.f32 %v4579, 0.0
  %v5915 = vmax.f32 %v4584, 0.0
  %v5916 = vmax.f32 %v4589, 0.0
  %v5917 = vmax.f32 %v4594, 0.0
  %v5918 = vmax.f32 %v4599, 0.0
  %v5919 = vmax.f32 %v4604, 0.0
  %v5920 = vmax.f32 %v4609, 0.0
  %v5921 = vmax.f32 %v4614, 0.0
  %v5922 = vmax.f32 %v4619, 0.0
  %v5923 = vmax.f32 %v4624, 0.0
  %v5924 = vmax.f32 %v4629, 0.0
  %v5925 = vmax.f32 %v4634, 0.0
  %v5926 = vmax.f32 %v4639, 0.0
  %v5927 = vmax.f32 %v4644, 0.0
  %v5928 = vmax.f32 %v4649, 0.0
  %v5929 = vmax.f32 %v4654, 0.0
  %v5930 = vmax.f32 %v4659, 0.0
  %v5931 = vmax.f32 %v4664, 0.0
  %v5932 = vmax.f32 %v4669, 0.0
  %v5933 = vmax.f32 %v4674, 0.0
  %v5934 = vmax.f32 %v4679, 0.0
  %v5935 = vmax.f32 %v4684, 0.0
  %v5936 = vmax.f32 %v4689, 0.0
  %v5937 = vmax.f32 %v4694, 0.0
  %v5938 = vmax.f32 %v4699, 0.0
  %v5939 = vmax.f32 %v4704, 0.0
  %v5940 = vmax.f32 %v4709, 0.0
  %v5941 = vmax.f32 %v4714, 0.0
  %v5942 = vmax.f32 %v4719, 0.0
  %v5943 = vmax.f32 %v4724, 0.0
  %v5944 = vmax.f32 %v4729, 0.0
  %v5945 = vmax.f32 %v4734, 0.0
  %v5946 = vmax.f32 %v4739, 0.0
  %v5947 = vmax.f32 %v4744, 0.0
  %v5948 = vmax.f32 %v4749, 0.0
  %v5949 = vmax.f32 %v4754, 0.0
  %v5950 = vmax.f32 %v4759, 0.0
  %v5951 = vmax.f32 %v4764, 0.0
  %v5952 = vmax.f32 %v4769, 0.0
  %v5953 = vmax.f32 %v4774, 0.0
  %v5954 = vmax.f32 %v4779, 0.0
  %v5955 = vmax.f32 %v4784, 0.0
  %v5956 = vmax.f32 %v4789, 0.0
  %v5957 = vmax.f32 %v4794, 0.0
  %v5958 = vmax.f32 %v4799, 0.0
  %v5959 = vmax.f32 %v4804, 0.0
  %v5960 = vmax.f32 %v4809, 0.0
  %v5961 = vmax.f32 %v4814, 0.0
  %v5962 = vmax.f32 %v4819, 0.0
  %v5963 = vmax.f32 %v4824, 0.0
  %v5964 = vmax.f32 %v4829, 0.0
  %v5965 = vmax.f32 %v4834, 0.0
  %v5966 = vmax.f32 %v4839, 0.0
  %v5967 = vmax.f32 %v4844, 0.0
  %v5968 = vmax.f32 %v4849, 0.0
  %v5969 = vmax.f32 %v4854, 0.0
  %v5970 = vmax.f32 %v4859, 0.0
  %v5971 = vmax.f32 %v4864, 0.0
  %v5972 = vmax.f32 %v4869, 0.0
  %v5973 = vmax.f32 %v4874, 0.0
  %v5974 = vmax.f32 %v4879, 0.0
  %v5975 = vmax.f32 %v4884, 0.0
  %v5976 = vmax.f32 %v4889, 0.0
  %v5977 = vmax.f32 %v4894, 0.0
  %v5978 = vmax.f32 %v4899, 0.0
  %v5979 = vmax.f32 %v4904, 0.0
  %v5980 = vmax.f32 %v4909, 0.0
  %v5981 = vmax.f32 %v4914, 0.0
  %v5982 = vmax.f32 %v4919, 0.0
  %v5983 = vmax.f32 %v4924, 0.0
  %v5984 = vmax.f32 %v4929, 0.0
  %v5985 = vmax.f32 %v4934, 0.0
  %v5986 = vmax.f32 %v4939, 0.0
  %v5987 = vmax.f32 %v4944, 0.0
  %v5988 = vmax.f32 %v4949, 0.0
  %v5989 = vmax.f32 %v4954, 0.0
  %v5990 = vmax.f32 %v4959, 0.0
  %v5991 = vmax.f32 %v4964, 0.0
  %v5993 = vlaneseq
  %v5994 = vshrl.u32 %v5993, 7
  %v5995 = vsub.s32 0, %v5994
  %v5996 = vrot.slane %v35, %v5995
  %v5999 = vsel %vm4967, %v5480, 0
  %v6002 = vsel %vm4967, %v5481, 0
  %v6005 = vsel %vm4967, %v5482, 0
  %v6008 = vsel %vm4967, %v5483, 0
  %v6011 = vsel %vm4967, %v5484, 0
  %v6014 = vsel %vm4967, %v5485, 0
  %v6017 = vsel %vm4967, %v5486, 0
  %v6020 = vsel %vm4967, %v5487, 0
  %v6023 = vsel %vm4967, %v5488, 0
  %v6026 = vsel %vm4967, %v5489, 0
  %v6029 = vsel %vm4967, %v5490, 0
  %v6032 = vsel %vm4967, %v5491, 0
  %v6035 = vsel %vm4967, %v5492, 0
  %v6038 = vsel %vm4967, %v5493, 0
  %v6041 = vsel %vm4967, %v5494, 0
  %v6044 = vsel %vm4967, %v5495, 0
  %v6047 = vsel %vm4967, %v5496, 0
  %v6050 = vsel %vm4967, %v5497, 0
  %v6053 = vsel %vm4967, %v5498, 0
  %v6056 = vsel %vm4967, %v5499, 0
  %v6059 = vsel %vm4967, %v5500, 0
  %v6062 = vsel %vm4967, %v5501, 0
  %v6065 = vsel %vm4967, %v5502, 0
  %v6068 = vsel %vm4967, %v5503, 0
  %v6071 = vsel %vm4967, %v5504, 0
  %v6074 = vsel %vm4967, %v5505, 0
  %v6077 = vsel %vm4967, %v5506, 0
  %v6080 = vsel %vm4967, %v5507, 0
  %v6083 = vsel %vm4967, %v5508, 0
  %v6086 = vsel %vm4967, %v5509, 0
  %v6089 = vsel %vm4967, %v5510, 0
  %v6092 = vsel %vm4967, %v5511, 0
  %v6095 = vsel %vm4967, %v5512, 0
  %v6098 = vsel %vm4967, %v5513, 0
  %v6101 = vsel %vm4967, %v5514, 0
  %v6104 = vsel %vm4967, %v5515, 0
  %v6107 = vsel %vm4967, %v5516, 0
  %v6110 = vsel %vm4967, %v5517, 0
  %v6113 = vsel %vm4967, %v5518, 0
  %v6116 = vsel %vm4967, %v5519, 0
  %v6119 = vsel %vm4967, %v5520, 0
  %v6122 = vsel %vm4967, %v5521, 0
  %v6125 = vsel %vm4967, %v5522, 0
  %v6128 = vsel %vm4967, %v5523, 0
  %v6131 = vsel %vm4967, %v5524, 0
  %v6134 = vsel %vm4967, %v5525, 0
  %v6137 = vsel %vm4967, %v5526, 0
  %v6140 = vsel %vm4967, %v5527, 0
  %v6143 = vsel %vm4967, %v5528, 0
  %v6146 = vsel %vm4967, %v5529, 0
  %v6149 = vsel %vm4967, %v5530, 0
  %v6152 = vsel %vm4967, %v5531, 0
  %v6155 = vsel %vm4967, %v5532, 0
  %v6158 = vsel %vm4967, %v5533, 0
  %v6161 = vsel %vm4967, %v5534, 0
  %v6164 = vsel %vm4967, %v5535, 0
  %v6167 = vsel %vm4967, %v5536, 0
  %v6170 = vsel %vm4967, %v5537, 0
  %v6173 = vsel %vm4967, %v5538, 0
  %v6176 = vsel %vm4967, %v5539, 0
  %v6179 = vsel %vm4967, %v5540, 0
  %v6182 = vsel %vm4967, %v5541, 0
  %v6185 = vsel %vm4967, %v5542, 0
  %v6188 = vsel %vm4967, %v5543, 0
  %v6191 = vsel %vm4967, %v5544, 0
  %v6194 = vsel %vm4967, %v5545, 0
  %v6197 = vsel %vm4967, %v5546, 0
  %v6200 = vsel %vm4967, %v5547, 0
  %v6203 = vsel %vm4967, %v5548, 0
  %v6206 = vsel %vm4967, %v5549, 0
  %v6209 = vsel %vm4967, %v5550, 0
  %v6212 = vsel %vm4967, %v5551, 0
  %v6215 = vsel %vm4967, %v5552, 0
  %v6218 = vsel %vm4967, %v5553, 0
  %v6221 = vsel %vm4967, %v5554, 0
  %v6224 = vsel %vm4967, %v5555, 0
  %v6227 = vsel %vm4967, %v5556, 0
  %v6230 = vsel %vm4967, %v5557, 0
  %v6233 = vsel %vm4967, %v5558, 0
  %v6236 = vsel %vm4967, %v5559, 0
  %v6239 = vsel %vm4967, %v5560, 0
  %v6242 = vsel %vm4967, %v5561, 0
  %v6245 = vsel %vm4967, %v5562, 0
  %v6248 = vsel %vm4967, %v5563, 0
  %v6251 = vsel %vm4967, %v5564, 0
  %v6254 = vsel %vm4967, %v5565, 0
  %v6257 = vsel %vm4967, %v5566, 0
  %v6260 = vsel %vm4967, %v5567, 0
  %v6263 = vsel %vm4967, %v5568, 0
  %v6266 = vsel %vm4967, %v5569, 0
  %v6269 = vsel %vm4967, %v5570, 0
  %v6272 = vsel %vm4967, %v5571, 0
  %v6275 = vsel %vm4967, %v5572, 0
  %v6278 = vsel %vm4967, %v5573, 0
  %v6281 = vsel %vm4967, %v5574, 0
  %v6284 = vsel %vm4967, %v5575, 0
  %v6287 = vsel %vm4967, %v5576, 0
  %v6290 = vsel %vm4967, %v5577, 0
  %v6293 = vsel %vm4967, %v5578, 0
  %v6296 = vsel %vm4967, %v5579, 0
  %v6299 = vsel %vm4967, %v5580, 0
  %v6302 = vsel %vm4967, %v5581, 0
  %v6305 = vsel %vm4967, %v5582, 0
  %v6308 = vsel %vm4967, %v5583, 0
  %v6311 = vsel %vm4967, %v5584, 0
  %v6314 = vsel %vm4967, %v5585, 0
  %v6317 = vsel %vm4967, %v5586, 0
  %v6320 = vsel %vm4967, %v5587, 0
  %v6323 = vsel %vm4967, %v5588, 0
  %v6326 = vsel %vm4967, %v5589, 0
  %v6329 = vsel %vm4967, %v5590, 0
  %v6332 = vsel %vm4967, %v5591, 0
  %v6335 = vsel %vm4967, %v5592, 0
  %v6338 = vsel %vm4967, %v5593, 0
  %v6341 = vsel %vm4967, %v5594, 0
  %v6344 = vsel %vm4967, %v5595, 0
  %v6347 = vsel %vm4967, %v5596, 0
  %v6350 = vsel %vm4967, %v5597, 0
  %v6353 = vsel %vm4967, %v5598, 0
  %v6356 = vsel %vm4967, %v5599, 0
  %v6359 = vsel %vm4967, %v5600, 0
  %v6362 = vsel %vm4967, %v5601, 0
  %v6365 = vsel %vm4967, %v5602, 0
  %v6368 = vsel %vm4967, %v5603, 0
  %v6371 = vsel %vm4967, %v5604, 0
  %v6374 = vsel %vm4967, %v5605, 0
  %v6377 = vsel %vm4967, %v5606, 0
  %v6380 = vsel %vm4967, %v5607, 0
  %v6383 = vsel %vm4967, %v5608, 0
  %v6386 = vsel %vm4967, %v5609, 0
  %v6389 = vsel %vm4967, %v5610, 0
  %v6392 = vsel %vm4967, %v5611, 0
  %v6395 = vsel %vm4967, %v5612, 0
  %v6398 = vsel %vm4967, %v5613, 0
  %v6401 = vsel %vm4967, %v5614, 0
  %v6404 = vsel %vm4967, %v5615, 0
  %v6407 = vsel %vm4967, %v5616, 0
  %v6410 = vsel %vm4967, %v5617, 0
  %v6413 = vsel %vm4967, %v5618, 0
  %v6416 = vsel %vm4967, %v5619, 0
  %v6419 = vsel %vm4967, %v5620, 0
  %v6422 = vsel %vm4967, %v5621, 0
  %v6425 = vsel %vm4967, %v5622, 0
  %v6428 = vsel %vm4967, %v5623, 0
  %v6431 = vsel %vm4967, %v5624, 0
  %v6434 = vsel %vm4967, %v5625, 0
  %v6437 = vsel %vm4967, %v5626, 0
  %v6440 = vsel %vm4967, %v5627, 0
  %v6443 = vsel %vm4967, %v5628, 0
  %v6446 = vsel %vm4967, %v5629, 0
  %v6449 = vsel %vm4967, %v5630, 0
  %v6452 = vsel %vm4967, %v5631, 0
  %v6455 = vsel %vm4967, %v5632, 0
  %v6458 = vsel %vm4967, %v5633, 0
  %v6461 = vsel %vm4967, %v5634, 0
  %v6464 = vsel %vm4967, %v5635, 0
  %v6467 = vsel %vm4967, %v5636, 0
  %v6470 = vsel %vm4967, %v5637, 0
  %v6473 = vsel %vm4967, %v5638, 0
  %v6476 = vsel %vm4967, %v5639, 0
  %v6479 = vsel %vm4967, %v5640, 0
  %v6482 = vsel %vm4967, %v5641, 0
  %v6485 = vsel %vm4967, %v5642, 0
  %v6488 = vsel %vm4967, %v5643, 0
  %v6491 = vsel %vm4967, %v5644, 0
  %v6494 = vsel %vm4967, %v5645, 0
  %v6497 = vsel %vm4967, %v5646, 0
  %v6500 = vsel %vm4967, %v5647, 0
  %v6503 = vsel %vm4967, %v5648, 0
  %v6506 = vsel %vm4967, %v5649, 0
  %v6509 = vsel %vm4967, %v5650, 0
  %v6512 = vsel %vm4967, %v5651, 0
  %v6515 = vsel %vm4967, %v5652, 0
  %v6518 = vsel %vm4967, %v5653, 0
  %v6521 = vsel %vm4967, %v5654, 0
  %v6524 = vsel %vm4967, %v5655, 0
  %v6527 = vsel %vm4967, %v5656, 0
  %v6530 = vsel %vm4967, %v5657, 0
  %v6533 = vsel %vm4967, %v5658, 0
  %v6536 = vsel %vm4967, %v5659, 0
  %v6539 = vsel %vm4967, %v5660, 0
  %v6542 = vsel %vm4967, %v5661, 0
  %v6545 = vsel %vm4967, %v5662, 0
  %v6548 = vsel %vm4967, %v5663, 0
  %v6551 = vsel %vm4967, %v5664, 0
  %v6554 = vsel %vm4967, %v5665, 0
  %v6557 = vsel %vm4967, %v5666, 0
  %v6560 = vsel %vm4967, %v5667, 0
  %v6563 = vsel %vm4967, %v5668, 0
  %v6566 = vsel %vm4967, %v5669, 0
  %v6569 = vsel %vm4967, %v5670, 0
  %v6572 = vsel %vm4967, %v5671, 0
  %v6575 = vsel %vm4967, %v5672, 0
  %v6578 = vsel %vm4967, %v5673, 0
  %v6581 = vsel %vm4967, %v5674, 0
  %v6584 = vsel %vm4967, %v5675, 0
  %v6587 = vsel %vm4967, %v5676, 0
  %v6590 = vsel %vm4967, %v5677, 0
  %v6593 = vsel %vm4967, %v5678, 0
  %v6596 = vsel %vm4967, %v5679, 0
  %v6599 = vsel %vm4967, %v5680, 0
  %v6602 = vsel %vm4967, %v5681, 0
  %v6605 = vsel %vm4967, %v5682, 0
  %v6608 = vsel %vm4967, %v5683, 0
  %v6611 = vsel %vm4967, %v5684, 0
  %v6614 = vsel %vm4967, %v5685, 0
  %v6617 = vsel %vm4967, %v5686, 0
  %v6620 = vsel %vm4967, %v5687, 0
  %v6623 = vsel %vm4967, %v5688, 0
  %v6626 = vsel %vm4967, %v5689, 0
  %v6629 = vsel %vm4967, %v5690, 0
  %v6632 = vsel %vm4967, %v5691, 0
  %v6635 = vsel %vm4967, %v5692, 0
  %v6638 = vsel %vm4967, %v5693, 0
  %v6641 = vsel %vm4967, %v5694, 0
  %v6644 = vsel %vm4967, %v5695, 0
  %v6647 = vsel %vm4967, %v5696, 0
  %v6650 = vsel %vm4967, %v5697, 0
  %v6653 = vsel %vm4967, %v5698, 0
  %v6656 = vsel %vm4967, %v5699, 0
  %v6659 = vsel %vm4967, %v5700, 0
  %v6662 = vsel %vm4967, %v5701, 0
  %v6665 = vsel %vm4967, %v5702, 0
  %v6668 = vsel %vm4967, %v5703, 0
  %v6671 = vsel %vm4967, %v5704, 0
  %v6674 = vsel %vm4967, %v5705, 0
  %v6677 = vsel %vm4967, %v5706, 0
  %v6680 = vsel %vm4967, %v5707, 0
  %v6683 = vsel %vm4967, %v5708, 0
  %v6686 = vsel %vm4967, %v5709, 0
  %v6689 = vsel %vm4967, %v5710, 0
  %v6692 = vsel %vm4967, %v5711, 0
  %v6695 = vsel %vm4967, %v5712, 0
  %v6698 = vsel %vm4967, %v5713, 0
  %v6701 = vsel %vm4967, %v5714, 0
  %v6704 = vsel %vm4967, %v5715, 0
  %v6707 = vsel %vm4967, %v5716, 0
  %v6710 = vsel %vm4967, %v5717, 0
  %v6713 = vsel %vm4967, %v5718, 0
  %v6716 = vsel %vm4967, %v5719, 0
  %v6719 = vsel %vm4967, %v5720, 0
  %v6722 = vsel %vm4967, %v5721, 0
  %v6725 = vsel %vm4967, %v5722, 0
  %v6728 = vsel %vm4967, %v5723, 0
  %v6731 = vsel %vm4967, %v5724, 0
  %v6734 = vsel %vm4967, %v5725, 0
  %v6737 = vsel %vm4967, %v5726, 0
  %v6740 = vsel %vm4967, %v5727, 0
  %v6743 = vsel %vm4967, %v5728, 0
  %v6746 = vsel %vm4967, %v5729, 0
  %v6749 = vsel %vm4967, %v5730, 0
  %v6752 = vsel %vm4967, %v5731, 0
  %v6755 = vsel %vm4967, %v5732, 0
  %v6758 = vsel %vm4967, %v5733, 0
  %v6761 = vsel %vm4967, %v5734, 0
  %v6764 = vsel %vm4967, %v5735, 0
  %v6767 = vsel %vm4967, %v5736, 0
  %v6770 = vsel %vm4967, %v5737, 0
  %v6773 = vsel %vm4967, %v5738, 0
  %v6776 = vsel %vm4967, %v5739, 0
  %v6779 = vsel %vm4967, %v5740, 0
  %v6782 = vsel %vm4967, %v5741, 0
  %v6785 = vsel %vm4967, %v5742, 0
  %v6788 = vsel %vm4967, %v5743, 0
  %v6791 = vsel %vm4967, %v5744, 0
  %v6794 = vsel %vm4967, %v5745, 0
  %v6797 = vsel %vm4967, %v5746, 0
  %v6800 = vsel %vm4967, %v5747, 0
  %v6803 = vsel %vm4967, %v5748, 0
  %v6806 = vsel %vm4967, %v5749, 0
  %v6809 = vsel %vm4967, %v5750, 0
  %v6812 = vsel %vm4967, %v5751, 0
  %v6815 = vsel %vm4967, %v5752, 0
  %v6818 = vsel %vm4967, %v5753, 0
  %v6821 = vsel %vm4967, %v5754, 0
  %v6824 = vsel %vm4967, %v5755, 0
  %v6827 = vsel %vm4967, %v5756, 0
  %v6830 = vsel %vm4967, %v5757, 0
  %v6833 = vsel %vm4967, %v5758, 0
  %v6836 = vsel %vm4967, %v5759, 0
  %v6839 = vsel %vm4967, %v5760, 0
  %v6842 = vsel %vm4967, %v5761, 0
  %v6845 = vsel %vm4967, %v5762, 0
  %v6848 = vsel %vm4967, %v5763, 0
  %v6851 = vsel %vm4967, %v5764, 0
  %v6854 = vsel %vm4967, %v5765, 0
  %v6857 = vsel %vm4967, %v5766, 0
  %v6860 = vsel %vm4967, %v5767, 0
  %v6863 = vsel %vm4967, %v5768, 0
  %v6866 = vsel %vm4967, %v5769, 0
  %v6869 = vsel %vm4967, %v5770, 0
  %v6872 = vsel %vm4967, %v5771, 0
  %v6875 = vsel %vm4967, %v5772, 0
  %v6878 = vsel %vm4967, %v5773, 0
  %v6881 = vsel %vm4967, %v5774, 0
  %v6884 = vsel %vm4967, %v5775, 0
  %v6887 = vsel %vm4967, %v5776, 0
  %v6890 = vsel %vm4967, %v5777, 0
  %v6893 = vsel %vm4967, %v5778, 0
  %v6896 = vsel %vm4967, %v5779, 0
  %v6899 = vsel %vm4967, %v5780, 0
  %v6902 = vsel %vm4967, %v5781, 0
  %v6905 = vsel %vm4967, %v5782, 0
  %v6908 = vsel %vm4967, %v5783, 0
  %v6911 = vsel %vm4967, %v5784, 0
  %v6914 = vsel %vm4967, %v5785, 0
  %v6917 = vsel %vm4967, %v5786, 0
  %v6920 = vsel %vm4967, %v5787, 0
  %v6923 = vsel %vm4967, %v5788, 0
  %v6926 = vsel %vm4967, %v5789, 0
  %v6929 = vsel %vm4967, %v5790, 0
  %v6932 = vsel %vm4967, %v5791, 0
  %v6935 = vsel %vm4967, %v5792, 0
  %v6938 = vsel %vm4967, %v5793, 0
  %v6941 = vsel %vm4967, %v5794, 0
  %v6944 = vsel %vm4967, %v5795, 0
  %v6947 = vsel %vm4967, %v5796, 0
  %v6950 = vsel %vm4967, %v5797, 0
  %v6953 = vsel %vm4967, %v5798, 0
  %v6956 = vsel %vm4967, %v5799, 0
  %v6959 = vsel %vm4967, %v5800, 0
  %v6962 = vsel %vm4967, %v5801, 0
  %v6965 = vsel %vm4967, %v5802, 0
  %v6968 = vsel %vm4967, %v5803, 0
  %v6971 = vsel %vm4967, %v5804, 0
  %v6974 = vsel %vm4967, %v5805, 0
  %v6977 = vsel %vm4967, %v5806, 0
  %v6980 = vsel %vm4967, %v5807, 0
  %v6983 = vsel %vm4967, %v5808, 0
  %v6986 = vsel %vm4967, %v5809, 0
  %v6989 = vsel %vm4967, %v5810, 0
  %v6992 = vsel %vm4967, %v5811, 0
  %v6995 = vsel %vm4967, %v5812, 0
  %v6998 = vsel %vm4967, %v5813, 0
  %v7001 = vsel %vm4967, %v5814, 0
  %v7004 = vsel %vm4967, %v5815, 0
  %v7007 = vsel %vm4967, %v5816, 0
  %v7010 = vsel %vm4967, %v5817, 0
  %v7013 = vsel %vm4967, %v5818, 0
  %v7016 = vsel %vm4967, %v5819, 0
  %v7019 = vsel %vm4967, %v5820, 0
  %v7022 = vsel %vm4967, %v5821, 0
  %v7025 = vsel %vm4967, %v5822, 0
  %v7028 = vsel %vm4967, %v5823, 0
  %v7031 = vsel %vm4967, %v5824, 0
  %v7034 = vsel %vm4967, %v5825, 0
  %v7037 = vsel %vm4967, %v5826, 0
  %v7040 = vsel %vm4967, %v5827, 0
  %v7043 = vsel %vm4967, %v5828, 0
  %v7046 = vsel %vm4967, %v5829, 0
  %v7049 = vsel %vm4967, %v5830, 0
  %v7052 = vsel %vm4967, %v5831, 0
  %v7055 = vsel %vm4967, %v5832, 0
  %v7058 = vsel %vm4967, %v5833, 0
  %v7061 = vsel %vm4967, %v5834, 0
  %v7064 = vsel %vm4967, %v5835, 0
  %v7067 = vsel %vm4967, %v5836, 0
  %v7070 = vsel %vm4967, %v5837, 0
  %v7073 = vsel %vm4967, %v5838, 0
  %v7076 = vsel %vm4967, %v5839, 0
  %v7079 = vsel %vm4967, %v5840, 0
  %v7082 = vsel %vm4967, %v5841, 0
  %v7085 = vsel %vm4967, %v5842, 0
  %v7088 = vsel %vm4967, %v5843, 0
  %v7091 = vsel %vm4967, %v5844, 0
  %v7094 = vsel %vm4967, %v5845, 0
  %v7097 = vsel %vm4967, %v5846, 0
  %v7100 = vsel %vm4967, %v5847, 0
  %v7103 = vsel %vm4967, %v5848, 0
  %v7106 = vsel %vm4967, %v5849, 0
  %v7109 = vsel %vm4967, %v5850, 0
  %v7112 = vsel %vm4967, %v5851, 0
  %v7115 = vsel %vm4967, %v5852, 0
  %v7118 = vsel %vm4967, %v5853, 0
  %v7121 = vsel %vm4967, %v5854, 0
  %v7124 = vsel %vm4967, %v5855, 0
  %v7127 = vsel %vm4967, %v5856, 0
  %v7130 = vsel %vm4967, %v5857, 0
  %v7133 = vsel %vm4967, %v5858, 0
  %v7136 = vsel %vm4967, %v5859, 0
  %v7139 = vsel %vm4967, %v5860, 0
  %v7142 = vsel %vm4967, %v5861, 0
  %v7145 = vsel %vm4967, %v5862, 0
  %v7148 = vsel %vm4967, %v5863, 0
  %v7151 = vsel %vm4967, %v5864, 0
  %v7154 = vsel %vm4967, %v5865, 0
  %v7157 = vsel %vm4967, %v5866, 0
  %v7160 = vsel %vm4967, %v5867, 0
  %v7163 = vsel %vm4967, %v5868, 0
  %v7166 = vsel %vm4967, %v5869, 0
  %v7169 = vsel %vm4967, %v5870, 0
  %v7172 = vsel %vm4967, %v5871, 0
  %v7175 = vsel %vm4967, %v5872, 0
  %v7178 = vsel %vm4967, %v5873, 0
  %v7181 = vsel %vm4967, %v5874, 0
  %v7184 = vsel %vm4967, %v5875, 0
  %v7187 = vsel %vm4967, %v5876, 0
  %v7190 = vsel %vm4967, %v5877, 0
  %v7193 = vsel %vm4967, %v5878, 0
  %v7196 = vsel %vm4967, %v5879, 0
  %v7199 = vsel %vm4967, %v5880, 0
  %v7202 = vsel %vm4967, %v5881, 0
  %v7205 = vsel %vm4967, %v5882, 0
  %v7208 = vsel %vm4967, %v5883, 0
  %v7211 = vsel %vm4967, %v5884, 0
  %v7214 = vsel %vm4967, %v5885, 0
  %v7217 = vsel %vm4967, %v5886, 0
  %v7220 = vsel %vm4967, %v5887, 0
  %v7223 = vsel %vm4967, %v5888, 0
  %v7226 = vsel %vm4967, %v5889, 0
  %v7229 = vsel %vm4967, %v5890, 0
  %v7232 = vsel %vm4967, %v5891, 0
  %v7235 = vsel %vm4967, %v5892, 0
  %v7238 = vsel %vm4967, %v5893, 0
  %v7241 = vsel %vm4967, %v5894, 0
  %v7244 = vsel %vm4967, %v5895, 0
  %v7247 = vsel %vm4967, %v5896, 0
  %v7250 = vsel %vm4967, %v5897, 0
  %v7253 = vsel %vm4967, %v5898, 0
  %v7256 = vsel %vm4967, %v5899, 0
  %v7259 = vsel %vm4967, %v5900, 0
  %v7262 = vsel %vm4967, %v5901, 0
  %v7265 = vsel %vm4967, %v5902, 0
  %v7268 = vsel %vm4967, %v5903, 0
  %v7271 = vsel %vm4967, %v5904, 0
  %v7274 = vsel %vm4967, %v5905, 0
  %v7277 = vsel %vm4967, %v5906, 0
  %v7280 = vsel %vm4967, %v5907, 0
  %v7283 = vsel %vm4967, %v5908, 0
  %v7286 = vsel %vm4967, %v5909, 0
  %v7289 = vsel %vm4967, %v5910, 0
  %v7292 = vsel %vm4967, %v5911, 0
  %v7295 = vsel %vm4967, %v5912, 0
  %v7298 = vsel %vm4967, %v5913, 0
  %v7301 = vsel %vm4967, %v5914, 0
  %v7304 = vsel %vm4967, %v5915, 0
  %v7307 = vsel %vm4967, %v5916, 0
  %v7310 = vsel %vm4967, %v5917, 0
  %v7313 = vsel %vm4967, %v5918, 0
  %v7316 = vsel %vm4967, %v5919, 0
  %v7319 = vsel %vm4967, %v5920, 0
  %v7322 = vsel %vm4967, %v5921, 0
  %v7325 = vsel %vm4967, %v5922, 0
  %v7328 = vsel %vm4967, %v5923, 0
  %v7331 = vsel %vm4967, %v5924, 0
  %v7334 = vsel %vm4967, %v5925, 0
  %v7337 = vsel %vm4967, %v5926, 0
  %v7340 = vsel %vm4967, %v5927, 0
  %v7343 = vsel %vm4967, %v5928, 0
  %v7346 = vsel %vm4967, %v5929, 0
  %v7349 = vsel %vm4967, %v5930, 0
  %v7352 = vsel %vm4967, %v5931, 0
  %v7355 = vsel %vm4967, %v5932, 0
  %v7358 = vsel %vm4967, %v5933, 0
  %v7361 = vsel %vm4967, %v5934, 0
  %v7364 = vsel %vm4967, %v5935, 0
  %v7367 = vsel %vm4967, %v5936, 0
  %v7370 = vsel %vm4967, %v5937, 0
  %v7373 = vsel %vm4967, %v5938, 0
  %v7376 = vsel %vm4967, %v5939, 0
  %v7379 = vsel %vm4967, %v5940, 0
  %v7382 = vsel %vm4967, %v5941, 0
  %v7385 = vsel %vm4967, %v5942, 0
  %v7388 = vsel %vm4967, %v5943, 0
  %v7391 = vsel %vm4967, %v5944, 0
  %v7394 = vsel %vm4967, %v5945, 0
  %v7397 = vsel %vm4967, %v5946, 0
  %v7400 = vsel %vm4967, %v5947, 0
  %v7403 = vsel %vm4967, %v5948, 0
  %v7406 = vsel %vm4967, %v5949, 0
  %v7409 = vsel %vm4967, %v5950, 0
  %v7412 = vsel %vm4967, %v5951, 0
  %v7415 = vsel %vm4967, %v5952, 0
  %v7418 = vsel %vm4967, %v5953, 0
  %v7421 = vsel %vm4967, %v5954, 0
  %v7424 = vsel %vm4967, %v5955, 0
  %v7427 = vsel %vm4967, %v5956, 0
  %v7430 = vsel %vm4967, %v5957, 0
  %v7433 = vsel %vm4967, %v5958, 0
  %v7436 = vsel %vm4967, %v5959, 0
  %v7439 = vsel %vm4967, %v5960, 0
  %v7442 = vsel %vm4967, %v5961, 0
  %v7445 = vsel %vm4967, %v5962, 0
  %v7448 = vsel %vm4967, %v5963, 0
  %v7451 = vsel %vm4967, %v5964, 0
  %v7454 = vsel %vm4967, %v5965, 0
  %v7457 = vsel %vm4967, %v5966, 0
  %v7460 = vsel %vm4967, %v5967, 0
  %v7463 = vsel %vm4967, %v5968, 0
  %v7466 = vsel %vm4967, %v5969, 0
  %v7469 = vsel %vm4967, %v5970, 0
  %v7472 = vsel %vm4967, %v5971, 0
  %v7475 = vsel %vm4967, %v5972, 0
  %v7478 = vsel %vm4967, %v5973, 0
  %v7481 = vsel %vm4967, %v5974, 0
  %v7484 = vsel %vm4967, %v5975, 0
  %v7487 = vsel %vm4967, %v5976, 0
  %v7490 = vsel %vm4967, %v5977, 0
  %v7493 = vsel %vm4967, %v5978, 0
  %v7496 = vsel %vm4967, %v5979, 0
  %v7499 = vsel %vm4967, %v5980, 0
  %v7502 = vsel %vm4967, %v5981, 0
  %v7505 = vsel %vm4967, %v5982, 0
  %v7508 = vsel %vm4967, %v5983, 0
  %v7511 = vsel %vm4967, %v5984, 0
  %v7514 = vsel %vm4967, %v5985, 0
  %v7517 = vsel %vm4967, %v5986, 0
  %v7520 = vsel %vm4967, %v5987, 0
  %v7523 = vsel %vm4967, %v5988, 0
  %v7526 = vsel %vm4967, %v5989, 0
  %v7529 = vsel %vm4967, %v5990, 0
  %v7532 = vsel %vm4967, %v5991, 0
  %7534 = vmatprep.subr.mxu0 0.0
  %7535 = vmatpush1.msra.mxu0 %v33
  %7536 = vmatprep.subr.mxu0 0.0
  %7537 = vmatpush1.msra.mxu0 %v34
  %7538 = vmatprep.subr.mxu0 0.0
  %7539 = vmatpush1.msra.mxu0 0.0
  %7540 = vmatprep.subr.mxu0 0.0
  %7541 = vmatpush1.msra.mxu0 0.0
  %7542 = vmatprep.subr.mxu0 0.0
  %7543 = vmatpush1.msra.mxu0 0.0
  %7544 = vmatprep.subr.mxu0 0.0
  %7545 = vmatpush1.msra.mxu0 0.0
  %7546 = vmatprep.subr.mxu0 0.0
  %7547 = vmatpush1.msra.mxu0 0.0
  %7548 = vmatprep.subr.mxu0 0.0
  %7549 = vmatpush1.msra.mxu0 0.0
  %7550 = vmatprep.subr.mxu0 0.0
  %7551 = vmatpush1.msra.mxu0 0.0
  %7552 = vmatprep.subr.mxu0 0.0
  %7553 = vmatpush1.msra.mxu0 0.0
  %7554 = vmatprep.subr.mxu0 0.0
  %7555 = vmatpush1.msra.mxu0 0.0
  %7556 = vmatprep.subr.mxu0 0.0
  %7557 = vmatpush1.msra.mxu0 0.0
  %7558 = vmatprep.subr.mxu0 0.0
  %7559 = vmatpush1.msra.mxu0 0.0
  %7560 = vmatprep.subr.mxu0 0.0
  %7561 = vmatpush1.msra.mxu0 0.0
  %7562 = vmatprep.subr.mxu0 0.0
  %7563 = vmatpush1.msra.mxu0 0.0
  %7564 = vmatprep.subr.mxu0 0.0
  %7565 = vmatpush1.msra.mxu0 0.0
  %7566 = vmatprep.subr.mxu0 0.0
  %7567 = vmatpush1.msra.mxu0 0.0
  %7568 = vmatprep.subr.mxu0 0.0
  %7569 = vmatpush1.msra.mxu0 0.0
  %7570 = vmatprep.subr.mxu0 0.0
  %7571 = vmatpush1.msra.mxu0 0.0
  %7572 = vmatprep.subr.mxu0 0.0
  %7573 = vmatpush1.msra.mxu0 0.0
  %7574 = vmatprep.subr.mxu0 0.0
  %7575 = vmatpush1.msra.mxu0 0.0
  %7576 = vmatprep.subr.mxu0 0.0
  %7577 = vmatpush1.msra.mxu0 0.0
  %7578 = vmatprep.subr.mxu0 0.0
  %7579 = vmatpush1.msra.mxu0 0.0
  %7580 = vmatprep.subr.mxu0 0.0
  %7581 = vmatpush1.msra.mxu0 0.0
  %7582 = vmatprep.subr.mxu0 0.0
  %7583 = vmatpush1.msra.mxu0 0.0
  %7584 = vmatprep.subr.mxu0 0.0
  %7585 = vmatpush1.msra.mxu0 0.0
  %7586 = vmatprep.subr.mxu0 0.0
  %7587 = vmatpush1.msra.mxu0 0.0
  %7588 = vmatprep.subr.mxu0 0.0
  %7589 = vmatpush1.msra.mxu0 0.0
  %7590 = vmatprep.subr.mxu0 0.0
  %7591 = vmatpush1.msra.mxu0 0.0
  %7592 = vmatprep.subr.mxu0 0.0
  %7593 = vmatpush1.msra.mxu0 0.0
  %7594 = vmatprep.subr.mxu0 0.0
  %7595 = vmatpush1.msra.mxu0 0.0
  %7596 = vmatprep.subr.mxu0 0.0
  %7597 = vmatpush1.msra.mxu0 0.0
  %7598 = vmatprep.mubr.f32.mxu0 0.0
  %7599 = vmatmul.mubr.f32.gmra.mrb[0].mxu0 %v5999
  %v7600 = vpop.f32.mrb[0].mxu0
  %v7601 = vadd.f32 %v5996, %v7600
  %v7602 = vpop.f32.mrb[0].mxu0
  %7603 = vmatprep.mubr.f32.mxu0 0.0
  %7604 = vmatmul.mubr.f32.gmra.mrb[0].mxu0 %v6002
  %v7605 = vpop.f32.mrb[0].mxu0
  %v7606 = vadd.f32 %v5996, %v7605
  %v7607 = vpop.f32.mrb[0].mxu0
  %7608 = vmatprep.mubr.f32.mxu0 0.0
  %7609 = vmatmul.mubr.f32.gmra.mrb[0].mxu0 %v6005
  %v7610 = vpop.f32.mrb[0].mxu0
  %v7611 = vadd.f32 %v5996, %v7610
  %v7612 = vpop.f32.mrb[0].mxu0
  %7613 = vmatprep.mubr.f32.mxu0 0.0
  %7614 = vmatmul.mubr.f32.gmra.mrb[0].mxu0 %v6008
  %v7615 = vpop.f32.mrb[0].mxu0
  %v7616 = vadd.f32 %v5996, %v7615
  %v7617 = vpop.f32.mrb[0].mxu0
  %7618 = vmatprep.mubr.f32.mxu0 0.0
  %7619 = vmatmul.mubr.f32.gmra.mrb[0].mxu0 %v6011
  %v7620 = vpop.f32.mrb[0].mxu0
  %v7621 = vadd.f32 %v5996, %v7620
  %v7622 = vpop.f32.mrb[0].mxu0
  %7623 = vmatprep.mubr.f32.mxu0 0.0
  %7624 = vmatmul.mubr.f32.gmra.mrb[0].mxu0 %v6014
  %v7625 = vpop.f32.mrb[0].mxu0
  %v7626 = vadd.f32 %v5996, %v7625
  %v7627 = vpop.f32.mrb[0].mxu0
  %7628 = vmatprep.mubr.f32.mxu0 0.0
  %7629 = vmatmul.mubr.f32.gmra.mrb[0].mxu0 %v6017
  %v7630 = vpop.f32.mrb[0].mxu0
  %v7631 = vadd.f32 %v5996, %v7630
  %v7632 = vpop.f32.mrb[0].mxu0
  %7633 = vmatprep.mubr.f32.mxu0 0.0
  %7634 = vmatmul.mubr.f32.gmra.mrb[0].mxu0 %v6020
  %v7635 = vpop.f32.mrb[0].mxu0
  %v7636 = vadd.f32 %v5996, %v7635
  %v7637 = vpop.f32.mrb[0].mxu0
  %7638 = vmatprep.mubr.f32.mxu0 0.0
  %7639 = vmatmul.mubr.f32.gmra.mrb[0].mxu0 %v6023
  %v7640 = vpop.f32.mrb[0].mxu0
  %v7641 = vadd.f32 %v5996, %v7640
  %v7642 = vpop.f32.mrb[0].mxu0
  %7643 = vmatprep.mubr.f32.mxu0 0.0
  %7644 = vmatmul.mubr.f32.gmra.mrb[0].mxu0 %v6026
  %v7645 = vpop.f32.mrb[0].mxu0
  %v7646 = vadd.f32 %v5996, %v7645
  %v7647 = vpop.f32.mrb[0].mxu0
  %7648 = vmatprep.mubr.f32.mxu0 0.0
  %7649 = vmatmul.mubr.f32.gmra.mrb[0].mxu0 %v6029
  %v7650 = vpop.f32.mrb[0].mxu0
  %v7651 = vadd.f32 %v5996, %v7650
  %v7652 = vpop.f32.mrb[0].mxu0
  %7653 = vmatprep.mubr.f32.mxu0 0.0
  %7654 = vmatmul.mubr.f32.gmra.mrb[0].mxu0 %v6032
  %v7655 = vpop.f32.mrb[0].mxu0
  %v7656 = vadd.f32 %v5996, %v7655
  %v7657 = vpop.f32.mrb[0].mxu0
  %7658 = vmatprep.mubr.f32.mxu0 0.0
  %7659 = vmatmul.mubr.f32.gmra.mrb[0].mxu0 %v6035
  %v7660 = vpop.f32.mrb[0].mxu0
  %v7661 = vadd.f32 %v5996, %v7660
  %v7662 = vpop.f32.mrb[0].mxu0
  %7663 = vmatprep.mubr.f32.mxu0 0.0
  %7664 = vmatmul.mubr.f32.gmra.mrb[0].mxu0 %v6038
  %v7665 = vpop.f32.mrb[0].mxu0
  %v7666 = vadd.f32 %v5996, %v7665
  %v7667 = vpop.f32.mrb[0].mxu0
  %7668 = vmatprep.mubr.f32.mxu0 0.0
  %7669 = vmatmul.mubr.f32.gmra.mrb[0].mxu0 %v6041
  %v7670 = vpop.f32.mrb[0].mxu0
  %v7671 = vadd.f32 %v5996, %v7670
  %v7672 = vpop.f32.mrb[0].mxu0
  %7673 = vmatprep.mubr.f32.mxu0 0.0
  %7674 = vmatmul.mubr.f32.gmra.mrb[0].mxu0 %v6044
  %v7675 = vpop.f32.mrb[0].mxu0
  %v7676 = vadd.f32 %v5996, %v7675
  %v7677 = vpop.f32.mrb[0].mxu0
  %7678 = vmatprep.mubr.f32.mxu0 0.0
  %7679 = vmatmul.mubr.f32.gmra.mrb[0].mxu0 %v6047
  %v7680 = vpop.f32.mrb[0].mxu0
  %v7681 = vadd.f32 %v5996, %v7680
  %v7682 = vpop.f32.mrb[0].mxu0
  %7683 = vmatprep.mubr.f32.mxu0 0.0
  %7684 = vmatmul.mubr.f32.gmra.mrb[0].mxu0 %v6050
  %v7685 = vpop.f32.mrb[0].mxu0
  %v7686 = vadd.f32 %v5996, %v7685
  %v7687 = vpop.f32.mrb[0].mxu0
  %7688 = vmatprep.mubr.f32.mxu0 0.0
  %7689 = vmatmul.mubr.f32.gmra.mrb[0].mxu0 %v6053
  %v7690 = vpop.f32.mrb[0].mxu0
  %v7691 = vadd.f32 %v5996, %v7690
  %v7692 = vpop.f32.mrb[0].mxu0
  %7693 = vmatprep.mubr.f32.mxu0 0.0
  %7694 = vmatmul.mubr.f32.gmra.mrb[0].mxu0 %v6056
  %v7695 = vpop.f32.mrb[0].mxu0
  %v7696 = vadd.f32 %v5996, %v7695
  %v7697 = vpop.f32.mrb[0].mxu0
  %7698 = vmatprep.mubr.f32.mxu0 0.0
  %7699 = vmatmul.mubr.f32.gmra.mrb[0].mxu0 %v6059
  %v7700 = vpop.f32.mrb[0].mxu0
  %v7701 = vadd.f32 %v5996, %v7700
  %v7702 = vpop.f32.mrb[0].mxu0
  %7703 = vmatprep.mubr.f32.mxu0 0.0
  %7704 = vmatmul.mubr.f32.gmra.mrb[0].mxu0 %v6062
  %v7705 = vpop.f32.mrb[0].mxu0
  %v7706 = vadd.f32 %v5996, %v7705
  %v7707 = vpop.f32.mrb[0].mxu0
  %7708 = vmatprep.mubr.f32.mxu0 0.0
  %7709 = vmatmul.mubr.f32.gmra.mrb[0].mxu0 %v6065
  %v7710 = vpop.f32.mrb[0].mxu0
  %v7711 = vadd.f32 %v5996, %v7710
  %v7712 = vpop.f32.mrb[0].mxu0
  %7713 = vmatprep.mubr.f32.mxu0 0.0
  %7714 = vmatmul.mubr.f32.gmra.mrb[0].mxu0 %v6068
  %v7715 = vpop.f32.mrb[0].mxu0
  %v7716 = vadd.f32 %v5996, %v7715
  %v7717 = vpop.f32.mrb[0].mxu0
  %7718 = vmatprep.mubr.f32.mxu0 0.0
  %7719 = vmatmul.mubr.f32.gmra.mrb[0].mxu0 %v6071
  %v7720 = vpop.f32.mrb[0].mxu0
  %v7721 = vadd.f32 %v5996, %v7720
  %v7722 = vpop.f32.mrb[0].mxu0
  %7723 = vmatprep.mubr.f32.mxu0 0.0
  %7724 = vmatmul.mubr.f32.gmra.mrb[0].mxu0 %v6074
  %v7725 = vpop.f32.mrb[0].mxu0
  %v7726 = vadd.f32 %v5996, %v7725
  %v7727 = vpop.f32.mrb[0].mxu0
  %7728 = vmatprep.mubr.f32.mxu0 0.0
  %7729 = vmatmul.mubr.f32.gmra.mrb[0].mxu0 %v6077
  %v7730 = vpop.f32.mrb[0].mxu0
  %v7731 = vadd.f32 %v5996, %v7730
  %v7732 = vpop.f32.mrb[0].mxu0
  %7733 = vmatprep.mubr.f32.mxu0 0.0
  %7734 = vmatmul.mubr.f32.gmra.mrb[0].mxu0 %v6080
  %v7735 = vpop.f32.mrb[0].mxu0
  %v7736 = vadd.f32 %v5996, %v7735
  %v7737 = vpop.f32.mrb[0].mxu0
  %7738 = vmatprep.mubr.f32.mxu0 0.0
  %7739 = vmatmul.mubr.f32.gmra.mrb[0].mxu0 %v6083
  %v7740 = vpop.f32.mrb[0].mxu0
  %v7741 = vadd.f32 %v5996, %v7740
  %v7742 = vpop.f32.mrb[0].mxu0
  %7743 = vmatprep.mubr.f32.mxu0 0.0
  %7744 = vmatmul.mubr.f32.gmra.mrb[0].mxu0 %v6086
  %v7745 = vpop.f32.mrb[0].mxu0
  %v7746 = vadd.f32 %v5996, %v7745
  %v7747 = vpop.f32.mrb[0].mxu0
  %7748 = vmatprep.mubr.f32.mxu0 0.0
  %7749 = vmatmul.mubr.f32.gmra.mrb[0].mxu0 %v6089
  %v7750 = vpop.f32.mrb[0].mxu0
  %v7751 = vadd.f32 %v5996, %v7750
  %v7752 = vpop.f32.mrb[0].mxu0
  %7753 = vmatprep.mubr.f32.mxu0 0.0
  %7754 = vmatmul.mubr.f32.gmra.mrb[0].mxu0 %v6092
  %v7755 = vpop.f32.mrb[0].mxu0
  %v7756 = vadd.f32 %v5996, %v7755
  %v7757 = vpop.f32.mrb[0].mxu0
  %7758 = vmatprep.mubr.f32.mxu0 0.0
  %7759 = vmatmul.mubr.f32.gmra.mrb[0].mxu0 %v6095
  %v7760 = vpop.f32.mrb[0].mxu0
  %v7761 = vadd.f32 %v5996, %v7760
  %v7762 = vpop.f32.mrb[0].mxu0
  %7763 = vmatprep.mubr.f32.mxu0 0.0
  %7764 = vmatmul.mubr.f32.gmra.mrb[0].mxu0 %v6098
  %v7765 = vpop.f32.mrb[0].mxu0
  %v7766 = vadd.f32 %v5996, %v7765
  %v7767 = vpop.f32.mrb[0].mxu0
  %7768 = vmatprep.mubr.f32.mxu0 0.0
  %7769 = vmatmul.mubr.f32.gmra.mrb[0].mxu0 %v6101
  %v7770 = vpop.f32.mrb[0].mxu0
  %v7771 = vadd.f32 %v5996, %v7770
  %v7772 = vpop.f32.mrb[0].mxu0
  %7773 = vmatprep.mubr.f32.mxu0 0.0
  %7774 = vmatmul.mubr.f32.gmra.mrb[0].mxu0 %v6104
  %v7775 = vpop.f32.mrb[0].mxu0
  %v7776 = vadd.f32 %v5996, %v7775
  %v7777 = vpop.f32.mrb[0].mxu0
  %7778 = vmatprep.mubr.f32.mxu0 0.0
  %7779 = vmatmul.mubr.f32.gmra.mrb[0].mxu0 %v6107
  %v7780 = vpop.f32.mrb[0].mxu0
  %v7781 = vadd.f32 %v5996, %v7780
  %v7782 = vpop.f32.mrb[0].mxu0
  %7783 = vmatprep.mubr.f32.mxu0 0.0
  %7784 = vmatmul.mubr.f32.gmra.mrb[0].mxu0 %v6110
  %v7785 = vpop.f32.mrb[0].mxu0
  %v7786 = vadd.f32 %v5996, %v7785
  %v7787 = vpop.f32.mrb[0].mxu0
  %7788 = vmatprep.mubr.f32.mxu0 0.0
  %7789 = vmatmul.mubr.f32.gmra.mrb[0].mxu0 %v6113
  %v7790 = vpop.f32.mrb[0].mxu0
  %v7791 = vadd.f32 %v5996, %v7790
  %v7792 = vpop.f32.mrb[0].mxu0
  %7793 = vmatprep.mubr.f32.mxu0 0.0
  %7794 = vmatmul.mubr.f32.gmra.mrb[0].mxu0 %v6116
  %v7795 = vpop.f32.mrb[0].mxu0
  %v7796 = vadd.f32 %v5996, %v7795
  %v7797 = vpop.f32.mrb[0].mxu0
  %7798 = vmatprep.mubr.f32.mxu0 0.0
  %7799 = vmatmul.mubr.f32.gmra.mrb[0].mxu0 %v6119
  %v7800 = vpop.f32.mrb[0].mxu0
  %v7801 = vadd.f32 %v5996, %v7800
  %v7802 = vpop.f32.mrb[0].mxu0
  %7803 = vmatprep.mubr.f32.mxu0 0.0
  %7804 = vmatmul.mubr.f32.gmra.mrb[0].mxu0 %v6122
  %v7805 = vpop.f32.mrb[0].mxu0
  %v7806 = vadd.f32 %v5996, %v7805
  %v7807 = vpop.f32.mrb[0].mxu0
  %7808 = vmatprep.mubr.f32.mxu0 0.0
  %7809 = vmatmul.mubr.f32.gmra.mrb[0].mxu0 %v6125
  %v7810 = vpop.f32.mrb[0].mxu0
  %v7811 = vadd.f32 %v5996, %v7810
  %v7812 = vpop.f32.mrb[0].mxu0
  %7813 = vmatprep.mubr.f32.mxu0 0.0
  %7814 = vmatmul.mubr.f32.gmra.mrb[0].mxu0 %v6128
  %v7815 = vpop.f32.mrb[0].mxu0
  %v7816 = vadd.f32 %v5996, %v7815
  %v7817 = vpop.f32.mrb[0].mxu0
  %7818 = vmatprep.mubr.f32.mxu0 0.0
  %7819 = vmatmul.mubr.f32.gmra.mrb[0].mxu0 %v6131
  %v7820 = vpop.f32.mrb[0].mxu0
  %v7821 = vadd.f32 %v5996, %v7820
  %v7822 = vpop.f32.mrb[0].mxu0
  %7823 = vmatprep.mubr.f32.mxu0 0.0
  %7824 = vmatmul.mubr.f32.gmra.mrb[0].mxu0 %v6134
  %v7825 = vpop.f32.mrb[0].mxu0
  %v7826 = vadd.f32 %v5996, %v7825
  %v7827 = vpop.f32.mrb[0].mxu0
  %7828 = vmatprep.mubr.f32.mxu0 0.0
  %7829 = vmatmul.mubr.f32.gmra.mrb[0].mxu0 %v6137
  %v7830 = vpop.f32.mrb[0].mxu0
  %v7831 = vadd.f32 %v5996, %v7830
  %v7832 = vpop.f32.mrb[0].mxu0
  %7833 = vmatprep.mubr.f32.mxu0 0.0
  %7834 = vmatmul.mubr.f32.gmra.mrb[0].mxu0 %v6140
  %v7835 = vpop.f32.mrb[0].mxu0
  %v7836 = vadd.f32 %v5996, %v7835
  %v7837 = vpop.f32.mrb[0].mxu0
  %7838 = vmatprep.mubr.f32.mxu0 0.0
  %7839 = vmatmul.mubr.f32.gmra.mrb[0].mxu0 %v6143
  %v7840 = vpop.f32.mrb[0].mxu0
  %v7841 = vadd.f32 %v5996, %v7840
  %v7842 = vpop.f32.mrb[0].mxu0
  %7843 = vmatprep.mubr.f32.mxu0 0.0
  %7844 = vmatmul.mubr.f32.gmra.mrb[0].mxu0 %v6146
  %v7845 = vpop.f32.mrb[0].mxu0
  %v7846 = vadd.f32 %v5996, %v7845
  %v7847 = vpop.f32.mrb[0].mxu0
  %7848 = vmatprep.mubr.f32.mxu0 0.0
  %7849 = vmatmul.mubr.f32.gmra.mrb[0].mxu0 %v6149
  %v7850 = vpop.f32.mrb[0].mxu0
  %v7851 = vadd.f32 %v5996, %v7850
  %v7852 = vpop.f32.mrb[0].mxu0
  %7853 = vmatprep.mubr.f32.mxu0 0.0
  %7854 = vmatmul.mubr.f32.gmra.mrb[0].mxu0 %v6152
  %v7855 = vpop.f32.mrb[0].mxu0
  %v7856 = vadd.f32 %v5996, %v7855
  %v7857 = vpop.f32.mrb[0].mxu0
  %7858 = vmatprep.mubr.f32.mxu0 0.0
  %7859 = vmatmul.mubr.f32.gmra.mrb[0].mxu0 %v6155
  %v7860 = vpop.f32.mrb[0].mxu0
  %v7861 = vadd.f32 %v5996, %v7860
  %v7862 = vpop.f32.mrb[0].mxu0
  %7863 = vmatprep.mubr.f32.mxu0 0.0
  %7864 = vmatmul.mubr.f32.gmra.mrb[0].mxu0 %v6158
  %v7865 = vpop.f32.mrb[0].mxu0
  %v7866 = vadd.f32 %v5996, %v7865
  %v7867 = vpop.f32.mrb[0].mxu0
  %7868 = vmatprep.mubr.f32.mxu0 0.0
  %7869 = vmatmul.mubr.f32.gmra.mrb[0].mxu0 %v6161
  %v7870 = vpop.f32.mrb[0].mxu0
  %v7871 = vadd.f32 %v5996, %v7870
  %v7872 = vpop.f32.mrb[0].mxu0
  %7873 = vmatprep.mubr.f32.mxu0 0.0
  %7874 = vmatmul.mubr.f32.gmra.mrb[0].mxu0 %v6164
  %v7875 = vpop.f32.mrb[0].mxu0
  %v7876 = vadd.f32 %v5996, %v7875
  %v7877 = vpop.f32.mrb[0].mxu0
  %7878 = vmatprep.mubr.f32.mxu0 0.0
  %7879 = vmatmul.mubr.f32.gmra.mrb[0].mxu0 %v6167
  %v7880 = vpop.f32.mrb[0].mxu0
  %v7881 = vadd.f32 %v5996, %v7880
  %v7882 = vpop.f32.mrb[0].mxu0
  %7883 = vmatprep.mubr.f32.mxu0 0.0
  %7884 = vmatmul.mubr.f32.gmra.mrb[0].mxu0 %v6170
  %v7885 = vpop.f32.mrb[0].mxu0
  %v7886 = vadd.f32 %v5996, %v7885
  %v7887 = vpop.f32.mrb[0].mxu0
  %7888 = vmatprep.mubr.f32.mxu0 0.0
  %7889 = vmatmul.mubr.f32.gmra.mrb[0].mxu0 %v6173
  %v7890 = vpop.f32.mrb[0].mxu0
  %v7891 = vadd.f32 %v5996, %v7890
  %v7892 = vpop.f32.mrb[0].mxu0
  %7893 = vmatprep.mubr.f32.mxu0 0.0
  %7894 = vmatmul.mubr.f32.gmra.mrb[0].mxu0 %v6176
  %v7895 = vpop.f32.mrb[0].mxu0
  %v7896 = vadd.f32 %v5996, %v7895
  %v7897 = vpop.f32.mrb[0].mxu0
  %7898 = vmatprep.mubr.f32.mxu0 0.0
  %7899 = vmatmul.mubr.f32.gmra.mrb[0].mxu0 %v6179
  %v7900 = vpop.f32.mrb[0].mxu0
  %v7901 = vadd.f32 %v5996, %v7900
  %v7902 = vpop.f32.mrb[0].mxu0
  %7903 = vmatprep.mubr.f32.mxu0 0.0
  %7904 = vmatmul.mubr.f32.gmra.mrb[0].mxu0 %v6182
  %v7905 = vpop.f32.mrb[0].mxu0
  %v7906 = vadd.f32 %v5996, %v7905
  %v7907 = vpop.f32.mrb[0].mxu0
  %7908 = vmatprep.mubr.f32.mxu0 0.0
  %7909 = vmatmul.mubr.f32.gmra.mrb[0].mxu0 %v6185
  %v7910 = vpop.f32.mrb[0].mxu0
  %v7911 = vadd.f32 %v5996, %v7910
  %v7912 = vpop.f32.mrb[0].mxu0
  %7913 = vmatprep.mubr.f32.mxu0 0.0
  %7914 = vmatmul.mubr.f32.gmra.mrb[0].mxu0 %v6188
  %v7915 = vpop.f32.mrb[0].mxu0
  %v7916 = vadd.f32 %v5996, %v7915
  %v7917 = vpop.f32.mrb[0].mxu0
  %7918 = vmatprep.mubr.f32.mxu0 0.0
  %7919 = vmatmul.mubr.f32.gmra.mrb[0].mxu0 %v6191
  %v7920 = vpop.f32.mrb[0].mxu0
  %v7921 = vadd.f32 %v5996, %v7920
  %v7922 = vpop.f32.mrb[0].mxu0
  %7923 = vmatprep.mubr.f32.mxu0 0.0
  %7924 = vmatmul.mubr.f32.gmra.mrb[0].mxu0 %v6194
  %v7925 = vpop.f32.mrb[0].mxu0
  %v7926 = vadd.f32 %v5996, %v7925
  %v7927 = vpop.f32.mrb[0].mxu0
  %7928 = vmatprep.mubr.f32.mxu0 0.0
  %7929 = vmatmul.mubr.f32.gmra.mrb[0].mxu0 %v6197
  %v7930 = vpop.f32.mrb[0].mxu0
  %v7931 = vadd.f32 %v5996, %v7930
  %v7932 = vpop.f32.mrb[0].mxu0
  %7933 = vmatprep.mubr.f32.mxu0 0.0
  %7934 = vmatmul.mubr.f32.gmra.mrb[0].mxu0 %v6200
  %v7935 = vpop.f32.mrb[0].mxu0
  %v7936 = vadd.f32 %v5996, %v7935
  %v7937 = vpop.f32.mrb[0].mxu0
  %7938 = vmatprep.mubr.f32.mxu0 0.0
  %7939 = vmatmul.mubr.f32.gmra.mrb[0].mxu0 %v6203
  %v7940 = vpop.f32.mrb[0].mxu0
  %v7941 = vadd.f32 %v5996, %v7940
  %v7942 = vpop.f32.mrb[0].mxu0
  %7943 = vmatprep.mubr.f32.mxu0 0.0
  %7944 = vmatmul.mubr.f32.gmra.mrb[0].mxu0 %v6206
  %v7945 = vpop.f32.mrb[0].mxu0
  %v7946 = vadd.f32 %v5996, %v7945
  %v7947 = vpop.f32.mrb[0].mxu0
  %7948 = vmatprep.mubr.f32.mxu0 0.0
  %7949 = vmatmul.mubr.f32.gmra.mrb[0].mxu0 %v6209
  %v7950 = vpop.f32.mrb[0].mxu0
  %v7951 = vadd.f32 %v5996, %v7950
  %v7952 = vpop.f32.mrb[0].mxu0
  %7953 = vmatprep.mubr.f32.mxu0 0.0
  %7954 = vmatmul.mubr.f32.gmra.mrb[0].mxu0 %v6212
  %v7955 = vpop.f32.mrb[0].mxu0
  %v7956 = vadd.f32 %v5996, %v7955
  %v7957 = vpop.f32.mrb[0].mxu0
  %7958 = vmatprep.mubr.f32.mxu0 0.0
  %7959 = vmatmul.mubr.f32.gmra.mrb[0].mxu0 %v6215
  %v7960 = vpop.f32.mrb[0].mxu0
  %v7961 = vadd.f32 %v5996, %v7960
  %v7962 = vpop.f32.mrb[0].mxu0
  %7963 = vmatprep.mubr.f32.mxu0 0.0
  %7964 = vmatmul.mubr.f32.gmra.mrb[0].mxu0 %v6218
  %v7965 = vpop.f32.mrb[0].mxu0
  %v7966 = vadd.f32 %v5996, %v7965
  %v7967 = vpop.f32.mrb[0].mxu0
  %7968 = vmatprep.mubr.f32.mxu0 0.0
  %7969 = vmatmul.mubr.f32.gmra.mrb[0].mxu0 %v6221
  %v7970 = vpop.f32.mrb[0].mxu0
  %v7971 = vadd.f32 %v5996, %v7970
  %v7972 = vpop.f32.mrb[0].mxu0
  %7973 = vmatprep.mubr.f32.mxu0 0.0
  %7974 = vmatmul.mubr.f32.gmra.mrb[0].mxu0 %v6224
  %v7975 = vpop.f32.mrb[0].mxu0
  %v7976 = vadd.f32 %v5996, %v7975
  %v7977 = vpop.f32.mrb[0].mxu0
  %7978 = vmatprep.mubr.f32.mxu0 0.0
  %7979 = vmatmul.mubr.f32.gmra.mrb[0].mxu0 %v6227
  %v7980 = vpop.f32.mrb[0].mxu0
  %v7981 = vadd.f32 %v5996, %v7980
  %v7982 = vpop.f32.mrb[0].mxu0
  %7983 = vmatprep.mubr.f32.mxu0 0.0
  %7984 = vmatmul.mubr.f32.gmra.mrb[0].mxu0 %v6230
  %v7985 = vpop.f32.mrb[0].mxu0
  %v7986 = vadd.f32 %v5996, %v7985
  %v7987 = vpop.f32.mrb[0].mxu0
  %7988 = vmatprep.mubr.f32.mxu0 0.0
  %7989 = vmatmul.mubr.f32.gmra.mrb[0].mxu0 %v6233
  %v7990 = vpop.f32.mrb[0].mxu0
  %v7991 = vadd.f32 %v5996, %v7990
  %v7992 = vpop.f32.mrb[0].mxu0
  %7993 = vmatprep.mubr.f32.mxu0 0.0
  %7994 = vmatmul.mubr.f32.gmra.mrb[0].mxu0 %v6236
  %v7995 = vpop.f32.mrb[0].mxu0
  %v7996 = vadd.f32 %v5996, %v7995
  %v7997 = vpop.f32.mrb[0].mxu0
  %7998 = vmatprep.mubr.f32.mxu0 0.0
  %7999 = vmatmul.mubr.f32.gmra.mrb[0].mxu0 %v6239
  %v8000 = vpop.f32.mrb[0].mxu0
  %v8001 = vadd.f32 %v5996, %v8000
  %v8002 = vpop.f32.mrb[0].mxu0
  %8003 = vmatprep.mubr.f32.mxu0 0.0
  %8004 = vmatmul.mubr.f32.gmra.mrb[0].mxu0 %v6242
  %v8005 = vpop.f32.mrb[0].mxu0
  %v8006 = vadd.f32 %v5996, %v8005
  %v8007 = vpop.f32.mrb[0].mxu0
  %8008 = vmatprep.mubr.f32.mxu0 0.0
  %8009 = vmatmul.mubr.f32.gmra.mrb[0].mxu0 %v6245
  %v8010 = vpop.f32.mrb[0].mxu0
  %v8011 = vadd.f32 %v5996, %v8010
  %v8012 = vpop.f32.mrb[0].mxu0
  %8013 = vmatprep.mubr.f32.mxu0 0.0
  %8014 = vmatmul.mubr.f32.gmra.mrb[0].mxu0 %v6248
  %v8015 = vpop.f32.mrb[0].mxu0
  %v8016 = vadd.f32 %v5996, %v8015
  %v8017 = vpop.f32.mrb[0].mxu0
  %8018 = vmatprep.mubr.f32.mxu0 0.0
  %8019 = vmatmul.mubr.f32.gmra.mrb[0].mxu0 %v6251
  %v8020 = vpop.f32.mrb[0].mxu0
  %v8021 = vadd.f32 %v5996, %v8020
  %v8022 = vpop.f32.mrb[0].mxu0
  %8023 = vmatprep.mubr.f32.mxu0 0.0
  %8024 = vmatmul.mubr.f32.gmra.mrb[0].mxu0 %v6254
  %v8025 = vpop.f32.mrb[0].mxu0
  %v8026 = vadd.f32 %v5996, %v8025
  %v8027 = vpop.f32.mrb[0].mxu0
  %8028 = vmatprep.mubr.f32.mxu0 0.0
  %8029 = vmatmul.mubr.f32.gmra.mrb[0].mxu0 %v6257
  %v8030 = vpop.f32.mrb[0].mxu0
  %v8031 = vadd.f32 %v5996, %v8030
  %v8032 = vpop.f32.mrb[0].mxu0
  %8033 = vmatprep.mubr.f32.mxu0 0.0
  %8034 = vmatmul.mubr.f32.gmra.mrb[0].mxu0 %v6260
  %v8035 = vpop.f32.mrb[0].mxu0
  %v8036 = vadd.f32 %v5996, %v8035
  %v8037 = vpop.f32.mrb[0].mxu0
  %8038 = vmatprep.mubr.f32.mxu0 0.0
  %8039 = vmatmul.mubr.f32.gmra.mrb[0].mxu0 %v6263
  %v8040 = vpop.f32.mrb[0].mxu0
  %v8041 = vadd.f32 %v5996, %v8040
  %v8042 = vpop.f32.mrb[0].mxu0
  %8043 = vmatprep.mubr.f32.mxu0 0.0
  %8044 = vmatmul.mubr.f32.gmra.mrb[0].mxu0 %v6266
  %v8045 = vpop.f32.mrb[0].mxu0
  %v8046 = vadd.f32 %v5996, %v8045
  %v8047 = vpop.f32.mrb[0].mxu0
  %8048 = vmatprep.mubr.f32.mxu0 0.0
  %8049 = vmatmul.mubr.f32.gmra.mrb[0].mxu0 %v6269
  %v8050 = vpop.f32.mrb[0].mxu0
  %v8051 = vadd.f32 %v5996, %v8050
  %v8052 = vpop.f32.mrb[0].mxu0
  %8053 = vmatprep.mubr.f32.mxu0 0.0
  %8054 = vmatmul.mubr.f32.gmra.mrb[0].mxu0 %v6272
  %v8055 = vpop.f32.mrb[0].mxu0
  %v8056 = vadd.f32 %v5996, %v8055
  %v8057 = vpop.f32.mrb[0].mxu0
  %8058 = vmatprep.mubr.f32.mxu0 0.0
  %8059 = vmatmul.mubr.f32.gmra.mrb[0].mxu0 %v6275
  %v8060 = vpop.f32.mrb[0].mxu0
  %v8061 = vadd.f32 %v5996, %v8060
  %v8062 = vpop.f32.mrb[0].mxu0
  %8063 = vmatprep.mubr.f32.mxu0 0.0
  %8064 = vmatmul.mubr.f32.gmra.mrb[0].mxu0 %v6278
  %v8065 = vpop.f32.mrb[0].mxu0
  %v8066 = vadd.f32 %v5996, %v8065
  %v8067 = vpop.f32.mrb[0].mxu0
  %8068 = vmatprep.mubr.f32.mxu0 0.0
  %8069 = vmatmul.mubr.f32.gmra.mrb[0].mxu0 %v6281
  %v8070 = vpop.f32.mrb[0].mxu0
  %v8071 = vadd.f32 %v5996, %v8070
  %v8072 = vpop.f32.mrb[0].mxu0
  %8073 = vmatprep.mubr.f32.mxu0 0.0
  %8074 = vmatmul.mubr.f32.gmra.mrb[0].mxu0 %v6284
  %v8075 = vpop.f32.mrb[0].mxu0
  %v8076 = vadd.f32 %v5996, %v8075
  %v8077 = vpop.f32.mrb[0].mxu0
  %8078 = vmatprep.mubr.f32.mxu0 0.0
  %8079 = vmatmul.mubr.f32.gmra.mrb[0].mxu0 %v6287
  %v8080 = vpop.f32.mrb[0].mxu0
  %v8081 = vadd.f32 %v5996, %v8080
  %v8082 = vpop.f32.mrb[0].mxu0
  %8083 = vmatprep.mubr.f32.mxu0 0.0
  %8084 = vmatmul.mubr.f32.gmra.mrb[0].mxu0 %v6290
  %v8085 = vpop.f32.mrb[0].mxu0
  %v8086 = vadd.f32 %v5996, %v8085
  %v8087 = vpop.f32.mrb[0].mxu0
  %8088 = vmatprep.mubr.f32.mxu0 0.0
  %8089 = vmatmul.mubr.f32.gmra.mrb[0].mxu0 %v6293
  %v8090 = vpop.f32.mrb[0].mxu0
  %v8091 = vadd.f32 %v5996, %v8090
  %v8092 = vpop.f32.mrb[0].mxu0
  %8093 = vmatprep.mubr.f32.mxu0 0.0
  %8094 = vmatmul.mubr.f32.gmra.mrb[0].mxu0 %v6296
  %v8095 = vpop.f32.mrb[0].mxu0
  %v8096 = vadd.f32 %v5996, %v8095
  %v8097 = vpop.f32.mrb[0].mxu0
  %8098 = vmatprep.mubr.f32.mxu0 0.0
  %8099 = vmatmul.mubr.f32.gmra.mrb[0].mxu0 %v6299
  %v8100 = vpop.f32.mrb[0].mxu0
  %v8101 = vadd.f32 %v5996, %v8100
  %v8102 = vpop.f32.mrb[0].mxu0
  %8103 = vmatprep.mubr.f32.mxu0 0.0
  %8104 = vmatmul.mubr.f32.gmra.mrb[0].mxu0 %v6302
  %v8105 = vpop.f32.mrb[0].mxu0
  %v8106 = vadd.f32 %v5996, %v8105
  %v8107 = vpop.f32.mrb[0].mxu0
  %8108 = vmatprep.mubr.f32.mxu0 0.0
  %8109 = vmatmul.mubr.f32.gmra.mrb[0].mxu0 %v6305
  %v8110 = vpop.f32.mrb[0].mxu0
  %v8111 = vadd.f32 %v5996, %v8110
  %v8112 = vpop.f32.mrb[0].mxu0
  %8113 = vmatprep.mubr.f32.mxu0 0.0
  %8114 = vmatmul.mubr.f32.gmra.mrb[0].mxu0 %v6308
  %v8115 = vpop.f32.mrb[0].mxu0
  %v8116 = vadd.f32 %v5996, %v8115
  %v8117 = vpop.f32.mrb[0].mxu0
  %8118 = vmatprep.mubr.f32.mxu0 0.0
  %8119 = vmatmul.mubr.f32.gmra.mrb[0].mxu0 %v6311
  %v8120 = vpop.f32.mrb[0].mxu0
  %v8121 = vadd.f32 %v5996, %v8120
  %v8122 = vpop.f32.mrb[0].mxu0
  %8123 = vmatprep.mubr.f32.mxu0 0.0
  %8124 = vmatmul.mubr.f32.gmra.mrb[0].mxu0 %v6314
  %v8125 = vpop.f32.mrb[0].mxu0
  %v8126 = vadd.f32 %v5996, %v8125
  %v8127 = vpop.f32.mrb[0].mxu0
  %8128 = vmatprep.mubr.f32.mxu0 0.0
  %8129 = vmatmul.mubr.f32.gmra.mrb[0].mxu0 %v6317
  %v8130 = vpop.f32.mrb[0].mxu0
  %v8131 = vadd.f32 %v5996, %v8130
  %v8132 = vpop.f32.mrb[0].mxu0
  %8133 = vmatprep.mubr.f32.mxu0 0.0
  %8134 = vmatmul.mubr.f32.gmra.mrb[0].mxu0 %v6320
  %v8135 = vpop.f32.mrb[0].mxu0
  %v8136 = vadd.f32 %v5996, %v8135
  %v8137 = vpop.f32.mrb[0].mxu0
  %8138 = vmatprep.mubr.f32.mxu0 0.0
  %8139 = vmatmul.mubr.f32.gmra.mrb[0].mxu0 %v6323
  %v8140 = vpop.f32.mrb[0].mxu0
  %v8141 = vadd.f32 %v5996, %v8140
  %v8142 = vpop.f32.mrb[0].mxu0
  %8143 = vmatprep.mubr.f32.mxu0 0.0
  %8144 = vmatmul.mubr.f32.gmra.mrb[0].mxu0 %v6326
  %v8145 = vpop.f32.mrb[0].mxu0
  %v8146 = vadd.f32 %v5996, %v8145
  %v8147 = vpop.f32.mrb[0].mxu0
  %8148 = vmatprep.mubr.f32.mxu0 0.0
  %8149 = vmatmul.mubr.f32.gmra.mrb[0].mxu0 %v6329
  %v8150 = vpop.f32.mrb[0].mxu0
  %v8151 = vadd.f32 %v5996, %v8150
  %v8152 = vpop.f32.mrb[0].mxu0
  %8153 = vmatprep.mubr.f32.mxu0 0.0
  %8154 = vmatmul.mubr.f32.gmra.mrb[0].mxu0 %v6332
  %v8155 = vpop.f32.mrb[0].mxu0
  %v8156 = vadd.f32 %v5996, %v8155
  %v8157 = vpop.f32.mrb[0].mxu0
  %8158 = vmatprep.mubr.f32.mxu0 0.0
  %8159 = vmatmul.mubr.f32.gmra.mrb[0].mxu0 %v6335
  %v8160 = vpop.f32.mrb[0].mxu0
  %v8161 = vadd.f32 %v5996, %v8160
  %v8162 = vpop.f32.mrb[0].mxu0
  %8163 = vmatprep.mubr.f32.mxu0 0.0
  %8164 = vmatmul.mubr.f32.gmra.mrb[0].mxu0 %v6338
  %v8165 = vpop.f32.mrb[0].mxu0
  %v8166 = vadd.f32 %v5996, %v8165
  %v8167 = vpop.f32.mrb[0].mxu0
  %8168 = vmatprep.mubr.f32.mxu0 0.0
  %8169 = vmatmul.mubr.f32.gmra.mrb[0].mxu0 %v6341
  %v8170 = vpop.f32.mrb[0].mxu0
  %v8171 = vadd.f32 %v5996, %v8170
  %v8172 = vpop.f32.mrb[0].mxu0
  %8173 = vmatprep.mubr.f32.mxu0 0.0
  %8174 = vmatmul.mubr.f32.gmra.mrb[0].mxu0 %v6344
  %v8175 = vpop.f32.mrb[0].mxu0
  %v8176 = vadd.f32 %v5996, %v8175
  %v8177 = vpop.f32.mrb[0].mxu0
  %8178 = vmatprep.mubr.f32.mxu0 0.0
  %8179 = vmatmul.mubr.f32.gmra.mrb[0].mxu0 %v6347
  %v8180 = vpop.f32.mrb[0].mxu0
  %v8181 = vadd.f32 %v5996, %v8180
  %v8182 = vpop.f32.mrb[0].mxu0
  %8183 = vmatprep.mubr.f32.mxu0 0.0
  %8184 = vmatmul.mubr.f32.gmra.mrb[0].mxu0 %v6350
  %v8185 = vpop.f32.mrb[0].mxu0
  %v8186 = vadd.f32 %v5996, %v8185
  %v8187 = vpop.f32.mrb[0].mxu0
  %8188 = vmatprep.mubr.f32.mxu0 0.0
  %8189 = vmatmul.mubr.f32.gmra.mrb[0].mxu0 %v6353
  %v8190 = vpop.f32.mrb[0].mxu0
  %v8191 = vadd.f32 %v5996, %v8190
  %v8192 = vpop.f32.mrb[0].mxu0
  %8193 = vmatprep.mubr.f32.mxu0 0.0
  %8194 = vmatmul.mubr.f32.gmra.mrb[0].mxu0 %v6356
  %v8195 = vpop.f32.mrb[0].mxu0
  %v8196 = vadd.f32 %v5996, %v8195
  %v8197 = vpop.f32.mrb[0].mxu0
  %8198 = vmatprep.mubr.f32.mxu0 0.0
  %8199 = vmatmul.mubr.f32.gmra.mrb[0].mxu0 %v6359
  %v8200 = vpop.f32.mrb[0].mxu0
  %v8201 = vadd.f32 %v5996, %v8200
  %v8202 = vpop.f32.mrb[0].mxu0
  %8203 = vmatprep.mubr.f32.mxu0 0.0
  %8204 = vmatmul.mubr.f32.gmra.mrb[0].mxu0 %v6362
  %v8205 = vpop.f32.mrb[0].mxu0
  %v8206 = vadd.f32 %v5996, %v8205
  %v8207 = vpop.f32.mrb[0].mxu0
  %8208 = vmatprep.mubr.f32.mxu0 0.0
  %8209 = vmatmul.mubr.f32.gmra.mrb[0].mxu0 %v6365
  %v8210 = vpop.f32.mrb[0].mxu0
  %v8211 = vadd.f32 %v5996, %v8210
  %v8212 = vpop.f32.mrb[0].mxu0
  %8213 = vmatprep.mubr.f32.mxu0 0.0
  %8214 = vmatmul.mubr.f32.gmra.mrb[0].mxu0 %v6368
  %v8215 = vpop.f32.mrb[0].mxu0
  %v8216 = vadd.f32 %v5996, %v8215
  %v8217 = vpop.f32.mrb[0].mxu0
  %8218 = vmatprep.mubr.f32.mxu0 0.0
  %8219 = vmatmul.mubr.f32.gmra.mrb[0].mxu0 %v6371
  %v8220 = vpop.f32.mrb[0].mxu0
  %v8221 = vadd.f32 %v5996, %v8220
  %v8222 = vpop.f32.mrb[0].mxu0
  %8223 = vmatprep.mubr.f32.mxu0 0.0
  %8224 = vmatmul.mubr.f32.gmra.mrb[0].mxu0 %v6374
  %v8225 = vpop.f32.mrb[0].mxu0
  %v8226 = vadd.f32 %v5996, %v8225
  %v8227 = vpop.f32.mrb[0].mxu0
  %8228 = vmatprep.mubr.f32.mxu0 0.0
  %8229 = vmatmul.mubr.f32.gmra.mrb[0].mxu0 %v6377
  %v8230 = vpop.f32.mrb[0].mxu0
  %v8231 = vadd.f32 %v5996, %v8230
  %v8232 = vpop.f32.mrb[0].mxu0
  %8233 = vmatprep.mubr.f32.mxu0 0.0
  %8234 = vmatmul.mubr.f32.gmra.mrb[0].mxu0 %v6380
  %v8235 = vpop.f32.mrb[0].mxu0
  %v8236 = vadd.f32 %v5996, %v8235
  %v8237 = vpop.f32.mrb[0].mxu0
  %8238 = vmatprep.mubr.f32.mxu0 0.0
  %8239 = vmatmul.mubr.f32.gmra.mrb[0].mxu0 %v6383
  %v8240 = vpop.f32.mrb[0].mxu0
  %v8241 = vadd.f32 %v5996, %v8240
  %v8242 = vpop.f32.mrb[0].mxu0
  %8243 = vmatprep.mubr.f32.mxu0 0.0
  %8244 = vmatmul.mubr.f32.gmra.mrb[0].mxu0 %v6386
  %v8245 = vpop.f32.mrb[0].mxu0
  %v8246 = vadd.f32 %v5996, %v8245
  %v8247 = vpop.f32.mrb[0].mxu0
  %8248 = vmatprep.mubr.f32.mxu0 0.0
  %8249 = vmatmul.mubr.f32.gmra.mrb[0].mxu0 %v6389
  %v8250 = vpop.f32.mrb[0].mxu0
  %v8251 = vadd.f32 %v5996, %v8250
  %v8252 = vpop.f32.mrb[0].mxu0
  %8253 = vmatprep.mubr.f32.mxu0 0.0
  %8254 = vmatmul.mubr.f32.gmra.mrb[0].mxu0 %v6392
  %v8255 = vpop.f32.mrb[0].mxu0
  %v8256 = vadd.f32 %v5996, %v8255
  %v8257 = vpop.f32.mrb[0].mxu0
  %8258 = vmatprep.mubr.f32.mxu0 0.0
  %8259 = vmatmul.mubr.f32.gmra.mrb[0].mxu0 %v6395
  %v8260 = vpop.f32.mrb[0].mxu0
  %v8261 = vadd.f32 %v5996, %v8260
  %v8262 = vpop.f32.mrb[0].mxu0
  %8263 = vmatprep.mubr.f32.mxu0 0.0
  %8264 = vmatmul.mubr.f32.gmra.mrb[0].mxu0 %v6398
  %v8265 = vpop.f32.mrb[0].mxu0
  %v8266 = vadd.f32 %v5996, %v8265
  %v8267 = vpop.f32.mrb[0].mxu0
  %8268 = vmatprep.mubr.f32.mxu0 0.0
  %8269 = vmatmul.mubr.f32.gmra.mrb[0].mxu0 %v6401
  %v8270 = vpop.f32.mrb[0].mxu0
  %v8271 = vadd.f32 %v5996, %v8270
  %v8272 = vpop.f32.mrb[0].mxu0
  %8273 = vmatprep.mubr.f32.mxu0 0.0
  %8274 = vmatmul.mubr.f32.gmra.mrb[0].mxu0 %v6404
  %v8275 = vpop.f32.mrb[0].mxu0
  %v8276 = vadd.f32 %v5996, %v8275
  %v8277 = vpop.f32.mrb[0].mxu0
  %8278 = vmatprep.mubr.f32.mxu0 0.0
  %8279 = vmatmul.mubr.f32.gmra.mrb[0].mxu0 %v6407
  %v8280 = vpop.f32.mrb[0].mxu0
  %v8281 = vadd.f32 %v5996, %v8280
  %v8282 = vpop.f32.mrb[0].mxu0
  %8283 = vmatprep.mubr.f32.mxu0 0.0
  %8284 = vmatmul.mubr.f32.gmra.mrb[0].mxu0 %v6410
  %v8285 = vpop.f32.mrb[0].mxu0
  %v8286 = vadd.f32 %v5996, %v8285
  %v8287 = vpop.f32.mrb[0].mxu0
  %8288 = vmatprep.mubr.f32.mxu0 0.0
  %8289 = vmatmul.mubr.f32.gmra.mrb[0].mxu0 %v6413
  %v8290 = vpop.f32.mrb[0].mxu0
  %v8291 = vadd.f32 %v5996, %v8290
  %v8292 = vpop.f32.mrb[0].mxu0
  %8293 = vmatprep.mubr.f32.mxu0 0.0
  %8294 = vmatmul.mubr.f32.gmra.mrb[0].mxu0 %v6416
  %v8295 = vpop.f32.mrb[0].mxu0
  %v8296 = vadd.f32 %v5996, %v8295
  %v8297 = vpop.f32.mrb[0].mxu0
  %8298 = vmatprep.mubr.f32.mxu0 0.0
  %8299 = vmatmul.mubr.f32.gmra.mrb[0].mxu0 %v6419
  %v8300 = vpop.f32.mrb[0].mxu0
  %v8301 = vadd.f32 %v5996, %v8300
  %v8302 = vpop.f32.mrb[0].mxu0
  %8303 = vmatprep.mubr.f32.mxu0 0.0
  %8304 = vmatmul.mubr.f32.gmra.mrb[0].mxu0 %v6422
  %v8305 = vpop.f32.mrb[0].mxu0
  %v8306 = vadd.f32 %v5996, %v8305
  %v8307 = vpop.f32.mrb[0].mxu0
  %8308 = vmatprep.mubr.f32.mxu0 0.0
  %8309 = vmatmul.mubr.f32.gmra.mrb[0].mxu0 %v6425
  %v8310 = vpop.f32.mrb[0].mxu0
  %v8311 = vadd.f32 %v5996, %v8310
  %v8312 = vpop.f32.mrb[0].mxu0
  %8313 = vmatprep.mubr.f32.mxu0 0.0
  %8314 = vmatmul.mubr.f32.gmra.mrb[0].mxu0 %v6428
  %v8315 = vpop.f32.mrb[0].mxu0
  %v8316 = vadd.f32 %v5996, %v8315
  %v8317 = vpop.f32.mrb[0].mxu0
  %8318 = vmatprep.mubr.f32.mxu0 0.0
  %8319 = vmatmul.mubr.f32.gmra.mrb[0].mxu0 %v6431
  %v8320 = vpop.f32.mrb[0].mxu0
  %v8321 = vadd.f32 %v5996, %v8320
  %v8322 = vpop.f32.mrb[0].mxu0
  %8323 = vmatprep.mubr.f32.mxu0 0.0
  %8324 = vmatmul.mubr.f32.gmra.mrb[0].mxu0 %v6434
  %v8325 = vpop.f32.mrb[0].mxu0
  %v8326 = vadd.f32 %v5996, %v8325
  %v8327 = vpop.f32.mrb[0].mxu0
  %8328 = vmatprep.mubr.f32.mxu0 0.0
  %8329 = vmatmul.mubr.f32.gmra.mrb[0].mxu0 %v6437
  %v8330 = vpop.f32.mrb[0].mxu0
  %v8331 = vadd.f32 %v5996, %v8330
  %v8332 = vpop.f32.mrb[0].mxu0
  %8333 = vmatprep.mubr.f32.mxu0 0.0
  %8334 = vmatmul.mubr.f32.gmra.mrb[0].mxu0 %v6440
  %v8335 = vpop.f32.mrb[0].mxu0
  %v8336 = vadd.f32 %v5996, %v8335
  %v8337 = vpop.f32.mrb[0].mxu0
  %8338 = vmatprep.mubr.f32.mxu0 0.0
  %8339 = vmatmul.mubr.f32.gmra.mrb[0].mxu0 %v6443
  %v8340 = vpop.f32.mrb[0].mxu0
  %v8341 = vadd.f32 %v5996, %v8340
  %v8342 = vpop.f32.mrb[0].mxu0
  %8343 = vmatprep.mubr.f32.mxu0 0.0
  %8344 = vmatmul.mubr.f32.gmra.mrb[0].mxu0 %v6446
  %v8345 = vpop.f32.mrb[0].mxu0
  %v8346 = vadd.f32 %v5996, %v8345
  %v8347 = vpop.f32.mrb[0].mxu0
  %8348 = vmatprep.mubr.f32.mxu0 0.0
  %8349 = vmatmul.mubr.f32.gmra.mrb[0].mxu0 %v6449
  %v8350 = vpop.f32.mrb[0].mxu0
  %v8351 = vadd.f32 %v5996, %v8350
  %v8352 = vpop.f32.mrb[0].mxu0
  %8353 = vmatprep.mubr.f32.mxu0 0.0
  %8354 = vmatmul.mubr.f32.gmra.mrb[0].mxu0 %v6452
  %v8355 = vpop.f32.mrb[0].mxu0
  %v8356 = vadd.f32 %v5996, %v8355
  %v8357 = vpop.f32.mrb[0].mxu0
  %8358 = vmatprep.mubr.f32.mxu0 0.0
  %8359 = vmatmul.mubr.f32.gmra.mrb[0].mxu0 %v6455
  %v8360 = vpop.f32.mrb[0].mxu0
  %v8361 = vadd.f32 %v5996, %v8360
  %v8362 = vpop.f32.mrb[0].mxu0
  %8363 = vmatprep.mubr.f32.mxu0 0.0
  %8364 = vmatmul.mubr.f32.gmra.mrb[0].mxu0 %v6458
  %v8365 = vpop.f32.mrb[0].mxu0
  %v8366 = vadd.f32 %v5996, %v8365
  %v8367 = vpop.f32.mrb[0].mxu0
  %8368 = vmatprep.mubr.f32.mxu0 0.0
  %8369 = vmatmul.mubr.f32.gmra.mrb[0].mxu0 %v6461
  %v8370 = vpop.f32.mrb[0].mxu0
  %v8371 = vadd.f32 %v5996, %v8370
  %v8372 = vpop.f32.mrb[0].mxu0
  %8373 = vmatprep.mubr.f32.mxu0 0.0
  %8374 = vmatmul.mubr.f32.gmra.mrb[0].mxu0 %v6464
  %v8375 = vpop.f32.mrb[0].mxu0
  %v8376 = vadd.f32 %v5996, %v8375
  %v8377 = vpop.f32.mrb[0].mxu0
  %8378 = vmatprep.mubr.f32.mxu0 0.0
  %8379 = vmatmul.mubr.f32.gmra.mrb[0].mxu0 %v6467
  %v8380 = vpop.f32.mrb[0].mxu0
  %v8381 = vadd.f32 %v5996, %v8380
  %v8382 = vpop.f32.mrb[0].mxu0
  %8383 = vmatprep.mubr.f32.mxu0 0.0
  %8384 = vmatmul.mubr.f32.gmra.mrb[0].mxu0 %v6470
  %v8385 = vpop.f32.mrb[0].mxu0
  %v8386 = vadd.f32 %v5996, %v8385
  %v8387 = vpop.f32.mrb[0].mxu0
  %8388 = vmatprep.mubr.f32.mxu0 0.0
  %8389 = vmatmul.mubr.f32.gmra.mrb[0].mxu0 %v6473
  %v8390 = vpop.f32.mrb[0].mxu0
  %v8391 = vadd.f32 %v5996, %v8390
  %v8392 = vpop.f32.mrb[0].mxu0
  %8393 = vmatprep.mubr.f32.mxu0 0.0
  %8394 = vmatmul.mubr.f32.gmra.mrb[0].mxu0 %v6476
  %v8395 = vpop.f32.mrb[0].mxu0
  %v8396 = vadd.f32 %v5996, %v8395
  %v8397 = vpop.f32.mrb[0].mxu0
  %8398 = vmatprep.mubr.f32.mxu0 0.0
  %8399 = vmatmul.mubr.f32.gmra.mrb[0].mxu0 %v6479
  %v8400 = vpop.f32.mrb[0].mxu0
  %v8401 = vadd.f32 %v5996, %v8400
  %v8402 = vpop.f32.mrb[0].mxu0
  %8403 = vmatprep.mubr.f32.mxu0 0.0
  %8404 = vmatmul.mubr.f32.gmra.mrb[0].mxu0 %v6482
  %v8405 = vpop.f32.mrb[0].mxu0
  %v8406 = vadd.f32 %v5996, %v8405
  %v8407 = vpop.f32.mrb[0].mxu0
  %8408 = vmatprep.mubr.f32.mxu0 0.0
  %8409 = vmatmul.mubr.f32.gmra.mrb[0].mxu0 %v6485
  %v8410 = vpop.f32.mrb[0].mxu0
  %v8411 = vadd.f32 %v5996, %v8410
  %v8412 = vpop.f32.mrb[0].mxu0
  %8413 = vmatprep.mubr.f32.mxu0 0.0
  %8414 = vmatmul.mubr.f32.gmra.mrb[0].mxu0 %v6488
  %v8415 = vpop.f32.mrb[0].mxu0
  %v8416 = vadd.f32 %v5996, %v8415
  %v8417 = vpop.f32.mrb[0].mxu0
  %8418 = vmatprep.mubr.f32.mxu0 0.0
  %8419 = vmatmul.mubr.f32.gmra.mrb[0].mxu0 %v6491
  %v8420 = vpop.f32.mrb[0].mxu0
  %v8421 = vadd.f32 %v5996, %v8420
  %v8422 = vpop.f32.mrb[0].mxu0
  %8423 = vmatprep.mubr.f32.mxu0 0.0
  %8424 = vmatmul.mubr.f32.gmra.mrb[0].mxu0 %v6494
  %v8425 = vpop.f32.mrb[0].mxu0
  %v8426 = vadd.f32 %v5996, %v8425
  %v8427 = vpop.f32.mrb[0].mxu0
  %8428 = vmatprep.mubr.f32.mxu0 0.0
  %8429 = vmatmul.mubr.f32.gmra.mrb[0].mxu0 %v6497
  %v8430 = vpop.f32.mrb[0].mxu0
  %v8431 = vadd.f32 %v5996, %v8430
  %v8432 = vpop.f32.mrb[0].mxu0
  %8433 = vmatprep.mubr.f32.mxu0 0.0
  %8434 = vmatmul.mubr.f32.gmra.mrb[0].mxu0 %v6500
  %v8435 = vpop.f32.mrb[0].mxu0
  %v8436 = vadd.f32 %v5996, %v8435
  %v8437 = vpop.f32.mrb[0].mxu0
  %8438 = vmatprep.mubr.f32.mxu0 0.0
  %8439 = vmatmul.mubr.f32.gmra.mrb[0].mxu0 %v6503
  %v8440 = vpop.f32.mrb[0].mxu0
  %v8441 = vadd.f32 %v5996, %v8440
  %v8442 = vpop.f32.mrb[0].mxu0
  %8443 = vmatprep.mubr.f32.mxu0 0.0
  %8444 = vmatmul.mubr.f32.gmra.mrb[0].mxu0 %v6506
  %v8445 = vpop.f32.mrb[0].mxu0
  %v8446 = vadd.f32 %v5996, %v8445
  %v8447 = vpop.f32.mrb[0].mxu0
  %8448 = vmatprep.mubr.f32.mxu0 0.0
  %8449 = vmatmul.mubr.f32.gmra.mrb[0].mxu0 %v6509
  %v8450 = vpop.f32.mrb[0].mxu0
  %v8451 = vadd.f32 %v5996, %v8450
  %v8452 = vpop.f32.mrb[0].mxu0
  %8453 = vmatprep.mubr.f32.mxu0 0.0
  %8454 = vmatmul.mubr.f32.gmra.mrb[0].mxu0 %v6512
  %v8455 = vpop.f32.mrb[0].mxu0
  %v8456 = vadd.f32 %v5996, %v8455
  %v8457 = vpop.f32.mrb[0].mxu0
  %8458 = vmatprep.mubr.f32.mxu0 0.0
  %8459 = vmatmul.mubr.f32.gmra.mrb[0].mxu0 %v6515
  %v8460 = vpop.f32.mrb[0].mxu0
  %v8461 = vadd.f32 %v5996, %v8460
  %v8462 = vpop.f32.mrb[0].mxu0
  %8463 = vmatprep.mubr.f32.mxu0 0.0
  %8464 = vmatmul.mubr.f32.gmra.mrb[0].mxu0 %v6518
  %v8465 = vpop.f32.mrb[0].mxu0
  %v8466 = vadd.f32 %v5996, %v8465
  %v8467 = vpop.f32.mrb[0].mxu0
  %8468 = vmatprep.mubr.f32.mxu0 0.0
  %8469 = vmatmul.mubr.f32.gmra.mrb[0].mxu0 %v6521
  %v8470 = vpop.f32.mrb[0].mxu0
  %v8471 = vadd.f32 %v5996, %v8470
  %v8472 = vpop.f32.mrb[0].mxu0
  %8473 = vmatprep.mubr.f32.mxu0 0.0
  %8474 = vmatmul.mubr.f32.gmra.mrb[0].mxu0 %v6524
  %v8475 = vpop.f32.mrb[0].mxu0
  %v8476 = vadd.f32 %v5996, %v8475
  %v8477 = vpop.f32.mrb[0].mxu0
  %8478 = vmatprep.mubr.f32.mxu0 0.0
  %8479 = vmatmul.mubr.f32.gmra.mrb[0].mxu0 %v6527
  %v8480 = vpop.f32.mrb[0].mxu0
  %v8481 = vadd.f32 %v5996, %v8480
  %v8482 = vpop.f32.mrb[0].mxu0
  %8483 = vmatprep.mubr.f32.mxu0 0.0
  %8484 = vmatmul.mubr.f32.gmra.mrb[0].mxu0 %v6530
  %v8485 = vpop.f32.mrb[0].mxu0
  %v8486 = vadd.f32 %v5996, %v8485
  %v8487 = vpop.f32.mrb[0].mxu0
  %8488 = vmatprep.mubr.f32.mxu0 0.0
  %8489 = vmatmul.mubr.f32.gmra.mrb[0].mxu0 %v6533
  %v8490 = vpop.f32.mrb[0].mxu0
  %v8491 = vadd.f32 %v5996, %v8490
  %v8492 = vpop.f32.mrb[0].mxu0
  %8493 = vmatprep.mubr.f32.mxu0 0.0
  %8494 = vmatmul.mubr.f32.gmra.mrb[0].mxu0 %v6536
  %v8495 = vpop.f32.mrb[0].mxu0
  %v8496 = vadd.f32 %v5996, %v8495
  %v8497 = vpop.f32.mrb[0].mxu0
  %8498 = vmatprep.mubr.f32.mxu0 0.0
  %8499 = vmatmul.mubr.f32.gmra.mrb[0].mxu0 %v6539
  %v8500 = vpop.f32.mrb[0].mxu0
  %v8501 = vadd.f32 %v5996, %v8500
  %v8502 = vpop.f32.mrb[0].mxu0
  %8503 = vmatprep.mubr.f32.mxu0 0.0
  %8504 = vmatmul.mubr.f32.gmra.mrb[0].mxu0 %v6542
  %v8505 = vpop.f32.mrb[0].mxu0
  %v8506 = vadd.f32 %v5996, %v8505
  %v8507 = vpop.f32.mrb[0].mxu0
  %8508 = vmatprep.mubr.f32.mxu0 0.0
  %8509 = vmatmul.mubr.f32.gmra.mrb[0].mxu0 %v6545
  %v8510 = vpop.f32.mrb[0].mxu0
  %v8511 = vadd.f32 %v5996, %v8510
  %v8512 = vpop.f32.mrb[0].mxu0
  %8513 = vmatprep.mubr.f32.mxu0 0.0
  %8514 = vmatmul.mubr.f32.gmra.mrb[0].mxu0 %v6548
  %v8515 = vpop.f32.mrb[0].mxu0
  %v8516 = vadd.f32 %v5996, %v8515
  %v8517 = vpop.f32.mrb[0].mxu0
  %8518 = vmatprep.mubr.f32.mxu0 0.0
  %8519 = vmatmul.mubr.f32.gmra.mrb[0].mxu0 %v6551
  %v8520 = vpop.f32.mrb[0].mxu0
  %v8521 = vadd.f32 %v5996, %v8520
  %v8522 = vpop.f32.mrb[0].mxu0
  %8523 = vmatprep.mubr.f32.mxu0 0.0
  %8524 = vmatmul.mubr.f32.gmra.mrb[0].mxu0 %v6554
  %v8525 = vpop.f32.mrb[0].mxu0
  %v8526 = vadd.f32 %v5996, %v8525
  %v8527 = vpop.f32.mrb[0].mxu0
  %8528 = vmatprep.mubr.f32.mxu0 0.0
  %8529 = vmatmul.mubr.f32.gmra.mrb[0].mxu0 %v6557
  %v8530 = vpop.f32.mrb[0].mxu0
  %v8531 = vadd.f32 %v5996, %v8530
  %v8532 = vpop.f32.mrb[0].mxu0
  %8533 = vmatprep.mubr.f32.mxu0 0.0
  %8534 = vmatmul.mubr.f32.gmra.mrb[0].mxu0 %v6560
  %v8535 = vpop.f32.mrb[0].mxu0
  %v8536 = vadd.f32 %v5996, %v8535
  %v8537 = vpop.f32.mrb[0].mxu0
  %8538 = vmatprep.mubr.f32.mxu0 0.0
  %8539 = vmatmul.mubr.f32.gmra.mrb[0].mxu0 %v6563
  %v8540 = vpop.f32.mrb[0].mxu0
  %v8541 = vadd.f32 %v5996, %v8540
  %v8542 = vpop.f32.mrb[0].mxu0
  %8543 = vmatprep.mubr.f32.mxu0 0.0
  %8544 = vmatmul.mubr.f32.gmra.mrb[0].mxu0 %v6566
  %v8545 = vpop.f32.mrb[0].mxu0
  %v8546 = vadd.f32 %v5996, %v8545
  %v8547 = vpop.f32.mrb[0].mxu0
  %8548 = vmatprep.mubr.f32.mxu0 0.0
  %8549 = vmatmul.mubr.f32.gmra.mrb[0].mxu0 %v6569
  %v8550 = vpop.f32.mrb[0].mxu0
  %v8551 = vadd.f32 %v5996, %v8550
  %v8552 = vpop.f32.mrb[0].mxu0
  %8553 = vmatprep.mubr.f32.mxu0 0.0
  %8554 = vmatmul.mubr.f32.gmra.mrb[0].mxu0 %v6572
  %v8555 = vpop.f32.mrb[0].mxu0
  %v8556 = vadd.f32 %v5996, %v8555
  %v8557 = vpop.f32.mrb[0].mxu0
  %8558 = vmatprep.mubr.f32.mxu0 0.0
  %8559 = vmatmul.mubr.f32.gmra.mrb[0].mxu0 %v6575
  %v8560 = vpop.f32.mrb[0].mxu0
  %v8561 = vadd.f32 %v5996, %v8560
  %v8562 = vpop.f32.mrb[0].mxu0
  %8563 = vmatprep.mubr.f32.mxu0 0.0
  %8564 = vmatmul.mubr.f32.gmra.mrb[0].mxu0 %v6578
  %v8565 = vpop.f32.mrb[0].mxu0
  %v8566 = vadd.f32 %v5996, %v8565
  %v8567 = vpop.f32.mrb[0].mxu0
  %8568 = vmatprep.mubr.f32.mxu0 0.0
  %8569 = vmatmul.mubr.f32.gmra.mrb[0].mxu0 %v6581
  %v8570 = vpop.f32.mrb[0].mxu0
  %v8571 = vadd.f32 %v5996, %v8570
  %v8572 = vpop.f32.mrb[0].mxu0
  %8573 = vmatprep.mubr.f32.mxu0 0.0
  %8574 = vmatmul.mubr.f32.gmra.mrb[0].mxu0 %v6584
  %v8575 = vpop.f32.mrb[0].mxu0
  %v8576 = vadd.f32 %v5996, %v8575
  %v8577 = vpop.f32.mrb[0].mxu0
  %8578 = vmatprep.mubr.f32.mxu0 0.0
  %8579 = vmatmul.mubr.f32.gmra.mrb[0].mxu0 %v6587
  %v8580 = vpop.f32.mrb[0].mxu0
  %v8581 = vadd.f32 %v5996, %v8580
  %v8582 = vpop.f32.mrb[0].mxu0
  %8583 = vmatprep.mubr.f32.mxu0 0.0
  %8584 = vmatmul.mubr.f32.gmra.mrb[0].mxu0 %v6590
  %v8585 = vpop.f32.mrb[0].mxu0
  %v8586 = vadd.f32 %v5996, %v8585
  %v8587 = vpop.f32.mrb[0].mxu0
  %8588 = vmatprep.mubr.f32.mxu0 0.0
  %8589 = vmatmul.mubr.f32.gmra.mrb[0].mxu0 %v6593
  %v8590 = vpop.f32.mrb[0].mxu0
  %v8591 = vadd.f32 %v5996, %v8590
  %v8592 = vpop.f32.mrb[0].mxu0
  %8593 = vmatprep.mubr.f32.mxu0 0.0
  %8594 = vmatmul.mubr.f32.gmra.mrb[0].mxu0 %v6596
  %v8595 = vpop.f32.mrb[0].mxu0
  %v8596 = vadd.f32 %v5996, %v8595
  %v8597 = vpop.f32.mrb[0].mxu0
  %8598 = vmatprep.mubr.f32.mxu0 0.0
  %8599 = vmatmul.mubr.f32.gmra.mrb[0].mxu0 %v6599
  %v8600 = vpop.f32.mrb[0].mxu0
  %v8601 = vadd.f32 %v5996, %v8600
  %v8602 = vpop.f32.mrb[0].mxu0
  %8603 = vmatprep.mubr.f32.mxu0 0.0
  %8604 = vmatmul.mubr.f32.gmra.mrb[0].mxu0 %v6602
  %v8605 = vpop.f32.mrb[0].mxu0
  %v8606 = vadd.f32 %v5996, %v8605
  %v8607 = vpop.f32.mrb[0].mxu0
  %8608 = vmatprep.mubr.f32.mxu0 0.0
  %8609 = vmatmul.mubr.f32.gmra.mrb[0].mxu0 %v6605
  %v8610 = vpop.f32.mrb[0].mxu0
  %v8611 = vadd.f32 %v5996, %v8610
  %v8612 = vpop.f32.mrb[0].mxu0
  %8613 = vmatprep.mubr.f32.mxu0 0.0
  %8614 = vmatmul.mubr.f32.gmra.mrb[0].mxu0 %v6608
  %v8615 = vpop.f32.mrb[0].mxu0
  %v8616 = vadd.f32 %v5996, %v8615
  %v8617 = vpop.f32.mrb[0].mxu0
  %8618 = vmatprep.mubr.f32.mxu0 0.0
  %8619 = vmatmul.mubr.f32.gmra.mrb[0].mxu0 %v6611
  %v8620 = vpop.f32.mrb[0].mxu0
  %v8621 = vadd.f32 %v5996, %v8620
  %v8622 = vpop.f32.mrb[0].mxu0
  %8623 = vmatprep.mubr.f32.mxu0 0.0
  %8624 = vmatmul.mubr.f32.gmra.mrb[0].mxu0 %v6614
  %v8625 = vpop.f32.mrb[0].mxu0
  %v8626 = vadd.f32 %v5996, %v8625
  %v8627 = vpop.f32.mrb[0].mxu0
  %8628 = vmatprep.mubr.f32.mxu0 0.0
  %8629 = vmatmul.mubr.f32.gmra.mrb[0].mxu0 %v6617
  %v8630 = vpop.f32.mrb[0].mxu0
  %v8631 = vadd.f32 %v5996, %v8630
  %v8632 = vpop.f32.mrb[0].mxu0
  %8633 = vmatprep.mubr.f32.mxu0 0.0
  %8634 = vmatmul.mubr.f32.gmra.mrb[0].mxu0 %v6620
  %v8635 = vpop.f32.mrb[0].mxu0
  %v8636 = vadd.f32 %v5996, %v8635
  %v8637 = vpop.f32.mrb[0].mxu0
  %8638 = vmatprep.mubr.f32.mxu0 0.0
  %8639 = vmatmul.mubr.f32.gmra.mrb[0].mxu0 %v6623
  %v8640 = vpop.f32.mrb[0].mxu0
  %v8641 = vadd.f32 %v5996, %v8640
  %v8642 = vpop.f32.mrb[0].mxu0
  %8643 = vmatprep.mubr.f32.mxu0 0.0
  %8644 = vmatmul.mubr.f32.gmra.mrb[0].mxu0 %v6626
  %v8645 = vpop.f32.mrb[0].mxu0
  %v8646 = vadd.f32 %v5996, %v8645
  %v8647 = vpop.f32.mrb[0].mxu0
  %8648 = vmatprep.mubr.f32.mxu0 0.0
  %8649 = vmatmul.mubr.f32.gmra.mrb[0].mxu0 %v6629
  %v8650 = vpop.f32.mrb[0].mxu0
  %v8651 = vadd.f32 %v5996, %v8650
  %v8652 = vpop.f32.mrb[0].mxu0
  %8653 = vmatprep.mubr.f32.mxu0 0.0
  %8654 = vmatmul.mubr.f32.gmra.mrb[0].mxu0 %v6632
  %v8655 = vpop.f32.mrb[0].mxu0
  %v8656 = vadd.f32 %v5996, %v8655
  %v8657 = vpop.f32.mrb[0].mxu0
  %8658 = vmatprep.mubr.f32.mxu0 0.0
  %8659 = vmatmul.mubr.f32.gmra.mrb[0].mxu0 %v6635
  %v8660 = vpop.f32.mrb[0].mxu0
  %v8661 = vadd.f32 %v5996, %v8660
  %v8662 = vpop.f32.mrb[0].mxu0
  %8663 = vmatprep.mubr.f32.mxu0 0.0
  %8664 = vmatmul.mubr.f32.gmra.mrb[0].mxu0 %v6638
  %v8665 = vpop.f32.mrb[0].mxu0
  %v8666 = vadd.f32 %v5996, %v8665
  %v8667 = vpop.f32.mrb[0].mxu0
  %8668 = vmatprep.mubr.f32.mxu0 0.0
  %8669 = vmatmul.mubr.f32.gmra.mrb[0].mxu0 %v6641
  %v8670 = vpop.f32.mrb[0].mxu0
  %v8671 = vadd.f32 %v5996, %v8670
  %v8672 = vpop.f32.mrb[0].mxu0
  %8673 = vmatprep.mubr.f32.mxu0 0.0
  %8674 = vmatmul.mubr.f32.gmra.mrb[0].mxu0 %v6644
  %v8675 = vpop.f32.mrb[0].mxu0
  %v8676 = vadd.f32 %v5996, %v8675
  %v8677 = vpop.f32.mrb[0].mxu0
  %8678 = vmatprep.mubr.f32.mxu0 0.0
  %8679 = vmatmul.mubr.f32.gmra.mrb[0].mxu0 %v6647
  %v8680 = vpop.f32.mrb[0].mxu0
  %v8681 = vadd.f32 %v5996, %v8680
  %v8682 = vpop.f32.mrb[0].mxu0
  %8683 = vmatprep.mubr.f32.mxu0 0.0
  %8684 = vmatmul.mubr.f32.gmra.mrb[0].mxu0 %v6650
  %v8685 = vpop.f32.mrb[0].mxu0
  %v8686 = vadd.f32 %v5996, %v8685
  %v8687 = vpop.f32.mrb[0].mxu0
  %8688 = vmatprep.mubr.f32.mxu0 0.0
  %8689 = vmatmul.mubr.f32.gmra.mrb[0].mxu0 %v6653
  %v8690 = vpop.f32.mrb[0].mxu0
  %v8691 = vadd.f32 %v5996, %v8690
  %v8692 = vpop.f32.mrb[0].mxu0
  %8693 = vmatprep.mubr.f32.mxu0 0.0
  %8694 = vmatmul.mubr.f32.gmra.mrb[0].mxu0 %v6656
  %v8695 = vpop.f32.mrb[0].mxu0
  %v8696 = vadd.f32 %v5996, %v8695
  %v8697 = vpop.f32.mrb[0].mxu0
  %8698 = vmatprep.mubr.f32.mxu0 0.0
  %8699 = vmatmul.mubr.f32.gmra.mrb[0].mxu0 %v6659
  %v8700 = vpop.f32.mrb[0].mxu0
  %v8701 = vadd.f32 %v5996, %v8700
  %v8702 = vpop.f32.mrb[0].mxu0
  %8703 = vmatprep.mubr.f32.mxu0 0.0
  %8704 = vmatmul.mubr.f32.gmra.mrb[0].mxu0 %v6662
  %v8705 = vpop.f32.mrb[0].mxu0
  %v8706 = vadd.f32 %v5996, %v8705
  %v8707 = vpop.f32.mrb[0].mxu0
  %8708 = vmatprep.mubr.f32.mxu0 0.0
  %8709 = vmatmul.mubr.f32.gmra.mrb[0].mxu0 %v6665
  %v8710 = vpop.f32.mrb[0].mxu0
  %v8711 = vadd.f32 %v5996, %v8710
  %v8712 = vpop.f32.mrb[0].mxu0
  %8713 = vmatprep.mubr.f32.mxu0 0.0
  %8714 = vmatmul.mubr.f32.gmra.mrb[0].mxu0 %v6668
  %v8715 = vpop.f32.mrb[0].mxu0
  %v8716 = vadd.f32 %v5996, %v8715
  %v8717 = vpop.f32.mrb[0].mxu0
  %8718 = vmatprep.mubr.f32.mxu0 0.0
  %8719 = vmatmul.mubr.f32.gmra.mrb[0].mxu0 %v6671
  %v8720 = vpop.f32.mrb[0].mxu0
  %v8721 = vadd.f32 %v5996, %v8720
  %v8722 = vpop.f32.mrb[0].mxu0
  %8723 = vmatprep.mubr.f32.mxu0 0.0
  %8724 = vmatmul.mubr.f32.gmra.mrb[0].mxu0 %v6674
  %v8725 = vpop.f32.mrb[0].mxu0
  %v8726 = vadd.f32 %v5996, %v8725
  %v8727 = vpop.f32.mrb[0].mxu0
  %8728 = vmatprep.mubr.f32.mxu0 0.0
  %8729 = vmatmul.mubr.f32.gmra.mrb[0].mxu0 %v6677
  %v8730 = vpop.f32.mrb[0].mxu0
  %v8731 = vadd.f32 %v5996, %v8730
  %v8732 = vpop.f32.mrb[0].mxu0
  %8733 = vmatprep.mubr.f32.mxu0 0.0
  %8734 = vmatmul.mubr.f32.gmra.mrb[0].mxu0 %v6680
  %v8735 = vpop.f32.mrb[0].mxu0
  %v8736 = vadd.f32 %v5996, %v8735
  %v8737 = vpop.f32.mrb[0].mxu0
  %8738 = vmatprep.mubr.f32.mxu0 0.0
  %8739 = vmatmul.mubr.f32.gmra.mrb[0].mxu0 %v6683
  %v8740 = vpop.f32.mrb[0].mxu0
  %v8741 = vadd.f32 %v5996, %v8740
  %v8742 = vpop.f32.mrb[0].mxu0
  %8743 = vmatprep.mubr.f32.mxu0 0.0
  %8744 = vmatmul.mubr.f32.gmra.mrb[0].mxu0 %v6686
  %v8745 = vpop.f32.mrb[0].mxu0
  %v8746 = vadd.f32 %v5996, %v8745
  %v8747 = vpop.f32.mrb[0].mxu0
  %8748 = vmatprep.mubr.f32.mxu0 0.0
  %8749 = vmatmul.mubr.f32.gmra.mrb[0].mxu0 %v6689
  %v8750 = vpop.f32.mrb[0].mxu0
  %v8751 = vadd.f32 %v5996, %v8750
  %v8752 = vpop.f32.mrb[0].mxu0
  %8753 = vmatprep.mubr.f32.mxu0 0.0
  %8754 = vmatmul.mubr.f32.gmra.mrb[0].mxu0 %v6692
  %v8755 = vpop.f32.mrb[0].mxu0
  %v8756 = vadd.f32 %v5996, %v8755
  %v8757 = vpop.f32.mrb[0].mxu0
  %8758 = vmatprep.mubr.f32.mxu0 0.0
  %8759 = vmatmul.mubr.f32.gmra.mrb[0].mxu0 %v6695
  %v8760 = vpop.f32.mrb[0].mxu0
  %v8761 = vadd.f32 %v5996, %v8760
  %v8762 = vpop.f32.mrb[0].mxu0
  %8763 = vmatprep.mubr.f32.mxu0 0.0
  %8764 = vmatmul.mubr.f32.gmra.mrb[0].mxu0 %v6698
  %v8765 = vpop.f32.mrb[0].mxu0
  %v8766 = vadd.f32 %v5996, %v8765
  %v8767 = vpop.f32.mrb[0].mxu0
  %8768 = vmatprep.mubr.f32.mxu0 0.0
  %8769 = vmatmul.mubr.f32.gmra.mrb[0].mxu0 %v6701
  %v8770 = vpop.f32.mrb[0].mxu0
  %v8771 = vadd.f32 %v5996, %v8770
  %v8772 = vpop.f32.mrb[0].mxu0
  %8773 = vmatprep.mubr.f32.mxu0 0.0
  %8774 = vmatmul.mubr.f32.gmra.mrb[0].mxu0 %v6704
  %v8775 = vpop.f32.mrb[0].mxu0
  %v8776 = vadd.f32 %v5996, %v8775
  %v8777 = vpop.f32.mrb[0].mxu0
  %8778 = vmatprep.mubr.f32.mxu0 0.0
  %8779 = vmatmul.mubr.f32.gmra.mrb[0].mxu0 %v6707
  %v8780 = vpop.f32.mrb[0].mxu0
  %v8781 = vadd.f32 %v5996, %v8780
  %v8782 = vpop.f32.mrb[0].mxu0
  %8783 = vmatprep.mubr.f32.mxu0 0.0
  %8784 = vmatmul.mubr.f32.gmra.mrb[0].mxu0 %v6710
  %v8785 = vpop.f32.mrb[0].mxu0
  %v8786 = vadd.f32 %v5996, %v8785
  %v8787 = vpop.f32.mrb[0].mxu0
  %8788 = vmatprep.mubr.f32.mxu0 0.0
  %8789 = vmatmul.mubr.f32.gmra.mrb[0].mxu0 %v6713
  %v8790 = vpop.f32.mrb[0].mxu0
  %v8791 = vadd.f32 %v5996, %v8790
  %v8792 = vpop.f32.mrb[0].mxu0
  %8793 = vmatprep.mubr.f32.mxu0 0.0
  %8794 = vmatmul.mubr.f32.gmra.mrb[0].mxu0 %v6716
  %v8795 = vpop.f32.mrb[0].mxu0
  %v8796 = vadd.f32 %v5996, %v8795
  %v8797 = vpop.f32.mrb[0].mxu0
  %8798 = vmatprep.mubr.f32.mxu0 0.0
  %8799 = vmatmul.mubr.f32.gmra.mrb[0].mxu0 %v6719
  %v8800 = vpop.f32.mrb[0].mxu0
  %v8801 = vadd.f32 %v5996, %v8800
  %v8802 = vpop.f32.mrb[0].mxu0
  %8803 = vmatprep.mubr.f32.mxu0 0.0
  %8804 = vmatmul.mubr.f32.gmra.mrb[0].mxu0 %v6722
  %v8805 = vpop.f32.mrb[0].mxu0
  %v8806 = vadd.f32 %v5996, %v8805
  %v8807 = vpop.f32.mrb[0].mxu0
  %8808 = vmatprep.mubr.f32.mxu0 0.0
  %8809 = vmatmul.mubr.f32.gmra.mrb[0].mxu0 %v6725
  %v8810 = vpop.f32.mrb[0].mxu0
  %v8811 = vadd.f32 %v5996, %v8810
  %v8812 = vpop.f32.mrb[0].mxu0
  %8813 = vmatprep.mubr.f32.mxu0 0.0
  %8814 = vmatmul.mubr.f32.gmra.mrb[0].mxu0 %v6728
  %v8815 = vpop.f32.mrb[0].mxu0
  %v8816 = vadd.f32 %v5996, %v8815
  %v8817 = vpop.f32.mrb[0].mxu0
  %8818 = vmatprep.mubr.f32.mxu0 0.0
  %8819 = vmatmul.mubr.f32.gmra.mrb[0].mxu0 %v6731
  %v8820 = vpop.f32.mrb[0].mxu0
  %v8821 = vadd.f32 %v5996, %v8820
  %v8822 = vpop.f32.mrb[0].mxu0
  %8823 = vmatprep.mubr.f32.mxu0 0.0
  %8824 = vmatmul.mubr.f32.gmra.mrb[0].mxu0 %v6734
  %v8825 = vpop.f32.mrb[0].mxu0
  %v8826 = vadd.f32 %v5996, %v8825
  %v8827 = vpop.f32.mrb[0].mxu0
  %8828 = vmatprep.mubr.f32.mxu0 0.0
  %8829 = vmatmul.mubr.f32.gmra.mrb[0].mxu0 %v6737
  %v8830 = vpop.f32.mrb[0].mxu0
  %v8831 = vadd.f32 %v5996, %v8830
  %v8832 = vpop.f32.mrb[0].mxu0
  %8833 = vmatprep.mubr.f32.mxu0 0.0
  %8834 = vmatmul.mubr.f32.gmra.mrb[0].mxu0 %v6740
  %v8835 = vpop.f32.mrb[0].mxu0
  %v8836 = vadd.f32 %v5996, %v8835
  %v8837 = vpop.f32.mrb[0].mxu0
  %8838 = vmatprep.mubr.f32.mxu0 0.0
  %8839 = vmatmul.mubr.f32.gmra.mrb[0].mxu0 %v6743
  %v8840 = vpop.f32.mrb[0].mxu0
  %v8841 = vadd.f32 %v5996, %v8840
  %v8842 = vpop.f32.mrb[0].mxu0
  %8843 = vmatprep.mubr.f32.mxu0 0.0
  %8844 = vmatmul.mubr.f32.gmra.mrb[0].mxu0 %v6746
  %v8845 = vpop.f32.mrb[0].mxu0
  %v8846 = vadd.f32 %v5996, %v8845
  %v8847 = vpop.f32.mrb[0].mxu0
  %8848 = vmatprep.mubr.f32.mxu0 0.0
  %8849 = vmatmul.mubr.f32.gmra.mrb[0].mxu0 %v6749
  %v8850 = vpop.f32.mrb[0].mxu0
  %v8851 = vadd.f32 %v5996, %v8850
  %v8852 = vpop.f32.mrb[0].mxu0
  %8853 = vmatprep.mubr.f32.mxu0 0.0
  %8854 = vmatmul.mubr.f32.gmra.mrb[0].mxu0 %v6752
  %v8855 = vpop.f32.mrb[0].mxu0
  %v8856 = vadd.f32 %v5996, %v8855
  %v8857 = vpop.f32.mrb[0].mxu0
  %8858 = vmatprep.mubr.f32.mxu0 0.0
  %8859 = vmatmul.mubr.f32.gmra.mrb[0].mxu0 %v6755
  %v8860 = vpop.f32.mrb[0].mxu0
  %v8861 = vadd.f32 %v5996, %v8860
  %v8862 = vpop.f32.mrb[0].mxu0
  %8863 = vmatprep.mubr.f32.mxu0 0.0
  %8864 = vmatmul.mubr.f32.gmra.mrb[0].mxu0 %v6758
  %v8865 = vpop.f32.mrb[0].mxu0
  %v8866 = vadd.f32 %v5996, %v8865
  %v8867 = vpop.f32.mrb[0].mxu0
  %8868 = vmatprep.mubr.f32.mxu0 0.0
  %8869 = vmatmul.mubr.f32.gmra.mrb[0].mxu0 %v6761
  %v8870 = vpop.f32.mrb[0].mxu0
  %v8871 = vadd.f32 %v5996, %v8870
  %v8872 = vpop.f32.mrb[0].mxu0
  %8873 = vmatprep.mubr.f32.mxu0 0.0
  %8874 = vmatmul.mubr.f32.gmra.mrb[0].mxu0 %v6764
  %v8875 = vpop.f32.mrb[0].mxu0
  %v8876 = vadd.f32 %v5996, %v8875
  %v8877 = vpop.f32.mrb[0].mxu0
  %8878 = vmatprep.mubr.f32.mxu0 0.0
  %8879 = vmatmul.mubr.f32.gmra.mrb[0].mxu0 %v6767
  %v8880 = vpop.f32.mrb[0].mxu0
  %v8881 = vadd.f32 %v5996, %v8880
  %v8882 = vpop.f32.mrb[0].mxu0
  %8883 = vmatprep.mubr.f32.mxu0 0.0
  %8884 = vmatmul.mubr.f32.gmra.mrb[0].mxu0 %v6770
  %v8885 = vpop.f32.mrb[0].mxu0
  %v8886 = vadd.f32 %v5996, %v8885
  %v8887 = vpop.f32.mrb[0].mxu0
  %8888 = vmatprep.mubr.f32.mxu0 0.0
  %8889 = vmatmul.mubr.f32.gmra.mrb[0].mxu0 %v6773
  %v8890 = vpop.f32.mrb[0].mxu0
  %v8891 = vadd.f32 %v5996, %v8890
  %v8892 = vpop.f32.mrb[0].mxu0
  %8893 = vmatprep.mubr.f32.mxu0 0.0
  %8894 = vmatmul.mubr.f32.gmra.mrb[0].mxu0 %v6776
  %v8895 = vpop.f32.mrb[0].mxu0
  %v8896 = vadd.f32 %v5996, %v8895
  %v8897 = vpop.f32.mrb[0].mxu0
  %8898 = vmatprep.mubr.f32.mxu0 0.0
  %8899 = vmatmul.mubr.f32.gmra.mrb[0].mxu0 %v6779
  %v8900 = vpop.f32.mrb[0].mxu0
  %v8901 = vadd.f32 %v5996, %v8900
  %v8902 = vpop.f32.mrb[0].mxu0
  %8903 = vmatprep.mubr.f32.mxu0 0.0
  %8904 = vmatmul.mubr.f32.gmra.mrb[0].mxu0 %v6782
  %v8905 = vpop.f32.mrb[0].mxu0
  %v8906 = vadd.f32 %v5996, %v8905
  %v8907 = vpop.f32.mrb[0].mxu0
  %8908 = vmatprep.mubr.f32.mxu0 0.0
  %8909 = vmatmul.mubr.f32.gmra.mrb[0].mxu0 %v6785
  %v8910 = vpop.f32.mrb[0].mxu0
  %v8911 = vadd.f32 %v5996, %v8910
  %v8912 = vpop.f32.mrb[0].mxu0
  %8913 = vmatprep.mubr.f32.mxu0 0.0
  %8914 = vmatmul.mubr.f32.gmra.mrb[0].mxu0 %v6788
  %v8915 = vpop.f32.mrb[0].mxu0
  %v8916 = vadd.f32 %v5996, %v8915
  %v8917 = vpop.f32.mrb[0].mxu0
  %8918 = vmatprep.mubr.f32.mxu0 0.0
  %8919 = vmatmul.mubr.f32.gmra.mrb[0].mxu0 %v6791
  %v8920 = vpop.f32.mrb[0].mxu0
  %v8921 = vadd.f32 %v5996, %v8920
  %v8922 = vpop.f32.mrb[0].mxu0
  %8923 = vmatprep.mubr.f32.mxu0 0.0
  %8924 = vmatmul.mubr.f32.gmra.mrb[0].mxu0 %v6794
  %v8925 = vpop.f32.mrb[0].mxu0
  %v8926 = vadd.f32 %v5996, %v8925
  %v8927 = vpop.f32.mrb[0].mxu0
  %8928 = vmatprep.mubr.f32.mxu0 0.0
  %8929 = vmatmul.mubr.f32.gmra.mrb[0].mxu0 %v6797
  %v8930 = vpop.f32.mrb[0].mxu0
  %v8931 = vadd.f32 %v5996, %v8930
  %v8932 = vpop.f32.mrb[0].mxu0
  %8933 = vmatprep.mubr.f32.mxu0 0.0
  %8934 = vmatmul.mubr.f32.gmra.mrb[0].mxu0 %v6800
  %v8935 = vpop.f32.mrb[0].mxu0
  %v8936 = vadd.f32 %v5996, %v8935
  %v8937 = vpop.f32.mrb[0].mxu0
  %8938 = vmatprep.mubr.f32.mxu0 0.0
  %8939 = vmatmul.mubr.f32.gmra.mrb[0].mxu0 %v6803
  %v8940 = vpop.f32.mrb[0].mxu0
  %v8941 = vadd.f32 %v5996, %v8940
  %v8942 = vpop.f32.mrb[0].mxu0
  %8943 = vmatprep.mubr.f32.mxu0 0.0
  %8944 = vmatmul.mubr.f32.gmra.mrb[0].mxu0 %v6806
  %v8945 = vpop.f32.mrb[0].mxu0
  %v8946 = vadd.f32 %v5996, %v8945
  %v8947 = vpop.f32.mrb[0].mxu0
  %8948 = vmatprep.mubr.f32.mxu0 0.0
  %8949 = vmatmul.mubr.f32.gmra.mrb[0].mxu0 %v6809
  %v8950 = vpop.f32.mrb[0].mxu0
  %v8951 = vadd.f32 %v5996, %v8950
  %v8952 = vpop.f32.mrb[0].mxu0
  %8953 = vmatprep.mubr.f32.mxu0 0.0
  %8954 = vmatmul.mubr.f32.gmra.mrb[0].mxu0 %v6812
  %v8955 = vpop.f32.mrb[0].mxu0
  %v8956 = vadd.f32 %v5996, %v8955
  %v8957 = vpop.f32.mrb[0].mxu0
  %8958 = vmatprep.mubr.f32.mxu0 0.0
  %8959 = vmatmul.mubr.f32.gmra.mrb[0].mxu0 %v6815
  %v8960 = vpop.f32.mrb[0].mxu0
  %v8961 = vadd.f32 %v5996, %v8960
  %v8962 = vpop.f32.mrb[0].mxu0
  %8963 = vmatprep.mubr.f32.mxu0 0.0
  %8964 = vmatmul.mubr.f32.gmra.mrb[0].mxu0 %v6818
  %v8965 = vpop.f32.mrb[0].mxu0
  %v8966 = vadd.f32 %v5996, %v8965
  %v8967 = vpop.f32.mrb[0].mxu0
  %8968 = vmatprep.mubr.f32.mxu0 0.0
  %8969 = vmatmul.mubr.f32.gmra.mrb[0].mxu0 %v6821
  %v8970 = vpop.f32.mrb[0].mxu0
  %v8971 = vadd.f32 %v5996, %v8970
  %v8972 = vpop.f32.mrb[0].mxu0
  %8973 = vmatprep.mubr.f32.mxu0 0.0
  %8974 = vmatmul.mubr.f32.gmra.mrb[0].mxu0 %v6824
  %v8975 = vpop.f32.mrb[0].mxu0
  %v8976 = vadd.f32 %v5996, %v8975
  %v8977 = vpop.f32.mrb[0].mxu0
  %8978 = vmatprep.mubr.f32.mxu0 0.0
  %8979 = vmatmul.mubr.f32.gmra.mrb[0].mxu0 %v6827
  %v8980 = vpop.f32.mrb[0].mxu0
  %v8981 = vadd.f32 %v5996, %v8980
  %v8982 = vpop.f32.mrb[0].mxu0
  %8983 = vmatprep.mubr.f32.mxu0 0.0
  %8984 = vmatmul.mubr.f32.gmra.mrb[0].mxu0 %v6830
  %v8985 = vpop.f32.mrb[0].mxu0
  %v8986 = vadd.f32 %v5996, %v8985
  %v8987 = vpop.f32.mrb[0].mxu0
  %8988 = vmatprep.mubr.f32.mxu0 0.0
  %8989 = vmatmul.mubr.f32.gmra.mrb[0].mxu0 %v6833
  %v8990 = vpop.f32.mrb[0].mxu0
  %v8991 = vadd.f32 %v5996, %v8990
  %v8992 = vpop.f32.mrb[0].mxu0
  %8993 = vmatprep.mubr.f32.mxu0 0.0
  %8994 = vmatmul.mubr.f32.gmra.mrb[0].mxu0 %v6836
  %v8995 = vpop.f32.mrb[0].mxu0
  %v8996 = vadd.f32 %v5996, %v8995
  %v8997 = vpop.f32.mrb[0].mxu0
  %8998 = vmatprep.mubr.f32.mxu0 0.0
  %8999 = vmatmul.mubr.f32.gmra.mrb[0].mxu0 %v6839
  %v9000 = vpop.f32.mrb[0].mxu0
  %v9001 = vadd.f32 %v5996, %v9000
  %v9002 = vpop.f32.mrb[0].mxu0
  %9003 = vmatprep.mubr.f32.mxu0 0.0
  %9004 = vmatmul.mubr.f32.gmra.mrb[0].mxu0 %v6842
  %v9005 = vpop.f32.mrb[0].mxu0
  %v9006 = vadd.f32 %v5996, %v9005
  %v9007 = vpop.f32.mrb[0].mxu0
  %9008 = vmatprep.mubr.f32.mxu0 0.0
  %9009 = vmatmul.mubr.f32.gmra.mrb[0].mxu0 %v6845
  %v9010 = vpop.f32.mrb[0].mxu0
  %v9011 = vadd.f32 %v5996, %v9010
  %v9012 = vpop.f32.mrb[0].mxu0
  %9013 = vmatprep.mubr.f32.mxu0 0.0
  %9014 = vmatmul.mubr.f32.gmra.mrb[0].mxu0 %v6848
  %v9015 = vpop.f32.mrb[0].mxu0
  %v9016 = vadd.f32 %v5996, %v9015
  %v9017 = vpop.f32.mrb[0].mxu0
  %9018 = vmatprep.mubr.f32.mxu0 0.0
  %9019 = vmatmul.mubr.f32.gmra.mrb[0].mxu0 %v6851
  %v9020 = vpop.f32.mrb[0].mxu0
  %v9021 = vadd.f32 %v5996, %v9020
  %v9022 = vpop.f32.mrb[0].mxu0
  %9023 = vmatprep.mubr.f32.mxu0 0.0
  %9024 = vmatmul.mubr.f32.gmra.mrb[0].mxu0 %v6854
  %v9025 = vpop.f32.mrb[0].mxu0
  %v9026 = vadd.f32 %v5996, %v9025
  %v9027 = vpop.f32.mrb[0].mxu0
  %9028 = vmatprep.mubr.f32.mxu0 0.0
  %9029 = vmatmul.mubr.f32.gmra.mrb[0].mxu0 %v6857
  %v9030 = vpop.f32.mrb[0].mxu0
  %v9031 = vadd.f32 %v5996, %v9030
  %v9032 = vpop.f32.mrb[0].mxu0
  %9033 = vmatprep.mubr.f32.mxu0 0.0
  %9034 = vmatmul.mubr.f32.gmra.mrb[0].mxu0 %v6860
  %v9035 = vpop.f32.mrb[0].mxu0
  %v9036 = vadd.f32 %v5996, %v9035
  %v9037 = vpop.f32.mrb[0].mxu0
  %9038 = vmatprep.mubr.f32.mxu0 0.0
  %9039 = vmatmul.mubr.f32.gmra.mrb[0].mxu0 %v6863
  %v9040 = vpop.f32.mrb[0].mxu0
  %v9041 = vadd.f32 %v5996, %v9040
  %v9042 = vpop.f32.mrb[0].mxu0
  %9043 = vmatprep.mubr.f32.mxu0 0.0
  %9044 = vmatmul.mubr.f32.gmra.mrb[0].mxu0 %v6866
  %v9045 = vpop.f32.mrb[0].mxu0
  %v9046 = vadd.f32 %v5996, %v9045
  %v9047 = vpop.f32.mrb[0].mxu0
  %9048 = vmatprep.mubr.f32.mxu0 0.0
  %9049 = vmatmul.mubr.f32.gmra.mrb[0].mxu0 %v6869
  %v9050 = vpop.f32.mrb[0].mxu0
  %v9051 = vadd.f32 %v5996, %v9050
  %v9052 = vpop.f32.mrb[0].mxu0
  %9053 = vmatprep.mubr.f32.mxu0 0.0
  %9054 = vmatmul.mubr.f32.gmra.mrb[0].mxu0 %v6872
  %v9055 = vpop.f32.mrb[0].mxu0
  %v9056 = vadd.f32 %v5996, %v9055
  %v9057 = vpop.f32.mrb[0].mxu0
  %9058 = vmatprep.mubr.f32.mxu0 0.0
  %9059 = vmatmul.mubr.f32.gmra.mrb[0].mxu0 %v6875
  %v9060 = vpop.f32.mrb[0].mxu0
  %v9061 = vadd.f32 %v5996, %v9060
  %v9062 = vpop.f32.mrb[0].mxu0
  %9063 = vmatprep.mubr.f32.mxu0 0.0
  %9064 = vmatmul.mubr.f32.gmra.mrb[0].mxu0 %v6878
  %v9065 = vpop.f32.mrb[0].mxu0
  %v9066 = vadd.f32 %v5996, %v9065
  %v9067 = vpop.f32.mrb[0].mxu0
  %9068 = vmatprep.mubr.f32.mxu0 0.0
  %9069 = vmatmul.mubr.f32.gmra.mrb[0].mxu0 %v6881
  %v9070 = vpop.f32.mrb[0].mxu0
  %v9071 = vadd.f32 %v5996, %v9070
  %v9072 = vpop.f32.mrb[0].mxu0
  %9073 = vmatprep.mubr.f32.mxu0 0.0
  %9074 = vmatmul.mubr.f32.gmra.mrb[0].mxu0 %v6884
  %v9075 = vpop.f32.mrb[0].mxu0
  %v9076 = vadd.f32 %v5996, %v9075
  %v9077 = vpop.f32.mrb[0].mxu0
  %9078 = vmatprep.mubr.f32.mxu0 0.0
  %9079 = vmatmul.mubr.f32.gmra.mrb[0].mxu0 %v6887
  %v9080 = vpop.f32.mrb[0].mxu0
  %v9081 = vadd.f32 %v5996, %v9080
  %v9082 = vpop.f32.mrb[0].mxu0
  %9083 = vmatprep.mubr.f32.mxu0 0.0
  %9084 = vmatmul.mubr.f32.gmra.mrb[0].mxu0 %v6890
  %v9085 = vpop.f32.mrb[0].mxu0
  %v9086 = vadd.f32 %v5996, %v9085
  %v9087 = vpop.f32.mrb[0].mxu0
  %9088 = vmatprep.mubr.f32.mxu0 0.0
  %9089 = vmatmul.mubr.f32.gmra.mrb[0].mxu0 %v6893
  %v9090 = vpop.f32.mrb[0].mxu0
  %v9091 = vadd.f32 %v5996, %v9090
  %v9092 = vpop.f32.mrb[0].mxu0
  %9093 = vmatprep.mubr.f32.mxu0 0.0
  %9094 = vmatmul.mubr.f32.gmra.mrb[0].mxu0 %v6896
  %v9095 = vpop.f32.mrb[0].mxu0
  %v9096 = vadd.f32 %v5996, %v9095
  %v9097 = vpop.f32.mrb[0].mxu0
  %9098 = vmatprep.mubr.f32.mxu0 0.0
  %9099 = vmatmul.mubr.f32.gmra.mrb[0].mxu0 %v6899
  %v9100 = vpop.f32.mrb[0].mxu0
  %v9101 = vadd.f32 %v5996, %v9100
  %v9102 = vpop.f32.mrb[0].mxu0
  %9103 = vmatprep.mubr.f32.mxu0 0.0
  %9104 = vmatmul.mubr.f32.gmra.mrb[0].mxu0 %v6902
  %v9105 = vpop.f32.mrb[0].mxu0
  %v9106 = vadd.f32 %v5996, %v9105
  %v9107 = vpop.f32.mrb[0].mxu0
  %9108 = vmatprep.mubr.f32.mxu0 0.0
  %9109 = vmatmul.mubr.f32.gmra.mrb[0].mxu0 %v6905
  %v9110 = vpop.f32.mrb[0].mxu0
  %v9111 = vadd.f32 %v5996, %v9110
  %v9112 = vpop.f32.mrb[0].mxu0
  %9113 = vmatprep.mubr.f32.mxu0 0.0
  %9114 = vmatmul.mubr.f32.gmra.mrb[0].mxu0 %v6908
  %v9115 = vpop.f32.mrb[0].mxu0
  %v9116 = vadd.f32 %v5996, %v9115
  %v9117 = vpop.f32.mrb[0].mxu0
  %9118 = vmatprep.mubr.f32.mxu0 0.0
  %9119 = vmatmul.mubr.f32.gmra.mrb[0].mxu0 %v6911
  %v9120 = vpop.f32.mrb[0].mxu0
  %v9121 = vadd.f32 %v5996, %v9120
  %v9122 = vpop.f32.mrb[0].mxu0
  %9123 = vmatprep.mubr.f32.mxu0 0.0
  %9124 = vmatmul.mubr.f32.gmra.mrb[0].mxu0 %v6914
  %v9125 = vpop.f32.mrb[0].mxu0
  %v9126 = vadd.f32 %v5996, %v9125
  %v9127 = vpop.f32.mrb[0].mxu0
  %9128 = vmatprep.mubr.f32.mxu0 0.0
  %9129 = vmatmul.mubr.f32.gmra.mrb[0].mxu0 %v6917
  %v9130 = vpop.f32.mrb[0].mxu0
  %v9131 = vadd.f32 %v5996, %v9130
  %v9132 = vpop.f32.mrb[0].mxu0
  %9133 = vmatprep.mubr.f32.mxu0 0.0
  %9134 = vmatmul.mubr.f32.gmra.mrb[0].mxu0 %v6920
  %v9135 = vpop.f32.mrb[0].mxu0
  %v9136 = vadd.f32 %v5996, %v9135
  %v9137 = vpop.f32.mrb[0].mxu0
  %9138 = vmatprep.mubr.f32.mxu0 0.0
  %9139 = vmatmul.mubr.f32.gmra.mrb[0].mxu0 %v6923
  %v9140 = vpop.f32.mrb[0].mxu0
  %v9141 = vadd.f32 %v5996, %v9140
  %v9142 = vpop.f32.mrb[0].mxu0
  %9143 = vmatprep.mubr.f32.mxu0 0.0
  %9144 = vmatmul.mubr.f32.gmra.mrb[0].mxu0 %v6926
  %v9145 = vpop.f32.mrb[0].mxu0
  %v9146 = vadd.f32 %v5996, %v9145
  %v9147 = vpop.f32.mrb[0].mxu0
  %9148 = vmatprep.mubr.f32.mxu0 0.0
  %9149 = vmatmul.mubr.f32.gmra.mrb[0].mxu0 %v6929
  %v9150 = vpop.f32.mrb[0].mxu0
  %v9151 = vadd.f32 %v5996, %v9150
  %v9152 = vpop.f32.mrb[0].mxu0
  %9153 = vmatprep.mubr.f32.mxu0 0.0
  %9154 = vmatmul.mubr.f32.gmra.mrb[0].mxu0 %v6932
  %v9155 = vpop.f32.mrb[0].mxu0
  %v9156 = vadd.f32 %v5996, %v9155
  %v9157 = vpop.f32.mrb[0].mxu0
  %9158 = vmatprep.mubr.f32.mxu0 0.0
  %9159 = vmatmul.mubr.f32.gmra.mrb[0].mxu0 %v6935
  %v9160 = vpop.f32.mrb[0].mxu0
  %v9161 = vadd.f32 %v5996, %v9160
  %v9162 = vpop.f32.mrb[0].mxu0
  %9163 = vmatprep.mubr.f32.mxu0 0.0
  %9164 = vmatmul.mubr.f32.gmra.mrb[0].mxu0 %v6938
  %v9165 = vpop.f32.mrb[0].mxu0
  %v9166 = vadd.f32 %v5996, %v9165
  %v9167 = vpop.f32.mrb[0].mxu0
  %9168 = vmatprep.mubr.f32.mxu0 0.0
  %9169 = vmatmul.mubr.f32.gmra.mrb[0].mxu0 %v6941
  %v9170 = vpop.f32.mrb[0].mxu0
  %v9171 = vadd.f32 %v5996, %v9170
  %v9172 = vpop.f32.mrb[0].mxu0
  %9173 = vmatprep.mubr.f32.mxu0 0.0
  %9174 = vmatmul.mubr.f32.gmra.mrb[0].mxu0 %v6944
  %v9175 = vpop.f32.mrb[0].mxu0
  %v9176 = vadd.f32 %v5996, %v9175
  %v9177 = vpop.f32.mrb[0].mxu0
  %9178 = vmatprep.mubr.f32.mxu0 0.0
  %9179 = vmatmul.mubr.f32.gmra.mrb[0].mxu0 %v6947
  %v9180 = vpop.f32.mrb[0].mxu0
  %v9181 = vadd.f32 %v5996, %v9180
  %v9182 = vpop.f32.mrb[0].mxu0
  %9183 = vmatprep.mubr.f32.mxu0 0.0
  %9184 = vmatmul.mubr.f32.gmra.mrb[0].mxu0 %v6950
  %v9185 = vpop.f32.mrb[0].mxu0
  %v9186 = vadd.f32 %v5996, %v9185
  %v9187 = vpop.f32.mrb[0].mxu0
  %9188 = vmatprep.mubr.f32.mxu0 0.0
  %9189 = vmatmul.mubr.f32.gmra.mrb[0].mxu0 %v6953
  %v9190 = vpop.f32.mrb[0].mxu0
  %v9191 = vadd.f32 %v5996, %v9190
  %v9192 = vpop.f32.mrb[0].mxu0
  %9193 = vmatprep.mubr.f32.mxu0 0.0
  %9194 = vmatmul.mubr.f32.gmra.mrb[0].mxu0 %v6956
  %v9195 = vpop.f32.mrb[0].mxu0
  %v9196 = vadd.f32 %v5996, %v9195
  %v9197 = vpop.f32.mrb[0].mxu0
  %9198 = vmatprep.mubr.f32.mxu0 0.0
  %9199 = vmatmul.mubr.f32.gmra.mrb[0].mxu0 %v6959
  %v9200 = vpop.f32.mrb[0].mxu0
  %v9201 = vadd.f32 %v5996, %v9200
  %v9202 = vpop.f32.mrb[0].mxu0
  %9203 = vmatprep.mubr.f32.mxu0 0.0
  %9204 = vmatmul.mubr.f32.gmra.mrb[0].mxu0 %v6962
  %v9205 = vpop.f32.mrb[0].mxu0
  %v9206 = vadd.f32 %v5996, %v9205
  %v9207 = vpop.f32.mrb[0].mxu0
  %9208 = vmatprep.mubr.f32.mxu0 0.0
  %9209 = vmatmul.mubr.f32.gmra.mrb[0].mxu0 %v6965
  %v9210 = vpop.f32.mrb[0].mxu0
  %v9211 = vadd.f32 %v5996, %v9210
  %v9212 = vpop.f32.mrb[0].mxu0
  %9213 = vmatprep.mubr.f32.mxu0 0.0
  %9214 = vmatmul.mubr.f32.gmra.mrb[0].mxu0 %v6968
  %v9215 = vpop.f32.mrb[0].mxu0
  %v9216 = vadd.f32 %v5996, %v9215
  %v9217 = vpop.f32.mrb[0].mxu0
  %9218 = vmatprep.mubr.f32.mxu0 0.0
  %9219 = vmatmul.mubr.f32.gmra.mrb[0].mxu0 %v6971
  %v9220 = vpop.f32.mrb[0].mxu0
  %v9221 = vadd.f32 %v5996, %v9220
  %v9222 = vpop.f32.mrb[0].mxu0
  %9223 = vmatprep.mubr.f32.mxu0 0.0
  %9224 = vmatmul.mubr.f32.gmra.mrb[0].mxu0 %v6974
  %v9225 = vpop.f32.mrb[0].mxu0
  %v9226 = vadd.f32 %v5996, %v9225
  %v9227 = vpop.f32.mrb[0].mxu0
  %9228 = vmatprep.mubr.f32.mxu0 0.0
  %9229 = vmatmul.mubr.f32.gmra.mrb[0].mxu0 %v6977
  %v9230 = vpop.f32.mrb[0].mxu0
  %v9231 = vadd.f32 %v5996, %v9230
  %v9232 = vpop.f32.mrb[0].mxu0
  %9233 = vmatprep.mubr.f32.mxu0 0.0
  %9234 = vmatmul.mubr.f32.gmra.mrb[0].mxu0 %v6980
  %v9235 = vpop.f32.mrb[0].mxu0
  %v9236 = vadd.f32 %v5996, %v9235
  %v9237 = vpop.f32.mrb[0].mxu0
  %9238 = vmatprep.mubr.f32.mxu0 0.0
  %9239 = vmatmul.mubr.f32.gmra.mrb[0].mxu0 %v6983
  %v9240 = vpop.f32.mrb[0].mxu0
  %v9241 = vadd.f32 %v5996, %v9240
  %v9242 = vpop.f32.mrb[0].mxu0
  %9243 = vmatprep.mubr.f32.mxu0 0.0
  %9244 = vmatmul.mubr.f32.gmra.mrb[0].mxu0 %v6986
  %v9245 = vpop.f32.mrb[0].mxu0
  %v9246 = vadd.f32 %v5996, %v9245
  %v9247 = vpop.f32.mrb[0].mxu0
  %9248 = vmatprep.mubr.f32.mxu0 0.0
  %9249 = vmatmul.mubr.f32.gmra.mrb[0].mxu0 %v6989
  %v9250 = vpop.f32.mrb[0].mxu0
  %v9251 = vadd.f32 %v5996, %v9250
  %v9252 = vpop.f32.mrb[0].mxu0
  %9253 = vmatprep.mubr.f32.mxu0 0.0
  %9254 = vmatmul.mubr.f32.gmra.mrb[0].mxu0 %v6992
  %v9255 = vpop.f32.mrb[0].mxu0
  %v9256 = vadd.f32 %v5996, %v9255
  %v9257 = vpop.f32.mrb[0].mxu0
  %9258 = vmatprep.mubr.f32.mxu0 0.0
  %9259 = vmatmul.mubr.f32.gmra.mrb[0].mxu0 %v6995
  %v9260 = vpop.f32.mrb[0].mxu0
  %v9261 = vadd.f32 %v5996, %v9260
  %v9262 = vpop.f32.mrb[0].mxu0
  %9263 = vmatprep.mubr.f32.mxu0 0.0
  %9264 = vmatmul.mubr.f32.gmra.mrb[0].mxu0 %v6998
  %v9265 = vpop.f32.mrb[0].mxu0
  %v9266 = vadd.f32 %v5996, %v9265
  %v9267 = vpop.f32.mrb[0].mxu0
  %9268 = vmatprep.mubr.f32.mxu0 0.0
  %9269 = vmatmul.mubr.f32.gmra.mrb[0].mxu0 %v7001
  %v9270 = vpop.f32.mrb[0].mxu0
  %v9271 = vadd.f32 %v5996, %v9270
  %v9272 = vpop.f32.mrb[0].mxu0
  %9273 = vmatprep.mubr.f32.mxu0 0.0
  %9274 = vmatmul.mubr.f32.gmra.mrb[0].mxu0 %v7004
  %v9275 = vpop.f32.mrb[0].mxu0
  %v9276 = vadd.f32 %v5996, %v9275
  %v9277 = vpop.f32.mrb[0].mxu0
  %9278 = vmatprep.mubr.f32.mxu0 0.0
  %9279 = vmatmul.mubr.f32.gmra.mrb[0].mxu0 %v7007
  %v9280 = vpop.f32.mrb[0].mxu0
  %v9281 = vadd.f32 %v5996, %v9280
  %v9282 = vpop.f32.mrb[0].mxu0
  %9283 = vmatprep.mubr.f32.mxu0 0.0
  %9284 = vmatmul.mubr.f32.gmra.mrb[0].mxu0 %v7010
  %v9285 = vpop.f32.mrb[0].mxu0
  %v9286 = vadd.f32 %v5996, %v9285
  %v9287 = vpop.f32.mrb[0].mxu0
  %9288 = vmatprep.mubr.f32.mxu0 0.0
  %9289 = vmatmul.mubr.f32.gmra.mrb[0].mxu0 %v7013
  %v9290 = vpop.f32.mrb[0].mxu0
  %v9291 = vadd.f32 %v5996, %v9290
  %v9292 = vpop.f32.mrb[0].mxu0
  %9293 = vmatprep.mubr.f32.mxu0 0.0
  %9294 = vmatmul.mubr.f32.gmra.mrb[0].mxu0 %v7016
  %v9295 = vpop.f32.mrb[0].mxu0
  %v9296 = vadd.f32 %v5996, %v9295
  %v9297 = vpop.f32.mrb[0].mxu0
  %9298 = vmatprep.mubr.f32.mxu0 0.0
  %9299 = vmatmul.mubr.f32.gmra.mrb[0].mxu0 %v7019
  %v9300 = vpop.f32.mrb[0].mxu0
  %v9301 = vadd.f32 %v5996, %v9300
  %v9302 = vpop.f32.mrb[0].mxu0
  %9303 = vmatprep.mubr.f32.mxu0 0.0
  %9304 = vmatmul.mubr.f32.gmra.mrb[0].mxu0 %v7022
  %v9305 = vpop.f32.mrb[0].mxu0
  %v9306 = vadd.f32 %v5996, %v9305
  %v9307 = vpop.f32.mrb[0].mxu0
  %9308 = vmatprep.mubr.f32.mxu0 0.0
  %9309 = vmatmul.mubr.f32.gmra.mrb[0].mxu0 %v7025
  %v9310 = vpop.f32.mrb[0].mxu0
  %v9311 = vadd.f32 %v5996, %v9310
  %v9312 = vpop.f32.mrb[0].mxu0
  %9313 = vmatprep.mubr.f32.mxu0 0.0
  %9314 = vmatmul.mubr.f32.gmra.mrb[0].mxu0 %v7028
  %v9315 = vpop.f32.mrb[0].mxu0
  %v9316 = vadd.f32 %v5996, %v9315
  %v9317 = vpop.f32.mrb[0].mxu0
  %9318 = vmatprep.mubr.f32.mxu0 0.0
  %9319 = vmatmul.mubr.f32.gmra.mrb[0].mxu0 %v7031
  %v9320 = vpop.f32.mrb[0].mxu0
  %v9321 = vadd.f32 %v5996, %v9320
  %v9322 = vpop.f32.mrb[0].mxu0
  %9323 = vmatprep.mubr.f32.mxu0 0.0
  %9324 = vmatmul.mubr.f32.gmra.mrb[0].mxu0 %v7034
  %v9325 = vpop.f32.mrb[0].mxu0
  %v9326 = vadd.f32 %v5996, %v9325
  %v9327 = vpop.f32.mrb[0].mxu0
  %9328 = vmatprep.mubr.f32.mxu0 0.0
  %9329 = vmatmul.mubr.f32.gmra.mrb[0].mxu0 %v7037
  %v9330 = vpop.f32.mrb[0].mxu0
  %v9331 = vadd.f32 %v5996, %v9330
  %v9332 = vpop.f32.mrb[0].mxu0
  %9333 = vmatprep.mubr.f32.mxu0 0.0
  %9334 = vmatmul.mubr.f32.gmra.mrb[0].mxu0 %v7040
  %v9335 = vpop.f32.mrb[0].mxu0
  %v9336 = vadd.f32 %v5996, %v9335
  %v9337 = vpop.f32.mrb[0].mxu0
  %9338 = vmatprep.mubr.f32.mxu0 0.0
  %9339 = vmatmul.mubr.f32.gmra.mrb[0].mxu0 %v7043
  %v9340 = vpop.f32.mrb[0].mxu0
  %v9341 = vadd.f32 %v5996, %v9340
  %v9342 = vpop.f32.mrb[0].mxu0
  %9343 = vmatprep.mubr.f32.mxu0 0.0
  %9344 = vmatmul.mubr.f32.gmra.mrb[0].mxu0 %v7046
  %v9345 = vpop.f32.mrb[0].mxu0
  %v9346 = vadd.f32 %v5996, %v9345
  %v9347 = vpop.f32.mrb[0].mxu0
  %9348 = vmatprep.mubr.f32.mxu0 0.0
  %9349 = vmatmul.mubr.f32.gmra.mrb[0].mxu0 %v7049
  %v9350 = vpop.f32.mrb[0].mxu0
  %v9351 = vadd.f32 %v5996, %v9350
  %v9352 = vpop.f32.mrb[0].mxu0
  %9353 = vmatprep.mubr.f32.mxu0 0.0
  %9354 = vmatmul.mubr.f32.gmra.mrb[0].mxu0 %v7052
  %v9355 = vpop.f32.mrb[0].mxu0
  %v9356 = vadd.f32 %v5996, %v9355
  %v9357 = vpop.f32.mrb[0].mxu0
  %9358 = vmatprep.mubr.f32.mxu0 0.0
  %9359 = vmatmul.mubr.f32.gmra.mrb[0].mxu0 %v7055
  %v9360 = vpop.f32.mrb[0].mxu0
  %v9361 = vadd.f32 %v5996, %v9360
  %v9362 = vpop.f32.mrb[0].mxu0
  %9363 = vmatprep.mubr.f32.mxu0 0.0
  %9364 = vmatmul.mubr.f32.gmra.mrb[0].mxu0 %v7058
  %v9365 = vpop.f32.mrb[0].mxu0
  %v9366 = vadd.f32 %v5996, %v9365
  %v9367 = vpop.f32.mrb[0].mxu0
  %9368 = vmatprep.mubr.f32.mxu0 0.0
  %9369 = vmatmul.mubr.f32.gmra.mrb[0].mxu0 %v7061
  %v9370 = vpop.f32.mrb[0].mxu0
  %v9371 = vadd.f32 %v5996, %v9370
  %v9372 = vpop.f32.mrb[0].mxu0
  %9373 = vmatprep.mubr.f32.mxu0 0.0
  %9374 = vmatmul.mubr.f32.gmra.mrb[0].mxu0 %v7064
  %v9375 = vpop.f32.mrb[0].mxu0
  %v9376 = vadd.f32 %v5996, %v9375
  %v9377 = vpop.f32.mrb[0].mxu0
  %9378 = vmatprep.mubr.f32.mxu0 0.0
  %9379 = vmatmul.mubr.f32.gmra.mrb[0].mxu0 %v7067
  %v9380 = vpop.f32.mrb[0].mxu0
  %v9381 = vadd.f32 %v5996, %v9380
  %v9382 = vpop.f32.mrb[0].mxu0
  %9383 = vmatprep.mubr.f32.mxu0 0.0
  %9384 = vmatmul.mubr.f32.gmra.mrb[0].mxu0 %v7070
  %v9385 = vpop.f32.mrb[0].mxu0
  %v9386 = vadd.f32 %v5996, %v9385
  %v9387 = vpop.f32.mrb[0].mxu0
  %9388 = vmatprep.mubr.f32.mxu0 0.0
  %9389 = vmatmul.mubr.f32.gmra.mrb[0].mxu0 %v7073
  %v9390 = vpop.f32.mrb[0].mxu0
  %v9391 = vadd.f32 %v5996, %v9390
  %v9392 = vpop.f32.mrb[0].mxu0
  %9393 = vmatprep.mubr.f32.mxu0 0.0
  %9394 = vmatmul.mubr.f32.gmra.mrb[0].mxu0 %v7076
  %v9395 = vpop.f32.mrb[0].mxu0
  %v9396 = vadd.f32 %v5996, %v9395
  %v9397 = vpop.f32.mrb[0].mxu0
  %9398 = vmatprep.mubr.f32.mxu0 0.0
  %9399 = vmatmul.mubr.f32.gmra.mrb[0].mxu0 %v7079
  %v9400 = vpop.f32.mrb[0].mxu0
  %v9401 = vadd.f32 %v5996, %v9400
  %v9402 = vpop.f32.mrb[0].mxu0
  %9403 = vmatprep.mubr.f32.mxu0 0.0
  %9404 = vmatmul.mubr.f32.gmra.mrb[0].mxu0 %v7082
  %v9405 = vpop.f32.mrb[0].mxu0
  %v9406 = vadd.f32 %v5996, %v9405
  %v9407 = vpop.f32.mrb[0].mxu0
  %9408 = vmatprep.mubr.f32.mxu0 0.0
  %9409 = vmatmul.mubr.f32.gmra.mrb[0].mxu0 %v7085
  %v9410 = vpop.f32.mrb[0].mxu0
  %v9411 = vadd.f32 %v5996, %v9410
  %v9412 = vpop.f32.mrb[0].mxu0
  %9413 = vmatprep.mubr.f32.mxu0 0.0
  %9414 = vmatmul.mubr.f32.gmra.mrb[0].mxu0 %v7088
  %v9415 = vpop.f32.mrb[0].mxu0
  %v9416 = vadd.f32 %v5996, %v9415
  %v9417 = vpop.f32.mrb[0].mxu0
  %9418 = vmatprep.mubr.f32.mxu0 0.0
  %9419 = vmatmul.mubr.f32.gmra.mrb[0].mxu0 %v7091
  %v9420 = vpop.f32.mrb[0].mxu0
  %v9421 = vadd.f32 %v5996, %v9420
  %v9422 = vpop.f32.mrb[0].mxu0
  %9423 = vmatprep.mubr.f32.mxu0 0.0
  %9424 = vmatmul.mubr.f32.gmra.mrb[0].mxu0 %v7094
  %v9425 = vpop.f32.mrb[0].mxu0
  %v9426 = vadd.f32 %v5996, %v9425
  %v9427 = vpop.f32.mrb[0].mxu0
  %9428 = vmatprep.mubr.f32.mxu0 0.0
  %9429 = vmatmul.mubr.f32.gmra.mrb[0].mxu0 %v7097
  %v9430 = vpop.f32.mrb[0].mxu0
  %v9431 = vadd.f32 %v5996, %v9430
  %v9432 = vpop.f32.mrb[0].mxu0
  %9433 = vmatprep.mubr.f32.mxu0 0.0
  %9434 = vmatmul.mubr.f32.gmra.mrb[0].mxu0 %v7100
  %v9435 = vpop.f32.mrb[0].mxu0
  %v9436 = vadd.f32 %v5996, %v9435
  %v9437 = vpop.f32.mrb[0].mxu0
  %9438 = vmatprep.mubr.f32.mxu0 0.0
  %9439 = vmatmul.mubr.f32.gmra.mrb[0].mxu0 %v7103
  %v9440 = vpop.f32.mrb[0].mxu0
  %v9441 = vadd.f32 %v5996, %v9440
  %v9442 = vpop.f32.mrb[0].mxu0
  %9443 = vmatprep.mubr.f32.mxu0 0.0
  %9444 = vmatmul.mubr.f32.gmra.mrb[0].mxu0 %v7106
  %v9445 = vpop.f32.mrb[0].mxu0
  %v9446 = vadd.f32 %v5996, %v9445
  %v9447 = vpop.f32.mrb[0].mxu0
  %9448 = vmatprep.mubr.f32.mxu0 0.0
  %9449 = vmatmul.mubr.f32.gmra.mrb[0].mxu0 %v7109
  %v9450 = vpop.f32.mrb[0].mxu0
  %v9451 = vadd.f32 %v5996, %v9450
  %v9452 = vpop.f32.mrb[0].mxu0
  %9453 = vmatprep.mubr.f32.mxu0 0.0
  %9454 = vmatmul.mubr.f32.gmra.mrb[0].mxu0 %v7112
  %v9455 = vpop.f32.mrb[0].mxu0
  %v9456 = vadd.f32 %v5996, %v9455
  %v9457 = vpop.f32.mrb[0].mxu0
  %9458 = vmatprep.mubr.f32.mxu0 0.0
  %9459 = vmatmul.mubr.f32.gmra.mrb[0].mxu0 %v7115
  %v9460 = vpop.f32.mrb[0].mxu0
  %v9461 = vadd.f32 %v5996, %v9460
  %v9462 = vpop.f32.mrb[0].mxu0
  %9463 = vmatprep.mubr.f32.mxu0 0.0
  %9464 = vmatmul.mubr.f32.gmra.mrb[0].mxu0 %v7118
  %v9465 = vpop.f32.mrb[0].mxu0
  %v9466 = vadd.f32 %v5996, %v9465
  %v9467 = vpop.f32.mrb[0].mxu0
  %9468 = vmatprep.mubr.f32.mxu0 0.0
  %9469 = vmatmul.mubr.f32.gmra.mrb[0].mxu0 %v7121
  %v9470 = vpop.f32.mrb[0].mxu0
  %v9471 = vadd.f32 %v5996, %v9470
  %v9472 = vpop.f32.mrb[0].mxu0
  %9473 = vmatprep.mubr.f32.mxu0 0.0
  %9474 = vmatmul.mubr.f32.gmra.mrb[0].mxu0 %v7124
  %v9475 = vpop.f32.mrb[0].mxu0
  %v9476 = vadd.f32 %v5996, %v9475
  %v9477 = vpop.f32.mrb[0].mxu0
  %9478 = vmatprep.mubr.f32.mxu0 0.0
  %9479 = vmatmul.mubr.f32.gmra.mrb[0].mxu0 %v7127
  %v9480 = vpop.f32.mrb[0].mxu0
  %v9481 = vadd.f32 %v5996, %v9480
  %v9482 = vpop.f32.mrb[0].mxu0
  %9483 = vmatprep.mubr.f32.mxu0 0.0
  %9484 = vmatmul.mubr.f32.gmra.mrb[0].mxu0 %v7130
  %v9485 = vpop.f32.mrb[0].mxu0
  %v9486 = vadd.f32 %v5996, %v9485
  %v9487 = vpop.f32.mrb[0].mxu0
  %9488 = vmatprep.mubr.f32.mxu0 0.0
  %9489 = vmatmul.mubr.f32.gmra.mrb[0].mxu0 %v7133
  %v9490 = vpop.f32.mrb[0].mxu0
  %v9491 = vadd.f32 %v5996, %v9490
  %v9492 = vpop.f32.mrb[0].mxu0
  %9493 = vmatprep.mubr.f32.mxu0 0.0
  %9494 = vmatmul.mubr.f32.gmra.mrb[0].mxu0 %v7136
  %v9495 = vpop.f32.mrb[0].mxu0
  %v9496 = vadd.f32 %v5996, %v9495
  %v9497 = vpop.f32.mrb[0].mxu0
  %9498 = vmatprep.mubr.f32.mxu0 0.0
  %9499 = vmatmul.mubr.f32.gmra.mrb[0].mxu0 %v7139
  %v9500 = vpop.f32.mrb[0].mxu0
  %v9501 = vadd.f32 %v5996, %v9500
  %v9502 = vpop.f32.mrb[0].mxu0
  %9503 = vmatprep.mubr.f32.mxu0 0.0
  %9504 = vmatmul.mubr.f32.gmra.mrb[0].mxu0 %v7142
  %v9505 = vpop.f32.mrb[0].mxu0
  %v9506 = vadd.f32 %v5996, %v9505
  %v9507 = vpop.f32.mrb[0].mxu0
  %9508 = vmatprep.mubr.f32.mxu0 0.0
  %9509 = vmatmul.mubr.f32.gmra.mrb[0].mxu0 %v7145
  %v9510 = vpop.f32.mrb[0].mxu0
  %v9511 = vadd.f32 %v5996, %v9510
  %v9512 = vpop.f32.mrb[0].mxu0
  %9513 = vmatprep.mubr.f32.mxu0 0.0
  %9514 = vmatmul.mubr.f32.gmra.mrb[0].mxu0 %v7148
  %v9515 = vpop.f32.mrb[0].mxu0
  %v9516 = vadd.f32 %v5996, %v9515
  %v9517 = vpop.f32.mrb[0].mxu0
  %9518 = vmatprep.mubr.f32.mxu0 0.0
  %9519 = vmatmul.mubr.f32.gmra.mrb[0].mxu0 %v7151
  %v9520 = vpop.f32.mrb[0].mxu0
  %v9521 = vadd.f32 %v5996, %v9520
  %v9522 = vpop.f32.mrb[0].mxu0
  %9523 = vmatprep.mubr.f32.mxu0 0.0
  %9524 = vmatmul.mubr.f32.gmra.mrb[0].mxu0 %v7154
  %v9525 = vpop.f32.mrb[0].mxu0
  %v9526 = vadd.f32 %v5996, %v9525
  %v9527 = vpop.f32.mrb[0].mxu0
  %9528 = vmatprep.mubr.f32.mxu0 0.0
  %9529 = vmatmul.mubr.f32.gmra.mrb[0].mxu0 %v7157
  %v9530 = vpop.f32.mrb[0].mxu0
  %v9531 = vadd.f32 %v5996, %v9530
  %v9532 = vpop.f32.mrb[0].mxu0
  %9533 = vmatprep.mubr.f32.mxu0 0.0
  %9534 = vmatmul.mubr.f32.gmra.mrb[0].mxu0 %v7160
  %v9535 = vpop.f32.mrb[0].mxu0
  %v9536 = vadd.f32 %v5996, %v9535
  %v9537 = vpop.f32.mrb[0].mxu0
  %9538 = vmatprep.mubr.f32.mxu0 0.0
  %9539 = vmatmul.mubr.f32.gmra.mrb[0].mxu0 %v7163
  %v9540 = vpop.f32.mrb[0].mxu0
  %v9541 = vadd.f32 %v5996, %v9540
  %v9542 = vpop.f32.mrb[0].mxu0
  %9543 = vmatprep.mubr.f32.mxu0 0.0
  %9544 = vmatmul.mubr.f32.gmra.mrb[0].mxu0 %v7166
  %v9545 = vpop.f32.mrb[0].mxu0
  %v9546 = vadd.f32 %v5996, %v9545
  %v9547 = vpop.f32.mrb[0].mxu0
  %9548 = vmatprep.mubr.f32.mxu0 0.0
  %9549 = vmatmul.mubr.f32.gmra.mrb[0].mxu0 %v7169
  %v9550 = vpop.f32.mrb[0].mxu0
  %v9551 = vadd.f32 %v5996, %v9550
  %v9552 = vpop.f32.mrb[0].mxu0
  %9553 = vmatprep.mubr.f32.mxu0 0.0
  %9554 = vmatmul.mubr.f32.gmra.mrb[0].mxu0 %v7172
  %v9555 = vpop.f32.mrb[0].mxu0
  %v9556 = vadd.f32 %v5996, %v9555
  %v9557 = vpop.f32.mrb[0].mxu0
  %9558 = vmatprep.mubr.f32.mxu0 0.0
  %9559 = vmatmul.mubr.f32.gmra.mrb[0].mxu0 %v7175
  %v9560 = vpop.f32.mrb[0].mxu0
  %v9561 = vadd.f32 %v5996, %v9560
  %v9562 = vpop.f32.mrb[0].mxu0
  %9563 = vmatprep.mubr.f32.mxu0 0.0
  %9564 = vmatmul.mubr.f32.gmra.mrb[0].mxu0 %v7178
  %v9565 = vpop.f32.mrb[0].mxu0
  %v9566 = vadd.f32 %v5996, %v9565
  %v9567 = vpop.f32.mrb[0].mxu0
  %9568 = vmatprep.mubr.f32.mxu0 0.0
  %9569 = vmatmul.mubr.f32.gmra.mrb[0].mxu0 %v7181
  %v9570 = vpop.f32.mrb[0].mxu0
  %v9571 = vadd.f32 %v5996, %v9570
  %v9572 = vpop.f32.mrb[0].mxu0
  %9573 = vmatprep.mubr.f32.mxu0 0.0
  %9574 = vmatmul.mubr.f32.gmra.mrb[0].mxu0 %v7184
  %v9575 = vpop.f32.mrb[0].mxu0
  %v9576 = vadd.f32 %v5996, %v9575
  %v9577 = vpop.f32.mrb[0].mxu0
  %9578 = vmatprep.mubr.f32.mxu0 0.0
  %9579 = vmatmul.mubr.f32.gmra.mrb[0].mxu0 %v7187
  %v9580 = vpop.f32.mrb[0].mxu0
  %v9581 = vadd.f32 %v5996, %v9580
  %v9582 = vpop.f32.mrb[0].mxu0
  %9583 = vmatprep.mubr.f32.mxu0 0.0
  %9584 = vmatmul.mubr.f32.gmra.mrb[0].mxu0 %v7190
  %v9585 = vpop.f32.mrb[0].mxu0
  %v9586 = vadd.f32 %v5996, %v9585
  %v9587 = vpop.f32.mrb[0].mxu0
  %9588 = vmatprep.mubr.f32.mxu0 0.0
  %9589 = vmatmul.mubr.f32.gmra.mrb[0].mxu0 %v7193
  %v9590 = vpop.f32.mrb[0].mxu0
  %v9591 = vadd.f32 %v5996, %v9590
  %v9592 = vpop.f32.mrb[0].mxu0
  %9593 = vmatprep.mubr.f32.mxu0 0.0
  %9594 = vmatmul.mubr.f32.gmra.mrb[0].mxu0 %v7196
  %v9595 = vpop.f32.mrb[0].mxu0
  %v9596 = vadd.f32 %v5996, %v9595
  %v9597 = vpop.f32.mrb[0].mxu0
  %9598 = vmatprep.mubr.f32.mxu0 0.0
  %9599 = vmatmul.mubr.f32.gmra.mrb[0].mxu0 %v7199
  %v9600 = vpop.f32.mrb[0].mxu0
  %v9601 = vadd.f32 %v5996, %v9600
  %v9602 = vpop.f32.mrb[0].mxu0
  %9603 = vmatprep.mubr.f32.mxu0 0.0
  %9604 = vmatmul.mubr.f32.gmra.mrb[0].mxu0 %v7202
  %v9605 = vpop.f32.mrb[0].mxu0
  %v9606 = vadd.f32 %v5996, %v9605
  %v9607 = vpop.f32.mrb[0].mxu0
  %9608 = vmatprep.mubr.f32.mxu0 0.0
  %9609 = vmatmul.mubr.f32.gmra.mrb[0].mxu0 %v7205
  %v9610 = vpop.f32.mrb[0].mxu0
  %v9611 = vadd.f32 %v5996, %v9610
  %v9612 = vpop.f32.mrb[0].mxu0
  %9613 = vmatprep.mubr.f32.mxu0 0.0
  %9614 = vmatmul.mubr.f32.gmra.mrb[0].mxu0 %v7208
  %v9615 = vpop.f32.mrb[0].mxu0
  %v9616 = vadd.f32 %v5996, %v9615
  %v9617 = vpop.f32.mrb[0].mxu0
  %9618 = vmatprep.mubr.f32.mxu0 0.0
  %9619 = vmatmul.mubr.f32.gmra.mrb[0].mxu0 %v7211
  %v9620 = vpop.f32.mrb[0].mxu0
  %v9621 = vadd.f32 %v5996, %v9620
  %v9622 = vpop.f32.mrb[0].mxu0
  %9623 = vmatprep.mubr.f32.mxu0 0.0
  %9624 = vmatmul.mubr.f32.gmra.mrb[0].mxu0 %v7214
  %v9625 = vpop.f32.mrb[0].mxu0
  %v9626 = vadd.f32 %v5996, %v9625
  %v9627 = vpop.f32.mrb[0].mxu0
  %9628 = vmatprep.mubr.f32.mxu0 0.0
  %9629 = vmatmul.mubr.f32.gmra.mrb[0].mxu0 %v7217
  %v9630 = vpop.f32.mrb[0].mxu0
  %v9631 = vadd.f32 %v5996, %v9630
  %v9632 = vpop.f32.mrb[0].mxu0
  %9633 = vmatprep.mubr.f32.mxu0 0.0
  %9634 = vmatmul.mubr.f32.gmra.mrb[0].mxu0 %v7220
  %v9635 = vpop.f32.mrb[0].mxu0
  %v9636 = vadd.f32 %v5996, %v9635
  %v9637 = vpop.f32.mrb[0].mxu0
  %9638 = vmatprep.mubr.f32.mxu0 0.0
  %9639 = vmatmul.mubr.f32.gmra.mrb[0].mxu0 %v7223
  %v9640 = vpop.f32.mrb[0].mxu0
  %v9641 = vadd.f32 %v5996, %v9640
  %v9642 = vpop.f32.mrb[0].mxu0
  %9643 = vmatprep.mubr.f32.mxu0 0.0
  %9644 = vmatmul.mubr.f32.gmra.mrb[0].mxu0 %v7226
  %v9645 = vpop.f32.mrb[0].mxu0
  %v9646 = vadd.f32 %v5996, %v9645
  %v9647 = vpop.f32.mrb[0].mxu0
  %9648 = vmatprep.mubr.f32.mxu0 0.0
  %9649 = vmatmul.mubr.f32.gmra.mrb[0].mxu0 %v7229
  %v9650 = vpop.f32.mrb[0].mxu0
  %v9651 = vadd.f32 %v5996, %v9650
  %v9652 = vpop.f32.mrb[0].mxu0
  %9653 = vmatprep.mubr.f32.mxu0 0.0
  %9654 = vmatmul.mubr.f32.gmra.mrb[0].mxu0 %v7232
  %v9655 = vpop.f32.mrb[0].mxu0
  %v9656 = vadd.f32 %v5996, %v9655
  %v9657 = vpop.f32.mrb[0].mxu0
  %9658 = vmatprep.mubr.f32.mxu0 0.0
  %9659 = vmatmul.mubr.f32.gmra.mrb[0].mxu0 %v7235
  %v9660 = vpop.f32.mrb[0].mxu0
  %v9661 = vadd.f32 %v5996, %v9660
  %v9662 = vpop.f32.mrb[0].mxu0
  %9663 = vmatprep.mubr.f32.mxu0 0.0
  %9664 = vmatmul.mubr.f32.gmra.mrb[0].mxu0 %v7238
  %v9665 = vpop.f32.mrb[0].mxu0
  %v9666 = vadd.f32 %v5996, %v9665
  %v9667 = vpop.f32.mrb[0].mxu0
  %9668 = vmatprep.mubr.f32.mxu0 0.0
  %9669 = vmatmul.mubr.f32.gmra.mrb[0].mxu0 %v7241
  %v9670 = vpop.f32.mrb[0].mxu0
  %v9671 = vadd.f32 %v5996, %v9670
  %v9672 = vpop.f32.mrb[0].mxu0
  %9673 = vmatprep.mubr.f32.mxu0 0.0
  %9674 = vmatmul.mubr.f32.gmra.mrb[0].mxu0 %v7244
  %v9675 = vpop.f32.mrb[0].mxu0
  %v9676 = vadd.f32 %v5996, %v9675
  %v9677 = vpop.f32.mrb[0].mxu0
  %9678 = vmatprep.mubr.f32.mxu0 0.0
  %9679 = vmatmul.mubr.f32.gmra.mrb[0].mxu0 %v7247
  %v9680 = vpop.f32.mrb[0].mxu0
  %v9681 = vadd.f32 %v5996, %v9680
  %v9682 = vpop.f32.mrb[0].mxu0
  %9683 = vmatprep.mubr.f32.mxu0 0.0
  %9684 = vmatmul.mubr.f32.gmra.mrb[0].mxu0 %v7250
  %v9685 = vpop.f32.mrb[0].mxu0
  %v9686 = vadd.f32 %v5996, %v9685
  %v9687 = vpop.f32.mrb[0].mxu0
  %9688 = vmatprep.mubr.f32.mxu0 0.0
  %9689 = vmatmul.mubr.f32.gmra.mrb[0].mxu0 %v7253
  %v9690 = vpop.f32.mrb[0].mxu0
  %v9691 = vadd.f32 %v5996, %v9690
  %v9692 = vpop.f32.mrb[0].mxu0
  %9693 = vmatprep.mubr.f32.mxu0 0.0
  %9694 = vmatmul.mubr.f32.gmra.mrb[0].mxu0 %v7256
  %v9695 = vpop.f32.mrb[0].mxu0
  %v9696 = vadd.f32 %v5996, %v9695
  %v9697 = vpop.f32.mrb[0].mxu0
  %9698 = vmatprep.mubr.f32.mxu0 0.0
  %9699 = vmatmul.mubr.f32.gmra.mrb[0].mxu0 %v7259
  %v9700 = vpop.f32.mrb[0].mxu0
  %v9701 = vadd.f32 %v5996, %v9700
  %v9702 = vpop.f32.mrb[0].mxu0
  %9703 = vmatprep.mubr.f32.mxu0 0.0
  %9704 = vmatmul.mubr.f32.gmra.mrb[0].mxu0 %v7262
  %v9705 = vpop.f32.mrb[0].mxu0
  %v9706 = vadd.f32 %v5996, %v9705
  %v9707 = vpop.f32.mrb[0].mxu0
  %9708 = vmatprep.mubr.f32.mxu0 0.0
  %9709 = vmatmul.mubr.f32.gmra.mrb[0].mxu0 %v7265
  %v9710 = vpop.f32.mrb[0].mxu0
  %v9711 = vadd.f32 %v5996, %v9710
  %v9712 = vpop.f32.mrb[0].mxu0
  %9713 = vmatprep.mubr.f32.mxu0 0.0
  %9714 = vmatmul.mubr.f32.gmra.mrb[0].mxu0 %v7268
  %v9715 = vpop.f32.mrb[0].mxu0
  %v9716 = vadd.f32 %v5996, %v9715
  %v9717 = vpop.f32.mrb[0].mxu0
  %9718 = vmatprep.mubr.f32.mxu0 0.0
  %9719 = vmatmul.mubr.f32.gmra.mrb[0].mxu0 %v7271
  %v9720 = vpop.f32.mrb[0].mxu0
  %v9721 = vadd.f32 %v5996, %v9720
  %v9722 = vpop.f32.mrb[0].mxu0
  %9723 = vmatprep.mubr.f32.mxu0 0.0
  %9724 = vmatmul.mubr.f32.gmra.mrb[0].mxu0 %v7274
  %v9725 = vpop.f32.mrb[0].mxu0
  %v9726 = vadd.f32 %v5996, %v9725
  %v9727 = vpop.f32.mrb[0].mxu0
  %9728 = vmatprep.mubr.f32.mxu0 0.0
  %9729 = vmatmul.mubr.f32.gmra.mrb[0].mxu0 %v7277
  %v9730 = vpop.f32.mrb[0].mxu0
  %v9731 = vadd.f32 %v5996, %v9730
  %v9732 = vpop.f32.mrb[0].mxu0
  %9733 = vmatprep.mubr.f32.mxu0 0.0
  %9734 = vmatmul.mubr.f32.gmra.mrb[0].mxu0 %v7280
  %v9735 = vpop.f32.mrb[0].mxu0
  %v9736 = vadd.f32 %v5996, %v9735
  %v9737 = vpop.f32.mrb[0].mxu0
  %9738 = vmatprep.mubr.f32.mxu0 0.0
  %9739 = vmatmul.mubr.f32.gmra.mrb[0].mxu0 %v7283
  %v9740 = vpop.f32.mrb[0].mxu0
  %v9741 = vadd.f32 %v5996, %v9740
  %v9742 = vpop.f32.mrb[0].mxu0
  %9743 = vmatprep.mubr.f32.mxu0 0.0
  %9744 = vmatmul.mubr.f32.gmra.mrb[0].mxu0 %v7286
  %v9745 = vpop.f32.mrb[0].mxu0
  %v9746 = vadd.f32 %v5996, %v9745
  %v9747 = vpop.f32.mrb[0].mxu0
  %9748 = vmatprep.mubr.f32.mxu0 0.0
  %9749 = vmatmul.mubr.f32.gmra.mrb[0].mxu0 %v7289
  %v9750 = vpop.f32.mrb[0].mxu0
  %v9751 = vadd.f32 %v5996, %v9750
  %v9752 = vpop.f32.mrb[0].mxu0
  %9753 = vmatprep.mubr.f32.mxu0 0.0
  %9754 = vmatmul.mubr.f32.gmra.mrb[0].mxu0 %v7292
  %v9755 = vpop.f32.mrb[0].mxu0
  %v9756 = vadd.f32 %v5996, %v9755
  %v9757 = vpop.f32.mrb[0].mxu0
  %9758 = vmatprep.mubr.f32.mxu0 0.0
  %9759 = vmatmul.mubr.f32.gmra.mrb[0].mxu0 %v7295
  %v9760 = vpop.f32.mrb[0].mxu0
  %v9761 = vadd.f32 %v5996, %v9760
  %v9762 = vpop.f32.mrb[0].mxu0
  %9763 = vmatprep.mubr.f32.mxu0 0.0
  %9764 = vmatmul.mubr.f32.gmra.mrb[0].mxu0 %v7298
  %v9765 = vpop.f32.mrb[0].mxu0
  %v9766 = vadd.f32 %v5996, %v9765
  %v9767 = vpop.f32.mrb[0].mxu0
  %9768 = vmatprep.mubr.f32.mxu0 0.0
  %9769 = vmatmul.mubr.f32.gmra.mrb[0].mxu0 %v7301
  %v9770 = vpop.f32.mrb[0].mxu0
  %v9771 = vadd.f32 %v5996, %v9770
  %v9772 = vpop.f32.mrb[0].mxu0
  %9773 = vmatprep.mubr.f32.mxu0 0.0
  %9774 = vmatmul.mubr.f32.gmra.mrb[0].mxu0 %v7304
  %v9775 = vpop.f32.mrb[0].mxu0
  %v9776 = vadd.f32 %v5996, %v9775
  %v9777 = vpop.f32.mrb[0].mxu0
  %9778 = vmatprep.mubr.f32.mxu0 0.0
  %9779 = vmatmul.mubr.f32.gmra.mrb[0].mxu0 %v7307
  %v9780 = vpop.f32.mrb[0].mxu0
  %v9781 = vadd.f32 %v5996, %v9780
  %v9782 = vpop.f32.mrb[0].mxu0
  %9783 = vmatprep.mubr.f32.mxu0 0.0
  %9784 = vmatmul.mubr.f32.gmra.mrb[0].mxu0 %v7310
  %v9785 = vpop.f32.mrb[0].mxu0
  %v9786 = vadd.f32 %v5996, %v9785
  %v9787 = vpop.f32.mrb[0].mxu0
  %9788 = vmatprep.mubr.f32.mxu0 0.0
  %9789 = vmatmul.mubr.f32.gmra.mrb[0].mxu0 %v7313
  %v9790 = vpop.f32.mrb[0].mxu0
  %v9791 = vadd.f32 %v5996, %v9790
  %v9792 = vpop.f32.mrb[0].mxu0
  %9793 = vmatprep.mubr.f32.mxu0 0.0
  %9794 = vmatmul.mubr.f32.gmra.mrb[0].mxu0 %v7316
  %v9795 = vpop.f32.mrb[0].mxu0
  %v9796 = vadd.f32 %v5996, %v9795
  %v9797 = vpop.f32.mrb[0].mxu0
  %9798 = vmatprep.mubr.f32.mxu0 0.0
  %9799 = vmatmul.mubr.f32.gmra.mrb[0].mxu0 %v7319
  %v9800 = vpop.f32.mrb[0].mxu0
  %v9801 = vadd.f32 %v5996, %v9800
  %v9802 = vpop.f32.mrb[0].mxu0
  %9803 = vmatprep.mubr.f32.mxu0 0.0
  %9804 = vmatmul.mubr.f32.gmra.mrb[0].mxu0 %v7322
  %v9805 = vpop.f32.mrb[0].mxu0
  %v9806 = vadd.f32 %v5996, %v9805
  %v9807 = vpop.f32.mrb[0].mxu0
  %9808 = vmatprep.mubr.f32.mxu0 0.0
  %9809 = vmatmul.mubr.f32.gmra.mrb[0].mxu0 %v7325
  %v9810 = vpop.f32.mrb[0].mxu0
  %v9811 = vadd.f32 %v5996, %v9810
  %v9812 = vpop.f32.mrb[0].mxu0
  %9813 = vmatprep.mubr.f32.mxu0 0.0
  %9814 = vmatmul.mubr.f32.gmra.mrb[0].mxu0 %v7328
  %v9815 = vpop.f32.mrb[0].mxu0
  %v9816 = vadd.f32 %v5996, %v9815
  %v9817 = vpop.f32.mrb[0].mxu0
  %9818 = vmatprep.mubr.f32.mxu0 0.0
  %9819 = vmatmul.mubr.f32.gmra.mrb[0].mxu0 %v7331
  %v9820 = vpop.f32.mrb[0].mxu0
  %v9821 = vadd.f32 %v5996, %v9820
  %v9822 = vpop.f32.mrb[0].mxu0
  %9823 = vmatprep.mubr.f32.mxu0 0.0
  %9824 = vmatmul.mubr.f32.gmra.mrb[0].mxu0 %v7334
  %v9825 = vpop.f32.mrb[0].mxu0
  %v9826 = vadd.f32 %v5996, %v9825
  %v9827 = vpop.f32.mrb[0].mxu0
  %9828 = vmatprep.mubr.f32.mxu0 0.0
  %9829 = vmatmul.mubr.f32.gmra.mrb[0].mxu0 %v7337
  %v9830 = vpop.f32.mrb[0].mxu0
  %v9831 = vadd.f32 %v5996, %v9830
  %v9832 = vpop.f32.mrb[0].mxu0
  %9833 = vmatprep.mubr.f32.mxu0 0.0
  %9834 = vmatmul.mubr.f32.gmra.mrb[0].mxu0 %v7340
  %v9835 = vpop.f32.mrb[0].mxu0
  %v9836 = vadd.f32 %v5996, %v9835
  %v9837 = vpop.f32.mrb[0].mxu0
  %9838 = vmatprep.mubr.f32.mxu0 0.0
  %9839 = vmatmul.mubr.f32.gmra.mrb[0].mxu0 %v7343
  %v9840 = vpop.f32.mrb[0].mxu0
  %v9841 = vadd.f32 %v5996, %v9840
  %v9842 = vpop.f32.mrb[0].mxu0
  %9843 = vmatprep.mubr.f32.mxu0 0.0
  %9844 = vmatmul.mubr.f32.gmra.mrb[0].mxu0 %v7346
  %v9845 = vpop.f32.mrb[0].mxu0
  %v9846 = vadd.f32 %v5996, %v9845
  %v9847 = vpop.f32.mrb[0].mxu0
  %9848 = vmatprep.mubr.f32.mxu0 0.0
  %9849 = vmatmul.mubr.f32.gmra.mrb[0].mxu0 %v7349
  %v9850 = vpop.f32.mrb[0].mxu0
  %v9851 = vadd.f32 %v5996, %v9850
  %v9852 = vpop.f32.mrb[0].mxu0
  %9853 = vmatprep.mubr.f32.mxu0 0.0
  %9854 = vmatmul.mubr.f32.gmra.mrb[0].mxu0 %v7352
  %v9855 = vpop.f32.mrb[0].mxu0
  %v9856 = vadd.f32 %v5996, %v9855
  %v9857 = vpop.f32.mrb[0].mxu0
  %9858 = vmatprep.mubr.f32.mxu0 0.0
  %9859 = vmatmul.mubr.f32.gmra.mrb[0].mxu0 %v7355
  %v9860 = vpop.f32.mrb[0].mxu0
  %v9861 = vadd.f32 %v5996, %v9860
  %v9862 = vpop.f32.mrb[0].mxu0
  %9863 = vmatprep.mubr.f32.mxu0 0.0
  %9864 = vmatmul.mubr.f32.gmra.mrb[0].mxu0 %v7358
  %v9865 = vpop.f32.mrb[0].mxu0
  %v9866 = vadd.f32 %v5996, %v9865
  %v9867 = vpop.f32.mrb[0].mxu0
  %9868 = vmatprep.mubr.f32.mxu0 0.0
  %9869 = vmatmul.mubr.f32.gmra.mrb[0].mxu0 %v7361
  %v9870 = vpop.f32.mrb[0].mxu0
  %v9871 = vadd.f32 %v5996, %v9870
  %v9872 = vpop.f32.mrb[0].mxu0
  %9873 = vmatprep.mubr.f32.mxu0 0.0
  %9874 = vmatmul.mubr.f32.gmra.mrb[0].mxu0 %v7364
  %v9875 = vpop.f32.mrb[0].mxu0
  %v9876 = vadd.f32 %v5996, %v9875
  %v9877 = vpop.f32.mrb[0].mxu0
  %9878 = vmatprep.mubr.f32.mxu0 0.0
  %9879 = vmatmul.mubr.f32.gmra.mrb[0].mxu0 %v7367
  %v9880 = vpop.f32.mrb[0].mxu0
  %v9881 = vadd.f32 %v5996, %v9880
  %v9882 = vpop.f32.mrb[0].mxu0
  %9883 = vmatprep.mubr.f32.mxu0 0.0
  %9884 = vmatmul.mubr.f32.gmra.mrb[0].mxu0 %v7370
  %v9885 = vpop.f32.mrb[0].mxu0
  %v9886 = vadd.f32 %v5996, %v9885
  %v9887 = vpop.f32.mrb[0].mxu0
  %9888 = vmatprep.mubr.f32.mxu0 0.0
  %9889 = vmatmul.mubr.f32.gmra.mrb[0].mxu0 %v7373
  %v9890 = vpop.f32.mrb[0].mxu0
  %v9891 = vadd.f32 %v5996, %v9890
  %v9892 = vpop.f32.mrb[0].mxu0
  %9893 = vmatprep.mubr.f32.mxu0 0.0
  %9894 = vmatmul.mubr.f32.gmra.mrb[0].mxu0 %v7376
  %v9895 = vpop.f32.mrb[0].mxu0
  %v9896 = vadd.f32 %v5996, %v9895
  %v9897 = vpop.f32.mrb[0].mxu0
  %9898 = vmatprep.mubr.f32.mxu0 0.0
  %9899 = vmatmul.mubr.f32.gmra.mrb[0].mxu0 %v7379
  %v9900 = vpop.f32.mrb[0].mxu0
  %v9901 = vadd.f32 %v5996, %v9900
  %v9902 = vpop.f32.mrb[0].mxu0
  %9903 = vmatprep.mubr.f32.mxu0 0.0
  %9904 = vmatmul.mubr.f32.gmra.mrb[0].mxu0 %v7382
  %v9905 = vpop.f32.mrb[0].mxu0
  %v9906 = vadd.f32 %v5996, %v9905
  %v9907 = vpop.f32.mrb[0].mxu0
  %9908 = vmatprep.mubr.f32.mxu0 0.0
  %9909 = vmatmul.mubr.f32.gmra.mrb[0].mxu0 %v7385
  %v9910 = vpop.f32.mrb[0].mxu0
  %v9911 = vadd.f32 %v5996, %v9910
  %v9912 = vpop.f32.mrb[0].mxu0
  %9913 = vmatprep.mubr.f32.mxu0 0.0
  %9914 = vmatmul.mubr.f32.gmra.mrb[0].mxu0 %v7388
  %v9915 = vpop.f32.mrb[0].mxu0
  %v9916 = vadd.f32 %v5996, %v9915
  %v9917 = vpop.f32.mrb[0].mxu0
  %9918 = vmatprep.mubr.f32.mxu0 0.0
  %9919 = vmatmul.mubr.f32.gmra.mrb[0].mxu0 %v7391
  %v9920 = vpop.f32.mrb[0].mxu0
  %v9921 = vadd.f32 %v5996, %v9920
  %v9922 = vpop.f32.mrb[0].mxu0
  %9923 = vmatprep.mubr.f32.mxu0 0.0
  %9924 = vmatmul.mubr.f32.gmra.mrb[0].mxu0 %v7394
  %v9925 = vpop.f32.mrb[0].mxu0
  %v9926 = vadd.f32 %v5996, %v9925
  %v9927 = vpop.f32.mrb[0].mxu0
  %9928 = vmatprep.mubr.f32.mxu0 0.0
  %9929 = vmatmul.mubr.f32.gmra.mrb[0].mxu0 %v7397
  %v9930 = vpop.f32.mrb[0].mxu0
  %v9931 = vadd.f32 %v5996, %v9930
  %v9932 = vpop.f32.mrb[0].mxu0
  %9933 = vmatprep.mubr.f32.mxu0 0.0
  %9934 = vmatmul.mubr.f32.gmra.mrb[0].mxu0 %v7400
  %v9935 = vpop.f32.mrb[0].mxu0
  %v9936 = vadd.f32 %v5996, %v9935
  %v9937 = vpop.f32.mrb[0].mxu0
  %9938 = vmatprep.mubr.f32.mxu0 0.0
  %9939 = vmatmul.mubr.f32.gmra.mrb[0].mxu0 %v7403
  %v9940 = vpop.f32.mrb[0].mxu0
  %v9941 = vadd.f32 %v5996, %v9940
  %v9942 = vpop.f32.mrb[0].mxu0
  %9943 = vmatprep.mubr.f32.mxu0 0.0
  %9944 = vmatmul.mubr.f32.gmra.mrb[0].mxu0 %v7406
  %v9945 = vpop.f32.mrb[0].mxu0
  %v9946 = vadd.f32 %v5996, %v9945
  %v9947 = vpop.f32.mrb[0].mxu0
  %9948 = vmatprep.mubr.f32.mxu0 0.0
  %9949 = vmatmul.mubr.f32.gmra.mrb[0].mxu0 %v7409
  %v9950 = vpop.f32.mrb[0].mxu0
  %v9951 = vadd.f32 %v5996, %v9950
  %v9952 = vpop.f32.mrb[0].mxu0
  %9953 = vmatprep.mubr.f32.mxu0 0.0
  %9954 = vmatmul.mubr.f32.gmra.mrb[0].mxu0 %v7412
  %v9955 = vpop.f32.mrb[0].mxu0
  %v9956 = vadd.f32 %v5996, %v9955
  %v9957 = vpop.f32.mrb[0].mxu0
  %9958 = vmatprep.mubr.f32.mxu0 0.0
  %9959 = vmatmul.mubr.f32.gmra.mrb[0].mxu0 %v7415
  %v9960 = vpop.f32.mrb[0].mxu0
  %v9961 = vadd.f32 %v5996, %v9960
  %v9962 = vpop.f32.mrb[0].mxu0
  %9963 = vmatprep.mubr.f32.mxu0 0.0
  %9964 = vmatmul.mubr.f32.gmra.mrb[0].mxu0 %v7418
  %v9965 = vpop.f32.mrb[0].mxu0
  %v9966 = vadd.f32 %v5996, %v9965
  %v9967 = vpop.f32.mrb[0].mxu0
  %9968 = vmatprep.mubr.f32.mxu0 0.0
  %9969 = vmatmul.mubr.f32.gmra.mrb[0].mxu0 %v7421
  %v9970 = vpop.f32.mrb[0].mxu0
  %v9971 = vadd.f32 %v5996, %v9970
  %v9972 = vpop.f32.mrb[0].mxu0
  %9973 = vmatprep.mubr.f32.mxu0 0.0
  %9974 = vmatmul.mubr.f32.gmra.mrb[0].mxu0 %v7424
  %v9975 = vpop.f32.mrb[0].mxu0
  %v9976 = vadd.f32 %v5996, %v9975
  %v9977 = vpop.f32.mrb[0].mxu0
  %9978 = vmatprep.mubr.f32.mxu0 0.0
  %9979 = vmatmul.mubr.f32.gmra.mrb[0].mxu0 %v7427
  %v9980 = vpop.f32.mrb[0].mxu0
  %v9981 = vadd.f32 %v5996, %v9980
  %v9982 = vpop.f32.mrb[0].mxu0
  %9983 = vmatprep.mubr.f32.mxu0 0.0
  %9984 = vmatmul.mubr.f32.gmra.mrb[0].mxu0 %v7430
  %v9985 = vpop.f32.mrb[0].mxu0
  %v9986 = vadd.f32 %v5996, %v9985
  %v9987 = vpop.f32.mrb[0].mxu0
  %9988 = vmatprep.mubr.f32.mxu0 0.0
  %9989 = vmatmul.mubr.f32.gmra.mrb[0].mxu0 %v7433
  %v9990 = vpop.f32.mrb[0].mxu0
  %v9991 = vadd.f32 %v5996, %v9990
  %v9992 = vpop.f32.mrb[0].mxu0
  %9993 = vmatprep.mubr.f32.mxu0 0.0
  %9994 = vmatmul.mubr.f32.gmra.mrb[0].mxu0 %v7436
  %v9995 = vpop.f32.mrb[0].mxu0
  %v9996 = vadd.f32 %v5996, %v9995
  %v9997 = vpop.f32.mrb[0].mxu0
  %9998 = vmatprep.mubr.f32.mxu0 0.0
  %9999 = vmatmul.mubr.f32.gmra.mrb[0].mxu0 %v7439
  %v10000 = vpop.f32.mrb[0].mxu0
  %v10001 = vadd.f32 %v5996, %v10000
  %v10002 = vpop.f32.mrb[0].mxu0
  %10003 = vmatprep.mubr.f32.mxu0 0.0
  %10004 = vmatmul.mubr.f32.gmra.mrb[0].mxu0 %v7442
  %v10005 = vpop.f32.mrb[0].mxu0
  %v10006 = vadd.f32 %v5996, %v10005
  %v10007 = vpop.f32.mrb[0].mxu0
  %10008 = vmatprep.mubr.f32.mxu0 0.0
  %10009 = vmatmul.mubr.f32.gmra.mrb[0].mxu0 %v7445
  %v10010 = vpop.f32.mrb[0].mxu0
  %v10011 = vadd.f32 %v5996, %v10010
  %v10012 = vpop.f32.mrb[0].mxu0
  %10013 = vmatprep.mubr.f32.mxu0 0.0
  %10014 = vmatmul.mubr.f32.gmra.mrb[0].mxu0 %v7448
  %v10015 = vpop.f32.mrb[0].mxu0
  %v10016 = vadd.f32 %v5996, %v10015
  %v10017 = vpop.f32.mrb[0].mxu0
  %10018 = vmatprep.mubr.f32.mxu0 0.0
  %10019 = vmatmul.mubr.f32.gmra.mrb[0].mxu0 %v7451
  %v10020 = vpop.f32.mrb[0].mxu0
  %v10021 = vadd.f32 %v5996, %v10020
  %v10022 = vpop.f32.mrb[0].mxu0
  %10023 = vmatprep.mubr.f32.mxu0 0.0
  %10024 = vmatmul.mubr.f32.gmra.mrb[0].mxu0 %v7454
  %v10025 = vpop.f32.mrb[0].mxu0
  %v10026 = vadd.f32 %v5996, %v10025
  %v10027 = vpop.f32.mrb[0].mxu0
  %10028 = vmatprep.mubr.f32.mxu0 0.0
  %10029 = vmatmul.mubr.f32.gmra.mrb[0].mxu0 %v7457
  %v10030 = vpop.f32.mrb[0].mxu0
  %v10031 = vadd.f32 %v5996, %v10030
  %v10032 = vpop.f32.mrb[0].mxu0
  %10033 = vmatprep.mubr.f32.mxu0 0.0
  %10034 = vmatmul.mubr.f32.gmra.mrb[0].mxu0 %v7460
  %v10035 = vpop.f32.mrb[0].mxu0
  %v10036 = vadd.f32 %v5996, %v10035
  %v10037 = vpop.f32.mrb[0].mxu0
  %10038 = vmatprep.mubr.f32.mxu0 0.0
  %10039 = vmatmul.mubr.f32.gmra.mrb[0].mxu0 %v7463
  %v10040 = vpop.f32.mrb[0].mxu0
  %v10041 = vadd.f32 %v5996, %v10040
  %v10042 = vpop.f32.mrb[0].mxu0
  %10043 = vmatprep.mubr.f32.mxu0 0.0
  %10044 = vmatmul.mubr.f32.gmra.mrb[0].mxu0 %v7466
  %v10045 = vpop.f32.mrb[0].mxu0
  %v10046 = vadd.f32 %v5996, %v10045
  %v10047 = vpop.f32.mrb[0].mxu0
  %10048 = vmatprep.mubr.f32.mxu0 0.0
  %10049 = vmatmul.mubr.f32.gmra.mrb[0].mxu0 %v7469
  %v10050 = vpop.f32.mrb[0].mxu0
  %v10051 = vadd.f32 %v5996, %v10050
  %v10052 = vpop.f32.mrb[0].mxu0
  %10053 = vmatprep.mubr.f32.mxu0 0.0
  %10054 = vmatmul.mubr.f32.gmra.mrb[0].mxu0 %v7472
  %v10055 = vpop.f32.mrb[0].mxu0
  %v10056 = vadd.f32 %v5996, %v10055
  %v10057 = vpop.f32.mrb[0].mxu0
  %10058 = vmatprep.mubr.f32.mxu0 0.0
  %10059 = vmatmul.mubr.f32.gmra.mrb[0].mxu0 %v7475
  %v10060 = vpop.f32.mrb[0].mxu0
  %v10061 = vadd.f32 %v5996, %v10060
  %v10062 = vpop.f32.mrb[0].mxu0
  %10063 = vmatprep.mubr.f32.mxu0 0.0
  %10064 = vmatmul.mubr.f32.gmra.mrb[0].mxu0 %v7478
  %v10065 = vpop.f32.mrb[0].mxu0
  %v10066 = vadd.f32 %v5996, %v10065
  %v10067 = vpop.f32.mrb[0].mxu0
  %10068 = vmatprep.mubr.f32.mxu0 0.0
  %10069 = vmatmul.mubr.f32.gmra.mrb[0].mxu0 %v7481
  %v10070 = vpop.f32.mrb[0].mxu0
  %v10071 = vadd.f32 %v5996, %v10070
  %v10072 = vpop.f32.mrb[0].mxu0
  %10073 = vmatprep.mubr.f32.mxu0 0.0
  %10074 = vmatmul.mubr.f32.gmra.mrb[0].mxu0 %v7484
  %v10075 = vpop.f32.mrb[0].mxu0
  %v10076 = vadd.f32 %v5996, %v10075
  %v10077 = vpop.f32.mrb[0].mxu0
  %10078 = vmatprep.mubr.f32.mxu0 0.0
  %10079 = vmatmul.mubr.f32.gmra.mrb[0].mxu0 %v7487
  %v10080 = vpop.f32.mrb[0].mxu0
  %v10081 = vadd.f32 %v5996, %v10080
  %v10082 = vpop.f32.mrb[0].mxu0
  %10083 = vmatprep.mubr.f32.mxu0 0.0
  %10084 = vmatmul.mubr.f32.gmra.mrb[0].mxu0 %v7490
  %v10085 = vpop.f32.mrb[0].mxu0
  %v10086 = vadd.f32 %v5996, %v10085
  %v10087 = vpop.f32.mrb[0].mxu0
  %10088 = vmatprep.mubr.f32.mxu0 0.0
  %10089 = vmatmul.mubr.f32.gmra.mrb[0].mxu0 %v7493
  %v10090 = vpop.f32.mrb[0].mxu0
  %v10091 = vadd.f32 %v5996, %v10090
  %v10092 = vpop.f32.mrb[0].mxu0
  %10093 = vmatprep.mubr.f32.mxu0 0.0
  %10094 = vmatmul.mubr.f32.gmra.mrb[0].mxu0 %v7496
  %v10095 = vpop.f32.mrb[0].mxu0
  %v10096 = vadd.f32 %v5996, %v10095
  %v10097 = vpop.f32.mrb[0].mxu0
  %10098 = vmatprep.mubr.f32.mxu0 0.0
  %10099 = vmatmul.mubr.f32.gmra.mrb[0].mxu0 %v7499
  %v10100 = vpop.f32.mrb[0].mxu0
  %v10101 = vadd.f32 %v5996, %v10100
  %v10102 = vpop.f32.mrb[0].mxu0
  %10103 = vmatprep.mubr.f32.mxu0 0.0
  %10104 = vmatmul.mubr.f32.gmra.mrb[0].mxu0 %v7502
  %v10105 = vpop.f32.mrb[0].mxu0
  %v10106 = vadd.f32 %v5996, %v10105
  %v10107 = vpop.f32.mrb[0].mxu0
  %10108 = vmatprep.mubr.f32.mxu0 0.0
  %10109 = vmatmul.mubr.f32.gmra.mrb[0].mxu0 %v7505
  %v10110 = vpop.f32.mrb[0].mxu0
  %v10111 = vadd.f32 %v5996, %v10110
  %v10112 = vpop.f32.mrb[0].mxu0
  %10113 = vmatprep.mubr.f32.mxu0 0.0
  %10114 = vmatmul.mubr.f32.gmra.mrb[0].mxu0 %v7508
  %v10115 = vpop.f32.mrb[0].mxu0
  %v10116 = vadd.f32 %v5996, %v10115
  %v10117 = vpop.f32.mrb[0].mxu0
  %10118 = vmatprep.mubr.f32.mxu0 0.0
  %10119 = vmatmul.mubr.f32.gmra.mrb[0].mxu0 %v7511
  %v10120 = vpop.f32.mrb[0].mxu0
  %v10121 = vadd.f32 %v5996, %v10120
  %v10122 = vpop.f32.mrb[0].mxu0
  %10123 = vmatprep.mubr.f32.mxu0 0.0
  %10124 = vmatmul.mubr.f32.gmra.mrb[0].mxu0 %v7514
  %v10125 = vpop.f32.mrb[0].mxu0
  %v10126 = vadd.f32 %v5996, %v10125
  %v10127 = vpop.f32.mrb[0].mxu0
  %10128 = vmatprep.mubr.f32.mxu0 0.0
  %10129 = vmatmul.mubr.f32.gmra.mrb[0].mxu0 %v7517
  %v10130 = vpop.f32.mrb[0].mxu0
  %v10131 = vadd.f32 %v5996, %v10130
  %v10132 = vpop.f32.mrb[0].mxu0
  %10133 = vmatprep.mubr.f32.mxu0 0.0
  %10134 = vmatmul.mubr.f32.gmra.mrb[0].mxu0 %v7520
  %v10135 = vpop.f32.mrb[0].mxu0
  %v10136 = vadd.f32 %v5996, %v10135
  %v10137 = vpop.f32.mrb[0].mxu0
  %10138 = vmatprep.mubr.f32.mxu0 0.0
  %10139 = vmatmul.mubr.f32.gmra.mrb[0].mxu0 %v7523
  %v10140 = vpop.f32.mrb[0].mxu0
  %v10141 = vadd.f32 %v5996, %v10140
  %v10142 = vpop.f32.mrb[0].mxu0
  %10143 = vmatprep.mubr.f32.mxu0 0.0
  %10144 = vmatmul.mubr.f32.gmra.mrb[0].mxu0 %v7526
  %v10145 = vpop.f32.mrb[0].mxu0
  %v10146 = vadd.f32 %v5996, %v10145
  %v10147 = vpop.f32.mrb[0].mxu0
  %10148 = vmatprep.mubr.f32.mxu0 0.0
  %10149 = vmatmul.mubr.f32.gmra.mrb[0].mxu0 %v7529
  %v10150 = vpop.f32.mrb[0].mxu0
  %v10151 = vadd.f32 %v5996, %v10150
  %v10152 = vpop.f32.mrb[0].mxu0
  %10153 = vmatprep.mubr.f32.mxu0 0.0
  %10154 = vmatmul.mubr.f32.gmra.mrb[0].mxu0 %v7532
  %v10155 = vpop.f32.mrb[0].mxu0
  %v10156 = vadd.f32 %v5996, %v10155
  %v10157 = vpop.f32.mrb[0].mxu0
  %10158 = vdwg.mxu0
  %v10159 = vmax.f32 %v7601, 0.0
  %v10160 = vmax.f32 %v7606, 0.0
  %v10161 = vmax.f32 %v7611, 0.0
  %v10162 = vmax.f32 %v7616, 0.0
  %v10163 = vmax.f32 %v7621, 0.0
  %v10164 = vmax.f32 %v7626, 0.0
  %v10165 = vmax.f32 %v7631, 0.0
  %v10166 = vmax.f32 %v7636, 0.0
  %v10167 = vmax.f32 %v7641, 0.0
  %v10168 = vmax.f32 %v7646, 0.0
  %v10169 = vmax.f32 %v7651, 0.0
  %v10170 = vmax.f32 %v7656, 0.0
  %v10171 = vmax.f32 %v7661, 0.0
  %v10172 = vmax.f32 %v7666, 0.0
  %v10173 = vmax.f32 %v7671, 0.0
  %v10174 = vmax.f32 %v7676, 0.0
  %v10175 = vmax.f32 %v7681, 0.0
  %v10176 = vmax.f32 %v7686, 0.0
  %v10177 = vmax.f32 %v7691, 0.0
  %v10178 = vmax.f32 %v7696, 0.0
  %v10179 = vmax.f32 %v7701, 0.0
  %v10180 = vmax.f32 %v7706, 0.0
  %v10181 = vmax.f32 %v7711, 0.0
  %v10182 = vmax.f32 %v7716, 0.0
  %v10183 = vmax.f32 %v7721, 0.0
  %v10184 = vmax.f32 %v7726, 0.0
  %v10185 = vmax.f32 %v7731, 0.0
  %v10186 = vmax.f32 %v7736, 0.0
  %v10187 = vmax.f32 %v7741, 0.0
  %v10188 = vmax.f32 %v7746, 0.0
  %v10189 = vmax.f32 %v7751, 0.0
  %v10190 = vmax.f32 %v7756, 0.0
  %v10191 = vmax.f32 %v7761, 0.0
  %v10192 = vmax.f32 %v7766, 0.0
  %v10193 = vmax.f32 %v7771, 0.0
  %v10194 = vmax.f32 %v7776, 0.0
  %v10195 = vmax.f32 %v7781, 0.0
  %v10196 = vmax.f32 %v7786, 0.0
  %v10197 = vmax.f32 %v7791, 0.0
  %v10198 = vmax.f32 %v7796, 0.0
  %v10199 = vmax.f32 %v7801, 0.0
  %v10200 = vmax.f32 %v7806, 0.0
  %v10201 = vmax.f32 %v7811, 0.0
  %v10202 = vmax.f32 %v7816, 0.0
  %v10203 = vmax.f32 %v7821, 0.0
  %v10204 = vmax.f32 %v7826, 0.0
  %v10205 = vmax.f32 %v7831, 0.0
  %v10206 = vmax.f32 %v7836, 0.0
  %v10207 = vmax.f32 %v7841, 0.0
  %v10208 = vmax.f32 %v7846, 0.0
  %v10209 = vmax.f32 %v7851, 0.0
  %v10210 = vmax.f32 %v7856, 0.0
  %v10211 = vmax.f32 %v7861, 0.0
  %v10212 = vmax.f32 %v7866, 0.0
  %v10213 = vmax.f32 %v7871, 0.0
  %v10214 = vmax.f32 %v7876, 0.0
  %v10215 = vmax.f32 %v7881, 0.0
  %v10216 = vmax.f32 %v7886, 0.0
  %v10217 = vmax.f32 %v7891, 0.0
  %v10218 = vmax.f32 %v7896, 0.0
  %v10219 = vmax.f32 %v7901, 0.0
  %v10220 = vmax.f32 %v7906, 0.0
  %v10221 = vmax.f32 %v7911, 0.0
  %v10222 = vmax.f32 %v7916, 0.0
  %v10223 = vmax.f32 %v7921, 0.0
  %v10224 = vmax.f32 %v7926, 0.0
  %v10225 = vmax.f32 %v7931, 0.0
  %v10226 = vmax.f32 %v7936, 0.0
  %v10227 = vmax.f32 %v7941, 0.0
  %v10228 = vmax.f32 %v7946, 0.0
  %v10229 = vmax.f32 %v7951, 0.0
  %v10230 = vmax.f32 %v7956, 0.0
  %v10231 = vmax.f32 %v7961, 0.0
  %v10232 = vmax.f32 %v7966, 0.0
  %v10233 = vmax.f32 %v7971, 0.0
  %v10234 = vmax.f32 %v7976, 0.0
  %v10235 = vmax.f32 %v7981, 0.0
  %v10236 = vmax.f32 %v7986, 0.0
  %v10237 = vmax.f32 %v7991, 0.0
  %v10238 = vmax.f32 %v7996, 0.0
  %v10239 = vmax.f32 %v8001, 0.0
  %v10240 = vmax.f32 %v8006, 0.0
  %v10241 = vmax.f32 %v8011, 0.0
  %v10242 = vmax.f32 %v8016, 0.0
  %v10243 = vmax.f32 %v8021, 0.0
  %v10244 = vmax.f32 %v8026, 0.0
  %v10245 = vmax.f32 %v8031, 0.0
  %v10246 = vmax.f32 %v8036, 0.0
  %v10247 = vmax.f32 %v8041, 0.0
  %v10248 = vmax.f32 %v8046, 0.0
  %v10249 = vmax.f32 %v8051, 0.0
  %v10250 = vmax.f32 %v8056, 0.0
  %v10251 = vmax.f32 %v8061, 0.0
  %v10252 = vmax.f32 %v8066, 0.0
  %v10253 = vmax.f32 %v8071, 0.0
  %v10254 = vmax.f32 %v8076, 0.0
  %v10255 = vmax.f32 %v8081, 0.0
  %v10256 = vmax.f32 %v8086, 0.0
  %v10257 = vmax.f32 %v8091, 0.0
  %v10258 = vmax.f32 %v8096, 0.0
  %v10259 = vmax.f32 %v8101, 0.0
  %v10260 = vmax.f32 %v8106, 0.0
  %v10261 = vmax.f32 %v8111, 0.0
  %v10262 = vmax.f32 %v8116, 0.0
  %v10263 = vmax.f32 %v8121, 0.0
  %v10264 = vmax.f32 %v8126, 0.0
  %v10265 = vmax.f32 %v8131, 0.0
  %v10266 = vmax.f32 %v8136, 0.0
  %v10267 = vmax.f32 %v8141, 0.0
  %v10268 = vmax.f32 %v8146, 0.0
  %v10269 = vmax.f32 %v8151, 0.0
  %v10270 = vmax.f32 %v8156, 0.0
  %v10271 = vmax.f32 %v8161, 0.0
  %v10272 = vmax.f32 %v8166, 0.0
  %v10273 = vmax.f32 %v8171, 0.0
  %v10274 = vmax.f32 %v8176, 0.0
  %v10275 = vmax.f32 %v8181, 0.0
  %v10276 = vmax.f32 %v8186, 0.0
  %v10277 = vmax.f32 %v8191, 0.0
  %v10278 = vmax.f32 %v8196, 0.0
  %v10279 = vmax.f32 %v8201, 0.0
  %v10280 = vmax.f32 %v8206, 0.0
  %v10281 = vmax.f32 %v8211, 0.0
  %v10282 = vmax.f32 %v8216, 0.0
  %v10283 = vmax.f32 %v8221, 0.0
  %v10284 = vmax.f32 %v8226, 0.0
  %v10285 = vmax.f32 %v8231, 0.0
  %v10286 = vmax.f32 %v8236, 0.0
  %v10287 = vmax.f32 %v8241, 0.0
  %v10288 = vmax.f32 %v8246, 0.0
  %v10289 = vmax.f32 %v8251, 0.0
  %v10290 = vmax.f32 %v8256, 0.0
  %v10291 = vmax.f32 %v8261, 0.0
  %v10292 = vmax.f32 %v8266, 0.0
  %v10293 = vmax.f32 %v8271, 0.0
  %v10294 = vmax.f32 %v8276, 0.0
  %v10295 = vmax.f32 %v8281, 0.0
  %v10296 = vmax.f32 %v8286, 0.0
  %v10297 = vmax.f32 %v8291, 0.0
  %v10298 = vmax.f32 %v8296, 0.0
  %v10299 = vmax.f32 %v8301, 0.0
  %v10300 = vmax.f32 %v8306, 0.0
  %v10301 = vmax.f32 %v8311, 0.0
  %v10302 = vmax.f32 %v8316, 0.0
  %v10303 = vmax.f32 %v8321, 0.0
  %v10304 = vmax.f32 %v8326, 0.0
  %v10305 = vmax.f32 %v8331, 0.0
  %v10306 = vmax.f32 %v8336, 0.0
  %v10307 = vmax.f32 %v8341, 0.0
  %v10308 = vmax.f32 %v8346, 0.0
  %v10309 = vmax.f32 %v8351, 0.0
  %v10310 = vmax.f32 %v8356, 0.0
  %v10311 = vmax.f32 %v8361, 0.0
  %v10312 = vmax.f32 %v8366, 0.0
  %v10313 = vmax.f32 %v8371, 0.0
  %v10314 = vmax.f32 %v8376, 0.0
  %v10315 = vmax.f32 %v8381, 0.0
  %v10316 = vmax.f32 %v8386, 0.0
  %v10317 = vmax.f32 %v8391, 0.0
  %v10318 = vmax.f32 %v8396, 0.0
  %v10319 = vmax.f32 %v8401, 0.0
  %v10320 = vmax.f32 %v8406, 0.0
  %v10321 = vmax.f32 %v8411, 0.0
  %v10322 = vmax.f32 %v8416, 0.0
  %v10323 = vmax.f32 %v8421, 0.0
  %v10324 = vmax.f32 %v8426, 0.0
  %v10325 = vmax.f32 %v8431, 0.0
  %v10326 = vmax.f32 %v8436, 0.0
  %v10327 = vmax.f32 %v8441, 0.0
  %v10328 = vmax.f32 %v8446, 0.0
  %v10329 = vmax.f32 %v8451, 0.0
  %v10330 = vmax.f32 %v8456, 0.0
  %v10331 = vmax.f32 %v8461, 0.0
  %v10332 = vmax.f32 %v8466, 0.0
  %v10333 = vmax.f32 %v8471, 0.0
  %v10334 = vmax.f32 %v8476, 0.0
  %v10335 = vmax.f32 %v8481, 0.0
  %v10336 = vmax.f32 %v8486, 0.0
  %v10337 = vmax.f32 %v8491, 0.0
  %v10338 = vmax.f32 %v8496, 0.0
  %v10339 = vmax.f32 %v8501, 0.0
  %v10340 = vmax.f32 %v8506, 0.0
  %v10341 = vmax.f32 %v8511, 0.0
  %v10342 = vmax.f32 %v8516, 0.0
  %v10343 = vmax.f32 %v8521, 0.0
  %v10344 = vmax.f32 %v8526, 0.0
  %v10345 = vmax.f32 %v8531, 0.0
  %v10346 = vmax.f32 %v8536, 0.0
  %v10347 = vmax.f32 %v8541, 0.0
  %v10348 = vmax.f32 %v8546, 0.0
  %v10349 = vmax.f32 %v8551, 0.0
  %v10350 = vmax.f32 %v8556, 0.0
  %v10351 = vmax.f32 %v8561, 0.0
  %v10352 = vmax.f32 %v8566, 0.0
  %v10353 = vmax.f32 %v8571, 0.0
  %v10354 = vmax.f32 %v8576, 0.0
  %v10355 = vmax.f32 %v8581, 0.0
  %v10356 = vmax.f32 %v8586, 0.0
  %v10357 = vmax.f32 %v8591, 0.0
  %v10358 = vmax.f32 %v8596, 0.0
  %v10359 = vmax.f32 %v8601, 0.0
  %v10360 = vmax.f32 %v8606, 0.0
  %v10361 = vmax.f32 %v8611, 0.0
  %v10362 = vmax.f32 %v8616, 0.0
  %v10363 = vmax.f32 %v8621, 0.0
  %v10364 = vmax.f32 %v8626, 0.0
  %v10365 = vmax.f32 %v8631, 0.0
  %v10366 = vmax.f32 %v8636, 0.0
  %v10367 = vmax.f32 %v8641, 0.0
  %v10368 = vmax.f32 %v8646, 0.0
  %v10369 = vmax.f32 %v8651, 0.0
  %v10370 = vmax.f32 %v8656, 0.0
  %v10371 = vmax.f32 %v8661, 0.0
  %v10372 = vmax.f32 %v8666, 0.0
  %v10373 = vmax.f32 %v8671, 0.0
  %v10374 = vmax.f32 %v8676, 0.0
  %v10375 = vmax.f32 %v8681, 0.0
  %v10376 = vmax.f32 %v8686, 0.0
  %v10377 = vmax.f32 %v8691, 0.0
  %v10378 = vmax.f32 %v8696, 0.0
  %v10379 = vmax.f32 %v8701, 0.0
  %v10380 = vmax.f32 %v8706, 0.0
  %v10381 = vmax.f32 %v8711, 0.0
  %v10382 = vmax.f32 %v8716, 0.0
  %v10383 = vmax.f32 %v8721, 0.0
  %v10384 = vmax.f32 %v8726, 0.0
  %v10385 = vmax.f32 %v8731, 0.0
  %v10386 = vmax.f32 %v8736, 0.0
  %v10387 = vmax.f32 %v8741, 0.0
  %v10388 = vmax.f32 %v8746, 0.0
  %v10389 = vmax.f32 %v8751, 0.0
  %v10390 = vmax.f32 %v8756, 0.0
  %v10391 = vmax.f32 %v8761, 0.0
  %v10392 = vmax.f32 %v8766, 0.0
  %v10393 = vmax.f32 %v8771, 0.0
  %v10394 = vmax.f32 %v8776, 0.0
  %v10395 = vmax.f32 %v8781, 0.0
  %v10396 = vmax.f32 %v8786, 0.0
  %v10397 = vmax.f32 %v8791, 0.0
  %v10398 = vmax.f32 %v8796, 0.0
  %v10399 = vmax.f32 %v8801, 0.0
  %v10400 = vmax.f32 %v8806, 0.0
  %v10401 = vmax.f32 %v8811, 0.0
  %v10402 = vmax.f32 %v8816, 0.0
  %v10403 = vmax.f32 %v8821, 0.0
  %v10404 = vmax.f32 %v8826, 0.0
  %v10405 = vmax.f32 %v8831, 0.0
  %v10406 = vmax.f32 %v8836, 0.0
  %v10407 = vmax.f32 %v8841, 0.0
  %v10408 = vmax.f32 %v8846, 0.0
  %v10409 = vmax.f32 %v8851, 0.0
  %v10410 = vmax.f32 %v8856, 0.0
  %v10411 = vmax.f32 %v8861, 0.0
  %v10412 = vmax.f32 %v8866, 0.0
  %v10413 = vmax.f32 %v8871, 0.0
  %v10414 = vmax.f32 %v8876, 0.0
  %v10415 = vmax.f32 %v8881, 0.0
  %v10416 = vmax.f32 %v8886, 0.0
  %v10417 = vmax.f32 %v8891, 0.0
  %v10418 = vmax.f32 %v8896, 0.0
  %v10419 = vmax.f32 %v8901, 0.0
  %v10420 = vmax.f32 %v8906, 0.0
  %v10421 = vmax.f32 %v8911, 0.0
  %v10422 = vmax.f32 %v8916, 0.0
  %v10423 = vmax.f32 %v8921, 0.0
  %v10424 = vmax.f32 %v8926, 0.0
  %v10425 = vmax.f32 %v8931, 0.0
  %v10426 = vmax.f32 %v8936, 0.0
  %v10427 = vmax.f32 %v8941, 0.0
  %v10428 = vmax.f32 %v8946, 0.0
  %v10429 = vmax.f32 %v8951, 0.0
  %v10430 = vmax.f32 %v8956, 0.0
  %v10431 = vmax.f32 %v8961, 0.0
  %v10432 = vmax.f32 %v8966, 0.0
  %v10433 = vmax.f32 %v8971, 0.0
  %v10434 = vmax.f32 %v8976, 0.0
  %v10435 = vmax.f32 %v8981, 0.0
  %v10436 = vmax.f32 %v8986, 0.0
  %v10437 = vmax.f32 %v8991, 0.0
  %v10438 = vmax.f32 %v8996, 0.0
  %v10439 = vmax.f32 %v9001, 0.0
  %v10440 = vmax.f32 %v9006, 0.0
  %v10441 = vmax.f32 %v9011, 0.0
  %v10442 = vmax.f32 %v9016, 0.0
  %v10443 = vmax.f32 %v9021, 0.0
  %v10444 = vmax.f32 %v9026, 0.0
  %v10445 = vmax.f32 %v9031, 0.0
  %v10446 = vmax.f32 %v9036, 0.0
  %v10447 = vmax.f32 %v9041, 0.0
  %v10448 = vmax.f32 %v9046, 0.0
  %v10449 = vmax.f32 %v9051, 0.0
  %v10450 = vmax.f32 %v9056, 0.0
  %v10451 = vmax.f32 %v9061, 0.0
  %v10452 = vmax.f32 %v9066, 0.0
  %v10453 = vmax.f32 %v9071, 0.0
  %v10454 = vmax.f32 %v9076, 0.0
  %v10455 = vmax.f32 %v9081, 0.0
  %v10456 = vmax.f32 %v9086, 0.0
  %v10457 = vmax.f32 %v9091, 0.0
  %v10458 = vmax.f32 %v9096, 0.0
  %v10459 = vmax.f32 %v9101, 0.0
  %v10460 = vmax.f32 %v9106, 0.0
  %v10461 = vmax.f32 %v9111, 0.0
  %v10462 = vmax.f32 %v9116, 0.0
  %v10463 = vmax.f32 %v9121, 0.0
  %v10464 = vmax.f32 %v9126, 0.0
  %v10465 = vmax.f32 %v9131, 0.0
  %v10466 = vmax.f32 %v9136, 0.0
  %v10467 = vmax.f32 %v9141, 0.0
  %v10468 = vmax.f32 %v9146, 0.0
  %v10469 = vmax.f32 %v9151, 0.0
  %v10470 = vmax.f32 %v9156, 0.0
  %v10471 = vmax.f32 %v9161, 0.0
  %v10472 = vmax.f32 %v9166, 0.0
  %v10473 = vmax.f32 %v9171, 0.0
  %v10474 = vmax.f32 %v9176, 0.0
  %v10475 = vmax.f32 %v9181, 0.0
  %v10476 = vmax.f32 %v9186, 0.0
  %v10477 = vmax.f32 %v9191, 0.0
  %v10478 = vmax.f32 %v9196, 0.0
  %v10479 = vmax.f32 %v9201, 0.0
  %v10480 = vmax.f32 %v9206, 0.0
  %v10481 = vmax.f32 %v9211, 0.0
  %v10482 = vmax.f32 %v9216, 0.0
  %v10483 = vmax.f32 %v9221, 0.0
  %v10484 = vmax.f32 %v9226, 0.0
  %v10485 = vmax.f32 %v9231, 0.0
  %v10486 = vmax.f32 %v9236, 0.0
  %v10487 = vmax.f32 %v9241, 0.0
  %v10488 = vmax.f32 %v9246, 0.0
  %v10489 = vmax.f32 %v9251, 0.0
  %v10490 = vmax.f32 %v9256, 0.0
  %v10491 = vmax.f32 %v9261, 0.0
  %v10492 = vmax.f32 %v9266, 0.0
  %v10493 = vmax.f32 %v9271, 0.0
  %v10494 = vmax.f32 %v9276, 0.0
  %v10495 = vmax.f32 %v9281, 0.0
  %v10496 = vmax.f32 %v9286, 0.0
  %v10497 = vmax.f32 %v9291, 0.0
  %v10498 = vmax.f32 %v9296, 0.0
  %v10499 = vmax.f32 %v9301, 0.0
  %v10500 = vmax.f32 %v9306, 0.0
  %v10501 = vmax.f32 %v9311, 0.0
  %v10502 = vmax.f32 %v9316, 0.0
  %v10503 = vmax.f32 %v9321, 0.0
  %v10504 = vmax.f32 %v9326, 0.0
  %v10505 = vmax.f32 %v9331, 0.0
  %v10506 = vmax.f32 %v9336, 0.0
  %v10507 = vmax.f32 %v9341, 0.0
  %v10508 = vmax.f32 %v9346, 0.0
  %v10509 = vmax.f32 %v9351, 0.0
  %v10510 = vmax.f32 %v9356, 0.0
  %v10511 = vmax.f32 %v9361, 0.0
  %v10512 = vmax.f32 %v9366, 0.0
  %v10513 = vmax.f32 %v9371, 0.0
  %v10514 = vmax.f32 %v9376, 0.0
  %v10515 = vmax.f32 %v9381, 0.0
  %v10516 = vmax.f32 %v9386, 0.0
  %v10517 = vmax.f32 %v9391, 0.0
  %v10518 = vmax.f32 %v9396, 0.0
  %v10519 = vmax.f32 %v9401, 0.0
  %v10520 = vmax.f32 %v9406, 0.0
  %v10521 = vmax.f32 %v9411, 0.0
  %v10522 = vmax.f32 %v9416, 0.0
  %v10523 = vmax.f32 %v9421, 0.0
  %v10524 = vmax.f32 %v9426, 0.0
  %v10525 = vmax.f32 %v9431, 0.0
  %v10526 = vmax.f32 %v9436, 0.0
  %v10527 = vmax.f32 %v9441, 0.0
  %v10528 = vmax.f32 %v9446, 0.0
  %v10529 = vmax.f32 %v9451, 0.0
  %v10530 = vmax.f32 %v9456, 0.0
  %v10531 = vmax.f32 %v9461, 0.0
  %v10532 = vmax.f32 %v9466, 0.0
  %v10533 = vmax.f32 %v9471, 0.0
  %v10534 = vmax.f32 %v9476, 0.0
  %v10535 = vmax.f32 %v9481, 0.0
  %v10536 = vmax.f32 %v9486, 0.0
  %v10537 = vmax.f32 %v9491, 0.0
  %v10538 = vmax.f32 %v9496, 0.0
  %v10539 = vmax.f32 %v9501, 0.0
  %v10540 = vmax.f32 %v9506, 0.0
  %v10541 = vmax.f32 %v9511, 0.0
  %v10542 = vmax.f32 %v9516, 0.0
  %v10543 = vmax.f32 %v9521, 0.0
  %v10544 = vmax.f32 %v9526, 0.0
  %v10545 = vmax.f32 %v9531, 0.0
  %v10546 = vmax.f32 %v9536, 0.0
  %v10547 = vmax.f32 %v9541, 0.0
  %v10548 = vmax.f32 %v9546, 0.0
  %v10549 = vmax.f32 %v9551, 0.0
  %v10550 = vmax.f32 %v9556, 0.0
  %v10551 = vmax.f32 %v9561, 0.0
  %v10552 = vmax.f32 %v9566, 0.0
  %v10553 = vmax.f32 %v9571, 0.0
  %v10554 = vmax.f32 %v9576, 0.0
  %v10555 = vmax.f32 %v9581, 0.0
  %v10556 = vmax.f32 %v9586, 0.0
  %v10557 = vmax.f32 %v9591, 0.0
  %v10558 = vmax.f32 %v9596, 0.0
  %v10559 = vmax.f32 %v9601, 0.0
  %v10560 = vmax.f32 %v9606, 0.0
  %v10561 = vmax.f32 %v9611, 0.0
  %v10562 = vmax.f32 %v9616, 0.0
  %v10563 = vmax.f32 %v9621, 0.0
  %v10564 = vmax.f32 %v9626, 0.0
  %v10565 = vmax.f32 %v9631, 0.0
  %v10566 = vmax.f32 %v9636, 0.0
  %v10567 = vmax.f32 %v9641, 0.0
  %v10568 = vmax.f32 %v9646, 0.0
  %v10569 = vmax.f32 %v9651, 0.0
  %v10570 = vmax.f32 %v9656, 0.0
  %v10571 = vmax.f32 %v9661, 0.0
  %v10572 = vmax.f32 %v9666, 0.0
  %v10573 = vmax.f32 %v9671, 0.0
  %v10574 = vmax.f32 %v9676, 0.0
  %v10575 = vmax.f32 %v9681, 0.0
  %v10576 = vmax.f32 %v9686, 0.0
  %v10577 = vmax.f32 %v9691, 0.0
  %v10578 = vmax.f32 %v9696, 0.0
  %v10579 = vmax.f32 %v9701, 0.0
  %v10580 = vmax.f32 %v9706, 0.0
  %v10581 = vmax.f32 %v9711, 0.0
  %v10582 = vmax.f32 %v9716, 0.0
  %v10583 = vmax.f32 %v9721, 0.0
  %v10584 = vmax.f32 %v9726, 0.0
  %v10585 = vmax.f32 %v9731, 0.0
  %v10586 = vmax.f32 %v9736, 0.0
  %v10587 = vmax.f32 %v9741, 0.0
  %v10588 = vmax.f32 %v9746, 0.0
  %v10589 = vmax.f32 %v9751, 0.0
  %v10590 = vmax.f32 %v9756, 0.0
  %v10591 = vmax.f32 %v9761, 0.0
  %v10592 = vmax.f32 %v9766, 0.0
  %v10593 = vmax.f32 %v9771, 0.0
  %v10594 = vmax.f32 %v9776, 0.0
  %v10595 = vmax.f32 %v9781, 0.0
  %v10596 = vmax.f32 %v9786, 0.0
  %v10597 = vmax.f32 %v9791, 0.0
  %v10598 = vmax.f32 %v9796, 0.0
  %v10599 = vmax.f32 %v9801, 0.0
  %v10600 = vmax.f32 %v9806, 0.0
  %v10601 = vmax.f32 %v9811, 0.0
  %v10602 = vmax.f32 %v9816, 0.0
  %v10603 = vmax.f32 %v9821, 0.0
  %v10604 = vmax.f32 %v9826, 0.0
  %v10605 = vmax.f32 %v9831, 0.0
  %v10606 = vmax.f32 %v9836, 0.0
  %v10607 = vmax.f32 %v9841, 0.0
  %v10608 = vmax.f32 %v9846, 0.0
  %v10609 = vmax.f32 %v9851, 0.0
  %v10610 = vmax.f32 %v9856, 0.0
  %v10611 = vmax.f32 %v9861, 0.0
  %v10612 = vmax.f32 %v9866, 0.0
  %v10613 = vmax.f32 %v9871, 0.0
  %v10614 = vmax.f32 %v9876, 0.0
  %v10615 = vmax.f32 %v9881, 0.0
  %v10616 = vmax.f32 %v9886, 0.0
  %v10617 = vmax.f32 %v9891, 0.0
  %v10618 = vmax.f32 %v9896, 0.0
  %v10619 = vmax.f32 %v9901, 0.0
  %v10620 = vmax.f32 %v9906, 0.0
  %v10621 = vmax.f32 %v9911, 0.0
  %v10622 = vmax.f32 %v9916, 0.0
  %v10623 = vmax.f32 %v9921, 0.0
  %v10624 = vmax.f32 %v9926, 0.0
  %v10625 = vmax.f32 %v9931, 0.0
  %v10626 = vmax.f32 %v9936, 0.0
  %v10627 = vmax.f32 %v9941, 0.0
  %v10628 = vmax.f32 %v9946, 0.0
  %v10629 = vmax.f32 %v9951, 0.0
  %v10630 = vmax.f32 %v9956, 0.0
  %v10631 = vmax.f32 %v9961, 0.0
  %v10632 = vmax.f32 %v9966, 0.0
  %v10633 = vmax.f32 %v9971, 0.0
  %v10634 = vmax.f32 %v9976, 0.0
  %v10635 = vmax.f32 %v9981, 0.0
  %v10636 = vmax.f32 %v9986, 0.0
  %v10637 = vmax.f32 %v9991, 0.0
  %v10638 = vmax.f32 %v9996, 0.0
  %v10639 = vmax.f32 %v10001, 0.0
  %v10640 = vmax.f32 %v10006, 0.0
  %v10641 = vmax.f32 %v10011, 0.0
  %v10642 = vmax.f32 %v10016, 0.0
  %v10643 = vmax.f32 %v10021, 0.0
  %v10644 = vmax.f32 %v10026, 0.0
  %v10645 = vmax.f32 %v10031, 0.0
  %v10646 = vmax.f32 %v10036, 0.0
  %v10647 = vmax.f32 %v10041, 0.0
  %v10648 = vmax.f32 %v10046, 0.0
  %v10649 = vmax.f32 %v10051, 0.0
  %v10650 = vmax.f32 %v10056, 0.0
  %v10651 = vmax.f32 %v10061, 0.0
  %v10652 = vmax.f32 %v10066, 0.0
  %v10653 = vmax.f32 %v10071, 0.0
  %v10654 = vmax.f32 %v10076, 0.0
  %v10655 = vmax.f32 %v10081, 0.0
  %v10656 = vmax.f32 %v10086, 0.0
  %v10657 = vmax.f32 %v10091, 0.0
  %v10658 = vmax.f32 %v10096, 0.0
  %v10659 = vmax.f32 %v10101, 0.0
  %v10660 = vmax.f32 %v10106, 0.0
  %v10661 = vmax.f32 %v10111, 0.0
  %v10662 = vmax.f32 %v10116, 0.0
  %v10663 = vmax.f32 %v10121, 0.0
  %v10664 = vmax.f32 %v10126, 0.0
  %v10665 = vmax.f32 %v10131, 0.0
  %v10666 = vmax.f32 %v10136, 0.0
  %v10667 = vmax.f32 %v10141, 0.0
  %v10668 = vmax.f32 %v10146, 0.0
  %v10669 = vmax.f32 %v10151, 0.0
  %v10670 = vmax.f32 %v10156, 0.0
  %v10672 = vlaneseq
  %v10673 = vshrl.u32 %v10672, 7
  %v10674 = vsub.s32 0, %v10673
  %v10675 = vrot.slane %v292, %v10674
  %10677 = vxpose.xlu0.b32.start [1/16] %v10159, 128
  %10678 = vxpose.xlu0.b32.cont [2/16] %v10160, 128
  %10679 = vxpose.xlu0.b32.cont [3/16] %v10161, 128
  %10680 = vxpose.xlu0.b32.cont [4/16] %v10162, 128
  %10681 = vxpose.xlu0.b32.cont [5/16] %v10163, 128
  %10682 = vxpose.xlu0.b32.cont [6/16] %v10164, 128
  %10683 = vxpose.xlu0.b32.cont [7/16] %v10165, 128
  %10684 = vxpose.xlu0.b32.cont [8/16] %v10166, 128
  %10685 = vxpose.xlu0.b32.cont [9/16] %v10167, 128
  %10686 = vxpose.xlu0.b32.cont [10/16] %v10168, 128
  %10687 = vxpose.xlu0.b32.cont [11/16] %v10169, 128
  %10688 = vxpose.xlu0.b32.cont [12/16] %v10170, 128
  %10689 = vxpose.xlu0.b32.cont [13/16] %v10171, 128
  %10690 = vxpose.xlu0.b32.cont [14/16] %v10172, 128
  %10691 = vxpose.xlu0.b32.cont [15/16] %v10173, 128
  %10692 = vxpose.xlu0.b32.end [16/16] %v10174, 128
  %v10693 = vpop.trf.xlu0
  %v10694 = vpop.trf.xlu0
  %v10695 = vpop.trf.xlu0
  %v10696 = vpop.trf.xlu0
  %v10697 = vpop.trf.xlu0
  %v10698 = vpop.trf.xlu0
  %v10699 = vpop.trf.xlu0
  %v10700 = vpop.trf.xlu0
  %v10701 = vpop.trf.xlu0
  %v10702 = vpop.trf.xlu0
  %v10703 = vpop.trf.xlu0
  %v10704 = vpop.trf.xlu0
  %v10705 = vpop.trf.xlu0
  %v10706 = vpop.trf.xlu0
  %v10707 = vpop.trf.xlu0
  %v10708 = vpop.trf.xlu0
  %10709 = vxpose.xlu0.b32.start [1/16] %v10175, 128
  %10710 = vxpose.xlu0.b32.cont [2/16] %v10176, 128
  %10711 = vxpose.xlu0.b32.cont [3/16] %v10177, 128
  %10712 = vxpose.xlu0.b32.cont [4/16] %v10178, 128
  %10713 = vxpose.xlu0.b32.cont [5/16] %v10179, 128
  %10714 = vxpose.xlu0.b32.cont [6/16] %v10180, 128
  %10715 = vxpose.xlu0.b32.cont [7/16] %v10181, 128
  %10716 = vxpose.xlu0.b32.cont [8/16] %v10182, 128
  %10717 = vxpose.xlu0.b32.cont [9/16] %v10183, 128
  %10718 = vxpose.xlu0.b32.cont [10/16] %v10184, 128
  %10719 = vxpose.xlu0.b32.cont [11/16] %v10185, 128
  %10720 = vxpose.xlu0.b32.cont [12/16] %v10186, 128
  %10721 = vxpose.xlu0.b32.cont [13/16] %v10187, 128
  %10722 = vxpose.xlu0.b32.cont [14/16] %v10188, 128
  %10723 = vxpose.xlu0.b32.cont [15/16] %v10189, 128
  %10724 = vxpose.xlu0.b32.end [16/16] %v10190, 128
  %v10725 = vpop.trf.xlu0
  %v10726 = vpop.trf.xlu0
  %v10727 = vpop.trf.xlu0
  %v10728 = vpop.trf.xlu0
  %v10729 = vpop.trf.xlu0
  %v10730 = vpop.trf.xlu0
  %v10731 = vpop.trf.xlu0
  %v10732 = vpop.trf.xlu0
  %v10733 = vpop.trf.xlu0
  %v10734 = vpop.trf.xlu0
  %v10735 = vpop.trf.xlu0
  %v10736 = vpop.trf.xlu0
  %v10737 = vpop.trf.xlu0
  %v10738 = vpop.trf.xlu0
  %v10739 = vpop.trf.xlu0
  %v10740 = vpop.trf.xlu0
  %10741 = vxpose.xlu0.b32.start [1/16] %v10191, 128
  %10742 = vxpose.xlu0.b32.cont [2/16] %v10192, 128
  %10743 = vxpose.xlu0.b32.cont [3/16] %v10193, 128
  %10744 = vxpose.xlu0.b32.cont [4/16] %v10194, 128
  %10745 = vxpose.xlu0.b32.cont [5/16] %v10195, 128
  %10746 = vxpose.xlu0.b32.cont [6/16] %v10196, 128
  %10747 = vxpose.xlu0.b32.cont [7/16] %v10197, 128
  %10748 = vxpose.xlu0.b32.cont [8/16] %v10198, 128
  %10749 = vxpose.xlu0.b32.cont [9/16] %v10199, 128
  %10750 = vxpose.xlu0.b32.cont [10/16] %v10200, 128
  %10751 = vxpose.xlu0.b32.cont [11/16] %v10201, 128
  %10752 = vxpose.xlu0.b32.cont [12/16] %v10202, 128
  %10753 = vxpose.xlu0.b32.cont [13/16] %v10203, 128
  %10754 = vxpose.xlu0.b32.cont [14/16] %v10204, 128
  %10755 = vxpose.xlu0.b32.cont [15/16] %v10205, 128
  %10756 = vxpose.xlu0.b32.end [16/16] %v10206, 128
  %v10757 = vpop.trf.xlu0
  %v10758 = vpop.trf.xlu0
  %v10759 = vpop.trf.xlu0
  %v10760 = vpop.trf.xlu0
  %v10761 = vpop.trf.xlu0
  %v10762 = vpop.trf.xlu0
  %v10763 = vpop.trf.xlu0
  %v10764 = vpop.trf.xlu0
  %v10765 = vpop.trf.xlu0
  %v10766 = vpop.trf.xlu0
  %v10767 = vpop.trf.xlu0
  %v10768 = vpop.trf.xlu0
  %v10769 = vpop.trf.xlu0
  %v10770 = vpop.trf.xlu0
  %v10771 = vpop.trf.xlu0
  %v10772 = vpop.trf.xlu0
  %10773 = vxpose.xlu0.b32.start [1/16] %v10207, 128
  %10774 = vxpose.xlu0.b32.cont [2/16] %v10208, 128
  %10775 = vxpose.xlu0.b32.cont [3/16] %v10209, 128
  %10776 = vxpose.xlu0.b32.cont [4/16] %v10210, 128
  %10777 = vxpose.xlu0.b32.cont [5/16] %v10211, 128
  %10778 = vxpose.xlu0.b32.cont [6/16] %v10212, 128
  %10779 = vxpose.xlu0.b32.cont [7/16] %v10213, 128
  %10780 = vxpose.xlu0.b32.cont [8/16] %v10214, 128
  %10781 = vxpose.xlu0.b32.cont [9/16] %v10215, 128
  %10782 = vxpose.xlu0.b32.cont [10/16] %v10216, 128
  %10783 = vxpose.xlu0.b32.cont [11/16] %v10217, 128
  %10784 = vxpose.xlu0.b32.cont [12/16] %v10218, 128
  %10785 = vxpose.xlu0.b32.cont [13/16] %v10219, 128
  %10786 = vxpose.xlu0.b32.cont [14/16] %v10220, 128
  %10787 = vxpose.xlu0.b32.cont [15/16] %v10221, 128
  %10788 = vxpose.xlu0.b32.end [16/16] %v10222, 128
  %v10789 = vpop.trf.xlu0
  %v10790 = vpop.trf.xlu0
  %v10791 = vpop.trf.xlu0
  %v10792 = vpop.trf.xlu0
  %v10793 = vpop.trf.xlu0
  %v10794 = vpop.trf.xlu0
  %v10795 = vpop.trf.xlu0
  %v10796 = vpop.trf.xlu0
  %v10797 = vpop.trf.xlu0
  %v10798 = vpop.trf.xlu0
  %v10799 = vpop.trf.xlu0
  %v10800 = vpop.trf.xlu0
  %v10801 = vpop.trf.xlu0
  %v10802 = vpop.trf.xlu0
  %v10803 = vpop.trf.xlu0
  %v10804 = vpop.trf.xlu0
  %10805 = vxpose.xlu0.b32.start [1/16] %v10223, 128
  %10806 = vxpose.xlu0.b32.cont [2/16] %v10224, 128
  %10807 = vxpose.xlu0.b32.cont [3/16] %v10225, 128
  %10808 = vxpose.xlu0.b32.cont [4/16] %v10226, 128
  %10809 = vxpose.xlu0.b32.cont [5/16] %v10227, 128
  %10810 = vxpose.xlu0.b32.cont [6/16] %v10228, 128
  %10811 = vxpose.xlu0.b32.cont [7/16] %v10229, 128
  %10812 = vxpose.xlu0.b32.cont [8/16] %v10230, 128
  %10813 = vxpose.xlu0.b32.cont [9/16] %v10231, 128
  %10814 = vxpose.xlu0.b32.cont [10/16] %v10232, 128
  %10815 = vxpose.xlu0.b32.cont [11/16] %v10233, 128
  %10816 = vxpose.xlu0.b32.cont [12/16] %v10234, 128
  %10817 = vxpose.xlu0.b32.cont [13/16] %v10235, 128
  %10818 = vxpose.xlu0.b32.cont [14/16] %v10236, 128
  %10819 = vxpose.xlu0.b32.cont [15/16] %v10237, 128
  %10820 = vxpose.xlu0.b32.end [16/16] %v10238, 128
  %v10821 = vpop.trf.xlu0
  %v10822 = vpop.trf.xlu0
  %v10823 = vpop.trf.xlu0
  %v10824 = vpop.trf.xlu0
  %v10825 = vpop.trf.xlu0
  %v10826 = vpop.trf.xlu0
  %v10827 = vpop.trf.xlu0
  %v10828 = vpop.trf.xlu0
  %v10829 = vpop.trf.xlu0
  %v10830 = vpop.trf.xlu0
  %v10831 = vpop.trf.xlu0
  %v10832 = vpop.trf.xlu0
  %v10833 = vpop.trf.xlu0
  %v10834 = vpop.trf.xlu0
  %v10835 = vpop.trf.xlu0
  %v10836 = vpop.trf.xlu0
  %10837 = vxpose.xlu0.b32.start [1/16] %v10239, 128
  %10838 = vxpose.xlu0.b32.cont [2/16] %v10240, 128
  %10839 = vxpose.xlu0.b32.cont [3/16] %v10241, 128
  %10840 = vxpose.xlu0.b32.cont [4/16] %v10242, 128
  %10841 = vxpose.xlu0.b32.cont [5/16] %v10243, 128
  %10842 = vxpose.xlu0.b32.cont [6/16] %v10244, 128
  %10843 = vxpose.xlu0.b32.cont [7/16] %v10245, 128
  %10844 = vxpose.xlu0.b32.cont [8/16] %v10246, 128
  %10845 = vxpose.xlu0.b32.cont [9/16] %v10247, 128
  %10846 = vxpose.xlu0.b32.cont [10/16] %v10248, 128
  %10847 = vxpose.xlu0.b32.cont [11/16] %v10249, 128
  %10848 = vxpose.xlu0.b32.cont [12/16] %v10250, 128
  %10849 = vxpose.xlu0.b32.cont [13/16] %v10251, 128
  %10850 = vxpose.xlu0.b32.cont [14/16] %v10252, 128
  %10851 = vxpose.xlu0.b32.cont [15/16] %v10253, 128
  %10852 = vxpose.xlu0.b32.end [16/16] %v10254, 128
  %v10853 = vpop.trf.xlu0
  %v10854 = vpop.trf.xlu0
  %v10855 = vpop.trf.xlu0
  %v10856 = vpop.trf.xlu0
  %v10857 = vpop.trf.xlu0
  %v10858 = vpop.trf.xlu0
  %v10859 = vpop.trf.xlu0
  %v10860 = vpop.trf.xlu0
  %v10861 = vpop.trf.xlu0
  %v10862 = vpop.trf.xlu0
  %v10863 = vpop.trf.xlu0
  %v10864 = vpop.trf.xlu0
  %v10865 = vpop.trf.xlu0
  %v10866 = vpop.trf.xlu0
  %v10867 = vpop.trf.xlu0
  %v10868 = vpop.trf.xlu0
  %10869 = vxpose.xlu0.b32.start [1/16] %v10255, 128
  %10870 = vxpose.xlu0.b32.cont [2/16] %v10256, 128
  %10871 = vxpose.xlu0.b32.cont [3/16] %v10257, 128
  %10872 = vxpose.xlu0.b32.cont [4/16] %v10258, 128
  %10873 = vxpose.xlu0.b32.cont [5/16] %v10259, 128
  %10874 = vxpose.xlu0.b32.cont [6/16] %v10260, 128
  %10875 = vxpose.xlu0.b32.cont [7/16] %v10261, 128
  %10876 = vxpose.xlu0.b32.cont [8/16] %v10262, 128
  %10877 = vxpose.xlu0.b32.cont [9/16] %v10263, 128
  %10878 = vxpose.xlu0.b32.cont [10/16] %v10264, 128
  %10879 = vxpose.xlu0.b32.cont [11/16] %v10265, 128
  %10880 = vxpose.xlu0.b32.cont [12/16] %v10266, 128
  %10881 = vxpose.xlu0.b32.cont [13/16] %v10267, 128
  %10882 = vxpose.xlu0.b32.cont [14/16] %v10268, 128
  %10883 = vxpose.xlu0.b32.cont [15/16] %v10269, 128
  %10884 = vxpose.xlu0.b32.end [16/16] %v10270, 128
  %v10885 = vpop.trf.xlu0
  %v10886 = vpop.trf.xlu0
  %v10887 = vpop.trf.xlu0
  %v10888 = vpop.trf.xlu0
  %v10889 = vpop.trf.xlu0
  %v10890 = vpop.trf.xlu0
  %v10891 = vpop.trf.xlu0
  %v10892 = vpop.trf.xlu0
  %v10893 = vpop.trf.xlu0
  %v10894 = vpop.trf.xlu0
  %v10895 = vpop.trf.xlu0
  %v10896 = vpop.trf.xlu0
  %v10897 = vpop.trf.xlu0
  %v10898 = vpop.trf.xlu0
  %v10899 = vpop.trf.xlu0
  %v10900 = vpop.trf.xlu0
  %10901 = vxpose.xlu0.b32.start [1/16] %v10271, 128
  %10902 = vxpose.xlu0.b32.cont [2/16] %v10272, 128
  %10903 = vxpose.xlu0.b32.cont [3/16] %v10273, 128
  %10904 = vxpose.xlu0.b32.cont [4/16] %v10274, 128
  %10905 = vxpose.xlu0.b32.cont [5/16] %v10275, 128
  %10906 = vxpose.xlu0.b32.cont [6/16] %v10276, 128
  %10907 = vxpose.xlu0.b32.cont [7/16] %v10277, 128
  %10908 = vxpose.xlu0.b32.cont [8/16] %v10278, 128
  %10909 = vxpose.xlu0.b32.cont [9/16] %v10279, 128
  %10910 = vxpose.xlu0.b32.cont [10/16] %v10280, 128
  %10911 = vxpose.xlu0.b32.cont [11/16] %v10281, 128
  %10912 = vxpose.xlu0.b32.cont [12/16] %v10282, 128
  %10913 = vxpose.xlu0.b32.cont [13/16] %v10283, 128
  %10914 = vxpose.xlu0.b32.cont [14/16] %v10284, 128
  %10915 = vxpose.xlu0.b32.cont [15/16] %v10285, 128
  %10916 = vxpose.xlu0.b32.end [16/16] %v10286, 128
  %v10917 = vpop.trf.xlu0
  %v10918 = vpop.trf.xlu0
  %v10919 = vpop.trf.xlu0
  %v10920 = vpop.trf.xlu0
  %v10921 = vpop.trf.xlu0
  %v10922 = vpop.trf.xlu0
  %v10923 = vpop.trf.xlu0
  %v10924 = vpop.trf.xlu0
  %v10925 = vpop.trf.xlu0
  %v10926 = vpop.trf.xlu0
  %v10927 = vpop.trf.xlu0
  %v10928 = vpop.trf.xlu0
  %v10929 = vpop.trf.xlu0
  %v10930 = vpop.trf.xlu0
  %v10931 = vpop.trf.xlu0
  %v10932 = vpop.trf.xlu0
  %10933 = vxpose.xlu0.b32.start [1/16] %v10287, 128
  %10934 = vxpose.xlu0.b32.cont [2/16] %v10288, 128
  %10935 = vxpose.xlu0.b32.cont [3/16] %v10289, 128
  %10936 = vxpose.xlu0.b32.cont [4/16] %v10290, 128
  %10937 = vxpose.xlu0.b32.cont [5/16] %v10291, 128
  %10938 = vxpose.xlu0.b32.cont [6/16] %v10292, 128
  %10939 = vxpose.xlu0.b32.cont [7/16] %v10293, 128
  %10940 = vxpose.xlu0.b32.cont [8/16] %v10294, 128
  %10941 = vxpose.xlu0.b32.cont [9/16] %v10295, 128
  %10942 = vxpose.xlu0.b32.cont [10/16] %v10296, 128
  %10943 = vxpose.xlu0.b32.cont [11/16] %v10297, 128
  %10944 = vxpose.xlu0.b32.cont [12/16] %v10298, 128
  %10945 = vxpose.xlu0.b32.cont [13/16] %v10299, 128
  %10946 = vxpose.xlu0.b32.cont [14/16] %v10300, 128
  %10947 = vxpose.xlu0.b32.cont [15/16] %v10301, 128
  %10948 = vxpose.xlu0.b32.end [16/16] %v10302, 128
  %v10949 = vpop.trf.xlu0
  %v10950 = vpop.trf.xlu0
  %v10951 = vpop.trf.xlu0
  %v10952 = vpop.trf.xlu0
  %v10953 = vpop.trf.xlu0
  %v10954 = vpop.trf.xlu0
  %v10955 = vpop.trf.xlu0
  %v10956 = vpop.trf.xlu0
  %v10957 = vpop.trf.xlu0
  %v10958 = vpop.trf.xlu0
  %v10959 = vpop.trf.xlu0
  %v10960 = vpop.trf.xlu0
  %v10961 = vpop.trf.xlu0
  %v10962 = vpop.trf.xlu0
  %v10963 = vpop.trf.xlu0
  %v10964 = vpop.trf.xlu0
  %10965 = vxpose.xlu0.b32.start [1/16] %v10303, 128
  %10966 = vxpose.xlu0.b32.cont [2/16] %v10304, 128
  %10967 = vxpose.xlu0.b32.cont [3/16] %v10305, 128
  %10968 = vxpose.xlu0.b32.cont [4/16] %v10306, 128
  %10969 = vxpose.xlu0.b32.cont [5/16] %v10307, 128
  %10970 = vxpose.xlu0.b32.cont [6/16] %v10308, 128
  %10971 = vxpose.xlu0.b32.cont [7/16] %v10309, 128
  %10972 = vxpose.xlu0.b32.cont [8/16] %v10310, 128
  %10973 = vxpose.xlu0.b32.cont [9/16] %v10311, 128
  %10974 = vxpose.xlu0.b32.cont [10/16] %v10312, 128
  %10975 = vxpose.xlu0.b32.cont [11/16] %v10313, 128
  %10976 = vxpose.xlu0.b32.cont [12/16] %v10314, 128
  %10977 = vxpose.xlu0.b32.cont [13/16] %v10315, 128
  %10978 = vxpose.xlu0.b32.cont [14/16] %v10316, 128
  %10979 = vxpose.xlu0.b32.cont [15/16] %v10317, 128
  %10980 = vxpose.xlu0.b32.end [16/16] %v10318, 128
  %v10981 = vpop.trf.xlu0
  %v10982 = vpop.trf.xlu0
  %v10983 = vpop.trf.xlu0
  %v10984 = vpop.trf.xlu0
  %v10985 = vpop.trf.xlu0
  %v10986 = vpop.trf.xlu0
  %v10987 = vpop.trf.xlu0
  %v10988 = vpop.trf.xlu0
  %v10989 = vpop.trf.xlu0
  %v10990 = vpop.trf.xlu0
  %v10991 = vpop.trf.xlu0
  %v10992 = vpop.trf.xlu0
  %v10993 = vpop.trf.xlu0
  %v10994 = vpop.trf.xlu0
  %v10995 = vpop.trf.xlu0
  %v10996 = vpop.trf.xlu0
  %10997 = vxpose.xlu0.b32.start [1/16] %v10319, 128
  %10998 = vxpose.xlu0.b32.cont [2/16] %v10320, 128
  %10999 = vxpose.xlu0.b32.cont [3/16] %v10321, 128
  %11000 = vxpose.xlu0.b32.cont [4/16] %v10322, 128
  %11001 = vxpose.xlu0.b32.cont [5/16] %v10323, 128
  %11002 = vxpose.xlu0.b32.cont [6/16] %v10324, 128
  %11003 = vxpose.xlu0.b32.cont [7/16] %v10325, 128
  %11004 = vxpose.xlu0.b32.cont [8/16] %v10326, 128
  %11005 = vxpose.xlu0.b32.cont [9/16] %v10327, 128
  %11006 = vxpose.xlu0.b32.cont [10/16] %v10328, 128
  %11007 = vxpose.xlu0.b32.cont [11/16] %v10329, 128
  %11008 = vxpose.xlu0.b32.cont [12/16] %v10330, 128
  %11009 = vxpose.xlu0.b32.cont [13/16] %v10331, 128
  %11010 = vxpose.xlu0.b32.cont [14/16] %v10332, 128
  %11011 = vxpose.xlu0.b32.cont [15/16] %v10333, 128
  %11012 = vxpose.xlu0.b32.end [16/16] %v10334, 128
  %v11013 = vpop.trf.xlu0
  %v11014 = vpop.trf.xlu0
  %v11015 = vpop.trf.xlu0
  %v11016 = vpop.trf.xlu0
  %v11017 = vpop.trf.xlu0
  %v11018 = vpop.trf.xlu0
  %v11019 = vpop.trf.xlu0
  %v11020 = vpop.trf.xlu0
  %v11021 = vpop.trf.xlu0
  %v11022 = vpop.trf.xlu0
  %v11023 = vpop.trf.xlu0
  %v11024 = vpop.trf.xlu0
  %v11025 = vpop.trf.xlu0
  %v11026 = vpop.trf.xlu0
  %v11027 = vpop.trf.xlu0
  %v11028 = vpop.trf.xlu0
  %11029 = vxpose.xlu0.b32.start [1/16] %v10335, 128
  %11030 = vxpose.xlu0.b32.cont [2/16] %v10336, 128
  %11031 = vxpose.xlu0.b32.cont [3/16] %v10337, 128
  %11032 = vxpose.xlu0.b32.cont [4/16] %v10338, 128
  %11033 = vxpose.xlu0.b32.cont [5/16] %v10339, 128
  %11034 = vxpose.xlu0.b32.cont [6/16] %v10340, 128
  %11035 = vxpose.xlu0.b32.cont [7/16] %v10341, 128
  %11036 = vxpose.xlu0.b32.cont [8/16] %v10342, 128
  %11037 = vxpose.xlu0.b32.cont [9/16] %v10343, 128
  %11038 = vxpose.xlu0.b32.cont [10/16] %v10344, 128
  %11039 = vxpose.xlu0.b32.cont [11/16] %v10345, 128
  %11040 = vxpose.xlu0.b32.cont [12/16] %v10346, 128
  %11041 = vxpose.xlu0.b32.cont [13/16] %v10347, 128
  %11042 = vxpose.xlu0.b32.cont [14/16] %v10348, 128
  %11043 = vxpose.xlu0.b32.cont [15/16] %v10349, 128
  %11044 = vxpose.xlu0.b32.end [16/16] %v10350, 128
  %v11045 = vpop.trf.xlu0
  %v11046 = vpop.trf.xlu0
  %v11047 = vpop.trf.xlu0
  %v11048 = vpop.trf.xlu0
  %v11049 = vpop.trf.xlu0
  %v11050 = vpop.trf.xlu0
  %v11051 = vpop.trf.xlu0
  %v11052 = vpop.trf.xlu0
  %v11053 = vpop.trf.xlu0
  %v11054 = vpop.trf.xlu0
  %v11055 = vpop.trf.xlu0
  %v11056 = vpop.trf.xlu0
  %v11057 = vpop.trf.xlu0
  %v11058 = vpop.trf.xlu0
  %v11059 = vpop.trf.xlu0
  %v11060 = vpop.trf.xlu0
  %11061 = vxpose.xlu0.b32.start [1/16] %v10351, 128
  %11062 = vxpose.xlu0.b32.cont [2/16] %v10352, 128
  %11063 = vxpose.xlu0.b32.cont [3/16] %v10353, 128
  %11064 = vxpose.xlu0.b32.cont [4/16] %v10354, 128
  %11065 = vxpose.xlu0.b32.cont [5/16] %v10355, 128
  %11066 = vxpose.xlu0.b32.cont [6/16] %v10356, 128
  %11067 = vxpose.xlu0.b32.cont [7/16] %v10357, 128
  %11068 = vxpose.xlu0.b32.cont [8/16] %v10358, 128
  %11069 = vxpose.xlu0.b32.cont [9/16] %v10359, 128
  %11070 = vxpose.xlu0.b32.cont [10/16] %v10360, 128
  %11071 = vxpose.xlu0.b32.cont [11/16] %v10361, 128
  %11072 = vxpose.xlu0.b32.cont [12/16] %v10362, 128
  %11073 = vxpose.xlu0.b32.cont [13/16] %v10363, 128
  %11074 = vxpose.xlu0.b32.cont [14/16] %v10364, 128
  %11075 = vxpose.xlu0.b32.cont [15/16] %v10365, 128
  %11076 = vxpose.xlu0.b32.end [16/16] %v10366, 128
  %v11077 = vpop.trf.xlu0
  %v11078 = vpop.trf.xlu0
  %v11079 = vpop.trf.xlu0
  %v11080 = vpop.trf.xlu0
  %v11081 = vpop.trf.xlu0
  %v11082 = vpop.trf.xlu0
  %v11083 = vpop.trf.xlu0
  %v11084 = vpop.trf.xlu0
  %v11085 = vpop.trf.xlu0
  %v11086 = vpop.trf.xlu0
  %v11087 = vpop.trf.xlu0
  %v11088 = vpop.trf.xlu0
  %v11089 = vpop.trf.xlu0
  %v11090 = vpop.trf.xlu0
  %v11091 = vpop.trf.xlu0
  %v11092 = vpop.trf.xlu0
  %11093 = vxpose.xlu0.b32.start [1/16] %v10367, 128
  %11094 = vxpose.xlu0.b32.cont [2/16] %v10368, 128
  %11095 = vxpose.xlu0.b32.cont [3/16] %v10369, 128
  %11096 = vxpose.xlu0.b32.cont [4/16] %v10370, 128
  %11097 = vxpose.xlu0.b32.cont [5/16] %v10371, 128
  %11098 = vxpose.xlu0.b32.cont [6/16] %v10372, 128
  %11099 = vxpose.xlu0.b32.cont [7/16] %v10373, 128
  %11100 = vxpose.xlu0.b32.cont [8/16] %v10374, 128
  %11101 = vxpose.xlu0.b32.cont [9/16] %v10375, 128
  %11102 = vxpose.xlu0.b32.cont [10/16] %v10376, 128
  %11103 = vxpose.xlu0.b32.cont [11/16] %v10377, 128
  %11104 = vxpose.xlu0.b32.cont [12/16] %v10378, 128
  %11105 = vxpose.xlu0.b32.cont [13/16] %v10379, 128
  %11106 = vxpose.xlu0.b32.cont [14/16] %v10380, 128
  %11107 = vxpose.xlu0.b32.cont [15/16] %v10381, 128
  %11108 = vxpose.xlu0.b32.end [16/16] %v10382, 128
  %v11109 = vpop.trf.xlu0
  %v11110 = vpop.trf.xlu0
  %v11111 = vpop.trf.xlu0
  %v11112 = vpop.trf.xlu0
  %v11113 = vpop.trf.xlu0
  %v11114 = vpop.trf.xlu0
  %v11115 = vpop.trf.xlu0
  %v11116 = vpop.trf.xlu0
  %v11117 = vpop.trf.xlu0
  %v11118 = vpop.trf.xlu0
  %v11119 = vpop.trf.xlu0
  %v11120 = vpop.trf.xlu0
  %v11121 = vpop.trf.xlu0
  %v11122 = vpop.trf.xlu0
  %v11123 = vpop.trf.xlu0
  %v11124 = vpop.trf.xlu0
  %11125 = vxpose.xlu0.b32.start [1/16] %v10383, 128
  %11126 = vxpose.xlu0.b32.cont [2/16] %v10384, 128
  %11127 = vxpose.xlu0.b32.cont [3/16] %v10385, 128
  %11128 = vxpose.xlu0.b32.cont [4/16] %v10386, 128
  %11129 = vxpose.xlu0.b32.cont [5/16] %v10387, 128
  %11130 = vxpose.xlu0.b32.cont [6/16] %v10388, 128
  %11131 = vxpose.xlu0.b32.cont [7/16] %v10389, 128
  %11132 = vxpose.xlu0.b32.cont [8/16] %v10390, 128
  %11133 = vxpose.xlu0.b32.cont [9/16] %v10391, 128
  %11134 = vxpose.xlu0.b32.cont [10/16] %v10392, 128
  %11135 = vxpose.xlu0.b32.cont [11/16] %v10393, 128
  %11136 = vxpose.xlu0.b32.cont [12/16] %v10394, 128
  %11137 = vxpose.xlu0.b32.cont [13/16] %v10395, 128
  %11138 = vxpose.xlu0.b32.cont [14/16] %v10396, 128
  %11139 = vxpose.xlu0.b32.cont [15/16] %v10397, 128
  %11140 = vxpose.xlu0.b32.end [16/16] %v10398, 128
  %v11141 = vpop.trf.xlu0
  %v11142 = vpop.trf.xlu0
  %v11143 = vpop.trf.xlu0
  %v11144 = vpop.trf.xlu0
  %v11145 = vpop.trf.xlu0
  %v11146 = vpop.trf.xlu0
  %v11147 = vpop.trf.xlu0
  %v11148 = vpop.trf.xlu0
  %v11149 = vpop.trf.xlu0
  %v11150 = vpop.trf.xlu0
  %v11151 = vpop.trf.xlu0
  %v11152 = vpop.trf.xlu0
  %v11153 = vpop.trf.xlu0
  %v11154 = vpop.trf.xlu0
  %v11155 = vpop.trf.xlu0
  %v11156 = vpop.trf.xlu0
  %11157 = vxpose.xlu0.b32.start [1/16] %v10399, 128
  %11158 = vxpose.xlu0.b32.cont [2/16] %v10400, 128
  %11159 = vxpose.xlu0.b32.cont [3/16] %v10401, 128
  %11160 = vxpose.xlu0.b32.cont [4/16] %v10402, 128
  %11161 = vxpose.xlu0.b32.cont [5/16] %v10403, 128
  %11162 = vxpose.xlu0.b32.cont [6/16] %v10404, 128
  %11163 = vxpose.xlu0.b32.cont [7/16] %v10405, 128
  %11164 = vxpose.xlu0.b32.cont [8/16] %v10406, 128
  %11165 = vxpose.xlu0.b32.cont [9/16] %v10407, 128
  %11166 = vxpose.xlu0.b32.cont [10/16] %v10408, 128
  %11167 = vxpose.xlu0.b32.cont [11/16] %v10409, 128
  %11168 = vxpose.xlu0.b32.cont [12/16] %v10410, 128
  %11169 = vxpose.xlu0.b32.cont [13/16] %v10411, 128
  %11170 = vxpose.xlu0.b32.cont [14/16] %v10412, 128
  %11171 = vxpose.xlu0.b32.cont [15/16] %v10413, 128
  %11172 = vxpose.xlu0.b32.end [16/16] %v10414, 128
  %v11173 = vpop.trf.xlu0
  %v11174 = vpop.trf.xlu0
  %v11175 = vpop.trf.xlu0
  %v11176 = vpop.trf.xlu0
  %v11177 = vpop.trf.xlu0
  %v11178 = vpop.trf.xlu0
  %v11179 = vpop.trf.xlu0
  %v11180 = vpop.trf.xlu0
  %v11181 = vpop.trf.xlu0
  %v11182 = vpop.trf.xlu0
  %v11183 = vpop.trf.xlu0
  %v11184 = vpop.trf.xlu0
  %v11185 = vpop.trf.xlu0
  %v11186 = vpop.trf.xlu0
  %v11187 = vpop.trf.xlu0
  %v11188 = vpop.trf.xlu0
  %11189 = vmatprep.subr.mxu0 0.0
  %11190 = vmatpush1.msra.mxu0 %v36
  %11191 = vmatprep.subr.mxu0 0.0
  %11192 = vmatpush1.msra.mxu0 %v37
  %11193 = vmatprep.subr.mxu0 0.0
  %11194 = vmatpush1.msra.mxu0 %v38
  %11195 = vmatprep.subr.mxu0 0.0
  %11196 = vmatpush1.msra.mxu0 %v39
  %11197 = vmatprep.subr.mxu0 0.0
  %11198 = vmatpush1.msra.mxu0 %v40
  %11199 = vmatprep.subr.mxu0 0.0
  %11200 = vmatpush1.msra.mxu0 %v41
  %11201 = vmatprep.subr.mxu0 0.0
  %11202 = vmatpush1.msra.mxu0 %v42
  %11203 = vmatprep.subr.mxu0 0.0
  %11204 = vmatpush1.msra.mxu0 %v43
  %11205 = vmatprep.subr.mxu0 0.0
  %11206 = vmatpush1.msra.mxu0 %v44
  %11207 = vmatprep.subr.mxu0 0.0
  %11208 = vmatpush1.msra.mxu0 %v45
  %11209 = vmatprep.subr.mxu0 0.0
  %11210 = vmatpush1.msra.mxu0 %v46
  %11211 = vmatprep.subr.mxu0 0.0
  %11212 = vmatpush1.msra.mxu0 %v47
  %11213 = vmatprep.subr.mxu0 0.0
  %11214 = vmatpush1.msra.mxu0 %v48
  %11215 = vmatprep.subr.mxu0 0.0
  %11216 = vmatpush1.msra.mxu0 %v49
  %11217 = vmatprep.subr.mxu0 0.0
  %11218 = vmatpush1.msra.mxu0 %v50
  %11219 = vmatprep.subr.mxu0 0.0
  %11220 = vmatpush1.msra.mxu0 %v51
  %11221 = vmatprep.subr.mxu0 0.0
  %11222 = vmatpush1.msra.mxu0 %v52
  %11223 = vmatprep.subr.mxu0 0.0
  %11224 = vmatpush1.msra.mxu0 %v53
  %11225 = vmatprep.subr.mxu0 0.0
  %11226 = vmatpush1.msra.mxu0 %v54
  %11227 = vmatprep.subr.mxu0 0.0
  %11228 = vmatpush1.msra.mxu0 %v55
  %11229 = vmatprep.subr.mxu0 0.0
  %11230 = vmatpush1.msra.mxu0 %v56
  %11231 = vmatprep.subr.mxu0 0.0
  %11232 = vmatpush1.msra.mxu0 %v57
  %11233 = vmatprep.subr.mxu0 0.0
  %11234 = vmatpush1.msra.mxu0 %v58
  %11235 = vmatprep.subr.mxu0 0.0
  %11236 = vmatpush1.msra.mxu0 %v59
  %11237 = vmatprep.subr.mxu0 0.0
  %11238 = vmatpush1.msra.mxu0 %v60
  %11239 = vmatprep.subr.mxu0 0.0
  %11240 = vmatpush1.msra.mxu0 %v61
  %11241 = vmatprep.subr.mxu0 0.0
  %11242 = vmatpush1.msra.mxu0 %v62
  %11243 = vmatprep.subr.mxu0 0.0
  %11244 = vmatpush1.msra.mxu0 %v63
  %11245 = vmatprep.subr.mxu0 0.0
  %11246 = vmatpush1.msra.mxu0 %v64
  %11247 = vmatprep.subr.mxu0 0.0
  %11248 = vmatpush1.msra.mxu0 %v65
  %11249 = vmatprep.subr.mxu0 0.0
  %11250 = vmatpush1.msra.mxu0 %v66
  %11251 = vmatprep.subr.mxu0 0.0
  %11252 = vmatpush1.msra.mxu0 %v67
  %11253 = vmatprep.mubr.f32.mxu0 %v10725
  %11254 = vmatmul.mubr.f32.gmra.mrb[0].mxu0 %v10693
  %v11255 = vpop.f32.mrb[0].mxu0
  %v11256 = vadd.f32 %v10675, %v11255
  %v11257 = vpop.f32.mrb[0].mxu0
  %11258 = vdwg.mxu0
  %11259 = vmatprep.subr.mxu0 0.0
  %11260 = vmatpush1.msra.mxu0 %v68
  %11261 = vmatprep.subr.mxu0 0.0
  %11262 = vmatpush1.msra.mxu0 %v69
  %11263 = vmatprep.subr.mxu0 0.0
  %11264 = vmatpush1.msra.mxu0 %v70
  %11265 = vmatprep.subr.mxu0 0.0
  %11266 = vmatpush1.msra.mxu0 %v71
  %11267 = vmatprep.subr.mxu0 0.0
  %11268 = vmatpush1.msra.mxu0 %v72
  %11269 = vmatprep.subr.mxu0 0.0
  %11270 = vmatpush1.msra.mxu0 %v73
  %11271 = vmatprep.subr.mxu0 0.0
  %11272 = vmatpush1.msra.mxu0 %v74
  %11273 = vmatprep.subr.mxu0 0.0
  %11274 = vmatpush1.msra.mxu0 %v75
  %11275 = vmatprep.subr.mxu0 0.0
  %11276 = vmatpush1.msra.mxu0 %v76
  %11277 = vmatprep.subr.mxu0 0.0
  %11278 = vmatpush1.msra.mxu0 %v77
  %11279 = vmatprep.subr.mxu0 0.0
  %11280 = vmatpush1.msra.mxu0 %v78
  %11281 = vmatprep.subr.mxu0 0.0
  %11282 = vmatpush1.msra.mxu0 %v79
  %11283 = vmatprep.subr.mxu0 0.0
  %11284 = vmatpush1.msra.mxu0 %v80
  %11285 = vmatprep.subr.mxu0 0.0
  %11286 = vmatpush1.msra.mxu0 %v81
  %11287 = vmatprep.subr.mxu0 0.0
  %11288 = vmatpush1.msra.mxu0 %v82
  %11289 = vmatprep.subr.mxu0 0.0
  %11290 = vmatpush1.msra.mxu0 %v83
  %11291 = vmatprep.subr.mxu0 0.0
  %11292 = vmatpush1.msra.mxu0 %v84
  %11293 = vmatprep.subr.mxu0 0.0
  %11294 = vmatpush1.msra.mxu0 %v85
  %11295 = vmatprep.subr.mxu0 0.0
  %11296 = vmatpush1.msra.mxu0 %v86
  %11297 = vmatprep.subr.mxu0 0.0
  %11298 = vmatpush1.msra.mxu0 %v87
  %11299 = vmatprep.subr.mxu0 0.0
  %11300 = vmatpush1.msra.mxu0 %v88
  %11301 = vmatprep.subr.mxu0 0.0
  %11302 = vmatpush1.msra.mxu0 %v89
  %11303 = vmatprep.subr.mxu0 0.0
  %11304 = vmatpush1.msra.mxu0 %v90
  %11305 = vmatprep.subr.mxu0 0.0
  %11306 = vmatpush1.msra.mxu0 %v91
  %11307 = vmatprep.subr.mxu0 0.0
  %11308 = vmatpush1.msra.mxu0 %v92
  %11309 = vmatprep.subr.mxu0 0.0
  %11310 = vmatpush1.msra.mxu0 %v93
  %11311 = vmatprep.subr.mxu0 0.0
  %11312 = vmatpush1.msra.mxu0 %v94
  %11313 = vmatprep.subr.mxu0 0.0
  %11314 = vmatpush1.msra.mxu0 %v95
  %11315 = vmatprep.subr.mxu0 0.0
  %11316 = vmatpush1.msra.mxu0 %v96
  %11317 = vmatprep.subr.mxu0 0.0
  %11318 = vmatpush1.msra.mxu0 %v97
  %11319 = vmatprep.subr.mxu0 0.0
  %11320 = vmatpush1.msra.mxu0 %v98
  %11321 = vmatprep.subr.mxu0 0.0
  %11322 = vmatpush1.msra.mxu0 %v99
  %11323 = vmatprep.mubr.f32.mxu0 %v10789
  %11324 = vmatmul.mubr.f32.gmra.mrb[0].mxu0 %v10757
  %v11325 = vpop.f32.mrb[0].mxu0
  %v11326 = vadd.f32 %v11256, %v11325
  %v11327 = vpop.f32.mrb[0].mxu0
  %11328 = vdwg.mxu0
  %11329 = vmatprep.subr.mxu0 0.0
  %11330 = vmatpush1.msra.mxu0 %v100
  %11331 = vmatprep.subr.mxu0 0.0
  %11332 = vmatpush1.msra.mxu0 %v101
  %11333 = vmatprep.subr.mxu0 0.0
  %11334 = vmatpush1.msra.mxu0 %v102
  %11335 = vmatprep.subr.mxu0 0.0
  %11336 = vmatpush1.msra.mxu0 %v103
  %11337 = vmatprep.subr.mxu0 0.0
  %11338 = vmatpush1.msra.mxu0 %v104
  %11339 = vmatprep.subr.mxu0 0.0
  %11340 = vmatpush1.msra.mxu0 %v105
  %11341 = vmatprep.subr.mxu0 0.0
  %11342 = vmatpush1.msra.mxu0 %v106
  %11343 = vmatprep.subr.mxu0 0.0
  %11344 = vmatpush1.msra.mxu0 %v107
  %11345 = vmatprep.subr.mxu0 0.0
  %11346 = vmatpush1.msra.mxu0 %v108
  %11347 = vmatprep.subr.mxu0 0.0
  %11348 = vmatpush1.msra.mxu0 %v109
  %11349 = vmatprep.subr.mxu0 0.0
  %11350 = vmatpush1.msra.mxu0 %v110
  %11351 = vmatprep.subr.mxu0 0.0
  %11352 = vmatpush1.msra.mxu0 %v111
  %11353 = vmatprep.subr.mxu0 0.0
  %11354 = vmatpush1.msra.mxu0 %v112
  %11355 = vmatprep.subr.mxu0 0.0
  %11356 = vmatpush1.msra.mxu0 %v113
  %11357 = vmatprep.subr.mxu0 0.0
  %11358 = vmatpush1.msra.mxu0 %v114
  %11359 = vmatprep.subr.mxu0 0.0
  %11360 = vmatpush1.msra.mxu0 %v115
  %11361 = vmatprep.subr.mxu0 0.0
  %11362 = vmatpush1.msra.mxu0 %v116
  %11363 = vmatprep.subr.mxu0 0.0
  %11364 = vmatpush1.msra.mxu0 %v117
  %11365 = vmatprep.subr.mxu0 0.0
  %11366 = vmatpush1.msra.mxu0 %v118
  %11367 = vmatprep.subr.mxu0 0.0
  %11368 = vmatpush1.msra.mxu0 %v119
  %11369 = vmatprep.subr.mxu0 0.0
  %11370 = vmatpush1.msra.mxu0 %v120
  %11371 = vmatprep.subr.mxu0 0.0
  %11372 = vmatpush1.msra.mxu0 %v121
  %11373 = vmatprep.subr.mxu0 0.0
  %11374 = vmatpush1.msra.mxu0 %v122
  %11375 = vmatprep.subr.mxu0 0.0
  %11376 = vmatpush1.msra.mxu0 %v123
  %11377 = vmatprep.subr.mxu0 0.0
  %11378 = vmatpush1.msra.mxu0 %v124
  %11379 = vmatprep.subr.mxu0 0.0
  %11380 = vmatpush1.msra.mxu0 %v125
  %11381 = vmatprep.subr.mxu0 0.0
  %11382 = vmatpush1.msra.mxu0 %v126
  %11383 = vmatprep.subr.mxu0 0.0
  %11384 = vmatpush1.msra.mxu0 %v127
  %11385 = vmatprep.subr.mxu0 0.0
  %11386 = vmatpush1.msra.mxu0 %v128
  %11387 = vmatprep.subr.mxu0 0.0
  %11388 = vmatpush1.msra.mxu0 %v129
  %11389 = vmatprep.subr.mxu0 0.0
  %11390 = vmatpush1.msra.mxu0 %v130
  %11391 = vmatprep.subr.mxu0 0.0
  %11392 = vmatpush1.msra.mxu0 %v131
  %11393 = vmatprep.mubr.f32.mxu0 %v10853
  %11394 = vmatmul.mubr.f32.gmra.mrb[0].mxu0 %v10821
  %v11395 = vpop.f32.mrb[0].mxu0
  %v11396 = vadd.f32 %v11326, %v11395
  %v11397 = vpop.f32.mrb[0].mxu0
  %11398 = vdwg.mxu0
  %11399 = vmatprep.subr.mxu0 0.0
  %11400 = vmatpush1.msra.mxu0 %v132
  %11401 = vmatprep.subr.mxu0 0.0
  %11402 = vmatpush1.msra.mxu0 %v133
  %11403 = vmatprep.subr.mxu0 0.0
  %11404 = vmatpush1.msra.mxu0 %v134
  %11405 = vmatprep.subr.mxu0 0.0
  %11406 = vmatpush1.msra.mxu0 %v135
  %11407 = vmatprep.subr.mxu0 0.0
  %11408 = vmatpush1.msra.mxu0 %v136
  %11409 = vmatprep.subr.mxu0 0.0
  %11410 = vmatpush1.msra.mxu0 %v137
  %11411 = vmatprep.subr.mxu0 0.0
  %11412 = vmatpush1.msra.mxu0 %v138
  %11413 = vmatprep.subr.mxu0 0.0
  %11414 = vmatpush1.msra.mxu0 %v139
  %11415 = vmatprep.subr.mxu0 0.0
  %11416 = vmatpush1.msra.mxu0 %v140
  %11417 = vmatprep.subr.mxu0 0.0
  %11418 = vmatpush1.msra.mxu0 %v141
  %11419 = vmatprep.subr.mxu0 0.0
  %11420 = vmatpush1.msra.mxu0 %v142
  %11421 = vmatprep.subr.mxu0 0.0
  %11422 = vmatpush1.msra.mxu0 %v143
  %11423 = vmatprep.subr.mxu0 0.0
  %11424 = vmatpush1.msra.mxu0 %v144
  %11425 = vmatprep.subr.mxu0 0.0
  %11426 = vmatpush1.msra.mxu0 %v145
  %11427 = vmatprep.subr.mxu0 0.0
  %11428 = vmatpush1.msra.mxu0 %v146
  %11429 = vmatprep.subr.mxu0 0.0
  %11430 = vmatpush1.msra.mxu0 %v147
  %11431 = vmatprep.subr.mxu0 0.0
  %11432 = vmatpush1.msra.mxu0 %v148
  %11433 = vmatprep.subr.mxu0 0.0
  %11434 = vmatpush1.msra.mxu0 %v149
  %11435 = vmatprep.subr.mxu0 0.0
  %11436 = vmatpush1.msra.mxu0 %v150
  %11437 = vmatprep.subr.mxu0 0.0
  %11438 = vmatpush1.msra.mxu0 %v151
  %11439 = vmatprep.subr.mxu0 0.0
  %11440 = vmatpush1.msra.mxu0 %v152
  %11441 = vmatprep.subr.mxu0 0.0
  %11442 = vmatpush1.msra.mxu0 %v153
  %11443 = vmatprep.subr.mxu0 0.0
  %11444 = vmatpush1.msra.mxu0 %v154
  %11445 = vmatprep.subr.mxu0 0.0
  %11446 = vmatpush1.msra.mxu0 %v155
  %11447 = vmatprep.subr.mxu0 0.0
  %11448 = vmatpush1.msra.mxu0 %v156
  %11449 = vmatprep.subr.mxu0 0.0
  %11450 = vmatpush1.msra.mxu0 %v157
  %11451 = vmatprep.subr.mxu0 0.0
  %11452 = vmatpush1.msra.mxu0 %v158
  %11453 = vmatprep.subr.mxu0 0.0
  %11454 = vmatpush1.msra.mxu0 %v159
  %11455 = vmatprep.subr.mxu0 0.0
  %11456 = vmatpush1.msra.mxu0 %v160
  %11457 = vmatprep.subr.mxu0 0.0
  %11458 = vmatpush1.msra.mxu0 %v161
  %11459 = vmatprep.subr.mxu0 0.0
  %11460 = vmatpush1.msra.mxu0 %v162
  %11461 = vmatprep.subr.mxu0 0.0
  %11462 = vmatpush1.msra.mxu0 %v163
  %11463 = vmatprep.mubr.f32.mxu0 %v10917
  %11464 = vmatmul.mubr.f32.gmra.mrb[0].mxu0 %v10885
  %v11465 = vpop.f32.mrb[0].mxu0
  %v11466 = vadd.f32 %v11396, %v11465
  %v11467 = vpop.f32.mrb[0].mxu0
  %11468 = vdwg.mxu0
  %11469 = vmatprep.subr.mxu0 0.0
  %11470 = vmatpush1.msra.mxu0 %v164
  %11471 = vmatprep.subr.mxu0 0.0
  %11472 = vmatpush1.msra.mxu0 %v165
  %11473 = vmatprep.subr.mxu0 0.0
  %11474 = vmatpush1.msra.mxu0 %v166
  %11475 = vmatprep.subr.mxu0 0.0
  %11476 = vmatpush1.msra.mxu0 %v167
  %11477 = vmatprep.subr.mxu0 0.0
  %11478 = vmatpush1.msra.mxu0 %v168
  %11479 = vmatprep.subr.mxu0 0.0
  %11480 = vmatpush1.msra.mxu0 %v169
  %11481 = vmatprep.subr.mxu0 0.0
  %11482 = vmatpush1.msra.mxu0 %v170
  %11483 = vmatprep.subr.mxu0 0.0
  %11484 = vmatpush1.msra.mxu0 %v171
  %11485 = vmatprep.subr.mxu0 0.0
  %11486 = vmatpush1.msra.mxu0 %v172
  %11487 = vmatprep.subr.mxu0 0.0
  %11488 = vmatpush1.msra.mxu0 %v173
  %11489 = vmatprep.subr.mxu0 0.0
  %11490 = vmatpush1.msra.mxu0 %v174
  %11491 = vmatprep.subr.mxu0 0.0
  %11492 = vmatpush1.msra.mxu0 %v175
  %11493 = vmatprep.subr.mxu0 0.0
  %11494 = vmatpush1.msra.mxu0 %v176
  %11495 = vmatprep.subr.mxu0 0.0
  %11496 = vmatpush1.msra.mxu0 %v177
  %11497 = vmatprep.subr.mxu0 0.0
  %11498 = vmatpush1.msra.mxu0 %v178
  %11499 = vmatprep.subr.mxu0 0.0
  %11500 = vmatpush1.msra.mxu0 %v179
  %11501 = vmatprep.subr.mxu0 0.0
  %11502 = vmatpush1.msra.mxu0 %v180
  %11503 = vmatprep.subr.mxu0 0.0
  %11504 = vmatpush1.msra.mxu0 %v181
  %11505 = vmatprep.subr.mxu0 0.0
  %11506 = vmatpush1.msra.mxu0 %v182
  %11507 = vmatprep.subr.mxu0 0.0
  %11508 = vmatpush1.msra.mxu0 %v183
  %11509 = vmatprep.subr.mxu0 0.0
  %11510 = vmatpush1.msra.mxu0 %v184
  %11511 = vmatprep.subr.mxu0 0.0
  %11512 = vmatpush1.msra.mxu0 %v185
  %11513 = vmatprep.subr.mxu0 0.0
  %11514 = vmatpush1.msra.mxu0 %v186
  %11515 = vmatprep.subr.mxu0 0.0
  %11516 = vmatpush1.msra.mxu0 %v187
  %11517 = vmatprep.subr.mxu0 0.0
  %11518 = vmatpush1.msra.mxu0 %v188
  %11519 = vmatprep.subr.mxu0 0.0
  %11520 = vmatpush1.msra.mxu0 %v189
  %11521 = vmatprep.subr.mxu0 0.0
  %11522 = vmatpush1.msra.mxu0 %v190
  %11523 = vmatprep.subr.mxu0 0.0
  %11524 = vmatpush1.msra.mxu0 %v191
  %11525 = vmatprep.subr.mxu0 0.0
  %11526 = vmatpush1.msra.mxu0 %v192
  %11527 = vmatprep.subr.mxu0 0.0
  %11528 = vmatpush1.msra.mxu0 %v193
  %11529 = vmatprep.subr.mxu0 0.0
  %11530 = vmatpush1.msra.mxu0 %v194
  %11531 = vmatprep.subr.mxu0 0.0
  %11532 = vmatpush1.msra.mxu0 %v195
  %11533 = vmatprep.mubr.f32.mxu0 %v10981
  %11534 = vmatmul.mubr.f32.gmra.mrb[0].mxu0 %v10949
  %v11535 = vpop.f32.mrb[0].mxu0
  %v11536 = vadd.f32 %v11466, %v11535
  %v11537 = vpop.f32.mrb[0].mxu0
  %11538 = vdwg.mxu0
  %11539 = vmatprep.subr.mxu0 0.0
  %11540 = vmatpush1.msra.mxu0 %v196
  %11541 = vmatprep.subr.mxu0 0.0
  %11542 = vmatpush1.msra.mxu0 %v197
  %11543 = vmatprep.subr.mxu0 0.0
  %11544 = vmatpush1.msra.mxu0 %v198
  %11545 = vmatprep.subr.mxu0 0.0
  %11546 = vmatpush1.msra.mxu0 %v199
  %11547 = vmatprep.subr.mxu0 0.0
  %11548 = vmatpush1.msra.mxu0 %v200
  %11549 = vmatprep.subr.mxu0 0.0
  %11550 = vmatpush1.msra.mxu0 %v201
  %11551 = vmatprep.subr.mxu0 0.0
  %11552 = vmatpush1.msra.mxu0 %v202
  %11553 = vmatprep.subr.mxu0 0.0
  %11554 = vmatpush1.msra.mxu0 %v203
  %11555 = vmatprep.subr.mxu0 0.0
  %11556 = vmatpush1.msra.mxu0 %v204
  %11557 = vmatprep.subr.mxu0 0.0
  %11558 = vmatpush1.msra.mxu0 %v205
  %11559 = vmatprep.subr.mxu0 0.0
  %11560 = vmatpush1.msra.mxu0 %v206
  %11561 = vmatprep.subr.mxu0 0.0
  %11562 = vmatpush1.msra.mxu0 %v207
  %11563 = vmatprep.subr.mxu0 0.0
  %11564 = vmatpush1.msra.mxu0 %v208
  %11565 = vmatprep.subr.mxu0 0.0
  %11566 = vmatpush1.msra.mxu0 %v209
  %11567 = vmatprep.subr.mxu0 0.0
  %11568 = vmatpush1.msra.mxu0 %v210
  %11569 = vmatprep.subr.mxu0 0.0
  %11570 = vmatpush1.msra.mxu0 %v211
  %11571 = vmatprep.subr.mxu0 0.0
  %11572 = vmatpush1.msra.mxu0 %v212
  %11573 = vmatprep.subr.mxu0 0.0
  %11574 = vmatpush1.msra.mxu0 %v213
  %11575 = vmatprep.subr.mxu0 0.0
  %11576 = vmatpush1.msra.mxu0 %v214
  %11577 = vmatprep.subr.mxu0 0.0
  %11578 = vmatpush1.msra.mxu0 %v215
  %11579 = vmatprep.subr.mxu0 0.0
  %11580 = vmatpush1.msra.mxu0 %v216
  %11581 = vmatprep.subr.mxu0 0.0
  %11582 = vmatpush1.msra.mxu0 %v217
  %11583 = vmatprep.subr.mxu0 0.0
  %11584 = vmatpush1.msra.mxu0 %v218
  %11585 = vmatprep.subr.mxu0 0.0
  %11586 = vmatpush1.msra.mxu0 %v219
  %11587 = vmatprep.subr.mxu0 0.0
  %11588 = vmatpush1.msra.mxu0 %v220
  %11589 = vmatprep.subr.mxu0 0.0
  %11590 = vmatpush1.msra.mxu0 %v221
  %11591 = vmatprep.subr.mxu0 0.0
  %11592 = vmatpush1.msra.mxu0 %v222
  %11593 = vmatprep.subr.mxu0 0.0
  %11594 = vmatpush1.msra.mxu0 %v223
  %11595 = vmatprep.subr.mxu0 0.0
  %11596 = vmatpush1.msra.mxu0 %v224
  %11597 = vmatprep.subr.mxu0 0.0
  %11598 = vmatpush1.msra.mxu0 %v225
  %11599 = vmatprep.subr.mxu0 0.0
  %11600 = vmatpush1.msra.mxu0 %v226
  %11601 = vmatprep.subr.mxu0 0.0
  %11602 = vmatpush1.msra.mxu0 %v227
  %11603 = vmatprep.mubr.f32.mxu0 %v11045
  %11604 = vmatmul.mubr.f32.gmra.mrb[0].mxu0 %v11013
  %v11605 = vpop.f32.mrb[0].mxu0
  %v11606 = vadd.f32 %v11536, %v11605
  %v11607 = vpop.f32.mrb[0].mxu0
  %11608 = vdwg.mxu0
  %11609 = vmatprep.subr.mxu0 0.0
  %11610 = vmatpush1.msra.mxu0 %v228
  %11611 = vmatprep.subr.mxu0 0.0
  %11612 = vmatpush1.msra.mxu0 %v229
  %11613 = vmatprep.subr.mxu0 0.0
  %11614 = vmatpush1.msra.mxu0 %v230
  %11615 = vmatprep.subr.mxu0 0.0
  %11616 = vmatpush1.msra.mxu0 %v231
  %11617 = vmatprep.subr.mxu0 0.0
  %11618 = vmatpush1.msra.mxu0 %v232
  %11619 = vmatprep.subr.mxu0 0.0
  %11620 = vmatpush1.msra.mxu0 %v233
  %11621 = vmatprep.subr.mxu0 0.0
  %11622 = vmatpush1.msra.mxu0 %v234
  %11623 = vmatprep.subr.mxu0 0.0
  %11624 = vmatpush1.msra.mxu0 %v235
  %11625 = vmatprep.subr.mxu0 0.0
  %11626 = vmatpush1.msra.mxu0 %v236
  %11627 = vmatprep.subr.mxu0 0.0
  %11628 = vmatpush1.msra.mxu0 %v237
  %11629 = vmatprep.subr.mxu0 0.0
  %11630 = vmatpush1.msra.mxu0 %v238
  %11631 = vmatprep.subr.mxu0 0.0
  %11632 = vmatpush1.msra.mxu0 %v239
  %11633 = vmatprep.subr.mxu0 0.0
  %11634 = vmatpush1.msra.mxu0 %v240
  %11635 = vmatprep.subr.mxu0 0.0
  %11636 = vmatpush1.msra.mxu0 %v241
  %11637 = vmatprep.subr.mxu0 0.0
  %11638 = vmatpush1.msra.mxu0 %v242
  %11639 = vmatprep.subr.mxu0 0.0
  %11640 = vmatpush1.msra.mxu0 %v243
  %11641 = vmatprep.subr.mxu0 0.0
  %11642 = vmatpush1.msra.mxu0 %v244
  %11643 = vmatprep.subr.mxu0 0.0
  %11644 = vmatpush1.msra.mxu0 %v245
  %11645 = vmatprep.subr.mxu0 0.0
  %11646 = vmatpush1.msra.mxu0 %v246
  %11647 = vmatprep.subr.mxu0 0.0
  %11648 = vmatpush1.msra.mxu0 %v247
  %11649 = vmatprep.subr.mxu0 0.0
  %11650 = vmatpush1.msra.mxu0 %v248
  %11651 = vmatprep.subr.mxu0 0.0
  %11652 = vmatpush1.msra.mxu0 %v249
  %11653 = vmatprep.subr.mxu0 0.0
  %11654 = vmatpush1.msra.mxu0 %v250
  %11655 = vmatprep.subr.mxu0 0.0
  %11656 = vmatpush1.msra.mxu0 %v251
  %11657 = vmatprep.subr.mxu0 0.0
  %11658 = vmatpush1.msra.mxu0 %v252
  %11659 = vmatprep.subr.mxu0 0.0
  %11660 = vmatpush1.msra.mxu0 %v253
  %11661 = vmatprep.subr.mxu0 0.0
  %11662 = vmatpush1.msra.mxu0 %v254
  %11663 = vmatprep.subr.mxu0 0.0
  %11664 = vmatpush1.msra.mxu0 %v255
  %11665 = vmatprep.subr.mxu0 0.0
  %11666 = vmatpush1.msra.mxu0 %v256
  %11667 = vmatprep.subr.mxu0 0.0
  %11668 = vmatpush1.msra.mxu0 %v257
  %11669 = vmatprep.subr.mxu0 0.0
  %11670 = vmatpush1.msra.mxu0 %v258
  %11671 = vmatprep.subr.mxu0 0.0
  %11672 = vmatpush1.msra.mxu0 %v259
  %11673 = vmatprep.mubr.f32.mxu0 %v11109
  %11674 = vmatmul.mubr.f32.gmra.mrb[0].mxu0 %v11077
  %v11675 = vpop.f32.mrb[0].mxu0
  %v11676 = vadd.f32 %v11606, %v11675
  %v11677 = vpop.f32.mrb[0].mxu0
  %11678 = vdwg.mxu0
  %11679 = vmatprep.subr.mxu0 0.0
  %11680 = vmatpush1.msra.mxu0 %v260
  %11681 = vmatprep.subr.mxu0 0.0
  %11682 = vmatpush1.msra.mxu0 %v261
  %11683 = vmatprep.subr.mxu0 0.0
  %11684 = vmatpush1.msra.mxu0 %v262
  %11685 = vmatprep.subr.mxu0 0.0
  %11686 = vmatpush1.msra.mxu0 %v263
  %11687 = vmatprep.subr.mxu0 0.0
  %11688 = vmatpush1.msra.mxu0 %v264
  %11689 = vmatprep.subr.mxu0 0.0
  %11690 = vmatpush1.msra.mxu0 %v265
  %11691 = vmatprep.subr.mxu0 0.0
  %11692 = vmatpush1.msra.mxu0 %v266
  %11693 = vmatprep.subr.mxu0 0.0
  %11694 = vmatpush1.msra.mxu0 %v267
  %11695 = vmatprep.subr.mxu0 0.0
  %11696 = vmatpush1.msra.mxu0 %v268
  %11697 = vmatprep.subr.mxu0 0.0
  %11698 = vmatpush1.msra.mxu0 %v269
  %11699 = vmatprep.subr.mxu0 0.0
  %11700 = vmatpush1.msra.mxu0 %v270
  %11701 = vmatprep.subr.mxu0 0.0
  %11702 = vmatpush1.msra.mxu0 %v271
  %11703 = vmatprep.subr.mxu0 0.0
  %11704 = vmatpush1.msra.mxu0 %v272
  %11705 = vmatprep.subr.mxu0 0.0
  %11706 = vmatpush1.msra.mxu0 %v273
  %11707 = vmatprep.subr.mxu0 0.0
  %11708 = vmatpush1.msra.mxu0 %v274
  %11709 = vmatprep.subr.mxu0 0.0
  %11710 = vmatpush1.msra.mxu0 %v275
  %11711 = vmatprep.subr.mxu0 0.0
  %11712 = vmatpush1.msra.mxu0 %v276
  %11713 = vmatprep.subr.mxu0 0.0
  %11714 = vmatpush1.msra.mxu0 %v277
  %11715 = vmatprep.subr.mxu0 0.0
  %11716 = vmatpush1.msra.mxu0 %v278
  %11717 = vmatprep.subr.mxu0 0.0
  %11718 = vmatpush1.msra.mxu0 %v279
  %11719 = vmatprep.subr.mxu0 0.0
  %11720 = vmatpush1.msra.mxu0 %v280
  %11721 = vmatprep.subr.mxu0 0.0
  %11722 = vmatpush1.msra.mxu0 %v281
  %11723 = vmatprep.subr.mxu0 0.0
  %11724 = vmatpush1.msra.mxu0 %v282
  %11725 = vmatprep.subr.mxu0 0.0
  %11726 = vmatpush1.msra.mxu0 %v283
  %11727 = vmatprep.subr.mxu0 0.0
  %11728 = vmatpush1.msra.mxu0 %v284
  %11729 = vmatprep.subr.mxu0 0.0
  %11730 = vmatpush1.msra.mxu0 %v285
  %11731 = vmatprep.subr.mxu0 0.0
  %11732 = vmatpush1.msra.mxu0 %v286
  %11733 = vmatprep.subr.mxu0 0.0
  %11734 = vmatpush1.msra.mxu0 %v287
  %11735 = vmatprep.subr.mxu0 0.0
  %11736 = vmatpush1.msra.mxu0 %v288
  %11737 = vmatprep.subr.mxu0 0.0
  %11738 = vmatpush1.msra.mxu0 %v289
  %11739 = vmatprep.subr.mxu0 0.0
  %11740 = vmatpush1.msra.mxu0 %v290
  %11741 = vmatprep.subr.mxu0 0.0
  %11742 = vmatpush1.msra.mxu0 %v291
  %11743 = vmatprep.mubr.f32.mxu0 %v11173
  %11744 = vmatmul.mubr.f32.gmra.mrb[0].mxu0 %v11141
  %v11745 = vpop.f32.mrb[0].mxu0
  %v11746 = vadd.f32 %v11676, %v11745
  %v11747 = vpop.f32.mrb[0].mxu0
  %11748 = vdwg.mxu0
  %vm11749 = vcmask 517120
  %11750 = vst.msk [vmem:[%s7] sm:$0x3] %vm11749, %v11746
  %11751 = vxpose.xlu0.b32.start [1/16] %v10415, 128
  %11752 = vxpose.xlu0.b32.cont [2/16] %v10416, 128
  %11753 = vxpose.xlu0.b32.cont [3/16] %v10417, 128
  %11754 = vxpose.xlu0.b32.cont [4/16] %v10418, 128
  %11755 = vxpose.xlu0.b32.cont [5/16] %v10419, 128
  %11756 = vxpose.xlu0.b32.cont [6/16] %v10420, 128
  %11757 = vxpose.xlu0.b32.cont [7/16] %v10421, 128
  %11758 = vxpose.xlu0.b32.cont [8/16] %v10422, 128
  %11759 = vxpose.xlu0.b32.cont [9/16] %v10423, 128
  %11760 = vxpose.xlu0.b32.cont [10/16] %v10424, 128
  %11761 = vxpose.xlu0.b32.cont [11/16] %v10425, 128
  %11762 = vxpose.xlu0.b32.cont [12/16] %v10426, 128
  %11763 = vxpose.xlu0.b32.cont [13/16] %v10427, 128
  %11764 = vxpose.xlu0.b32.cont [14/16] %v10428, 128
  %11765 = vxpose.xlu0.b32.cont [15/16] %v10429, 128
  %11766 = vxpose.xlu0.b32.end [16/16] %v10430, 128
  %v11767 = vpop.trf.xlu0
  %v11768 = vpop.trf.xlu0
  %v11769 = vpop.trf.xlu0
  %v11770 = vpop.trf.xlu0
  %v11771 = vpop.trf.xlu0
  %v11772 = vpop.trf.xlu0
  %v11773 = vpop.trf.xlu0
  %v11774 = vpop.trf.xlu0
  %v11775 = vpop.trf.xlu0
  %v11776 = vpop.trf.xlu0
  %v11777 = vpop.trf.xlu0
  %v11778 = vpop.trf.xlu0
  %v11779 = vpop.trf.xlu0
  %v11780 = vpop.trf.xlu0
  %v11781 = vpop.trf.xlu0
  %v11782 = vpop.trf.xlu0
  %11783 = vxpose.xlu0.b32.start [1/16] %v10431, 128
  %11784 = vxpose.xlu0.b32.cont [2/16] %v10432, 128
  %11785 = vxpose.xlu0.b32.cont [3/16] %v10433, 128
  %11786 = vxpose.xlu0.b32.cont [4/16] %v10434, 128
  %11787 = vxpose.xlu0.b32.cont [5/16] %v10435, 128
  %11788 = vxpose.xlu0.b32.cont [6/16] %v10436, 128
  %11789 = vxpose.xlu0.b32.cont [7/16] %v10437, 128
  %11790 = vxpose.xlu0.b32.cont [8/16] %v10438, 128
  %11791 = vxpose.xlu0.b32.cont [9/16] %v10439, 128
  %11792 = vxpose.xlu0.b32.cont [10/16] %v10440, 128
  %11793 = vxpose.xlu0.b32.cont [11/16] %v10441, 128
  %11794 = vxpose.xlu0.b32.cont [12/16] %v10442, 128
  %11795 = vxpose.xlu0.b32.cont [13/16] %v10443, 128
  %11796 = vxpose.xlu0.b32.cont [14/16] %v10444, 128
  %11797 = vxpose.xlu0.b32.cont [15/16] %v10445, 128
  %11798 = vxpose.xlu0.b32.end [16/16] %v10446, 128
  %v11799 = vpop.trf.xlu0
  %v11800 = vpop.trf.xlu0
  %v11801 = vpop.trf.xlu0
  %v11802 = vpop.trf.xlu0
  %v11803 = vpop.trf.xlu0
  %v11804 = vpop.trf.xlu0
  %v11805 = vpop.trf.xlu0
  %v11806 = vpop.trf.xlu0
  %v11807 = vpop.trf.xlu0
  %v11808 = vpop.trf.xlu0
  %v11809 = vpop.trf.xlu0
  %v11810 = vpop.trf.xlu0
  %v11811 = vpop.trf.xlu0
  %v11812 = vpop.trf.xlu0
  %v11813 = vpop.trf.xlu0
  %v11814 = vpop.trf.xlu0
  %11815 = vxpose.xlu0.b32.start [1/16] %v10447, 128
  %11816 = vxpose.xlu0.b32.cont [2/16] %v10448, 128
  %11817 = vxpose.xlu0.b32.cont [3/16] %v10449, 128
  %11818 = vxpose.xlu0.b32.cont [4/16] %v10450, 128
  %11819 = vxpose.xlu0.b32.cont [5/16] %v10451, 128
  %11820 = vxpose.xlu0.b32.cont [6/16] %v10452, 128
  %11821 = vxpose.xlu0.b32.cont [7/16] %v10453, 128
  %11822 = vxpose.xlu0.b32.cont [8/16] %v10454, 128
  %11823 = vxpose.xlu0.b32.cont [9/16] %v10455, 128
  %11824 = vxpose.xlu0.b32.cont [10/16] %v10456, 128
  %11825 = vxpose.xlu0.b32.cont [11/16] %v10457, 128
  %11826 = vxpose.xlu0.b32.cont [12/16] %v10458, 128
  %11827 = vxpose.xlu0.b32.cont [13/16] %v10459, 128
  %11828 = vxpose.xlu0.b32.cont [14/16] %v10460, 128
  %11829 = vxpose.xlu0.b32.cont [15/16] %v10461, 128
  %11830 = vxpose.xlu0.b32.end [16/16] %v10462, 128
  %v11831 = vpop.trf.xlu0
  %v11832 = vpop.trf.xlu0
  %v11833 = vpop.trf.xlu0
  %v11834 = vpop.trf.xlu0
  %v11835 = vpop.trf.xlu0
  %v11836 = vpop.trf.xlu0
  %v11837 = vpop.trf.xlu0
  %v11838 = vpop.trf.xlu0
  %v11839 = vpop.trf.xlu0
  %v11840 = vpop.trf.xlu0
  %v11841 = vpop.trf.xlu0
  %v11842 = vpop.trf.xlu0
  %v11843 = vpop.trf.xlu0
  %v11844 = vpop.trf.xlu0
  %v11845 = vpop.trf.xlu0
  %v11846 = vpop.trf.xlu0
  %11847 = vxpose.xlu0.b32.start [1/16] %v10463, 128
  %11848 = vxpose.xlu0.b32.cont [2/16] %v10464, 128
  %11849 = vxpose.xlu0.b32.cont [3/16] %v10465, 128
  %11850 = vxpose.xlu0.b32.cont [4/16] %v10466, 128
  %11851 = vxpose.xlu0.b32.cont [5/16] %v10467, 128
  %11852 = vxpose.xlu0.b32.cont [6/16] %v10468, 128
  %11853 = vxpose.xlu0.b32.cont [7/16] %v10469, 128
  %11854 = vxpose.xlu0.b32.cont [8/16] %v10470, 128
  %11855 = vxpose.xlu0.b32.cont [9/16] %v10471, 128
  %11856 = vxpose.xlu0.b32.cont [10/16] %v10472, 128
  %11857 = vxpose.xlu0.b32.cont [11/16] %v10473, 128
  %11858 = vxpose.xlu0.b32.cont [12/16] %v10474, 128
  %11859 = vxpose.xlu0.b32.cont [13/16] %v10475, 128
  %11860 = vxpose.xlu0.b32.cont [14/16] %v10476, 128
  %11861 = vxpose.xlu0.b32.cont [15/16] %v10477, 128
  %11862 = vxpose.xlu0.b32.end [16/16] %v10478, 128
  %v11863 = vpop.trf.xlu0
  %v11864 = vpop.trf.xlu0
  %v11865 = vpop.trf.xlu0
  %v11866 = vpop.trf.xlu0
  %v11867 = vpop.trf.xlu0
  %v11868 = vpop.trf.xlu0
  %v11869 = vpop.trf.xlu0
  %v11870 = vpop.trf.xlu0
  %v11871 = vpop.trf.xlu0
  %v11872 = vpop.trf.xlu0
  %v11873 = vpop.trf.xlu0
  %v11874 = vpop.trf.xlu0
  %v11875 = vpop.trf.xlu0
  %v11876 = vpop.trf.xlu0
  %v11877 = vpop.trf.xlu0
  %v11878 = vpop.trf.xlu0
  %11879 = vxpose.xlu0.b32.start [1/16] %v10479, 128
  %11880 = vxpose.xlu0.b32.cont [2/16] %v10480, 128
  %11881 = vxpose.xlu0.b32.cont [3/16] %v10481, 128
  %11882 = vxpose.xlu0.b32.cont [4/16] %v10482, 128
  %11883 = vxpose.xlu0.b32.cont [5/16] %v10483, 128
  %11884 = vxpose.xlu0.b32.cont [6/16] %v10484, 128
  %11885 = vxpose.xlu0.b32.cont [7/16] %v10485, 128
  %11886 = vxpose.xlu0.b32.cont [8/16] %v10486, 128
  %11887 = vxpose.xlu0.b32.cont [9/16] %v10487, 128
  %11888 = vxpose.xlu0.b32.cont [10/16] %v10488, 128
  %11889 = vxpose.xlu0.b32.cont [11/16] %v10489, 128
  %11890 = vxpose.xlu0.b32.cont [12/16] %v10490, 128
  %11891 = vxpose.xlu0.b32.cont [13/16] %v10491, 128
  %11892 = vxpose.xlu0.b32.cont [14/16] %v10492, 128
  %11893 = vxpose.xlu0.b32.cont [15/16] %v10493, 128
  %11894 = vxpose.xlu0.b32.end [16/16] %v10494, 128
  %v11895 = vpop.trf.xlu0
  %v11896 = vpop.trf.xlu0
  %v11897 = vpop.trf.xlu0
  %v11898 = vpop.trf.xlu0
  %v11899 = vpop.trf.xlu0
  %v11900 = vpop.trf.xlu0
  %v11901 = vpop.trf.xlu0
  %v11902 = vpop.trf.xlu0
  %v11903 = vpop.trf.xlu0
  %v11904 = vpop.trf.xlu0
  %v11905 = vpop.trf.xlu0
  %v11906 = vpop.trf.xlu0
  %v11907 = vpop.trf.xlu0
  %v11908 = vpop.trf.xlu0
  %v11909 = vpop.trf.xlu0
  %v11910 = vpop.trf.xlu0
  %11911 = vxpose.xlu0.b32.start [1/16] %v10495, 128
  %11912 = vxpose.xlu0.b32.cont [2/16] %v10496, 128
  %11913 = vxpose.xlu0.b32.cont [3/16] %v10497, 128
  %11914 = vxpose.xlu0.b32.cont [4/16] %v10498, 128
  %11915 = vxpose.xlu0.b32.cont [5/16] %v10499, 128
  %11916 = vxpose.xlu0.b32.cont [6/16] %v10500, 128
  %11917 = vxpose.xlu0.b32.cont [7/16] %v10501, 128
  %11918 = vxpose.xlu0.b32.cont [8/16] %v10502, 128
  %11919 = vxpose.xlu0.b32.cont [9/16] %v10503, 128
  %11920 = vxpose.xlu0.b32.cont [10/16] %v10504, 128
  %11921 = vxpose.xlu0.b32.cont [11/16] %v10505, 128
  %11922 = vxpose.xlu0.b32.cont [12/16] %v10506, 128
  %11923 = vxpose.xlu0.b32.cont [13/16] %v10507, 128
  %11924 = vxpose.xlu0.b32.cont [14/16] %v10508, 128
  %11925 = vxpose.xlu0.b32.cont [15/16] %v10509, 128
  %11926 = vxpose.xlu0.b32.end [16/16] %v10510, 128
  %v11927 = vpop.trf.xlu0
  %v11928 = vpop.trf.xlu0
  %v11929 = vpop.trf.xlu0
  %v11930 = vpop.trf.xlu0
  %v11931 = vpop.trf.xlu0
  %v11932 = vpop.trf.xlu0
  %v11933 = vpop.trf.xlu0
  %v11934 = vpop.trf.xlu0
  %v11935 = vpop.trf.xlu0
  %v11936 = vpop.trf.xlu0
  %v11937 = vpop.trf.xlu0
  %v11938 = vpop.trf.xlu0
  %v11939 = vpop.trf.xlu0
  %v11940 = vpop.trf.xlu0
  %v11941 = vpop.trf.xlu0
  %v11942 = vpop.trf.xlu0
  %11943 = vxpose.xlu0.b32.start [1/16] %v10511, 128
  %11944 = vxpose.xlu0.b32.cont [2/16] %v10512, 128
  %11945 = vxpose.xlu0.b32.cont [3/16] %v10513, 128
  %11946 = vxpose.xlu0.b32.cont [4/16] %v10514, 128
  %11947 = vxpose.xlu0.b32.cont [5/16] %v10515, 128
  %11948 = vxpose.xlu0.b32.cont [6/16] %v10516, 128
  %11949 = vxpose.xlu0.b32.cont [7/16] %v10517, 128
  %11950 = vxpose.xlu0.b32.cont [8/16] %v10518, 128
  %11951 = vxpose.xlu0.b32.cont [9/16] %v10519, 128
  %11952 = vxpose.xlu0.b32.cont [10/16] %v10520, 128
  %11953 = vxpose.xlu0.b32.cont [11/16] %v10521, 128
  %11954 = vxpose.xlu0.b32.cont [12/16] %v10522, 128
  %11955 = vxpose.xlu0.b32.cont [13/16] %v10523, 128
  %11956 = vxpose.xlu0.b32.cont [14/16] %v10524, 128
  %11957 = vxpose.xlu0.b32.cont [15/16] %v10525, 128
  %11958 = vxpose.xlu0.b32.end [16/16] %v10526, 128
  %v11959 = vpop.trf.xlu0
  %v11960 = vpop.trf.xlu0
  %v11961 = vpop.trf.xlu0
  %v11962 = vpop.trf.xlu0
  %v11963 = vpop.trf.xlu0
  %v11964 = vpop.trf.xlu0
  %v11965 = vpop.trf.xlu0
  %v11966 = vpop.trf.xlu0
  %v11967 = vpop.trf.xlu0
  %v11968 = vpop.trf.xlu0
  %v11969 = vpop.trf.xlu0
  %v11970 = vpop.trf.xlu0
  %v11971 = vpop.trf.xlu0
  %v11972 = vpop.trf.xlu0
  %v11973 = vpop.trf.xlu0
  %v11974 = vpop.trf.xlu0
  %11975 = vxpose.xlu0.b32.start [1/16] %v10527, 128
  %11976 = vxpose.xlu0.b32.cont [2/16] %v10528, 128
  %11977 = vxpose.xlu0.b32.cont [3/16] %v10529, 128
  %11978 = vxpose.xlu0.b32.cont [4/16] %v10530, 128
  %11979 = vxpose.xlu0.b32.cont [5/16] %v10531, 128
  %11980 = vxpose.xlu0.b32.cont [6/16] %v10532, 128
  %11981 = vxpose.xlu0.b32.cont [7/16] %v10533, 128
  %11982 = vxpose.xlu0.b32.cont [8/16] %v10534, 128
  %11983 = vxpose.xlu0.b32.cont [9/16] %v10535, 128
  %11984 = vxpose.xlu0.b32.cont [10/16] %v10536, 128
  %11985 = vxpose.xlu0.b32.cont [11/16] %v10537, 128
  %11986 = vxpose.xlu0.b32.cont [12/16] %v10538, 128
  %11987 = vxpose.xlu0.b32.cont [13/16] %v10539, 128
  %11988 = vxpose.xlu0.b32.cont [14/16] %v10540, 128
  %11989 = vxpose.xlu0.b32.cont [15/16] %v10541, 128
  %11990 = vxpose.xlu0.b32.end [16/16] %v10542, 128
  %v11991 = vpop.trf.xlu0
  %v11992 = vpop.trf.xlu0
  %v11993 = vpop.trf.xlu0
  %v11994 = vpop.trf.xlu0
  %v11995 = vpop.trf.xlu0
  %v11996 = vpop.trf.xlu0
  %v11997 = vpop.trf.xlu0
  %v11998 = vpop.trf.xlu0
  %v11999 = vpop.trf.xlu0
  %v12000 = vpop.trf.xlu0
  %v12001 = vpop.trf.xlu0
  %v12002 = vpop.trf.xlu0
  %v12003 = vpop.trf.xlu0
  %v12004 = vpop.trf.xlu0
  %v12005 = vpop.trf.xlu0
  %v12006 = vpop.trf.xlu0
  %12007 = vxpose.xlu0.b32.start [1/16] %v10543, 128
  %12008 = vxpose.xlu0.b32.cont [2/16] %v10544, 128
  %12009 = vxpose.xlu0.b32.cont [3/16] %v10545, 128
  %12010 = vxpose.xlu0.b32.cont [4/16] %v10546, 128
  %12011 = vxpose.xlu0.b32.cont [5/16] %v10547, 128
  %12012 = vxpose.xlu0.b32.cont [6/16] %v10548, 128
  %12013 = vxpose.xlu0.b32.cont [7/16] %v10549, 128
  %12014 = vxpose.xlu0.b32.cont [8/16] %v10550, 128
  %12015 = vxpose.xlu0.b32.cont [9/16] %v10551, 128
  %12016 = vxpose.xlu0.b32.cont [10/16] %v10552, 128
  %12017 = vxpose.xlu0.b32.cont [11/16] %v10553, 128
  %12018 = vxpose.xlu0.b32.cont [12/16] %v10554, 128
  %12019 = vxpose.xlu0.b32.cont [13/16] %v10555, 128
  %12020 = vxpose.xlu0.b32.cont [14/16] %v10556, 128
  %12021 = vxpose.xlu0.b32.cont [15/16] %v10557, 128
  %12022 = vxpose.xlu0.b32.end [16/16] %v10558, 128
  %v12023 = vpop.trf.xlu0
  %v12024 = vpop.trf.xlu0
  %v12025 = vpop.trf.xlu0
  %v12026 = vpop.trf.xlu0
  %v12027 = vpop.trf.xlu0
  %v12028 = vpop.trf.xlu0
  %v12029 = vpop.trf.xlu0
  %v12030 = vpop.trf.xlu0
  %v12031 = vpop.trf.xlu0
  %v12032 = vpop.trf.xlu0
  %v12033 = vpop.trf.xlu0
  %v12034 = vpop.trf.xlu0
  %v12035 = vpop.trf.xlu0
  %v12036 = vpop.trf.xlu0
  %v12037 = vpop.trf.xlu0
  %v12038 = vpop.trf.xlu0
  %12039 = vxpose.xlu0.b32.start [1/16] %v10559, 128
  %12040 = vxpose.xlu0.b32.cont [2/16] %v10560, 128
  %12041 = vxpose.xlu0.b32.cont [3/16] %v10561, 128
  %12042 = vxpose.xlu0.b32.cont [4/16] %v10562, 128
  %12043 = vxpose.xlu0.b32.cont [5/16] %v10563, 128
  %12044 = vxpose.xlu0.b32.cont [6/16] %v10564, 128
  %12045 = vxpose.xlu0.b32.cont [7/16] %v10565, 128
  %12046 = vxpose.xlu0.b32.cont [8/16] %v10566, 128
  %12047 = vxpose.xlu0.b32.cont [9/16] %v10567, 128
  %12048 = vxpose.xlu0.b32.cont [10/16] %v10568, 128
  %12049 = vxpose.xlu0.b32.cont [11/16] %v10569, 128
  %12050 = vxpose.xlu0.b32.cont [12/16] %v10570, 128
  %12051 = vxpose.xlu0.b32.cont [13/16] %v10571, 128
  %12052 = vxpose.xlu0.b32.cont [14/16] %v10572, 128
  %12053 = vxpose.xlu0.b32.cont [15/16] %v10573, 128
  %12054 = vxpose.xlu0.b32.end [16/16] %v10574, 128
  %v12055 = vpop.trf.xlu0
  %v12056 = vpop.trf.xlu0
  %v12057 = vpop.trf.xlu0
  %v12058 = vpop.trf.xlu0
  %v12059 = vpop.trf.xlu0
  %v12060 = vpop.trf.xlu0
  %v12061 = vpop.trf.xlu0
  %v12062 = vpop.trf.xlu0
  %v12063 = vpop.trf.xlu0
  %v12064 = vpop.trf.xlu0
  %v12065 = vpop.trf.xlu0
  %v12066 = vpop.trf.xlu0
  %v12067 = vpop.trf.xlu0
  %v12068 = vpop.trf.xlu0
  %v12069 = vpop.trf.xlu0
  %v12070 = vpop.trf.xlu0
  %12071 = vxpose.xlu0.b32.start [1/16] %v10575, 128
  %12072 = vxpose.xlu0.b32.cont [2/16] %v10576, 128
  %12073 = vxpose.xlu0.b32.cont [3/16] %v10577, 128
  %12074 = vxpose.xlu0.b32.cont [4/16] %v10578, 128
  %12075 = vxpose.xlu0.b32.cont [5/16] %v10579, 128
  %12076 = vxpose.xlu0.b32.cont [6/16] %v10580, 128
  %12077 = vxpose.xlu0.b32.cont [7/16] %v10581, 128
  %12078 = vxpose.xlu0.b32.cont [8/16] %v10582, 128
  %12079 = vxpose.xlu0.b32.cont [9/16] %v10583, 128
  %12080 = vxpose.xlu0.b32.cont [10/16] %v10584, 128
  %12081 = vxpose.xlu0.b32.cont [11/16] %v10585, 128
  %12082 = vxpose.xlu0.b32.cont [12/16] %v10586, 128
  %12083 = vxpose.xlu0.b32.cont [13/16] %v10587, 128
  %12084 = vxpose.xlu0.b32.cont [14/16] %v10588, 128
  %12085 = vxpose.xlu0.b32.cont [15/16] %v10589, 128
  %12086 = vxpose.xlu0.b32.end [16/16] %v10590, 128
  %v12087 = vpop.trf.xlu0
  %v12088 = vpop.trf.xlu0
  %v12089 = vpop.trf.xlu0
  %v12090 = vpop.trf.xlu0
  %v12091 = vpop.trf.xlu0
  %v12092 = vpop.trf.xlu0
  %v12093 = vpop.trf.xlu0
  %v12094 = vpop.trf.xlu0
  %v12095 = vpop.trf.xlu0
  %v12096 = vpop.trf.xlu0
  %v12097 = vpop.trf.xlu0
  %v12098 = vpop.trf.xlu0
  %v12099 = vpop.trf.xlu0
  %v12100 = vpop.trf.xlu0
  %v12101 = vpop.trf.xlu0
  %v12102 = vpop.trf.xlu0
  %12103 = vxpose.xlu0.b32.start [1/16] %v10591, 128
  %12104 = vxpose.xlu0.b32.cont [2/16] %v10592, 128
  %12105 = vxpose.xlu0.b32.cont [3/16] %v10593, 128
  %12106 = vxpose.xlu0.b32.cont [4/16] %v10594, 128
  %12107 = vxpose.xlu0.b32.cont [5/16] %v10595, 128
  %12108 = vxpose.xlu0.b32.cont [6/16] %v10596, 128
  %12109 = vxpose.xlu0.b32.cont [7/16] %v10597, 128
  %12110 = vxpose.xlu0.b32.cont [8/16] %v10598, 128
  %12111 = vxpose.xlu0.b32.cont [9/16] %v10599, 128
  %12112 = vxpose.xlu0.b32.cont [10/16] %v10600, 128
  %12113 = vxpose.xlu0.b32.cont [11/16] %v10601, 128
  %12114 = vxpose.xlu0.b32.cont [12/16] %v10602, 128
  %12115 = vxpose.xlu0.b32.cont [13/16] %v10603, 128
  %12116 = vxpose.xlu0.b32.cont [14/16] %v10604, 128
  %12117 = vxpose.xlu0.b32.cont [15/16] %v10605, 128
  %12118 = vxpose.xlu0.b32.end [16/16] %v10606, 128
  %v12119 = vpop.trf.xlu0
  %v12120 = vpop.trf.xlu0
  %v12121 = vpop.trf.xlu0
  %v12122 = vpop.trf.xlu0
  %v12123 = vpop.trf.xlu0
  %v12124 = vpop.trf.xlu0
  %v12125 = vpop.trf.xlu0
  %v12126 = vpop.trf.xlu0
  %v12127 = vpop.trf.xlu0
  %v12128 = vpop.trf.xlu0
  %v12129 = vpop.trf.xlu0
  %v12130 = vpop.trf.xlu0
  %v12131 = vpop.trf.xlu0
  %v12132 = vpop.trf.xlu0
  %v12133 = vpop.trf.xlu0
  %v12134 = vpop.trf.xlu0
  %12135 = vxpose.xlu0.b32.start [1/16] %v10607, 128
  %12136 = vxpose.xlu0.b32.cont [2/16] %v10608, 128
  %12137 = vxpose.xlu0.b32.cont [3/16] %v10609, 128
  %12138 = vxpose.xlu0.b32.cont [4/16] %v10610, 128
  %12139 = vxpose.xlu0.b32.cont [5/16] %v10611, 128
  %12140 = vxpose.xlu0.b32.cont [6/16] %v10612, 128
  %12141 = vxpose.xlu0.b32.cont [7/16] %v10613, 128
  %12142 = vxpose.xlu0.b32.cont [8/16] %v10614, 128
  %12143 = vxpose.xlu0.b32.cont [9/16] %v10615, 128
  %12144 = vxpose.xlu0.b32.cont [10/16] %v10616, 128
  %12145 = vxpose.xlu0.b32.cont [11/16] %v10617, 128
  %12146 = vxpose.xlu0.b32.cont [12/16] %v10618, 128
  %12147 = vxpose.xlu0.b32.cont [13/16] %v10619, 128
  %12148 = vxpose.xlu0.b32.cont [14/16] %v10620, 128
  %12149 = vxpose.xlu0.b32.cont [15/16] %v10621, 128
  %12150 = vxpose.xlu0.b32.end [16/16] %v10622, 128
  %v12151 = vpop.trf.xlu0
  %v12152 = vpop.trf.xlu0
  %v12153 = vpop.trf.xlu0
  %v12154 = vpop.trf.xlu0
  %v12155 = vpop.trf.xlu0
  %v12156 = vpop.trf.xlu0
  %v12157 = vpop.trf.xlu0
  %v12158 = vpop.trf.xlu0
  %v12159 = vpop.trf.xlu0
  %v12160 = vpop.trf.xlu0
  %v12161 = vpop.trf.xlu0
  %v12162 = vpop.trf.xlu0
  %v12163 = vpop.trf.xlu0
  %v12164 = vpop.trf.xlu0
  %v12165 = vpop.trf.xlu0
  %v12166 = vpop.trf.xlu0
  %12167 = vxpose.xlu0.b32.start [1/16] %v10623, 128
  %12168 = vxpose.xlu0.b32.cont [2/16] %v10624, 128
  %12169 = vxpose.xlu0.b32.cont [3/16] %v10625, 128
  %12170 = vxpose.xlu0.b32.cont [4/16] %v10626, 128
  %12171 = vxpose.xlu0.b32.cont [5/16] %v10627, 128
  %12172 = vxpose.xlu0.b32.cont [6/16] %v10628, 128
  %12173 = vxpose.xlu0.b32.cont [7/16] %v10629, 128
  %12174 = vxpose.xlu0.b32.cont [8/16] %v10630, 128
  %12175 = vxpose.xlu0.b32.cont [9/16] %v10631, 128
  %12176 = vxpose.xlu0.b32.cont [10/16] %v10632, 128
  %12177 = vxpose.xlu0.b32.cont [11/16] %v10633, 128
  %12178 = vxpose.xlu0.b32.cont [12/16] %v10634, 128
  %12179 = vxpose.xlu0.b32.cont [13/16] %v10635, 128
  %12180 = vxpose.xlu0.b32.cont [14/16] %v10636, 128
  %12181 = vxpose.xlu0.b32.cont [15/16] %v10637, 128
  %12182 = vxpose.xlu0.b32.end [16/16] %v10638, 128
  %v12183 = vpop.trf.xlu0
  %v12184 = vpop.trf.xlu0
  %v12185 = vpop.trf.xlu0
  %v12186 = vpop.trf.xlu0
  %v12187 = vpop.trf.xlu0
  %v12188 = vpop.trf.xlu0
  %v12189 = vpop.trf.xlu0
  %v12190 = vpop.trf.xlu0
  %v12191 = vpop.trf.xlu0
  %v12192 = vpop.trf.xlu0
  %v12193 = vpop.trf.xlu0
  %v12194 = vpop.trf.xlu0
  %v12195 = vpop.trf.xlu0
  %v12196 = vpop.trf.xlu0
  %v12197 = vpop.trf.xlu0
  %v12198 = vpop.trf.xlu0
  %12199 = vxpose.xlu0.b32.start [1/16] %v10639, 128
  %12200 = vxpose.xlu0.b32.cont [2/16] %v10640, 128
  %12201 = vxpose.xlu0.b32.cont [3/16] %v10641, 128
  %12202 = vxpose.xlu0.b32.cont [4/16] %v10642, 128
  %12203 = vxpose.xlu0.b32.cont [5/16] %v10643, 128
  %12204 = vxpose.xlu0.b32.cont [6/16] %v10644, 128
  %12205 = vxpose.xlu0.b32.cont [7/16] %v10645, 128
  %12206 = vxpose.xlu0.b32.cont [8/16] %v10646, 128
  %12207 = vxpose.xlu0.b32.cont [9/16] %v10647, 128
  %12208 = vxpose.xlu0.b32.cont [10/16] %v10648, 128
  %12209 = vxpose.xlu0.b32.cont [11/16] %v10649, 128
  %12210 = vxpose.xlu0.b32.cont [12/16] %v10650, 128
  %12211 = vxpose.xlu0.b32.cont [13/16] %v10651, 128
  %12212 = vxpose.xlu0.b32.cont [14/16] %v10652, 128
  %12213 = vxpose.xlu0.b32.cont [15/16] %v10653, 128
  %12214 = vxpose.xlu0.b32.end [16/16] %v10654, 128
  %v12215 = vpop.trf.xlu0
  %v12216 = vpop.trf.xlu0
  %v12217 = vpop.trf.xlu0
  %v12218 = vpop.trf.xlu0
  %v12219 = vpop.trf.xlu0
  %v12220 = vpop.trf.xlu0
  %v12221 = vpop.trf.xlu0
  %v12222 = vpop.trf.xlu0
  %v12223 = vpop.trf.xlu0
  %v12224 = vpop.trf.xlu0
  %v12225 = vpop.trf.xlu0
  %v12226 = vpop.trf.xlu0
  %v12227 = vpop.trf.xlu0
  %v12228 = vpop.trf.xlu0
  %v12229 = vpop.trf.xlu0
  %v12230 = vpop.trf.xlu0
  %12231 = vxpose.xlu0.b32.start [1/16] %v10655, 128
  %12232 = vxpose.xlu0.b32.cont [2/16] %v10656, 128
  %12233 = vxpose.xlu0.b32.cont [3/16] %v10657, 128
  %12234 = vxpose.xlu0.b32.cont [4/16] %v10658, 128
  %12235 = vxpose.xlu0.b32.cont [5/16] %v10659, 128
  %12236 = vxpose.xlu0.b32.cont [6/16] %v10660, 128
  %12237 = vxpose.xlu0.b32.cont [7/16] %v10661, 128
  %12238 = vxpose.xlu0.b32.cont [8/16] %v10662, 128
  %12239 = vxpose.xlu0.b32.cont [9/16] %v10663, 128
  %12240 = vxpose.xlu0.b32.cont [10/16] %v10664, 128
  %12241 = vxpose.xlu0.b32.cont [11/16] %v10665, 128
  %12242 = vxpose.xlu0.b32.cont [12/16] %v10666, 128
  %12243 = vxpose.xlu0.b32.cont [13/16] %v10667, 128
  %12244 = vxpose.xlu0.b32.cont [14/16] %v10668, 128
  %12245 = vxpose.xlu0.b32.cont [15/16] %v10669, 128
  %12246 = vxpose.xlu0.b32.end [16/16] %v10670, 128
  %v12247 = vpop.trf.xlu0
  %v12248 = vpop.trf.xlu0
  %v12249 = vpop.trf.xlu0
  %v12250 = vpop.trf.xlu0
  %v12251 = vpop.trf.xlu0
  %v12252 = vpop.trf.xlu0
  %v12253 = vpop.trf.xlu0
  %v12254 = vpop.trf.xlu0
  %v12255 = vpop.trf.xlu0
  %v12256 = vpop.trf.xlu0
  %v12257 = vpop.trf.xlu0
  %v12258 = vpop.trf.xlu0
  %v12259 = vpop.trf.xlu0
  %v12260 = vpop.trf.xlu0
  %v12261 = vpop.trf.xlu0
  %v12262 = vpop.trf.xlu0
  %12263 = vmatprep.subr.mxu0 0.0
  %12264 = vmatpush1.msra.mxu0 %v36
  %12265 = vmatprep.subr.mxu0 0.0
  %12266 = vmatpush1.msra.mxu0 %v37
  %12267 = vmatprep.subr.mxu0 0.0
  %12268 = vmatpush1.msra.mxu0 %v38
  %12269 = vmatprep.subr.mxu0 0.0
  %12270 = vmatpush1.msra.mxu0 %v39
  %12271 = vmatprep.subr.mxu0 0.0
  %12272 = vmatpush1.msra.mxu0 %v40
  %12273 = vmatprep.subr.mxu0 0.0
  %12274 = vmatpush1.msra.mxu0 %v41
  %12275 = vmatprep.subr.mxu0 0.0
  %12276 = vmatpush1.msra.mxu0 %v42
  %12277 = vmatprep.subr.mxu0 0.0
  %12278 = vmatpush1.msra.mxu0 %v43
  %12279 = vmatprep.subr.mxu0 0.0
  %12280 = vmatpush1.msra.mxu0 %v44
  %12281 = vmatprep.subr.mxu0 0.0
  %12282 = vmatpush1.msra.mxu0 %v45
  %12283 = vmatprep.subr.mxu0 0.0
  %12284 = vmatpush1.msra.mxu0 %v46
  %12285 = vmatprep.subr.mxu0 0.0
  %12286 = vmatpush1.msra.mxu0 %v47
  %12287 = vmatprep.subr.mxu0 0.0
  %12288 = vmatpush1.msra.mxu0 %v48
  %12289 = vmatprep.subr.mxu0 0.0
  %12290 = vmatpush1.msra.mxu0 %v49
  %12291 = vmatprep.subr.mxu0 0.0
  %12292 = vmatpush1.msra.mxu0 %v50
  %12293 = vmatprep.subr.mxu0 0.0
  %12294 = vmatpush1.msra.mxu0 %v51
  %12295 = vmatprep.subr.mxu0 0.0
  %12296 = vmatpush1.msra.mxu0 %v52
  %12297 = vmatprep.subr.mxu0 0.0
  %12298 = vmatpush1.msra.mxu0 %v53
  %12299 = vmatprep.subr.mxu0 0.0
  %12300 = vmatpush1.msra.mxu0 %v54
  %12301 = vmatprep.subr.mxu0 0.0
  %12302 = vmatpush1.msra.mxu0 %v55
  %12303 = vmatprep.subr.mxu0 0.0
  %12304 = vmatpush1.msra.mxu0 %v56
  %12305 = vmatprep.subr.mxu0 0.0
  %12306 = vmatpush1.msra.mxu0 %v57
  %12307 = vmatprep.subr.mxu0 0.0
  %12308 = vmatpush1.msra.mxu0 %v58
  %12309 = vmatprep.subr.mxu0 0.0
  %12310 = vmatpush1.msra.mxu0 %v59
  %12311 = vmatprep.subr.mxu0 0.0
  %12312 = vmatpush1.msra.mxu0 %v60
  %12313 = vmatprep.subr.mxu0 0.0
  %12314 = vmatpush1.msra.mxu0 %v61
  %12315 = vmatprep.subr.mxu0 0.0
  %12316 = vmatpush1.msra.mxu0 %v62
  %12317 = vmatprep.subr.mxu0 0.0
  %12318 = vmatpush1.msra.mxu0 %v63
  %12319 = vmatprep.subr.mxu0 0.0
  %12320 = vmatpush1.msra.mxu0 %v64
  %12321 = vmatprep.subr.mxu0 0.0
  %12322 = vmatpush1.msra.mxu0 %v65
  %12323 = vmatprep.subr.mxu0 0.0
  %12324 = vmatpush1.msra.mxu0 %v66
  %12325 = vmatprep.subr.mxu0 0.0
  %12326 = vmatpush1.msra.mxu0 %v67
  %12327 = vmatprep.mubr.f32.mxu0 %v11799
  %12328 = vmatmul.mubr.f32.gmra.mrb[0].mxu0 %v11767
  %v12329 = vpop.f32.mrb[0].mxu0
  %v12330 = vadd.f32 %v10675, %v12329
  %v12331 = vpop.f32.mrb[0].mxu0
  %12332 = vdwg.mxu0
  %12333 = vmatprep.subr.mxu0 0.0
  %12334 = vmatpush1.msra.mxu0 %v68
  %12335 = vmatprep.subr.mxu0 0.0
  %12336 = vmatpush1.msra.mxu0 %v69
  %12337 = vmatprep.subr.mxu0 0.0
  %12338 = vmatpush1.msra.mxu0 %v70
  %12339 = vmatprep.subr.mxu0 0.0
  %12340 = vmatpush1.msra.mxu0 %v71
  %12341 = vmatprep.subr.mxu0 0.0
  %12342 = vmatpush1.msra.mxu0 %v72
  %12343 = vmatprep.subr.mxu0 0.0
  %12344 = vmatpush1.msra.mxu0 %v73
  %12345 = vmatprep.subr.mxu0 0.0
  %12346 = vmatpush1.msra.mxu0 %v74
  %12347 = vmatprep.subr.mxu0 0.0
  %12348 = vmatpush1.msra.mxu0 %v75
  %12349 = vmatprep.subr.mxu0 0.0
  %12350 = vmatpush1.msra.mxu0 %v76
  %12351 = vmatprep.subr.mxu0 0.0
  %12352 = vmatpush1.msra.mxu0 %v77
  %12353 = vmatprep.subr.mxu0 0.0
  %12354 = vmatpush1.msra.mxu0 %v78
  %12355 = vmatprep.subr.mxu0 0.0
  %12356 = vmatpush1.msra.mxu0 %v79
  %12357 = vmatprep.subr.mxu0 0.0
  %12358 = vmatpush1.msra.mxu0 %v80
  %12359 = vmatprep.subr.mxu0 0.0
  %12360 = vmatpush1.msra.mxu0 %v81
  %12361 = vmatprep.subr.mxu0 0.0
  %12362 = vmatpush1.msra.mxu0 %v82
  %12363 = vmatprep.subr.mxu0 0.0
  %12364 = vmatpush1.msra.mxu0 %v83
  %12365 = vmatprep.subr.mxu0 0.0
  %12366 = vmatpush1.msra.mxu0 %v84
  %12367 = vmatprep.subr.mxu0 0.0
  %12368 = vmatpush1.msra.mxu0 %v85
  %12369 = vmatprep.subr.mxu0 0.0
  %12370 = vmatpush1.msra.mxu0 %v86
  %12371 = vmatprep.subr.mxu0 0.0
  %12372 = vmatpush1.msra.mxu0 %v87
  %12373 = vmatprep.subr.mxu0 0.0
  %12374 = vmatpush1.msra.mxu0 %v88
  %12375 = vmatprep.subr.mxu0 0.0
  %12376 = vmatpush1.msra.mxu0 %v89
  %12377 = vmatprep.subr.mxu0 0.0
  %12378 = vmatpush1.msra.mxu0 %v90
  %12379 = vmatprep.subr.mxu0 0.0
  %12380 = vmatpush1.msra.mxu0 %v91
  %12381 = vmatprep.subr.mxu0 0.0
  %12382 = vmatpush1.msra.mxu0 %v92
  %12383 = vmatprep.subr.mxu0 0.0
  %12384 = vmatpush1.msra.mxu0 %v93
  %12385 = vmatprep.subr.mxu0 0.0
  %12386 = vmatpush1.msra.mxu0 %v94
  %12387 = vmatprep.subr.mxu0 0.0
  %12388 = vmatpush1.msra.mxu0 %v95
  %12389 = vmatprep.subr.mxu0 0.0
  %12390 = vmatpush1.msra.mxu0 %v96
  %12391 = vmatprep.subr.mxu0 0.0
  %12392 = vmatpush1.msra.mxu0 %v97
  %12393 = vmatprep.subr.mxu0 0.0
  %12394 = vmatpush1.msra.mxu0 %v98
  %12395 = vmatprep.subr.mxu0 0.0
  %12396 = vmatpush1.msra.mxu0 %v99
  %12397 = vmatprep.mubr.f32.mxu0 %v11863
  %12398 = vmatmul.mubr.f32.gmra.mrb[0].mxu0 %v11831
  %v12399 = vpop.f32.mrb[0].mxu0
  %v12400 = vadd.f32 %v12330, %v12399
  %v12401 = vpop.f32.mrb[0].mxu0
  %12402 = vdwg.mxu0
  %12403 = vmatprep.subr.mxu0 0.0
  %12404 = vmatpush1.msra.mxu0 %v100
  %12405 = vmatprep.subr.mxu0 0.0
  %12406 = vmatpush1.msra.mxu0 %v101
  %12407 = vmatprep.subr.mxu0 0.0
  %12408 = vmatpush1.msra.mxu0 %v102
  %12409 = vmatprep.subr.mxu0 0.0
  %12410 = vmatpush1.msra.mxu0 %v103
  %12411 = vmatprep.subr.mxu0 0.0
  %12412 = vmatpush1.msra.mxu0 %v104
  %12413 = vmatprep.subr.mxu0 0.0
  %12414 = vmatpush1.msra.mxu0 %v105
  %12415 = vmatprep.subr.mxu0 0.0
  %12416 = vmatpush1.msra.mxu0 %v106
  %12417 = vmatprep.subr.mxu0 0.0
  %12418 = vmatpush1.msra.mxu0 %v107
  %12419 = vmatprep.subr.mxu0 0.0
  %12420 = vmatpush1.msra.mxu0 %v108
  %12421 = vmatprep.subr.mxu0 0.0
  %12422 = vmatpush1.msra.mxu0 %v109
  %12423 = vmatprep.subr.mxu0 0.0
  %12424 = vmatpush1.msra.mxu0 %v110
  %12425 = vmatprep.subr.mxu0 0.0
  %12426 = vmatpush1.msra.mxu0 %v111
  %12427 = vmatprep.subr.mxu0 0.0
  %12428 = vmatpush1.msra.mxu0 %v112
  %12429 = vmatprep.subr.mxu0 0.0
  %12430 = vmatpush1.msra.mxu0 %v113
  %12431 = vmatprep.subr.mxu0 0.0
  %12432 = vmatpush1.msra.mxu0 %v114
  %12433 = vmatprep.subr.mxu0 0.0
  %12434 = vmatpush1.msra.mxu0 %v115
  %12435 = vmatprep.subr.mxu0 0.0
  %12436 = vmatpush1.msra.mxu0 %v116
  %12437 = vmatprep.subr.mxu0 0.0
  %12438 = vmatpush1.msra.mxu0 %v117
  %12439 = vmatprep.subr.mxu0 0.0
  %12440 = vmatpush1.msra.mxu0 %v118
  %12441 = vmatprep.subr.mxu0 0.0
  %12442 = vmatpush1.msra.mxu0 %v119
  %12443 = vmatprep.subr.mxu0 0.0
  %12444 = vmatpush1.msra.mxu0 %v120
  %12445 = vmatprep.subr.mxu0 0.0
  %12446 = vmatpush1.msra.mxu0 %v121
  %12447 = vmatprep.subr.mxu0 0.0
  %12448 = vmatpush1.msra.mxu0 %v122
  %12449 = vmatprep.subr.mxu0 0.0
  %12450 = vmatpush1.msra.mxu0 %v123
  %12451 = vmatprep.subr.mxu0 0.0
  %12452 = vmatpush1.msra.mxu0 %v124
  %12453 = vmatprep.subr.mxu0 0.0
  %12454 = vmatpush1.msra.mxu0 %v125
  %12455 = vmatprep.subr.mxu0 0.0
  %12456 = vmatpush1.msra.mxu0 %v126
  %12457 = vmatprep.subr.mxu0 0.0
  %12458 = vmatpush1.msra.mxu0 %v127
  %12459 = vmatprep.subr.mxu0 0.0
  %12460 = vmatpush1.msra.mxu0 %v128
  %12461 = vmatprep.subr.mxu0 0.0
  %12462 = vmatpush1.msra.mxu0 %v129
  %12463 = vmatprep.subr.mxu0 0.0
  %12464 = vmatpush1.msra.mxu0 %v130
  %12465 = vmatprep.subr.mxu0 0.0
  %12466 = vmatpush1.msra.mxu0 %v131
  %12467 = vmatprep.mubr.f32.mxu0 %v11927
  %12468 = vmatmul.mubr.f32.gmra.mrb[0].mxu0 %v11895
  %v12469 = vpop.f32.mrb[0].mxu0
  %v12470 = vadd.f32 %v12400, %v12469
  %v12471 = vpop.f32.mrb[0].mxu0
  %12472 = vdwg.mxu0
  %12473 = vmatprep.subr.mxu0 0.0
  %12474 = vmatpush1.msra.mxu0 %v132
  %12475 = vmatprep.subr.mxu0 0.0
  %12476 = vmatpush1.msra.mxu0 %v133
  %12477 = vmatprep.subr.mxu0 0.0
  %12478 = vmatpush1.msra.mxu0 %v134
  %12479 = vmatprep.subr.mxu0 0.0
  %12480 = vmatpush1.msra.mxu0 %v135
  %12481 = vmatprep.subr.mxu0 0.0
  %12482 = vmatpush1.msra.mxu0 %v136
  %12483 = vmatprep.subr.mxu0 0.0
  %12484 = vmatpush1.msra.mxu0 %v137
  %12485 = vmatprep.subr.mxu0 0.0
  %12486 = vmatpush1.msra.mxu0 %v138
  %12487 = vmatprep.subr.mxu0 0.0
  %12488 = vmatpush1.msra.mxu0 %v139
  %12489 = vmatprep.subr.mxu0 0.0
  %12490 = vmatpush1.msra.mxu0 %v140
  %12491 = vmatprep.subr.mxu0 0.0
  %12492 = vmatpush1.msra.mxu0 %v141
  %12493 = vmatprep.subr.mxu0 0.0
  %12494 = vmatpush1.msra.mxu0 %v142
  %12495 = vmatprep.subr.mxu0 0.0
  %12496 = vmatpush1.msra.mxu0 %v143
  %12497 = vmatprep.subr.mxu0 0.0
  %12498 = vmatpush1.msra.mxu0 %v144
  %12499 = vmatprep.subr.mxu0 0.0
  %12500 = vmatpush1.msra.mxu0 %v145
  %12501 = vmatprep.subr.mxu0 0.0
  %12502 = vmatpush1.msra.mxu0 %v146
  %12503 = vmatprep.subr.mxu0 0.0
  %12504 = vmatpush1.msra.mxu0 %v147
  %12505 = vmatprep.subr.mxu0 0.0
  %12506 = vmatpush1.msra.mxu0 %v148
  %12507 = vmatprep.subr.mxu0 0.0
  %12508 = vmatpush1.msra.mxu0 %v149
  %12509 = vmatprep.subr.mxu0 0.0
  %12510 = vmatpush1.msra.mxu0 %v150
  %12511 = vmatprep.subr.mxu0 0.0
  %12512 = vmatpush1.msra.mxu0 %v151
  %12513 = vmatprep.subr.mxu0 0.0
  %12514 = vmatpush1.msra.mxu0 %v152
  %12515 = vmatprep.subr.mxu0 0.0
  %12516 = vmatpush1.msra.mxu0 %v153
  %12517 = vmatprep.subr.mxu0 0.0
  %12518 = vmatpush1.msra.mxu0 %v154
  %12519 = vmatprep.subr.mxu0 0.0
  %12520 = vmatpush1.msra.mxu0 %v155
  %12521 = vmatprep.subr.mxu0 0.0
  %12522 = vmatpush1.msra.mxu0 %v156
  %12523 = vmatprep.subr.mxu0 0.0
  %12524 = vmatpush1.msra.mxu0 %v157
  %12525 = vmatprep.subr.mxu0 0.0
  %12526 = vmatpush1.msra.mxu0 %v158
  %12527 = vmatprep.subr.mxu0 0.0
  %12528 = vmatpush1.msra.mxu0 %v159
  %12529 = vmatprep.subr.mxu0 0.0
  %12530 = vmatpush1.msra.mxu0 %v160
  %12531 = vmatprep.subr.mxu0 0.0
  %12532 = vmatpush1.msra.mxu0 %v161
  %12533 = vmatprep.subr.mxu0 0.0
  %12534 = vmatpush1.msra.mxu0 %v162
  %12535 = vmatprep.subr.mxu0 0.0
  %12536 = vmatpush1.msra.mxu0 %v163
  %12537 = vmatprep.mubr.f32.mxu0 %v11991
  %12538 = vmatmul.mubr.f32.gmra.mrb[0].mxu0 %v11959
  %v12539 = vpop.f32.mrb[0].mxu0
  %v12540 = vadd.f32 %v12470, %v12539
  %v12541 = vpop.f32.mrb[0].mxu0
  %12542 = vdwg.mxu0
  %12543 = vmatprep.subr.mxu0 0.0
  %12544 = vmatpush1.msra.mxu0 %v164
  %12545 = vmatprep.subr.mxu0 0.0
  %12546 = vmatpush1.msra.mxu0 %v165
  %12547 = vmatprep.subr.mxu0 0.0
  %12548 = vmatpush1.msra.mxu0 %v166
  %12549 = vmatprep.subr.mxu0 0.0
  %12550 = vmatpush1.msra.mxu0 %v167
  %12551 = vmatprep.subr.mxu0 0.0
  %12552 = vmatpush1.msra.mxu0 %v168
  %12553 = vmatprep.subr.mxu0 0.0
  %12554 = vmatpush1.msra.mxu0 %v169
  %12555 = vmatprep.subr.mxu0 0.0
  %12556 = vmatpush1.msra.mxu0 %v170
  %12557 = vmatprep.subr.mxu0 0.0
  %12558 = vmatpush1.msra.mxu0 %v171
  %12559 = vmatprep.subr.mxu0 0.0
  %12560 = vmatpush1.msra.mxu0 %v172
  %12561 = vmatprep.subr.mxu0 0.0
  %12562 = vmatpush1.msra.mxu0 %v173
  %12563 = vmatprep.subr.mxu0 0.0
  %12564 = vmatpush1.msra.mxu0 %v174
  %12565 = vmatprep.subr.mxu0 0.0
  %12566 = vmatpush1.msra.mxu0 %v175
  %12567 = vmatprep.subr.mxu0 0.0
  %12568 = vmatpush1.msra.mxu0 %v176
  %12569 = vmatprep.subr.mxu0 0.0
  %12570 = vmatpush1.msra.mxu0 %v177
  %12571 = vmatprep.subr.mxu0 0.0
  %12572 = vmatpush1.msra.mxu0 %v178
  %12573 = vmatprep.subr.mxu0 0.0
  %12574 = vmatpush1.msra.mxu0 %v179
  %12575 = vmatprep.subr.mxu0 0.0
  %12576 = vmatpush1.msra.mxu0 %v180
  %12577 = vmatprep.subr.mxu0 0.0
  %12578 = vmatpush1.msra.mxu0 %v181
  %12579 = vmatprep.subr.mxu0 0.0
  %12580 = vmatpush1.msra.mxu0 %v182
  %12581 = vmatprep.subr.mxu0 0.0
  %12582 = vmatpush1.msra.mxu0 %v183
  %12583 = vmatprep.subr.mxu0 0.0
  %12584 = vmatpush1.msra.mxu0 %v184
  %12585 = vmatprep.subr.mxu0 0.0
  %12586 = vmatpush1.msra.mxu0 %v185
  %12587 = vmatprep.subr.mxu0 0.0
  %12588 = vmatpush1.msra.mxu0 %v186
  %12589 = vmatprep.subr.mxu0 0.0
  %12590 = vmatpush1.msra.mxu0 %v187
  %12591 = vmatprep.subr.mxu0 0.0
  %12592 = vmatpush1.msra.mxu0 %v188
  %12593 = vmatprep.subr.mxu0 0.0
  %12594 = vmatpush1.msra.mxu0 %v189
  %12595 = vmatprep.subr.mxu0 0.0
  %12596 = vmatpush1.msra.mxu0 %v190
  %12597 = vmatprep.subr.mxu0 0.0
  %12598 = vmatpush1.msra.mxu0 %v191
  %12599 = vmatprep.subr.mxu0 0.0
  %12600 = vmatpush1.msra.mxu0 %v192
  %12601 = vmatprep.subr.mxu0 0.0
  %12602 = vmatpush1.msra.mxu0 %v193
  %12603 = vmatprep.subr.mxu0 0.0
  %12604 = vmatpush1.msra.mxu0 %v194
  %12605 = vmatprep.subr.mxu0 0.0
  %12606 = vmatpush1.msra.mxu0 %v195
  %12607 = vmatprep.mubr.f32.mxu0 %v12055
  %12608 = vmatmul.mubr.f32.gmra.mrb[0].mxu0 %v12023
  %v12609 = vpop.f32.mrb[0].mxu0
  %v12610 = vadd.f32 %v12540, %v12609
  %v12611 = vpop.f32.mrb[0].mxu0
  %12612 = vdwg.mxu0
  %12613 = vmatprep.subr.mxu0 0.0
  %12614 = vmatpush1.msra.mxu0 %v196
  %12615 = vmatprep.subr.mxu0 0.0
  %12616 = vmatpush1.msra.mxu0 %v197
  %12617 = vmatprep.subr.mxu0 0.0
  %12618 = vmatpush1.msra.mxu0 %v198
  %12619 = vmatprep.subr.mxu0 0.0
  %12620 = vmatpush1.msra.mxu0 %v199
  %12621 = vmatprep.subr.mxu0 0.0
  %12622 = vmatpush1.msra.mxu0 %v200
  %12623 = vmatprep.subr.mxu0 0.0
  %12624 = vmatpush1.msra.mxu0 %v201
  %12625 = vmatprep.subr.mxu0 0.0
  %12626 = vmatpush1.msra.mxu0 %v202
  %12627 = vmatprep.subr.mxu0 0.0
  %12628 = vmatpush1.msra.mxu0 %v203
  %12629 = vmatprep.subr.mxu0 0.0
  %12630 = vmatpush1.msra.mxu0 %v204
  %12631 = vmatprep.subr.mxu0 0.0
  %12632 = vmatpush1.msra.mxu0 %v205
  %12633 = vmatprep.subr.mxu0 0.0
  %12634 = vmatpush1.msra.mxu0 %v206
  %12635 = vmatprep.subr.mxu0 0.0
  %12636 = vmatpush1.msra.mxu0 %v207
  %12637 = vmatprep.subr.mxu0 0.0
  %12638 = vmatpush1.msra.mxu0 %v208
  %12639 = vmatprep.subr.mxu0 0.0
  %12640 = vmatpush1.msra.mxu0 %v209
  %12641 = vmatprep.subr.mxu0 0.0
  %12642 = vmatpush1.msra.mxu0 %v210
  %12643 = vmatprep.subr.mxu0 0.0
  %12644 = vmatpush1.msra.mxu0 %v211
  %12645 = vmatprep.subr.mxu0 0.0
  %12646 = vmatpush1.msra.mxu0 %v212
  %12647 = vmatprep.subr.mxu0 0.0
  %12648 = vmatpush1.msra.mxu0 %v213
  %12649 = vmatprep.subr.mxu0 0.0
  %12650 = vmatpush1.msra.mxu0 %v214
  %12651 = vmatprep.subr.mxu0 0.0
  %12652 = vmatpush1.msra.mxu0 %v215
  %12653 = vmatprep.subr.mxu0 0.0
  %12654 = vmatpush1.msra.mxu0 %v216
  %12655 = vmatprep.subr.mxu0 0.0
  %12656 = vmatpush1.msra.mxu0 %v217
  %12657 = vmatprep.subr.mxu0 0.0
  %12658 = vmatpush1.msra.mxu0 %v218
  %12659 = vmatprep.subr.mxu0 0.0
  %12660 = vmatpush1.msra.mxu0 %v219
  %12661 = vmatprep.subr.mxu0 0.0
  %12662 = vmatpush1.msra.mxu0 %v220
  %12663 = vmatprep.subr.mxu0 0.0
  %12664 = vmatpush1.msra.mxu0 %v221
  %12665 = vmatprep.subr.mxu0 0.0
  %12666 = vmatpush1.msra.mxu0 %v222
  %12667 = vmatprep.subr.mxu0 0.0
  %12668 = vmatpush1.msra.mxu0 %v223
  %12669 = vmatprep.subr.mxu0 0.0
  %12670 = vmatpush1.msra.mxu0 %v224
  %12671 = vmatprep.subr.mxu0 0.0
  %12672 = vmatpush1.msra.mxu0 %v225
  %12673 = vmatprep.subr.mxu0 0.0
  %12674 = vmatpush1.msra.mxu0 %v226
  %12675 = vmatprep.subr.mxu0 0.0
  %12676 = vmatpush1.msra.mxu0 %v227
  %12677 = vmatprep.mubr.f32.mxu0 %v12119
  %12678 = vmatmul.mubr.f32.gmra.mrb[0].mxu0 %v12087
  %v12679 = vpop.f32.mrb[0].mxu0
  %v12680 = vadd.f32 %v12610, %v12679
  %v12681 = vpop.f32.mrb[0].mxu0
  %12682 = vdwg.mxu0
  %12683 = vmatprep.subr.mxu0 0.0
  %12684 = vmatpush1.msra.mxu0 %v228
  %12685 = vmatprep.subr.mxu0 0.0
  %12686 = vmatpush1.msra.mxu0 %v229
  %12687 = vmatprep.subr.mxu0 0.0
  %12688 = vmatpush1.msra.mxu0 %v230
  %12689 = vmatprep.subr.mxu0 0.0
  %12690 = vmatpush1.msra.mxu0 %v231
  %12691 = vmatprep.subr.mxu0 0.0
  %12692 = vmatpush1.msra.mxu0 %v232
  %12693 = vmatprep.subr.mxu0 0.0
  %12694 = vmatpush1.msra.mxu0 %v233
  %12695 = vmatprep.subr.mxu0 0.0
  %12696 = vmatpush1.msra.mxu0 %v234
  %12697 = vmatprep.subr.mxu0 0.0
  %12698 = vmatpush1.msra.mxu0 %v235
  %12699 = vmatprep.subr.mxu0 0.0
  %12700 = vmatpush1.msra.mxu0 %v236
  %12701 = vmatprep.subr.mxu0 0.0
  %12702 = vmatpush1.msra.mxu0 %v237
  %12703 = vmatprep.subr.mxu0 0.0
  %12704 = vmatpush1.msra.mxu0 %v238
  %12705 = vmatprep.subr.mxu0 0.0
  %12706 = vmatpush1.msra.mxu0 %v239
  %12707 = vmatprep.subr.mxu0 0.0
  %12708 = vmatpush1.msra.mxu0 %v240
  %12709 = vmatprep.subr.mxu0 0.0
  %12710 = vmatpush1.msra.mxu0 %v241
  %12711 = vmatprep.subr.mxu0 0.0
  %12712 = vmatpush1.msra.mxu0 %v242
  %12713 = vmatprep.subr.mxu0 0.0
  %12714 = vmatpush1.msra.mxu0 %v243
  %12715 = vmatprep.subr.mxu0 0.0
  %12716 = vmatpush1.msra.mxu0 %v244
  %12717 = vmatprep.subr.mxu0 0.0
  %12718 = vmatpush1.msra.mxu0 %v245
  %12719 = vmatprep.subr.mxu0 0.0
  %12720 = vmatpush1.msra.mxu0 %v246
  %12721 = vmatprep.subr.mxu0 0.0
  %12722 = vmatpush1.msra.mxu0 %v247
  %12723 = vmatprep.subr.mxu0 0.0
  %12724 = vmatpush1.msra.mxu0 %v248
  %12725 = vmatprep.subr.mxu0 0.0
  %12726 = vmatpush1.msra.mxu0 %v249
  %12727 = vmatprep.subr.mxu0 0.0
  %12728 = vmatpush1.msra.mxu0 %v250
  %12729 = vmatprep.subr.mxu0 0.0
  %12730 = vmatpush1.msra.mxu0 %v251
  %12731 = vmatprep.subr.mxu0 0.0
  %12732 = vmatpush1.msra.mxu0 %v252
  %12733 = vmatprep.subr.mxu0 0.0
  %12734 = vmatpush1.msra.mxu0 %v253
  %12735 = vmatprep.subr.mxu0 0.0
  %12736 = vmatpush1.msra.mxu0 %v254
  %12737 = vmatprep.subr.mxu0 0.0
  %12738 = vmatpush1.msra.mxu0 %v255
  %12739 = vmatprep.subr.mxu0 0.0
  %12740 = vmatpush1.msra.mxu0 %v256
  %12741 = vmatprep.subr.mxu0 0.0
  %12742 = vmatpush1.msra.mxu0 %v257
  %12743 = vmatprep.subr.mxu0 0.0
  %12744 = vmatpush1.msra.mxu0 %v258
  %12745 = vmatprep.subr.mxu0 0.0
  %12746 = vmatpush1.msra.mxu0 %v259
  %12747 = vmatprep.mubr.f32.mxu0 %v12183
  %12748 = vmatmul.mubr.f32.gmra.mrb[0].mxu0 %v12151
  %v12749 = vpop.f32.mrb[0].mxu0
  %v12750 = vadd.f32 %v12680, %v12749
  %v12751 = vpop.f32.mrb[0].mxu0
  %12752 = vdwg.mxu0
  %12753 = vmatprep.subr.mxu0 0.0
  %12754 = vmatpush1.msra.mxu0 %v260
  %12755 = vmatprep.subr.mxu0 0.0
  %12756 = vmatpush1.msra.mxu0 %v261
  %12757 = vmatprep.subr.mxu0 0.0
  %12758 = vmatpush1.msra.mxu0 %v262
  %12759 = vmatprep.subr.mxu0 0.0
  %12760 = vmatpush1.msra.mxu0 %v263
  %12761 = vmatprep.subr.mxu0 0.0
  %12762 = vmatpush1.msra.mxu0 %v264
  %12763 = vmatprep.subr.mxu0 0.0
  %12764 = vmatpush1.msra.mxu0 %v265
  %12765 = vmatprep.subr.mxu0 0.0
  %12766 = vmatpush1.msra.mxu0 %v266
  %12767 = vmatprep.subr.mxu0 0.0
  %12768 = vmatpush1.msra.mxu0 %v267
  %12769 = vmatprep.subr.mxu0 0.0
  %12770 = vmatpush1.msra.mxu0 %v268
  %12771 = vmatprep.subr.mxu0 0.0
  %12772 = vmatpush1.msra.mxu0 %v269
  %12773 = vmatprep.subr.mxu0 0.0
  %12774 = vmatpush1.msra.mxu0 %v270
  %12775 = vmatprep.subr.mxu0 0.0
  %12776 = vmatpush1.msra.mxu0 %v271
  %12777 = vmatprep.subr.mxu0 0.0
  %12778 = vmatpush1.msra.mxu0 %v272
  %12779 = vmatprep.subr.mxu0 0.0
  %12780 = vmatpush1.msra.mxu0 %v273
  %12781 = vmatprep.subr.mxu0 0.0
  %12782 = vmatpush1.msra.mxu0 %v274
  %12783 = vmatprep.subr.mxu0 0.0
  %12784 = vmatpush1.msra.mxu0 %v275
  %12785 = vmatprep.subr.mxu0 0.0
  %12786 = vmatpush1.msra.mxu0 %v276
  %12787 = vmatprep.subr.mxu0 0.0
  %12788 = vmatpush1.msra.mxu0 %v277
  %12789 = vmatprep.subr.mxu0 0.0
  %12790 = vmatpush1.msra.mxu0 %v278
  %12791 = vmatprep.subr.mxu0 0.0
  %12792 = vmatpush1.msra.mxu0 %v279
  %12793 = vmatprep.subr.mxu0 0.0
  %12794 = vmatpush1.msra.mxu0 %v280
  %12795 = vmatprep.subr.mxu0 0.0
  %12796 = vmatpush1.msra.mxu0 %v281
  %12797 = vmatprep.subr.mxu0 0.0
  %12798 = vmatpush1.msra.mxu0 %v282
  %12799 = vmatprep.subr.mxu0 0.0
  %12800 = vmatpush1.msra.mxu0 %v283
  %12801 = vmatprep.subr.mxu0 0.0
  %12802 = vmatpush1.msra.mxu0 %v284
  %12803 = vmatprep.subr.mxu0 0.0
  %12804 = vmatpush1.msra.mxu0 %v285
  %12805 = vmatprep.subr.mxu0 0.0
  %12806 = vmatpush1.msra.mxu0 %v286
  %12807 = vmatprep.subr.mxu0 0.0
  %12808 = vmatpush1.msra.mxu0 %v287
  %12809 = vmatprep.subr.mxu0 0.0
  %12810 = vmatpush1.msra.mxu0 %v288
  %12811 = vmatprep.subr.mxu0 0.0
  %12812 = vmatpush1.msra.mxu0 %v289
  %12813 = vmatprep.subr.mxu0 0.0
  %12814 = vmatpush1.msra.mxu0 %v290
  %12815 = vmatprep.subr.mxu0 0.0
  %12816 = vmatpush1.msra.mxu0 %v291
  %12817 = vmatprep.mubr.f32.mxu0 %v12247
  %12818 = vmatmul.mubr.f32.gmra.mrb[0].mxu0 %v12215
  %v12819 = vpop.f32.mrb[0].mxu0
  %v12820 = vadd.f32 %v12750, %v12819
  %v12821 = vpop.f32.mrb[0].mxu0
  %12822 = vdwg.mxu0
  %s12823 = scalar_lea.vmem %s7, 2
  %12824 = vst.msk [vmem:[%s12823] sm:$0x3] %vm11749, %v12820
  // Predicated region
  $region26: #{encoder_forward.1} parent=0 // pred_check
    _
  $region27: #{encoder_forward.1} parent=0 // pred_check_branch
    %12826 = sbr.rel (0) target = $region29
  $region28: #{encoder_forward.1} parent=0 // pred_region
    _
  $region29: #{encoder_forward.1} parent=0 // pred_fallthru
    _
  // Predicated region
  $region30: #{encoder_forward.1} parent=0 // pred_check
    _
  $region31: #{encoder_forward.1} parent=0 // pred_check_branch
    %12828 = sbr.rel (0) target = $region33
  $region32: #{encoder_forward.1} parent=0 // pred_region
    _
  $region33: #{encoder_forward.1} parent=0 // pred_fallthru
    _
  // Predicated region
  $region34: #{encoder_forward.1} parent=0 // pred_check
    _
  $region35: #{encoder_forward.1} parent=0 // pred_check_branch
    %12830 = sbr.rel (0) target = $region37
  $region36: #{encoder_forward.1} parent=0 // pred_region
    _
  $region37: #{encoder_forward.1} parent=0 // pred_fallthru
    _
  // Predicated region
  $region38: #{encoder_forward.1} parent=0 // pred_check
    _
  $region39: #{encoder_forward.1} parent=0 // pred_check_branch
    %12832 = sbr.rel (0) target = $region41
  $region40: #{encoder_forward.1} parent=0 // pred_region
    _
  $region41: #{encoder_forward.1} parent=0 // pred_fallthru
    _

</llo_original>
